<compile_context>
chip_gen: v5e
topology: v5e:2x2
jax: 0.10.0
libtpu: 0.0.40
codegen_flags: <defaults>
</compile_context>

<pallas_src>
import jax
import jax.numpy as jnp
from jax import lax
from jax.experimental import pallas as pl
from jax.experimental.pallas import tpu as pltpu

BN_EPS = 1e-5
D_MID = 128  # LSFE always produces 128 channels


def _lsfe_kernel(xp_ref, mask_ref, dw1_ref, pw1_ref, dw2_ref, pw2_ref, sh_ref,
                 out_ref):
    # Block shapes (per grid step, B_blk batch images):
    #   xp_ref  : (B, H+4, Wpad+2, C)  zero-padded NHWC input
    #   mask_ref: (Hp, Wpad, 1)        0/1 halo mask (grid-invariant)
    #   dw1_ref : (3, 3, C)  f32       depthwise-1 weights, BN1 scale folded in
    #   pw1_ref : (C, D)     bf16      1x1-1 weights, BN2 scale folded in
    #   dw2_ref : (3, 3, D)  f32       depthwise-2 weights, BN3 scale folded in
    #   pw2_ref : (D, D)     bf16      1x1-2 weights, BN4 scale folded in
    #   sh_ref  : (4, P)     f32       packed BN shifts [b1(C), b2(D), b3(D), b4(D)]
    #   out_ref : (B, D, H*W) f32      NCHW-flat output (lane-dense stores)
    B = xp_ref.shape[0]
    C = xp_ref.shape[3]
    Wpad = xp_ref.shape[2] - 2          # multiple of 8 (wrapper guarantees)
    Hp = xp_ref.shape[1] - 2            # H + 2
    H = Hp - 2
    D = out_ref.shape[1]
    HW = out_ref.shape[2]
    W = HW // H

    xp = xp_ref[...]                    # (B, H+4, Wpad+2, C)
    dw1 = dw1_ref[...]
    dw2 = dw2_ref[...]
    sh = sh_ref[...]
    b1 = sh[0, :C]
    b2 = sh[1, :D]
    b3 = sh[2, :D]
    b4 = sh[3, :D]

    # ---- stage 1: depthwise 3x3, evaluated over the *padded* canvas (Hp, Wpad)
    # so the halo needed by stage 2 is produced directly (masked below).
    # Column (sublane) shifts are hoisted: only 2 unaligned slices per conv.
    acc1 = None
    for dx in range(3):
        xs = xp[:, :, dx:dx + Wpad, :]            # (B, H+4, Wpad, C)
        for dy in range(3):
            t = xs[:, dy:dy + Hp] * dw1[dy, dx]   # (B, Hp, Wpad, C)
            acc1 = t if acc1 is None else acc1 + t
    h = jnp.maximum(acc1 + b1, 0.0)               # BN1 shift + ReLU

    # ---- stage 1: pointwise 1x1 on the MXU (bf16 operands, f32 accumulation)
    h = h.reshape(B * Hp * Wpad, C).astype(jnp.bfloat16)
    h = jnp.dot(h, pw1_ref[...], preferred_element_type=jnp.float32)
    # BN2 shift + ReLU fused with the precomputed halo mask: the zeroed halo
    # *is* conv2's zero padding.
    h = jnp.maximum(h + b2, 0.0).reshape(B, Hp, Wpad, D)
    y = h * mask_ref[...]                         # (Hp,Wpad,1) bcast over B, D

    # ---- stage 2: depthwise 3x3 over the valid (H, W) output domain
    acc2 = None
    for dx in range(3):
        ys = y[:, :, dx:dx + W, :]                # (B, Hp, W, D)
        for dy in range(3):
            t = ys[:, dy:dy + H] * dw2[dy, dx]    # (B, H, W, D)
            acc2 = t if acc2 is None else acc2 + t
    g = jnp.maximum(acc2 + b3, 0.0)               # BN3 shift + ReLU

    # ---- stage 2: pointwise 1x1 on the MXU, then BN4 shift + ReLU
    g = g.reshape(B * H * W, D).astype(jnp.bfloat16)
    g = jnp.dot(g, pw2_ref[...], preferred_element_type=jnp.float32)
    g = jnp.maximum(g + b4, 0.0)                  # (B*HW, D) f32

    # ---- lane-dense NCHW-flat store: per image (D, HW), HW on the lane axis
    for b in range(B):
        out_ref[b] = g[b * HW:(b + 1) * HW, :].T.astype(out_ref.dtype)


def _fold_bn(gamma, beta, mean, var):
    scale = gamma / jnp.sqrt(var + BN_EPS)
    shift = beta - mean * scale
    return scale, shift


@jax.jit
def lsfe_forward(x_nchw, params):
    """x_nchw: (N, C, H, W) float32  ->  (N, 128, H, W) float32 (PyTorch layout)."""
    N, C, H, W = x_nchw.shape
    D = D_MID

    # Layout assumptions the kernel is designed around (see review): violating
    # them silently turns the "layout no-op" reshapes into relayouts and the
    # lane-dense stores into masked stores, so fail loudly instead.
    if W % 8 != 0:
        raise ValueError(f"lsfe_forward requires W % 8 == 0, got W={W}")
    if (H * W) % 128 != 0:
        raise ValueError(f"lsfe_forward requires H*W % 128 == 0, got H*W={H*W}")

    Wpad = -(-(W + 2) // 8) * 8        # padded canvas width, multiple of 8
    Hp = H + 2
    HW = H * W

    # Largest of 8/4/2/1 images per grid step that divides N (amortises the
    # per-grid-step overhead and enlarges the matmul M dimension).
    B_blk = next(b for b in (8, 4, 2, 1) if N % b == 0)

    # NCHW -> NHWC plus zero halo in one fused XLA copy (no separate pad pass).
    x = jnp.transpose(x_nchw, (0, 2, 3, 1))
    xp = jnp.pad(x, ((0, 0), (2, 2), (2, Wpad - W), (0, 0)))

    # Grid-invariant halo mask: 1 on the valid (H, W) interior of the (Hp, Wpad)
    # stage-1 canvas, 0 on the halo (== conv2's zero padding).
    mask = jnp.pad(jnp.ones((H, W, 1), jnp.float32),
                   ((1, 1), (1, Wpad - W - 1), (0, 0)))

    s1, b1 = _fold_bn(params["bn1_g"], params["bn1_b"], params["bn1_m"], params["bn1_v"])
    s2, b2 = _fold_bn(params["bn2_g"], params["bn2_b"], params["bn2_m"], params["bn2_v"])
    s3, b3 = _fold_bn(params["bn3_g"], params["bn3_b"], params["bn3_m"], params["bn3_v"])
    s4, b4 = _fold_bn(params["bn4_g"], params["bn4_b"], params["bn4_m"], params["bn4_v"])

    dw1f = params["dw1"] * s1                              # (3,3,C) f32, BN1 scale folded
    dw2f = params["dw2"] * s3                              # (3,3,D) f32, BN3 scale folded
    # bf16 MXU operands (f32 accumulation happens in-kernel).
    pw1f = (params["pw1"] * s2).astype(jnp.bfloat16)       # (C,D)
    pw2f = (params["pw2"] * s4).astype(jnp.bfloat16)       # (D,D)

    P = max(C, D)
    shifts = jnp.zeros((4, P), jnp.float32)
    shifts = shifts.at[0, :C].set(b1)
    shifts = shifts.at[1, :D].set(b2)
    shifts = shifts.at[2, :D].set(b3)
    shifts = shifts.at[3, :D].set(b4)

    # VMEM budget: real requirement (double-buffered I/O blocks + weights +
    # live intermediates, generous margin) capped at 48 MiB so v7x's 64 MiB
    # physical VMEM keeps headroom for compiler scratch.
    f32b = 4
    in_blk = B_blk * (H + 4) * (Wpad + 2) * C * f32b
    out_blk = B_blk * D * HW * f32b
    interm = B_blk * Hp * Wpad * D * f32b                  # largest live tensor
    weights = (9 * C + 9 * D + 4 * P + Hp * Wpad) * f32b + (C * D + D * D) * 2
    vmem_est = 2 * (in_blk + out_blk) + 6 * interm + 2 * weights
    vmem_limit = int(min(max(vmem_est, 16 * 1024 * 1024), 48 * 1024 * 1024))

    param_spec = lambda shape: pl.BlockSpec(shape, lambda n, _s=shape: (0,) * len(_s))

    out = pl.pallas_call(
        _lsfe_kernel,
        out_shape=jax.ShapeDtypeStruct((N, D, HW), jnp.float32),
        grid_spec=pltpu.PrefetchScalarGridSpec(
            num_scalar_prefetch=0,
            grid=(N // B_blk,),
            in_specs=[
                pl.BlockSpec((B_blk, H + 4, Wpad + 2, C), lambda n: (n, 0, 0, 0)),
                param_spec((Hp, Wpad, 1)),   # halo mask
                param_spec((3, 3, C)),       # depthwise-1 weight (f32)
                param_spec((C, D)),          # pointwise-1 weight (bf16)
                param_spec((3, 3, D)),       # depthwise-2 weight (f32)
                param_spec((D, D)),          # pointwise-2 weight (bf16)
                param_spec((4, P)),          # packed BN shifts
            ],
            out_specs=pl.BlockSpec((B_blk, D, HW), lambda n: (n, 0, 0)),
        ),
        compiler_params=pltpu.CompilerParams(
            dimension_semantics=("parallel",),
            vmem_limit_bytes=vmem_limit,
        ),
    )(xp, mask, dw1f, pw1f, dw2f, pw2f, shifts)

    # Output is already NCHW-contiguous; this reshape is free (metadata only).
    return out.reshape(N, D, H, W)


def make_params(key, in_channels):
    """Deterministic synthetic parameters with the same shapes as the PyTorch
    module, stored in the kernel's NHWC-friendly layout."""
    C, D = in_channels, D_MID
    ks = jax.random.split(key, 20)

    def bn_params(i, n):
        return (1.0 + 0.1 * jax.random.normal(ks[i], (n,), jnp.float32),
                0.1 * jax.random.normal(ks[i + 1], (n,), jnp.float32),
                0.05 * jax.random.normal(ks[i + 2], (n,), jnp.float32),
                1.0 + 0.1 * jax.random.uniform(ks[i + 3], (n,), jnp.float32))

    p = {
        # conv1[0]: Conv2d(C, C, 3, groups=C, bias=False) weight (C,1,3,3) -> (3,3,C)
        "dw1": 0.1 * jax.random.normal(ks[16], (3, 3, C), jnp.float32),
        # conv1[3]: Conv2d(C, 128, 1, bias=False) weight (128,C,1,1) -> (C,128)
        "pw1": 0.1 * jax.random.normal(ks[17], (C, D), jnp.float32),
        # conv2[0]: Conv2d(128,128,3, groups=128, bias=False) weight (128,1,3,3) -> (3,3,128)
        "dw2": 0.1 * jax.random.normal(ks[18], (3, 3, D), jnp.float32),
        # conv2[3]: Conv2d(128,128,1, bias=False) weight (128,128,1,1) -> (128,128)
        "pw2": 0.1 * jax.random.normal(ks[19], (D, D), jnp.float32),
    }
    for idx, (name, n) in enumerate((("bn1", C), ("bn2", D), ("bn3", D), ("bn4", D))):
        g, b, m, v = bn_params(4 * idx, n)
        p[name + "_g"], p[name + "_b"], p[name + "_m"], p[name + "_v"] = g, b, m, v
    return p


def _reference(x_nchw, params):
    """Pure-JAX (lax.conv, f32) reference of LSFEComponent.forward (inference BN)."""
    prec = lax.Precision.HIGHEST
    C = x_nchw.shape[1]
    D = D_MID

    def bn(y, g, b, m, v):
        s = g / jnp.sqrt(v + BN_EPS)
        return y * s[None, :, None, None] + (b - m * s)[None, :, None, None]

    y = x_nchw
    # conv1 block
    dw1 = jnp.transpose(params["dw1"], (2, 0, 1))[:, None, :, :]      # (C,1,3,3)
    y = lax.conv_general_dilated(y, dw1, (1, 1), ((1, 1), (1, 1)),
                                 feature_group_count=C,
                                 dimension_numbers=("NCHW", "OIHW", "NCHW"),
                                 precision=prec)
    y = jnp.maximum(bn(y, params["bn1_g"], params["bn1_b"], params["bn1_m"], params["bn1_v"]), 0.0)
    pw1 = jnp.transpose(params["pw1"], (1, 0))[:, :, None, None]      # (D,C,1,1)
    y = lax.conv_general_dilated(y, pw1, (1, 1), ((0, 0), (0, 0)),
                                 dimension_numbers=("NCHW", "OIHW", "NCHW"),
                                 precision=prec)
    y = jnp.maximum(bn(y, params["bn2_g"], params["bn2_b"], params["bn2_m"], params["bn2_v"]), 0.0)
    # conv2 block
    dw2 = jnp.transpose(params["dw2"], (2, 0, 1))[:, None, :, :]      # (D,1,3,3)
    y = lax.conv_general_dilated(y, dw2, (1, 1), ((1, 1), (1, 1)),
                                 feature_group_count=D,
                                 dimension_numbers=("NCHW", "OIHW", "NCHW"),
                                 precision=prec)
    y = jnp.maximum(bn(y, params["bn3_g"], params["bn3_b"], params["bn3_m"], params["bn3_v"]), 0.0)
    pw2 = jnp.transpose(params["pw2"], (1, 0))[:, :, None, None]      # (D,D,1,1)
    y = lax.conv_general_dilated(y, pw2, (1, 1), ((0, 0), (0, 0)),
                                 dimension_numbers=("NCHW", "OIHW", "NCHW"),
                                 precision=prec)
    y = jnp.maximum(bn(y, params["bn4_g"], params["bn4_b"], params["bn4_m"], params["bn4_v"]), 0.0)
    return y


if __name__ == "__main__":
    N, C, H, W = 2, 32, 16, 16

    key = jax.random.PRNGKey(0)
    kx, kp = jax.random.split(key)
    x = jax.random.normal(kx, (N, C, H, W), jnp.float32)
    params = make_params(kp, C)

    out = lsfe_forward(x, params)
    out = jax.block_until_ready(out)

    # Sanity check against a pure-f32 JAX reference.  The kernel uses bf16 MXU
    # operands with f32 accumulation (per the performance review), so exact f32
    # parity is intentionally relaxed; errors stay well inside this tolerance.
    ref = _reference(x, params)
    assert out.shape == (N, D_MID, H, W)
    max_err = float(jnp.max(jnp.abs(out - ref)))
    assert jnp.allclose(out, ref, atol=2e-2, rtol=2e-2), f"max abs err = {max_err}"

    print("KERNEL_OK")
</pallas_src>

<mosaic_0001>
module attributes {stable_mosaic.version = 11 : i64} {
  func.func @_lsfe_kernel(%arg0: i32, %arg1: memref<2x20x26x32xf32, #tpu.memory_space<vmem>>, %arg2: memref<18x24x1xf32, #tpu.memory_space<vmem>>, %arg3: memref<3x3x32xf32, #tpu.memory_space<vmem>>, %arg4: memref<32x128xbf16, #tpu.memory_space<vmem>>, %arg5: memref<3x3x128xf32, #tpu.memory_space<vmem>>, %arg6: memref<128x128xbf16, #tpu.memory_space<vmem>>, %arg7: memref<4x128xf32, #tpu.memory_space<vmem>>, %arg8: memref<2x128x256xf32, #tpu.memory_space<vmem>>) attributes {dimension_semantics = [#tpu.dimension_semantics<parallel>], iteration_bounds = array<i64: 1>, scalar_prefetch = 0 : i64, scratch_operands = 0 : i64, tpu.core_type = #tpu.core_type<tc>, window_params = [{transform_indices = @transform_0, window_bounds = array<i64: 2, 20, 26, 32>}, {pipeline_mode = #tpu.pipeline_mode<synchronous>, transform_indices = @transform_1, window_bounds = array<i64: 18, 24, 1>}, {pipeline_mode = #tpu.pipeline_mode<synchronous>, transform_indices = @transform_2, window_bounds = array<i64: 3, 3, 32>}, {pipeline_mode = #tpu.pipeline_mode<synchronous>, transform_indices = @transform_3, window_bounds = array<i64: 32, 128>}, {pipeline_mode = #tpu.pipeline_mode<synchronous>, transform_indices = @transform_4, window_bounds = array<i64: 3, 3, 128>}, {pipeline_mode = #tpu.pipeline_mode<synchronous>, transform_indices = @transform_5, window_bounds = array<i64: 128, 128>}, {pipeline_mode = #tpu.pipeline_mode<synchronous>, transform_indices = @transform_6, window_bounds = array<i64: 4, 128>}, {transform_indices = @transform_7, window_bounds = array<i64: 2, 128, 256>}]} {
    %c0 = arith.constant 0 : index
    %c0_0 = arith.constant 0 : index
    %c0_1 = arith.constant 0 : index
    %c0_2 = arith.constant 0 : index
    %0 = vector.load %arg1[%c0, %c0_0, %c0_1, %c0_2] : memref<2x20x26x32xf32, #tpu.memory_space<vmem>>, vector<2x20x26x32xf32>
    %c0_3 = arith.constant 0 : index
    %c0_4 = arith.constant 0 : index
    %c0_5 = arith.constant 0 : index
    %1 = vector.load %arg3[%c0_3, %c0_4, %c0_5] : memref<3x3x32xf32, #tpu.memory_space<vmem>>, vector<3x3x32xf32>
    %c0_6 = arith.constant 0 : index
    %c0_7 = arith.constant 0 : index
    %c0_8 = arith.constant 0 : index
    %2 = vector.load %arg5[%c0_6, %c0_7, %c0_8] : memref<3x3x128xf32, #tpu.memory_space<vmem>>, vector<3x3x128xf32>
    %c0_9 = arith.constant 0 : index
    %c0_10 = arith.constant 0 : index
    %3 = vector.load %arg7[%c0_9, %c0_10] : memref<4x128xf32, #tpu.memory_space<vmem>>, vector<4x128xf32>
    %4 = vector.extract_strided_slice %3 {offsets = [0, 0], sizes = [1, 32], strides = [1, 1]} : vector<4x128xf32> to vector<1x32xf32>
    %5 = vector.shape_cast %4 : vector<1x32xf32> to vector<32xf32>
    %6 = vector.extract_strided_slice %3 {offsets = [1, 0], sizes = [1, 128], strides = [1, 1]} : vector<4x128xf32> to vector<1x128xf32>
    %7 = vector.shape_cast %6 : vector<1x128xf32> to vector<128xf32>
    %8 = vector.extract_strided_slice %3 {offsets = [2, 0], sizes = [1, 128], strides = [1, 1]} : vector<4x128xf32> to vector<1x128xf32>
    %9 = vector.shape_cast %8 : vector<1x128xf32> to vector<128xf32>
    %10 = vector.extract_strided_slice %3 {offsets = [3, 0], sizes = [1, 128], strides = [1, 1]} : vector<4x128xf32> to vector<1x128xf32>
    %11 = vector.shape_cast %10 : vector<1x128xf32> to vector<128xf32>
    %12 = vector.extract_strided_slice %0 {offsets = [0, 0, 0, 0], sizes = [2, 20, 24, 32], strides = [1, 1, 1, 1]} : vector<2x20x26x32xf32> to vector<2x20x24x32xf32>
    %13 = vector.extract_strided_slice %12 {offsets = [0, 0, 0, 0], sizes = [2, 18, 24, 32], strides = [1, 1, 1, 1]} : vector<2x20x24x32xf32> to vector<2x18x24x32xf32>
    %14 = vector.extract_strided_slice %1 {offsets = [0, 0, 0], sizes = [1, 1, 32], strides = [1, 1, 1]} : vector<3x3x32xf32> to vector<1x1x32xf32>
    %15 = vector.shape_cast %14 : vector<1x1x32xf32> to vector<32xf32>
    %16 = vector.shape_cast %15 : vector<32xf32> to vector<1x1x1x32xf32>
    %17 = vector.broadcast %16 : vector<1x1x1x32xf32> to vector<2x18x24x32xf32>
    %18 = arith.mulf %13, %17 : vector<2x18x24x32xf32>
    %19 = vector.extract_strided_slice %12 {offsets = [0, 1, 0, 0], sizes = [2, 18, 24, 32], strides = [1, 1, 1, 1]} : vector<2x20x24x32xf32> to vector<2x18x24x32xf32>
    %20 = vector.extract_strided_slice %1 {offsets = [1, 0, 0], sizes = [1, 1, 32], strides = [1, 1, 1]} : vector<3x3x32xf32> to vector<1x1x32xf32>
    %21 = vector.shape_cast %20 : vector<1x1x32xf32> to vector<32xf32>
    %22 = vector.shape_cast %21 : vector<32xf32> to vector<1x1x1x32xf32>
    %23 = vector.broadcast %22 : vector<1x1x1x32xf32> to vector<2x18x24x32xf32>
    %24 = arith.mulf %19, %23 : vector<2x18x24x32xf32>
    %25 = arith.addf %18, %24 : vector<2x18x24x32xf32>
    %26 = vector.extract_strided_slice %12 {offsets = [0, 2, 0, 0], sizes = [2, 18, 24, 32], strides = [1, 1, 1, 1]} : vector<2x20x24x32xf32> to vector<2x18x24x32xf32>
    %27 = vector.extract_strided_slice %1 {offsets = [2, 0, 0], sizes = [1, 1, 32], strides = [1, 1, 1]} : vector<3x3x32xf32> to vector<1x1x32xf32>
    %28 = vector.shape_cast %27 : vector<1x1x32xf32> to vector<32xf32>
    %29 = vector.shape_cast %28 : vector<32xf32> to vector<1x1x1x32xf32>
    %30 = vector.broadcast %29 : vector<1x1x1x32xf32> to vector<2x18x24x32xf32>
    %31 = arith.mulf %26, %30 : vector<2x18x24x32xf32>
    %32 = arith.addf %25, %31 : vector<2x18x24x32xf32>
    %33 = vector.extract_strided_slice %0 {offsets = [0, 0, 1, 0], sizes = [2, 20, 24, 32], strides = [1, 1, 1, 1]} : vector<2x20x26x32xf32> to vector<2x20x24x32xf32>
    %34 = vector.extract_strided_slice %33 {offsets = [0, 0, 0, 0], sizes = [2, 18, 24, 32], strides = [1, 1, 1, 1]} : vector<2x20x24x32xf32> to vector<2x18x24x32xf32>
    %35 = vector.extract_strided_slice %1 {offsets = [0, 1, 0], sizes = [1, 1, 32], strides = [1, 1, 1]} : vector<3x3x32xf32> to vector<1x1x32xf32>
    %36 = vector.shape_cast %35 : vector<1x1x32xf32> to vector<32xf32>
    %37 = vector.shape_cast %36 : vector<32xf32> to vector<1x1x1x32xf32>
    %38 = vector.broadcast %37 : vector<1x1x1x32xf32> to vector<2x18x24x32xf32>
    %39 = arith.mulf %34, %38 : vector<2x18x24x32xf32>
    %40 = arith.addf %32, %39 : vector<2x18x24x32xf32>
    %41 = vector.extract_strided_slice %33 {offsets = [0, 1, 0, 0], sizes = [2, 18, 24, 32], strides = [1, 1, 1, 1]} : vector<2x20x24x32xf32> to vector<2x18x24x32xf32>
    %42 = vector.extract_strided_slice %1 {offsets = [1, 1, 0], sizes = [1, 1, 32], strides = [1, 1, 1]} : vector<3x3x32xf32> to vector<1x1x32xf32>
    %43 = vector.shape_cast %42 : vector<1x1x32xf32> to vector<32xf32>
    %44 = vector.shape_cast %43 : vector<32xf32> to vector<1x1x1x32xf32>
    %45 = vector.broadcast %44 : vector<1x1x1x32xf32> to vector<2x18x24x32xf32>
    %46 = arith.mulf %41, %45 : vector<2x18x24x32xf32>
    %47 = arith.addf %40, %46 : vector<2x18x24x32xf32>
    %48 = vector.extract_strided_slice %33 {offsets = [0, 2, 0, 0], sizes = [2, 18, 24, 32], strides = [1, 1, 1, 1]} : vector<2x20x24x32xf32> to vector<2x18x24x32xf32>
    %49 = vector.extract_strided_slice %1 {offsets = [2, 1, 0], sizes = [1, 1, 32], strides = [1, 1, 1]} : vector<3x3x32xf32> to vector<1x1x32xf32>
    %50 = vector.shape_cast %49 : vector<1x1x32xf32> to vector<32xf32>
    %51 = vector.shape_cast %50 : vector<32xf32> to vector<1x1x1x32xf32>
    %52 = vector.broadcast %51 : vector<1x1x1x32xf32> to vector<2x18x24x32xf32>
    %53 = arith.mulf %48, %52 : vector<2x18x24x32xf32>
    %54 = arith.addf %47, %53 : vector<2x18x24x32xf32>
    %55 = vector.extract_strided_slice %0 {offsets = [0, 0, 2, 0], sizes = [2, 20, 24, 32], strides = [1, 1, 1, 1]} : vector<2x20x26x32xf32> to vector<2x20x24x32xf32>
    %56 = vector.extract_strided_slice %55 {offsets = [0, 0, 0, 0], sizes = [2, 18, 24, 32], strides = [1, 1, 1, 1]} : vector<2x20x24x32xf32> to vector<2x18x24x32xf32>
    %57 = vector.extract_strided_slice %1 {offsets = [0, 2, 0], sizes = [1, 1, 32], strides = [1, 1, 1]} : vector<3x3x32xf32> to vector<1x1x32xf32>
    %58 = vector.shape_cast %57 : vector<1x1x32xf32> to vector<32xf32>
    %59 = vector.shape_cast %58 : vector<32xf32> to vector<1x1x1x32xf32>
    %60 = vector.broadcast %59 : vector<1x1x1x32xf32> to vector<2x18x24x32xf32>
    %61 = arith.mulf %56, %60 : vector<2x18x24x32xf32>
    %62 = arith.addf %54, %61 : vector<2x18x24x32xf32>
    %63 = vector.extract_strided_slice %55 {offsets = [0, 1, 0, 0], sizes = [2, 18, 24, 32], strides = [1, 1, 1, 1]} : vector<2x20x24x32xf32> to vector<2x18x24x32xf32>
    %64 = vector.extract_strided_slice %1 {offsets = [1, 2, 0], sizes = [1, 1, 32], strides = [1, 1, 1]} : vector<3x3x32xf32> to vector<1x1x32xf32>
    %65 = vector.shape_cast %64 : vector<1x1x32xf32> to vector<32xf32>
    %66 = vector.shape_cast %65 : vector<32xf32> to vector<1x1x1x32xf32>
    %67 = vector.broadcast %66 : vector<1x1x1x32xf32> to vector<2x18x24x32xf32>
    %68 = arith.mulf %63, %67 : vector<2x18x24x32xf32>
    %69 = arith.addf %62, %68 : vector<2x18x24x32xf32>
    %70 = vector.extract_strided_slice %55 {offsets = [0, 2, 0, 0], sizes = [2, 18, 24, 32], strides = [1, 1, 1, 1]} : vector<2x20x24x32xf32> to vector<2x18x24x32xf32>
    %71 = vector.extract_strided_slice %1 {offsets = [2, 2, 0], sizes = [1, 1, 32], strides = [1, 1, 1]} : vector<3x3x32xf32> to vector<1x1x32xf32>
    %72 = vector.shape_cast %71 : vector<1x1x32xf32> to vector<32xf32>
    %73 = vector.shape_cast %72 : vector<32xf32> to vector<1x1x1x32xf32>
    %74 = vector.broadcast %73 : vector<1x1x1x32xf32> to vector<2x18x24x32xf32>
    %75 = arith.mulf %70, %74 : vector<2x18x24x32xf32>
    %76 = arith.addf %69, %75 : vector<2x18x24x32xf32>
    %77 = vector.shape_cast %5 : vector<32xf32> to vector<1x1x1x32xf32>
    %78 = vector.broadcast %77 : vector<1x1x1x32xf32> to vector<2x18x24x32xf32>
    %79 = arith.addf %76, %78 : vector<2x18x24x32xf32>
    %cst = arith.constant 0.000000e+00 : f32
    %80 = vector.broadcast %cst : f32 to vector<2x18x24x32xf32>
    %81 = arith.maximumf %79, %80 : vector<2x18x24x32xf32>
    %82 = vector.shape_cast %81 : vector<2x18x24x32xf32> to vector<864x32xf32>
    %83 = arith.truncf %82 : vector<864x32xf32> to vector<864x32xbf16>
    %c0_11 = arith.constant 0 : index
    %c0_12 = arith.constant 0 : index
    %84 = vector.load %arg4[%c0_11, %c0_12] : memref<32x128xbf16, #tpu.memory_space<vmem>>, vector<32x128xbf16>
    %cst_13 = arith.constant dense<0.000000e+00> : vector<864x128xf32>
    %85 = tpu.matmul %83, %84, %cst_13 {dimension_numbers = #tpu.dot_dimension_numbers<[1], [0], [0], [1], [0, 0, 1, 1], [], []>} : vector<864x32xbf16>, vector<32x128xbf16>, vector<864x128xf32> -> vector<864x128xf32>
    %86 = vector.shape_cast %7 : vector<128xf32> to vector<1x128xf32>
    %87 = vector.broadcast %86 : vector<1x128xf32> to vector<864x128xf32>
    %88 = arith.addf %85, %87 : vector<864x128xf32>
    %cst_14 = arith.constant 0.000000e+00 : f32
    %89 = vector.broadcast %cst_14 : f32 to vector<864x128xf32>
    %90 = arith.maximumf %88, %89 : vector<864x128xf32>
    %91 = vector.shape_cast %90 : vector<864x128xf32> to vector<2x18x24x128xf32>
    %c0_15 = arith.constant 0 : index
    %c0_16 = arith.constant 0 : index
    %c0_17 = arith.constant 0 : index
    %92 = vector.load %arg2[%c0_15, %c0_16, %c0_17] : memref<18x24x1xf32, #tpu.memory_space<vmem>>, vector<18x24x1xf32>
    %93 = vector.shape_cast %92 : vector<18x24x1xf32> to vector<1x18x24x1xf32>
    %94 = vector.broadcast %93 : vector<1x18x24x1xf32> to vector<2x18x24x128xf32>
    %95 = arith.mulf %91, %94 : vector<2x18x24x128xf32>
    %96 = vector.extract_strided_slice %95 {offsets = [0, 0, 0, 0], sizes = [2, 18, 16, 128], strides = [1, 1, 1, 1]} : vector<2x18x24x128xf32> to vector<2x18x16x128xf32>
    %97 = vector.extract_strided_slice %96 {offsets = [0, 0, 0, 0], sizes = [2, 16, 16, 128], strides = [1, 1, 1, 1]} : vector<2x18x16x128xf32> to vector<2x16x16x128xf32>
    %98 = vector.extract_strided_slice %2 {offsets = [0, 0, 0], sizes = [1, 1, 128], strides = [1, 1, 1]} : vector<3x3x128xf32> to vector<1x1x128xf32>
    %99 = vector.shape_cast %98 : vector<1x1x128xf32> to vector<128xf32>
    %100 = vector.shape_cast %99 : vector<128xf32> to vector<1x1x1x128xf32>
    %101 = vector.broadcast %100 : vector<1x1x1x128xf32> to vector<2x16x16x128xf32>
    %102 = arith.mulf %97, %101 : vector<2x16x16x128xf32>
    %103 = vector.extract_strided_slice %96 {offsets = [0, 1, 0, 0], sizes = [2, 16, 16, 128], strides = [1, 1, 1, 1]} : vector<2x18x16x128xf32> to vector<2x16x16x128xf32>
    %104 = vector.extract_strided_slice %2 {offsets = [1, 0, 0], sizes = [1, 1, 128], strides = [1, 1, 1]} : vector<3x3x128xf32> to vector<1x1x128xf32>
    %105 = vector.shape_cast %104 : vector<1x1x128xf32> to vector<128xf32>
    %106 = vector.shape_cast %105 : vector<128xf32> to vector<1x1x1x128xf32>
    %107 = vector.broadcast %106 : vector<1x1x1x128xf32> to vector<2x16x16x128xf32>
    %108 = arith.mulf %103, %107 : vector<2x16x16x128xf32>
    %109 = arith.addf %102, %108 : vector<2x16x16x128xf32>
    %110 = vector.extract_strided_slice %96 {offsets = [0, 2, 0, 0], sizes = [2, 16, 16, 128], strides = [1, 1, 1, 1]} : vector<2x18x16x128xf32> to vector<2x16x16x128xf32>
    %111 = vector.extract_strided_slice %2 {offsets = [2, 0, 0], sizes = [1, 1, 128], strides = [1, 1, 1]} : vector<3x3x128xf32> to vector<1x1x128xf32>
    %112 = vector.shape_cast %111 : vector<1x1x128xf32> to vector<128xf32>
    %113 = vector.shape_cast %112 : vector<128xf32> to vector<1x1x1x128xf32>
    %114 = vector.broadcast %113 : vector<1x1x1x128xf32> to vector<2x16x16x128xf32>
    %115 = arith.mulf %110, %114 : vector<2x16x16x128xf32>
    %116 = arith.addf %109, %115 : vector<2x16x16x128xf32>
    %117 = vector.extract_strided_slice %95 {offsets = [0, 0, 1, 0], sizes = [2, 18, 16, 128], strides = [1, 1, 1, 1]} : vector<2x18x24x128xf32> to vector<2x18x16x128xf32>
    %118 = vector.extract_strided_slice %117 {offsets = [0, 0, 0, 0], sizes = [2, 16, 16, 128], strides = [1, 1, 1, 1]} : vector<2x18x16x128xf32> to vector<2x16x16x128xf32>
    %119 = vector.extract_strided_slice %2 {offsets = [0, 1, 0], sizes = [1, 1, 128], strides = [1, 1, 1]} : vector<3x3x128xf32> to vector<1x1x128xf32>
    %120 = vector.shape_cast %119 : vector<1x1x128xf32> to vector<128xf32>
    %121 = vector.shape_cast %120 : vector<128xf32> to vector<1x1x1x128xf32>
    %122 = vector.broadcast %121 : vector<1x1x1x128xf32> to vector<2x16x16x128xf32>
    %123 = arith.mulf %118, %122 : vector<2x16x16x128xf32>
    %124 = arith.addf %116, %123 : vector<2x16x16x128xf32>
    %125 = vector.extract_strided_slice %117 {offsets = [0, 1, 0, 0], sizes = [2, 16, 16, 128], strides = [1, 1, 1, 1]} : vector<2x18x16x128xf32> to vector<2x16x16x128xf32>
    %126 = vector.extract_strided_slice %2 {offsets = [1, 1, 0], sizes = [1, 1, 128], strides = [1, 1, 1]} : vector<3x3x128xf32> to vector<1x1x128xf32>
    %127 = vector.shape_cast %126 : vector<1x1x128xf32> to vector<128xf32>
    %128 = vector.shape_cast %127 : vector<128xf32> to vector<1x1x1x128xf32>
    %129 = vector.broadcast %128 : vector<1x1x1x128xf32> to vector<2x16x16x128xf32>
    %130 = arith.mulf %125, %129 : vector<2x16x16x128xf32>
    %131 = arith.addf %124, %130 : vector<2x16x16x128xf32>
    %132 = vector.extract_strided_slice %117 {offsets = [0, 2, 0, 0], sizes = [2, 16, 16, 128], strides = [1, 1, 1, 1]} : vector<2x18x16x128xf32> to vector<2x16x16x128xf32>
    %133 = vector.extract_strided_slice %2 {offsets = [2, 1, 0], sizes = [1, 1, 128], strides = [1, 1, 1]} : vector<3x3x128xf32> to vector<1x1x128xf32>
    %134 = vector.shape_cast %133 : vector<1x1x128xf32> to vector<128xf32>
    %135 = vector.shape_cast %134 : vector<128xf32> to vector<1x1x1x128xf32>
    %136 = vector.broadcast %135 : vector<1x1x1x128xf32> to vector<2x16x16x128xf32>
    %137 = arith.mulf %132, %136 : vector<2x16x16x128xf32>
    %138 = arith.addf %131, %137 : vector<2x16x16x128xf32>
    %139 = vector.extract_strided_slice %95 {offsets = [0, 0, 2, 0], sizes = [2, 18, 16, 128], strides = [1, 1, 1, 1]} : vector<2x18x24x128xf32> to vector<2x18x16x128xf32>
    %140 = vector.extract_strided_slice %139 {offsets = [0, 0, 0, 0], sizes = [2, 16, 16, 128], strides = [1, 1, 1, 1]} : vector<2x18x16x128xf32> to vector<2x16x16x128xf32>
    %141 = vector.extract_strided_slice %2 {offsets = [0, 2, 0], sizes = [1, 1, 128], strides = [1, 1, 1]} : vector<3x3x128xf32> to vector<1x1x128xf32>
    %142 = vector.shape_cast %141 : vector<1x1x128xf32> to vector<128xf32>
    %143 = vector.shape_cast %142 : vector<128xf32> to vector<1x1x1x128xf32>
    %144 = vector.broadcast %143 : vector<1x1x1x128xf32> to vector<2x16x16x128xf32>
    %145 = arith.mulf %140, %144 : vector<2x16x16x128xf32>
    %146 = arith.addf %138, %145 : vector<2x16x16x128xf32>
    %147 = vector.extract_strided_slice %139 {offsets = [0, 1, 0, 0], sizes = [2, 16, 16, 128], strides = [1, 1, 1, 1]} : vector<2x18x16x128xf32> to vector<2x16x16x128xf32>
    %148 = vector.extract_strided_slice %2 {offsets = [1, 2, 0], sizes = [1, 1, 128], strides = [1, 1, 1]} : vector<3x3x128xf32> to vector<1x1x128xf32>
    %149 = vector.shape_cast %148 : vector<1x1x128xf32> to vector<128xf32>
    %150 = vector.shape_cast %149 : vector<128xf32> to vector<1x1x1x128xf32>
    %151 = vector.broadcast %150 : vector<1x1x1x128xf32> to vector<2x16x16x128xf32>
    %152 = arith.mulf %147, %151 : vector<2x16x16x128xf32>
    %153 = arith.addf %146, %152 : vector<2x16x16x128xf32>
    %154 = vector.extract_strided_slice %139 {offsets = [0, 2, 0, 0], sizes = [2, 16, 16, 128], strides = [1, 1, 1, 1]} : vector<2x18x16x128xf32> to vector<2x16x16x128xf32>
    %155 = vector.extract_strided_slice %2 {offsets = [2, 2, 0], sizes = [1, 1, 128], strides = [1, 1, 1]} : vector<3x3x128xf32> to vector<1x1x128xf32>
    %156 = vector.shape_cast %155 : vector<1x1x128xf32> to vector<128xf32>
    %157 = vector.shape_cast %156 : vector<128xf32> to vector<1x1x1x128xf32>
    %158 = vector.broadcast %157 : vector<1x1x1x128xf32> to vector<2x16x16x128xf32>
    %159 = arith.mulf %154, %158 : vector<2x16x16x128xf32>
    %160 = arith.addf %153, %159 : vector<2x16x16x128xf32>
    %161 = vector.shape_cast %9 : vector<128xf32> to vector<1x1x1x128xf32>
    %162 = vector.broadcast %161 : vector<1x1x1x128xf32> to vector<2x16x16x128xf32>
    %163 = arith.addf %160, %162 : vector<2x16x16x128xf32>
    %cst_18 = arith.constant 0.000000e+00 : f32
    %164 = vector.broadcast %cst_18 : f32 to vector<2x16x16x128xf32>
    %165 = arith.maximumf %163, %164 : vector<2x16x16x128xf32>
    %166 = vector.shape_cast %165 : vector<2x16x16x128xf32> to vector<512x128xf32>
    %167 = arith.truncf %166 : vector<512x128xf32> to vector<512x128xbf16>
    %c0_19 = arith.constant 0 : index
    %c0_20 = arith.constant 0 : index
    %168 = vector.load %arg6[%c0_19, %c0_20] : memref<128x128xbf16, #tpu.memory_space<vmem>>, vector<128x128xbf16>
    %cst_21 = arith.constant dense<0.000000e+00> : vector<512x128xf32>
    %169 = tpu.matmul %167, %168, %cst_21 {dimension_numbers = #tpu.dot_dimension_numbers<[1], [0], [0], [1], [0, 0, 1, 1], [], []>} : vector<512x128xbf16>, vector<128x128xbf16>, vector<512x128xf32> -> vector<512x128xf32>
    %170 = vector.shape_cast %11 : vector<128xf32> to vector<1x128xf32>
    %171 = vector.broadcast %170 : vector<1x128xf32> to vector<512x128xf32>
    %172 = arith.addf %169, %171 : vector<512x128xf32>
    %cst_22 = arith.constant 0.000000e+00 : f32
    %173 = vector.broadcast %cst_22 : f32 to vector<512x128xf32>
    %174 = arith.maximumf %172, %173 : vector<512x128xf32>
    %175 = vector.extract_strided_slice %174 {offsets = [0, 0], sizes = [256, 128], strides = [1, 1]} : vector<512x128xf32> to vector<256x128xf32>
    %176 = tpu.transpose %175, [1, 0] : vector<256x128xf32> -> vector<128x256xf32>
    %c0_23 = arith.constant 0 : index
    %c0_24 = arith.constant 0 : index
    %c0_25 = arith.constant 0 : index
    %177 = vector.load %arg8[%c0_23, %c0_24, %c0_25] : memref<2x128x256xf32, #tpu.memory_space<vmem>>, vector<1x128x256xf32>
    %178 = vector.shape_cast %177 : vector<1x128x256xf32> to vector<128x256xf32>
    %179 = vector.shape_cast %176 : vector<128x256xf32> to vector<1x128x256xf32>
    tpu.vector_store %arg8[%c0_23, %c0_24, %c0_25], %179 {strides = array<i32>} : memref<2x128x256xf32, #tpu.memory_space<vmem>>, vector<1x128x256xf32>,
    %180 = vector.extract_strided_slice %174 {offsets = [256, 0], sizes = [256, 128], strides = [1, 1]} : vector<512x128xf32> to vector<256x128xf32>
    %181 = tpu.transpose %180, [1, 0] : vector<256x128xf32> -> vector<128x256xf32>
    %c1 = arith.constant 1 : index
    %c0_26 = arith.constant 0 : index
    %c0_27 = arith.constant 0 : index
    %182 = vector.load %arg8[%c1, %c0_26, %c0_27] : memref<2x128x256xf32, #tpu.memory_space<vmem>>, vector<1x128x256xf32>
    %183 = vector.shape_cast %182 : vector<1x128x256xf32> to vector<128x256xf32>
    %184 = vector.shape_cast %181 : vector<128x256xf32> to vector<1x128x256xf32>
    tpu.vector_store %arg8[%c1, %c0_26, %c0_27], %184 {strides = array<i32>} : memref<2x128x256xf32, #tpu.memory_space<vmem>>, vector<1x128x256xf32>,
    return
  }
  func.func @transform_0(%arg0: i32) -> (i32, i32, i32, i32) {
    %c0_i32 = arith.constant 0 : i32
    %c0_i32_0 = arith.constant 0 : i32
    %c0_i32_1 = arith.constant 0 : i32
    %c0_i32_2 = arith.constant 0 : i32
    return %arg0, %c0_i32, %c0_i32_0, %c0_i32_1 : i32, i32, i32, i32
  }
  func.func @transform_1(%arg0: i32) -> (i32, i32, i32) {
    %c0_i32 = arith.constant 0 : i32
    %c0_i32_0 = arith.constant 0 : i32
    %c0_i32_1 = arith.constant 0 : i32
    %c0_i32_2 = arith.constant 0 : i32
    return %c0_i32, %c0_i32_0, %c0_i32_1 : i32, i32, i32
  }
  func.func @transform_2(%arg0: i32) -> (i32, i32, i32) {
    %c0_i32 = arith.constant 0 : i32
    %c0_i32_0 = arith.constant 0 : i32
    %c0_i32_1 = arith.constant 0 : i32
    %c0_i32_2 = arith.constant 0 : i32
    return %c0_i32, %c0_i32_0, %c0_i32_1 : i32, i32, i32
  }
  func.func @transform_3(%arg0: i32) -> (i32, i32) {
    %c0_i32 = arith.constant 0 : i32
    %c0_i32_0 = arith.constant 0 : i32
    %c0_i32_1 = arith.constant 0 : i32
    return %c0_i32, %c0_i32_0 : i32, i32
  }
  func.func @transform_4(%arg0: i32) -> (i32, i32, i32) {
    %c0_i32 = arith.constant 0 : i32
    %c0_i32_0 = arith.constant 0 : i32
    %c0_i32_1 = arith.constant 0 : i32
    %c0_i32_2 = arith.constant 0 : i32
    return %c0_i32, %c0_i32_0, %c0_i32_1 : i32, i32, i32
  }
  func.func @transform_5(%arg0: i32) -> (i32, i32) {
    %c0_i32 = arith.constant 0 : i32
    %c0_i32_0 = arith.constant 0 : i32
    %c0_i32_1 = arith.constant 0 : i32
    return %c0_i32, %c0_i32_0 : i32, i32
  }
  func.func @transform_6(%arg0: i32) -> (i32, i32) {
    %c0_i32 = arith.constant 0 : i32
    %c0_i32_0 = arith.constant 0 : i32
    %c0_i32_1 = arith.constant 0 : i32
    return %c0_i32, %c0_i32_0 : i32, i32
  }
  func.func @transform_7(%arg0: i32) -> (i32, i32, i32) {
    %c0_i32 = arith.constant 0 : i32
    %c0_i32_0 = arith.constant 0 : i32
    %c0_i32_1 = arith.constant 0 : i32
    return %arg0, %c0_i32, %c0_i32_0 : i32, i32, i32
  }
}

</mosaic_0001>

<llo_original>
// kernel: lsfe_forward.1
$region0: #{lsfe_forward.1}
  #allocation0 [shape = 'u32[]', space=smem, size = 0x4, offset = 0x4, fixed_abs, tag = 'smem constant byte address 0x4 - core index']
  #allocation1 [shape = 'u32[72,128]{1,0:T(1,128)}', space=vmem, size = 0x9000, scoped, tag = 'internal scratch']
  %s0 = inlined_call_operand.vmem [shape: f32[2,20,26,32], index: 0, kind: input, shape index: {}]
  %s1 = inlined_call_operand.vmem [shape: f32[18,24,1], index: 1, kind: input, shape index: {}]
  %s2 = inlined_call_operand.vmem [shape: f32[3,3,32], index: 2, kind: input, shape index: {}]
  %s3 = inlined_call_operand.vmem [shape: bf16[32,128], index: 3, kind: input, shape index: {}]
  %s4 = inlined_call_operand.vmem [shape: f32[3,3,128], index: 4, kind: input, shape index: {}]
  %s5 = inlined_call_operand.vmem [shape: bf16[128,128], index: 5, kind: input, shape index: {}]
  %s6 = inlined_call_operand.vmem [shape: f32[4,128], index: 6, kind: input, shape index: {}]
  %s7 = inlined_call_operand.vmem [shape: f32[2,128,256], index: 7, kind: output, shape index: {}]
  %s8 = sld [smem:[#allocation0]]
  $region38: #{lsfe_forward.1} parent=0
    _
  %s10 = ssub.s32 1, %s8
  %s11 = scalar_select 0, %s10, %s8
  // Predicated region
  $region2: #{lsfe_forward.1} parent=0 // pred_check
    _
  $region3: #{lsfe_forward.1} parent=0 // pred_check_branch
    %13 = sbr.rel (0) target = $region5
  $region4: #{lsfe_forward.1} parent=0 // pred_region
    _
  $region5: #{lsfe_forward.1} parent=0 // pred_fallthru
    _
  // Predicated region
  $region6: #{lsfe_forward.1} parent=0 // pred_check
    _
  $region7: #{lsfe_forward.1} parent=0 // pred_check_branch
    %15 = sbr.rel (0) target = $region9
  $region8: #{lsfe_forward.1} parent=0 // pred_region
    _
  $region9: #{lsfe_forward.1} parent=0 // pred_fallthru
    _
  // Predicated region
  $region10: #{lsfe_forward.1} parent=0 // pred_check
    _
  $region11: #{lsfe_forward.1} parent=0 // pred_check_branch
    %17 = sbr.rel (0) target = $region13
  $region12: #{lsfe_forward.1} parent=0 // pred_region
    _
  $region13: #{lsfe_forward.1} parent=0 // pred_fallthru
    _
  // Predicated region
  $region14: #{lsfe_forward.1} parent=0 // pred_check
    _
  $region15: #{lsfe_forward.1} parent=0 // pred_check_branch
    %19 = sbr.rel (0) target = $region17
  $region16: #{lsfe_forward.1} parent=0 // pred_region
    _
  $region17: #{lsfe_forward.1} parent=0 // pred_fallthru
    _
  // Predicated region
  $region18: #{lsfe_forward.1} parent=0 // pred_check
    _
  $region19: #{lsfe_forward.1} parent=0 // pred_check_branch
    %21 = sbr.rel (0) target = $region21
  $region20: #{lsfe_forward.1} parent=0 // pred_region
    _
  $region21: #{lsfe_forward.1} parent=0 // pred_fallthru
    _
  // Predicated region
  $region22: #{lsfe_forward.1} parent=0 // pred_check
    _
  $region23: #{lsfe_forward.1} parent=0 // pred_check_branch
    %23 = sbr.rel (0) target = $region25
  $region24: #{lsfe_forward.1} parent=0 // pred_region
    _
  $region25: #{lsfe_forward.1} parent=0 // pred_fallthru
    _
  // Predicated region
  $region26: #{lsfe_forward.1} parent=0 // pred_check
    _
  $region27: #{lsfe_forward.1} parent=0 // pred_check_branch
    %25 = sbr.rel (0) target = $region29
  $region28: #{lsfe_forward.1} parent=0 // pred_region
    _
  $region29: #{lsfe_forward.1} parent=0 // pred_fallthru
    _
  %v27 = vld [vmem:[%s0] sm:$0xff]
  %v28 = vld [vmem:[%s0 + $0x8] sm:$0xff]
  %v29 = vld [vmem:[%s0 + $0x10] sm:$0xff]
  %v30 = vld [vmem:[%s0 + $0x18] sm:$0x3]
  %v31 = vld [vmem:[%s0 + $0x20] sm:$0xff]
  %v32 = vld [vmem:[%s0 + $0x28] sm:$0xff]
  %v33 = vld [vmem:[%s0 + $0x30] sm:$0xff]
  %v34 = vld [vmem:[%s0 + $0x38] sm:$0x3]
  %v35 = vld [vmem:[%s0 + $0x40] sm:$0xff]
  %v36 = vld [vmem:[%s0 + $0x48] sm:$0xff]
  %v37 = vld [vmem:[%s0 + $0x50] sm:$0xff]
  %v38 = vld [vmem:[%s0 + $0x58] sm:$0x3]
  %v39 = vld [vmem:[%s0 + $0x60] sm:$0xff]
  %v40 = vld [vmem:[%s0 + $0x68] sm:$0xff]
  %v41 = vld [vmem:[%s0 + $0x70] sm:$0xff]
  %v42 = vld [vmem:[%s0 + $0x78] sm:$0x3]
  %v43 = vld [vmem:[%s0 + $0x80] sm:$0xff]
  %v44 = vld [vmem:[%s0 + $0x88] sm:$0xff]
  %v45 = vld [vmem:[%s0 + $0x90] sm:$0xff]
  %v46 = vld [vmem:[%s0 + $0x98] sm:$0x3]
  %v47 = vld [vmem:[%s0 + $0xa0] sm:$0xff]
  %v48 = vld [vmem:[%s0 + $0xa8] sm:$0xff]
  %v49 = vld [vmem:[%s0 + $0xb0] sm:$0xff]
  %v50 = vld [vmem:[%s0 + $0xb8] sm:$0x3]
  %v51 = vld [vmem:[%s0 + $0xc0] sm:$0xff]
  %v52 = vld [vmem:[%s0 + $0xc8] sm:$0xff]
  %v53 = vld [vmem:[%s0 + $0xd0] sm:$0xff]
  %v54 = vld [vmem:[%s0 + $0xd8] sm:$0x3]
  %v55 = vld [vmem:[%s0 + $0xe0] sm:$0xff]
  %v56 = vld [vmem:[%s0 + $0xe8] sm:$0xff]
  %v57 = vld [vmem:[%s0 + $0xf0] sm:$0xff]
  %v58 = vld [vmem:[%s0 + $0xf8] sm:$0x3]
  %v59 = vld [vmem:[%s0 + $0x100] sm:$0xff]
  %v60 = vld [vmem:[%s0 + $0x108] sm:$0xff]
  %v61 = vld [vmem:[%s0 + $0x110] sm:$0xff]
  %v62 = vld [vmem:[%s0 + $0x118] sm:$0x3]
  %v63 = vld [vmem:[%s0 + $0x120] sm:$0xff]
  %v64 = vld [vmem:[%s0 + $0x128] sm:$0xff]
  %v65 = vld [vmem:[%s0 + $0x130] sm:$0xff]
  %v66 = vld [vmem:[%s0 + $0x138] sm:$0x3]
  %v67 = vld [vmem:[%s0 + $0x140] sm:$0xff]
  %v68 = vld [vmem:[%s0 + $0x148] sm:$0xff]
  %v69 = vld [vmem:[%s0 + $0x150] sm:$0xff]
  %v70 = vld [vmem:[%s0 + $0x158] sm:$0x3]
  %v71 = vld [vmem:[%s0 + $0x160] sm:$0xff]
  %v72 = vld [vmem:[%s0 + $0x168] sm:$0xff]
  %v73 = vld [vmem:[%s0 + $0x170] sm:$0xff]
  %v74 = vld [vmem:[%s0 + $0x178] sm:$0x3]
  %v75 = vld [vmem:[%s0 + $0x180] sm:$0xff]
  %v76 = vld [vmem:[%s0 + $0x188] sm:$0xff]
  %v77 = vld [vmem:[%s0 + $0x190] sm:$0xff]
  %v78 = vld [vmem:[%s0 + $0x198] sm:$0x3]
  %v79 = vld [vmem:[%s0 + $0x1a0] sm:$0xff]
  %v80 = vld [vmem:[%s0 + $0x1a8] sm:$0xff]
  %v81 = vld [vmem:[%s0 + $0x1b0] sm:$0xff]
  %v82 = vld [vmem:[%s0 + $0x1b8] sm:$0x3]
  %v83 = vld [vmem:[%s0 + $0x1c0] sm:$0xff]
  %v84 = vld [vmem:[%s0 + $0x1c8] sm:$0xff]
  %v85 = vld [vmem:[%s0 + $0x1d0] sm:$0xff]
  %v86 = vld [vmem:[%s0 + $0x1d8] sm:$0x3]
  %v87 = vld [vmem:[%s0 + $0x1e0] sm:$0xff]
  %v88 = vld [vmem:[%s0 + $0x1e8] sm:$0xff]
  %v89 = vld [vmem:[%s0 + $0x1f0] sm:$0xff]
  %v90 = vld [vmem:[%s0 + $0x1f8] sm:$0x3]
  %v91 = vld [vmem:[%s0 + $0x200] sm:$0xff]
  %v92 = vld [vmem:[%s0 + $0x208] sm:$0xff]
  %v93 = vld [vmem:[%s0 + $0x210] sm:$0xff]
  %v94 = vld [vmem:[%s0 + $0x218] sm:$0x3]
  %v95 = vld [vmem:[%s0 + $0x220] sm:$0xff]
  %v96 = vld [vmem:[%s0 + $0x228] sm:$0xff]
  %v97 = vld [vmem:[%s0 + $0x230] sm:$0xff]
  %v98 = vld [vmem:[%s0 + $0x238] sm:$0x3]
  %v99 = vld [vmem:[%s0 + $0x240] sm:$0xff]
  %v100 = vld [vmem:[%s0 + $0x248] sm:$0xff]
  %v101 = vld [vmem:[%s0 + $0x250] sm:$0xff]
  %v102 = vld [vmem:[%s0 + $0x258] sm:$0x3]
  %v103 = vld [vmem:[%s0 + $0x260] sm:$0xff]
  %v104 = vld [vmem:[%s0 + $0x268] sm:$0xff]
  %v105 = vld [vmem:[%s0 + $0x270] sm:$0xff]
  %v106 = vld [vmem:[%s0 + $0x278] sm:$0x3]
  %v107 = vld [vmem:[%s0 + $0x280] sm:$0xff]
  %v108 = vld [vmem:[%s0 + $0x288] sm:$0xff]
  %v109 = vld [vmem:[%s0 + $0x290] sm:$0xff]
  %v110 = vld [vmem:[%s0 + $0x298] sm:$0x3]
  %v111 = vld [vmem:[%s0 + $0x2a0] sm:$0xff]
  %v112 = vld [vmem:[%s0 + $0x2a8] sm:$0xff]
  %v113 = vld [vmem:[%s0 + $0x2b0] sm:$0xff]
  %v114 = vld [vmem:[%s0 + $0x2b8] sm:$0x3]
  %v115 = vld [vmem:[%s0 + $0x2c0] sm:$0xff]
  %v116 = vld [vmem:[%s0 + $0x2c8] sm:$0xff]
  %v117 = vld [vmem:[%s0 + $0x2d0] sm:$0xff]
  %v118 = vld [vmem:[%s0 + $0x2d8] sm:$0x3]
  %v119 = vld [vmem:[%s0 + $0x2e0] sm:$0xff]
  %v120 = vld [vmem:[%s0 + $0x2e8] sm:$0xff]
  %v121 = vld [vmem:[%s0 + $0x2f0] sm:$0xff]
  %v122 = vld [vmem:[%s0 + $0x2f8] sm:$0x3]
  %v123 = vld [vmem:[%s0 + $0x300] sm:$0xff]
  %v124 = vld [vmem:[%s0 + $0x308] sm:$0xff]
  %v125 = vld [vmem:[%s0 + $0x310] sm:$0xff]
  %v126 = vld [vmem:[%s0 + $0x318] sm:$0x3]
  %v127 = vld [vmem:[%s0 + $0x320] sm:$0xff]
  %v128 = vld [vmem:[%s0 + $0x328] sm:$0xff]
  %v129 = vld [vmem:[%s0 + $0x330] sm:$0xff]
  %v130 = vld [vmem:[%s0 + $0x338] sm:$0x3]
  %v131 = vld [vmem:[%s0 + $0x340] sm:$0xff]
  %v132 = vld [vmem:[%s0 + $0x348] sm:$0xff]
  %v133 = vld [vmem:[%s0 + $0x350] sm:$0xff]
  %v134 = vld [vmem:[%s0 + $0x358] sm:$0x3]
  %v135 = vld [vmem:[%s0 + $0x360] sm:$0xff]
  %v136 = vld [vmem:[%s0 + $0x368] sm:$0xff]
  %v137 = vld [vmem:[%s0 + $0x370] sm:$0xff]
  %v138 = vld [vmem:[%s0 + $0x378] sm:$0x3]
  %v139 = vld [vmem:[%s0 + $0x380] sm:$0xff]
  %v140 = vld [vmem:[%s0 + $0x388] sm:$0xff]
  %v141 = vld [vmem:[%s0 + $0x390] sm:$0xff]
  %v142 = vld [vmem:[%s0 + $0x398] sm:$0x3]
  %v143 = vld [vmem:[%s0 + $0x3a0] sm:$0xff]
  %v144 = vld [vmem:[%s0 + $0x3a8] sm:$0xff]
  %v145 = vld [vmem:[%s0 + $0x3b0] sm:$0xff]
  %v146 = vld [vmem:[%s0 + $0x3b8] sm:$0x3]
  %v147 = vld [vmem:[%s0 + $0x3c0] sm:$0xff]
  %v148 = vld [vmem:[%s0 + $0x3c8] sm:$0xff]
  %v149 = vld [vmem:[%s0 + $0x3d0] sm:$0xff]
  %v150 = vld [vmem:[%s0 + $0x3d8] sm:$0x3]
  %v151 = vld [vmem:[%s0 + $0x3e0] sm:$0xff]
  %v152 = vld [vmem:[%s0 + $0x3e8] sm:$0xff]
  %v153 = vld [vmem:[%s0 + $0x3f0] sm:$0xff]
  %v154 = vld [vmem:[%s0 + $0x3f8] sm:$0x3]
  %v155 = vld [vmem:[%s0 + $0x400] sm:$0xff]
  %v156 = vld [vmem:[%s0 + $0x408] sm:$0xff]
  %v157 = vld [vmem:[%s0 + $0x410] sm:$0xff]
  %v158 = vld [vmem:[%s0 + $0x418] sm:$0x3]
  %v159 = vld [vmem:[%s0 + $0x420] sm:$0xff]
  %v160 = vld [vmem:[%s0 + $0x428] sm:$0xff]
  %v161 = vld [vmem:[%s0 + $0x430] sm:$0xff]
  %v162 = vld [vmem:[%s0 + $0x438] sm:$0x3]
  %v163 = vld [vmem:[%s0 + $0x440] sm:$0xff]
  %v164 = vld [vmem:[%s0 + $0x448] sm:$0xff]
  %v165 = vld [vmem:[%s0 + $0x450] sm:$0xff]
  %v166 = vld [vmem:[%s0 + $0x458] sm:$0x3]
  %v167 = vld [vmem:[%s0 + $0x460] sm:$0xff]
  %v168 = vld [vmem:[%s0 + $0x468] sm:$0xff]
  %v169 = vld [vmem:[%s0 + $0x470] sm:$0xff]
  %v170 = vld [vmem:[%s0 + $0x478] sm:$0x3]
  %v171 = vld [vmem:[%s0 + $0x480] sm:$0xff]
  %v172 = vld [vmem:[%s0 + $0x488] sm:$0xff]
  %v173 = vld [vmem:[%s0 + $0x490] sm:$0xff]
  %v174 = vld [vmem:[%s0 + $0x498] sm:$0x3]
  %v175 = vld [vmem:[%s0 + $0x4a0] sm:$0xff]
  %v176 = vld [vmem:[%s0 + $0x4a8] sm:$0xff]
  %v177 = vld [vmem:[%s0 + $0x4b0] sm:$0xff]
  %v178 = vld [vmem:[%s0 + $0x4b8] sm:$0x3]
  %v179 = vld [vmem:[%s0 + $0x4c0] sm:$0xff]
  %v180 = vld [vmem:[%s0 + $0x4c8] sm:$0xff]
  %v181 = vld [vmem:[%s0 + $0x4d0] sm:$0xff]
  %v182 = vld [vmem:[%s0 + $0x4d8] sm:$0x3]
  %v183 = vld [vmem:[%s0 + $0x4e0] sm:$0xff]
  %v184 = vld [vmem:[%s0 + $0x4e8] sm:$0xff]
  %v185 = vld [vmem:[%s0 + $0x4f0] sm:$0xff]
  %v186 = vld [vmem:[%s0 + $0x4f8] sm:$0x3]
  %v187 = vld [vmem:[%s2] sm:$0x7]
  %v188 = vld [vmem:[%s2 + $0x4] sm:$0x7]
  %v189 = vld [vmem:[%s2 + $0x8] sm:$0x7]
  %v190 = vld [vmem:[%s4] sm:$0x7]
  %v191 = vld [vmem:[%s4 + $0x4] sm:$0x7]
  %v192 = vld [vmem:[%s4 + $0x8] sm:$0x7]
  %v193 = vld [vmem:[%s6] sm:$0xf]
  %v194 = vperm.slane %v187, 0
  %v195 = vmul.f32 %v27, %v194
  %v196 = vmul.f32 %v28, %v194
  %v197 = vmul.f32 %v29, %v194
  %v198 = vmul.f32 %v31, %v194
  %v199 = vmul.f32 %v32, %v194
  %v200 = vmul.f32 %v33, %v194
  %v201 = vmul.f32 %v35, %v194
  %v202 = vmul.f32 %v36, %v194
  %v203 = vmul.f32 %v37, %v194
  %v204 = vmul.f32 %v39, %v194
  %v205 = vmul.f32 %v40, %v194
  %v206 = vmul.f32 %v41, %v194
  %v207 = vmul.f32 %v43, %v194
  %v208 = vmul.f32 %v44, %v194
  %v209 = vmul.f32 %v45, %v194
  %v210 = vmul.f32 %v47, %v194
  %v211 = vmul.f32 %v48, %v194
  %v212 = vmul.f32 %v49, %v194
  %v213 = vmul.f32 %v51, %v194
  %v214 = vmul.f32 %v52, %v194
  %v215 = vmul.f32 %v53, %v194
  %v216 = vmul.f32 %v55, %v194
  %v217 = vmul.f32 %v56, %v194
  %v218 = vmul.f32 %v57, %v194
  %v219 = vmul.f32 %v59, %v194
  %v220 = vmul.f32 %v60, %v194
  %v221 = vmul.f32 %v61, %v194
  %v222 = vmul.f32 %v63, %v194
  %v223 = vmul.f32 %v64, %v194
  %v224 = vmul.f32 %v65, %v194
  %v225 = vmul.f32 %v67, %v194
  %v226 = vmul.f32 %v68, %v194
  %v227 = vmul.f32 %v69, %v194
  %v228 = vmul.f32 %v71, %v194
  %v229 = vmul.f32 %v72, %v194
  %v230 = vmul.f32 %v73, %v194
  %v231 = vmul.f32 %v75, %v194
  %v232 = vmul.f32 %v76, %v194
  %v233 = vmul.f32 %v77, %v194
  %v234 = vmul.f32 %v79, %v194
  %v235 = vmul.f32 %v80, %v194
  %v236 = vmul.f32 %v81, %v194
  %v237 = vmul.f32 %v83, %v194
  %v238 = vmul.f32 %v84, %v194
  %v239 = vmul.f32 %v85, %v194
  %v240 = vmul.f32 %v87, %v194
  %v241 = vmul.f32 %v88, %v194
  %v242 = vmul.f32 %v89, %v194
  %v243 = vmul.f32 %v91, %v194
  %v244 = vmul.f32 %v92, %v194
  %v245 = vmul.f32 %v93, %v194
  %v246 = vmul.f32 %v95, %v194
  %v247 = vmul.f32 %v96, %v194
  %v248 = vmul.f32 %v97, %v194
  %v249 = vmul.f32 %v107, %v194
  %v250 = vmul.f32 %v108, %v194
  %v251 = vmul.f32 %v109, %v194
  %v252 = vmul.f32 %v111, %v194
  %v253 = vmul.f32 %v112, %v194
  %v254 = vmul.f32 %v113, %v194
  %v255 = vmul.f32 %v115, %v194
  %v256 = vmul.f32 %v116, %v194
  %v257 = vmul.f32 %v117, %v194
  %v258 = vmul.f32 %v119, %v194
  %v259 = vmul.f32 %v120, %v194
  %v260 = vmul.f32 %v121, %v194
  %v261 = vmul.f32 %v123, %v194
  %v262 = vmul.f32 %v124, %v194
  %v263 = vmul.f32 %v125, %v194
  %v264 = vmul.f32 %v127, %v194
  %v265 = vmul.f32 %v128, %v194
  %v266 = vmul.f32 %v129, %v194
  %v267 = vmul.f32 %v131, %v194
  %v268 = vmul.f32 %v132, %v194
  %v269 = vmul.f32 %v133, %v194
  %v270 = vmul.f32 %v135, %v194
  %v271 = vmul.f32 %v136, %v194
  %v272 = vmul.f32 %v137, %v194
  %v273 = vmul.f32 %v139, %v194
  %v274 = vmul.f32 %v140, %v194
  %v275 = vmul.f32 %v141, %v194
  %v276 = vmul.f32 %v143, %v194
  %v277 = vmul.f32 %v144, %v194
  %v278 = vmul.f32 %v145, %v194
  %v279 = vmul.f32 %v147, %v194
  %v280 = vmul.f32 %v148, %v194
  %v281 = vmul.f32 %v149, %v194
  %v282 = vmul.f32 %v151, %v194
  %v283 = vmul.f32 %v152, %v194
  %v284 = vmul.f32 %v153, %v194
  %v285 = vmul.f32 %v155, %v194
  %v286 = vmul.f32 %v156, %v194
  %v287 = vmul.f32 %v157, %v194
  %v288 = vmul.f32 %v159, %v194
  %v289 = vmul.f32 %v160, %v194
  %v290 = vmul.f32 %v161, %v194
  %v291 = vmul.f32 %v163, %v194
  %v292 = vmul.f32 %v164, %v194
  %v293 = vmul.f32 %v165, %v194
  %v294 = vmul.f32 %v167, %v194
  %v295 = vmul.f32 %v168, %v194
  %v296 = vmul.f32 %v169, %v194
  %v297 = vmul.f32 %v171, %v194
  %v298 = vmul.f32 %v172, %v194
  %v299 = vmul.f32 %v173, %v194
  %v300 = vmul.f32 %v175, %v194
  %v301 = vmul.f32 %v176, %v194
  %v302 = vmul.f32 %v177, %v194
  %v303 = vperm.slane %v188, 0
  %v304 = vmul.f32 %v31, %v303
  %v305 = vmul.f32 %v32, %v303
  %v306 = vmul.f32 %v33, %v303
  %v307 = vmul.f32 %v35, %v303
  %v308 = vmul.f32 %v36, %v303
  %v309 = vmul.f32 %v37, %v303
  %v310 = vmul.f32 %v39, %v303
  %v311 = vmul.f32 %v40, %v303
  %v312 = vmul.f32 %v41, %v303
  %v313 = vmul.f32 %v43, %v303
  %v314 = vmul.f32 %v44, %v303
  %v315 = vmul.f32 %v45, %v303
  %v316 = vmul.f32 %v47, %v303
  %v317 = vmul.f32 %v48, %v303
  %v318 = vmul.f32 %v49, %v303
  %v319 = vmul.f32 %v51, %v303
  %v320 = vmul.f32 %v52, %v303
  %v321 = vmul.f32 %v53, %v303
  %v322 = vmul.f32 %v55, %v303
  %v323 = vmul.f32 %v56, %v303
  %v324 = vmul.f32 %v57, %v303
  %v325 = vmul.f32 %v59, %v303
  %v326 = vmul.f32 %v60, %v303
  %v327 = vmul.f32 %v61, %v303
  %v328 = vmul.f32 %v63, %v303
  %v329 = vmul.f32 %v64, %v303
  %v330 = vmul.f32 %v65, %v303
  %v331 = vmul.f32 %v67, %v303
  %v332 = vmul.f32 %v68, %v303
  %v333 = vmul.f32 %v69, %v303
  %v334 = vmul.f32 %v71, %v303
  %v335 = vmul.f32 %v72, %v303
  %v336 = vmul.f32 %v73, %v303
  %v337 = vmul.f32 %v75, %v303
  %v338 = vmul.f32 %v76, %v303
  %v339 = vmul.f32 %v77, %v303
  %v340 = vmul.f32 %v79, %v303
  %v341 = vmul.f32 %v80, %v303
  %v342 = vmul.f32 %v81, %v303
  %v343 = vmul.f32 %v83, %v303
  %v344 = vmul.f32 %v84, %v303
  %v345 = vmul.f32 %v85, %v303
  %v346 = vmul.f32 %v87, %v303
  %v347 = vmul.f32 %v88, %v303
  %v348 = vmul.f32 %v89, %v303
  %v349 = vmul.f32 %v91, %v303
  %v350 = vmul.f32 %v92, %v303
  %v351 = vmul.f32 %v93, %v303
  %v352 = vmul.f32 %v95, %v303
  %v353 = vmul.f32 %v96, %v303
  %v354 = vmul.f32 %v97, %v303
  %v355 = vmul.f32 %v99, %v303
  %v356 = vmul.f32 %v100, %v303
  %v357 = vmul.f32 %v101, %v303
  %v358 = vmul.f32 %v111, %v303
  %v359 = vmul.f32 %v112, %v303
  %v360 = vmul.f32 %v113, %v303
  %v361 = vmul.f32 %v115, %v303
  %v362 = vmul.f32 %v116, %v303
  %v363 = vmul.f32 %v117, %v303
  %v364 = vmul.f32 %v119, %v303
  %v365 = vmul.f32 %v120, %v303
  %v366 = vmul.f32 %v121, %v303
  %v367 = vmul.f32 %v123, %v303
  %v368 = vmul.f32 %v124, %v303
  %v369 = vmul.f32 %v125, %v303
  %v370 = vmul.f32 %v127, %v303
  %v371 = vmul.f32 %v128, %v303
  %v372 = vmul.f32 %v129, %v303
  %v373 = vmul.f32 %v131, %v303
  %v374 = vmul.f32 %v132, %v303
  %v375 = vmul.f32 %v133, %v303
  %v376 = vmul.f32 %v135, %v303
  %v377 = vmul.f32 %v136, %v303
  %v378 = vmul.f32 %v137, %v303
  %v379 = vmul.f32 %v139, %v303
  %v380 = vmul.f32 %v140, %v303
  %v381 = vmul.f32 %v141, %v303
  %v382 = vmul.f32 %v143, %v303
  %v383 = vmul.f32 %v144, %v303
  %v384 = vmul.f32 %v145, %v303
  %v385 = vmul.f32 %v147, %v303
  %v386 = vmul.f32 %v148, %v303
  %v387 = vmul.f32 %v149, %v303
  %v388 = vmul.f32 %v151, %v303
  %v389 = vmul.f32 %v152, %v303
  %v390 = vmul.f32 %v153, %v303
  %v391 = vmul.f32 %v155, %v303
  %v392 = vmul.f32 %v156, %v303
  %v393 = vmul.f32 %v157, %v303
  %v394 = vmul.f32 %v159, %v303
  %v395 = vmul.f32 %v160, %v303
  %v396 = vmul.f32 %v161, %v303
  %v397 = vmul.f32 %v163, %v303
  %v398 = vmul.f32 %v164, %v303
  %v399 = vmul.f32 %v165, %v303
  %v400 = vmul.f32 %v167, %v303
  %v401 = vmul.f32 %v168, %v303
  %v402 = vmul.f32 %v169, %v303
  %v403 = vmul.f32 %v171, %v303
  %v404 = vmul.f32 %v172, %v303
  %v405 = vmul.f32 %v173, %v303
  %v406 = vmul.f32 %v175, %v303
  %v407 = vmul.f32 %v176, %v303
  %v408 = vmul.f32 %v177, %v303
  %v409 = vmul.f32 %v179, %v303
  %v410 = vmul.f32 %v180, %v303
  %v411 = vmul.f32 %v181, %v303
  %v412 = vadd.f32 %v195, %v304
  %v413 = vadd.f32 %v196, %v305
  %v414 = vadd.f32 %v197, %v306
  %v415 = vadd.f32 %v198, %v307
  %v416 = vadd.f32 %v199, %v308
  %v417 = vadd.f32 %v200, %v309
  %v418 = vadd.f32 %v201, %v310
  %v419 = vadd.f32 %v202, %v311
  %v420 = vadd.f32 %v203, %v312
  %v421 = vadd.f32 %v204, %v313
  %v422 = vadd.f32 %v205, %v314
  %v423 = vadd.f32 %v206, %v315
  %v424 = vadd.f32 %v207, %v316
  %v425 = vadd.f32 %v208, %v317
  %v426 = vadd.f32 %v209, %v318
  %v427 = vadd.f32 %v210, %v319
  %v428 = vadd.f32 %v211, %v320
  %v429 = vadd.f32 %v212, %v321
  %v430 = vadd.f32 %v213, %v322
  %v431 = vadd.f32 %v214, %v323
  %v432 = vadd.f32 %v215, %v324
  %v433 = vadd.f32 %v216, %v325
  %v434 = vadd.f32 %v217, %v326
  %v435 = vadd.f32 %v218, %v327
  %v436 = vadd.f32 %v219, %v328
  %v437 = vadd.f32 %v220, %v329
  %v438 = vadd.f32 %v221, %v330
  %v439 = vadd.f32 %v222, %v331
  %v440 = vadd.f32 %v223, %v332
  %v441 = vadd.f32 %v224, %v333
  %v442 = vadd.f32 %v225, %v334
  %v443 = vadd.f32 %v226, %v335
  %v444 = vadd.f32 %v227, %v336
  %v445 = vadd.f32 %v228, %v337
  %v446 = vadd.f32 %v229, %v338
  %v447 = vadd.f32 %v230, %v339
  %v448 = vadd.f32 %v231, %v340
  %v449 = vadd.f32 %v232, %v341
  %v450 = vadd.f32 %v233, %v342
  %v451 = vadd.f32 %v234, %v343
  %v452 = vadd.f32 %v235, %v344
  %v453 = vadd.f32 %v236, %v345
  %v454 = vadd.f32 %v237, %v346
  %v455 = vadd.f32 %v238, %v347
  %v456 = vadd.f32 %v239, %v348
  %v457 = vadd.f32 %v240, %v349
  %v458 = vadd.f32 %v241, %v350
  %v459 = vadd.f32 %v242, %v351
  %v460 = vadd.f32 %v243, %v352
  %v461 = vadd.f32 %v244, %v353
  %v462 = vadd.f32 %v245, %v354
  %v463 = vadd.f32 %v246, %v355
  %v464 = vadd.f32 %v247, %v356
  %v465 = vadd.f32 %v248, %v357
  %v466 = vadd.f32 %v249, %v358
  %v467 = vadd.f32 %v250, %v359
  %v468 = vadd.f32 %v251, %v360
  %v469 = vadd.f32 %v252, %v361
  %v470 = vadd.f32 %v253, %v362
  %v471 = vadd.f32 %v254, %v363
  %v472 = vadd.f32 %v255, %v364
  %v473 = vadd.f32 %v256, %v365
  %v474 = vadd.f32 %v257, %v366
  %v475 = vadd.f32 %v258, %v367
  %v476 = vadd.f32 %v259, %v368
  %v477 = vadd.f32 %v260, %v369
  %v478 = vadd.f32 %v261, %v370
  %v479 = vadd.f32 %v262, %v371
  %v480 = vadd.f32 %v263, %v372
  %v481 = vadd.f32 %v264, %v373
  %v482 = vadd.f32 %v265, %v374
  %v483 = vadd.f32 %v266, %v375
  %v484 = vadd.f32 %v267, %v376
  %v485 = vadd.f32 %v268, %v377
  %v486 = vadd.f32 %v269, %v378
  %v487 = vadd.f32 %v270, %v379
  %v488 = vadd.f32 %v271, %v380
  %v489 = vadd.f32 %v272, %v381
  %v490 = vadd.f32 %v273, %v382
  %v491 = vadd.f32 %v274, %v383
  %v492 = vadd.f32 %v275, %v384
  %v493 = vadd.f32 %v276, %v385
  %v494 = vadd.f32 %v277, %v386
  %v495 = vadd.f32 %v278, %v387
  %v496 = vadd.f32 %v279, %v388
  %v497 = vadd.f32 %v280, %v389
  %v498 = vadd.f32 %v281, %v390
  %v499 = vadd.f32 %v282, %v391
  %v500 = vadd.f32 %v283, %v392
  %v501 = vadd.f32 %v284, %v393
  %v502 = vadd.f32 %v285, %v394
  %v503 = vadd.f32 %v286, %v395
  %v504 = vadd.f32 %v287, %v396
  %v505 = vadd.f32 %v288, %v397
  %v506 = vadd.f32 %v289, %v398
  %v507 = vadd.f32 %v290, %v399
  %v508 = vadd.f32 %v291, %v400
  %v509 = vadd.f32 %v292, %v401
  %v510 = vadd.f32 %v293, %v402
  %v511 = vadd.f32 %v294, %v403
  %v512 = vadd.f32 %v295, %v404
  %v513 = vadd.f32 %v296, %v405
  %v514 = vadd.f32 %v297, %v406
  %v515 = vadd.f32 %v298, %v407
  %v516 = vadd.f32 %v299, %v408
  %v517 = vadd.f32 %v300, %v409
  %v518 = vadd.f32 %v301, %v410
  %v519 = vadd.f32 %v302, %v411
  %v520 = vperm.slane %v189, 0
  %v521 = vmul.f32 %v35, %v520
  %v522 = vmul.f32 %v36, %v520
  %v523 = vmul.f32 %v37, %v520
  %v524 = vmul.f32 %v39, %v520
  %v525 = vmul.f32 %v40, %v520
  %v526 = vmul.f32 %v41, %v520
  %v527 = vmul.f32 %v43, %v520
  %v528 = vmul.f32 %v44, %v520
  %v529 = vmul.f32 %v45, %v520
  %v530 = vmul.f32 %v47, %v520
  %v531 = vmul.f32 %v48, %v520
  %v532 = vmul.f32 %v49, %v520
  %v533 = vmul.f32 %v51, %v520
  %v534 = vmul.f32 %v52, %v520
  %v535 = vmul.f32 %v53, %v520
  %v536 = vmul.f32 %v55, %v520
  %v537 = vmul.f32 %v56, %v520
  %v538 = vmul.f32 %v57, %v520
  %v539 = vmul.f32 %v59, %v520
  %v540 = vmul.f32 %v60, %v520
  %v541 = vmul.f32 %v61, %v520
  %v542 = vmul.f32 %v63, %v520
  %v543 = vmul.f32 %v64, %v520
  %v544 = vmul.f32 %v65, %v520
  %v545 = vmul.f32 %v67, %v520
  %v546 = vmul.f32 %v68, %v520
  %v547 = vmul.f32 %v69, %v520
  %v548 = vmul.f32 %v71, %v520
  %v549 = vmul.f32 %v72, %v520
  %v550 = vmul.f32 %v73, %v520
  %v551 = vmul.f32 %v75, %v520
  %v552 = vmul.f32 %v76, %v520
  %v553 = vmul.f32 %v77, %v520
  %v554 = vmul.f32 %v79, %v520
  %v555 = vmul.f32 %v80, %v520
  %v556 = vmul.f32 %v81, %v520
  %v557 = vmul.f32 %v83, %v520
  %v558 = vmul.f32 %v84, %v520
  %v559 = vmul.f32 %v85, %v520
  %v560 = vmul.f32 %v87, %v520
  %v561 = vmul.f32 %v88, %v520
  %v562 = vmul.f32 %v89, %v520
  %v563 = vmul.f32 %v91, %v520
  %v564 = vmul.f32 %v92, %v520
  %v565 = vmul.f32 %v93, %v520
  %v566 = vmul.f32 %v95, %v520
  %v567 = vmul.f32 %v96, %v520
  %v568 = vmul.f32 %v97, %v520
  %v569 = vmul.f32 %v99, %v520
  %v570 = vmul.f32 %v100, %v520
  %v571 = vmul.f32 %v101, %v520
  %v572 = vmul.f32 %v103, %v520
  %v573 = vmul.f32 %v104, %v520
  %v574 = vmul.f32 %v105, %v520
  %v575 = vmul.f32 %v115, %v520
  %v576 = vmul.f32 %v116, %v520
  %v577 = vmul.f32 %v117, %v520
  %v578 = vmul.f32 %v119, %v520
  %v579 = vmul.f32 %v120, %v520
  %v580 = vmul.f32 %v121, %v520
  %v581 = vmul.f32 %v123, %v520
  %v582 = vmul.f32 %v124, %v520
  %v583 = vmul.f32 %v125, %v520
  %v584 = vmul.f32 %v127, %v520
  %v585 = vmul.f32 %v128, %v520
  %v586 = vmul.f32 %v129, %v520
  %v587 = vmul.f32 %v131, %v520
  %v588 = vmul.f32 %v132, %v520
  %v589 = vmul.f32 %v133, %v520
  %v590 = vmul.f32 %v135, %v520
  %v591 = vmul.f32 %v136, %v520
  %v592 = vmul.f32 %v137, %v520
  %v593 = vmul.f32 %v139, %v520
  %v594 = vmul.f32 %v140, %v520
  %v595 = vmul.f32 %v141, %v520
  %v596 = vmul.f32 %v143, %v520
  %v597 = vmul.f32 %v144, %v520
  %v598 = vmul.f32 %v145, %v520
  %v599 = vmul.f32 %v147, %v520
  %v600 = vmul.f32 %v148, %v520
  %v601 = vmul.f32 %v149, %v520
  %v602 = vmul.f32 %v151, %v520
  %v603 = vmul.f32 %v152, %v520
  %v604 = vmul.f32 %v153, %v520
  %v605 = vmul.f32 %v155, %v520
  %v606 = vmul.f32 %v156, %v520
  %v607 = vmul.f32 %v157, %v520
  %v608 = vmul.f32 %v159, %v520
  %v609 = vmul.f32 %v160, %v520
  %v610 = vmul.f32 %v161, %v520
  %v611 = vmul.f32 %v163, %v520
  %v612 = vmul.f32 %v164, %v520
  %v613 = vmul.f32 %v165, %v520
  %v614 = vmul.f32 %v167, %v520
  %v615 = vmul.f32 %v168, %v520
  %v616 = vmul.f32 %v169, %v520
  %v617 = vmul.f32 %v171, %v520
  %v618 = vmul.f32 %v172, %v520
  %v619 = vmul.f32 %v173, %v520
  %v620 = vmul.f32 %v175, %v520
  %v621 = vmul.f32 %v176, %v520
  %v622 = vmul.f32 %v177, %v520
  %v623 = vmul.f32 %v179, %v520
  %v624 = vmul.f32 %v180, %v520
  %v625 = vmul.f32 %v181, %v520
  %v626 = vmul.f32 %v183, %v520
  %v627 = vmul.f32 %v184, %v520
  %v628 = vmul.f32 %v185, %v520
  %v629 = vadd.f32 %v412, %v521
  %v630 = vadd.f32 %v413, %v522
  %v631 = vadd.f32 %v414, %v523
  %v632 = vadd.f32 %v415, %v524
  %v633 = vadd.f32 %v416, %v525
  %v634 = vadd.f32 %v417, %v526
  %v635 = vadd.f32 %v418, %v527
  %v636 = vadd.f32 %v419, %v528
  %v637 = vadd.f32 %v420, %v529
  %v638 = vadd.f32 %v421, %v530
  %v639 = vadd.f32 %v422, %v531
  %v640 = vadd.f32 %v423, %v532
  %v641 = vadd.f32 %v424, %v533
  %v642 = vadd.f32 %v425, %v534
  %v643 = vadd.f32 %v426, %v535
  %v644 = vadd.f32 %v427, %v536
  %v645 = vadd.f32 %v428, %v537
  %v646 = vadd.f32 %v429, %v538
  %v647 = vadd.f32 %v430, %v539
  %v648 = vadd.f32 %v431, %v540
  %v649 = vadd.f32 %v432, %v541
  %v650 = vadd.f32 %v433, %v542
  %v651 = vadd.f32 %v434, %v543
  %v652 = vadd.f32 %v435, %v544
  %v653 = vadd.f32 %v436, %v545
  %v654 = vadd.f32 %v437, %v546
  %v655 = vadd.f32 %v438, %v547
  %v656 = vadd.f32 %v439, %v548
  %v657 = vadd.f32 %v440, %v549
  %v658 = vadd.f32 %v441, %v550
  %v659 = vadd.f32 %v442, %v551
  %v660 = vadd.f32 %v443, %v552
  %v661 = vadd.f32 %v444, %v553
  %v662 = vadd.f32 %v445, %v554
  %v663 = vadd.f32 %v446, %v555
  %v664 = vadd.f32 %v447, %v556
  %v665 = vadd.f32 %v448, %v557
  %v666 = vadd.f32 %v449, %v558
  %v667 = vadd.f32 %v450, %v559
  %v668 = vadd.f32 %v451, %v560
  %v669 = vadd.f32 %v452, %v561
  %v670 = vadd.f32 %v453, %v562
  %v671 = vadd.f32 %v454, %v563
  %v672 = vadd.f32 %v455, %v564
  %v673 = vadd.f32 %v456, %v565
  %v674 = vadd.f32 %v457, %v566
  %v675 = vadd.f32 %v458, %v567
  %v676 = vadd.f32 %v459, %v568
  %v677 = vadd.f32 %v460, %v569
  %v678 = vadd.f32 %v461, %v570
  %v679 = vadd.f32 %v462, %v571
  %v680 = vadd.f32 %v463, %v572
  %v681 = vadd.f32 %v464, %v573
  %v682 = vadd.f32 %v465, %v574
  %v683 = vadd.f32 %v466, %v575
  %v684 = vadd.f32 %v467, %v576
  %v685 = vadd.f32 %v468, %v577
  %v686 = vadd.f32 %v469, %v578
  %v687 = vadd.f32 %v470, %v579
  %v688 = vadd.f32 %v471, %v580
  %v689 = vadd.f32 %v472, %v581
  %v690 = vadd.f32 %v473, %v582
  %v691 = vadd.f32 %v474, %v583
  %v692 = vadd.f32 %v475, %v584
  %v693 = vadd.f32 %v476, %v585
  %v694 = vadd.f32 %v477, %v586
  %v695 = vadd.f32 %v478, %v587
  %v696 = vadd.f32 %v479, %v588
  %v697 = vadd.f32 %v480, %v589
  %v698 = vadd.f32 %v481, %v590
  %v699 = vadd.f32 %v482, %v591
  %v700 = vadd.f32 %v483, %v592
  %v701 = vadd.f32 %v484, %v593
  %v702 = vadd.f32 %v485, %v594
  %v703 = vadd.f32 %v486, %v595
  %v704 = vadd.f32 %v487, %v596
  %v705 = vadd.f32 %v488, %v597
  %v706 = vadd.f32 %v489, %v598
  %v707 = vadd.f32 %v490, %v599
  %v708 = vadd.f32 %v491, %v600
  %v709 = vadd.f32 %v492, %v601
  %v710 = vadd.f32 %v493, %v602
  %v711 = vadd.f32 %v494, %v603
  %v712 = vadd.f32 %v495, %v604
  %v713 = vadd.f32 %v496, %v605
  %v714 = vadd.f32 %v497, %v606
  %v715 = vadd.f32 %v498, %v607
  %v716 = vadd.f32 %v499, %v608
  %v717 = vadd.f32 %v500, %v609
  %v718 = vadd.f32 %v501, %v610
  %v719 = vadd.f32 %v502, %v611
  %v720 = vadd.f32 %v503, %v612
  %v721 = vadd.f32 %v504, %v613
  %v722 = vadd.f32 %v505, %v614
  %v723 = vadd.f32 %v506, %v615
  %v724 = vadd.f32 %v507, %v616
  %v725 = vadd.f32 %v508, %v617
  %v726 = vadd.f32 %v509, %v618
  %v727 = vadd.f32 %v510, %v619
  %v728 = vadd.f32 %v511, %v620
  %v729 = vadd.f32 %v512, %v621
  %v730 = vadd.f32 %v513, %v622
  %v731 = vadd.f32 %v514, %v623
  %v732 = vadd.f32 %v515, %v624
  %v733 = vadd.f32 %v516, %v625
  %v734 = vadd.f32 %v517, %v626
  %v735 = vadd.f32 %v518, %v627
  %v736 = vadd.f32 %v519, %v628
  %v737 = vperm.slane %v187, 1
  %v738 = vmul.f32 %v27, %v737
  %v739 = vmul.f32 %v28, %v737
  %v740 = vmul.f32 %v29, %v737
  %v741 = vmul.f32 %v30, %v737
  %v742 = vmul.f32 %v31, %v737
  %v743 = vmul.f32 %v32, %v737
  %v744 = vmul.f32 %v33, %v737
  %v745 = vmul.f32 %v34, %v737
  %v746 = vmul.f32 %v35, %v737
  %v747 = vmul.f32 %v36, %v737
  %v748 = vmul.f32 %v37, %v737
  %v749 = vmul.f32 %v38, %v737
  %v750 = vmul.f32 %v39, %v737
  %v751 = vmul.f32 %v40, %v737
  %v752 = vmul.f32 %v41, %v737
  %v753 = vmul.f32 %v42, %v737
  %v754 = vmul.f32 %v43, %v737
  %v755 = vmul.f32 %v44, %v737
  %v756 = vmul.f32 %v45, %v737
  %v757 = vmul.f32 %v46, %v737
  %v758 = vmul.f32 %v47, %v737
  %v759 = vmul.f32 %v48, %v737
  %v760 = vmul.f32 %v49, %v737
  %v761 = vmul.f32 %v50, %v737
  %v762 = vmul.f32 %v51, %v737
  %v763 = vmul.f32 %v52, %v737
  %v764 = vmul.f32 %v53, %v737
  %v765 = vmul.f32 %v54, %v737
  %v766 = vmul.f32 %v55, %v737
  %v767 = vmul.f32 %v56, %v737
  %v768 = vmul.f32 %v57, %v737
  %v769 = vmul.f32 %v58, %v737
  %v770 = vmul.f32 %v59, %v737
  %v771 = vmul.f32 %v60, %v737
  %v772 = vmul.f32 %v61, %v737
  %v773 = vmul.f32 %v62, %v737
  %v774 = vmul.f32 %v63, %v737
  %v775 = vmul.f32 %v64, %v737
  %v776 = vmul.f32 %v65, %v737
  %v777 = vmul.f32 %v66, %v737
  %v778 = vmul.f32 %v67, %v737
  %v779 = vmul.f32 %v68, %v737
  %v780 = vmul.f32 %v69, %v737
  %v781 = vmul.f32 %v70, %v737
  %v782 = vmul.f32 %v71, %v737
  %v783 = vmul.f32 %v72, %v737
  %v784 = vmul.f32 %v73, %v737
  %v785 = vmul.f32 %v74, %v737
  %v786 = vmul.f32 %v75, %v737
  %v787 = vmul.f32 %v76, %v737
  %v788 = vmul.f32 %v77, %v737
  %v789 = vmul.f32 %v78, %v737
  %v790 = vmul.f32 %v79, %v737
  %v791 = vmul.f32 %v80, %v737
  %v792 = vmul.f32 %v81, %v737
  %v793 = vmul.f32 %v82, %v737
  %v794 = vmul.f32 %v83, %v737
  %v795 = vmul.f32 %v84, %v737
  %v796 = vmul.f32 %v85, %v737
  %v797 = vmul.f32 %v86, %v737
  %v798 = vmul.f32 %v87, %v737
  %v799 = vmul.f32 %v88, %v737
  %v800 = vmul.f32 %v89, %v737
  %v801 = vmul.f32 %v90, %v737
  %v802 = vmul.f32 %v91, %v737
  %v803 = vmul.f32 %v92, %v737
  %v804 = vmul.f32 %v93, %v737
  %v805 = vmul.f32 %v94, %v737
  %v806 = vmul.f32 %v95, %v737
  %v807 = vmul.f32 %v96, %v737
  %v808 = vmul.f32 %v97, %v737
  %v809 = vmul.f32 %v98, %v737
  %v810 = vmul.f32 %v107, %v737
  %v811 = vmul.f32 %v108, %v737
  %v812 = vmul.f32 %v109, %v737
  %v813 = vmul.f32 %v110, %v737
  %v814 = vmul.f32 %v111, %v737
  %v815 = vmul.f32 %v112, %v737
  %v816 = vmul.f32 %v113, %v737
  %v817 = vmul.f32 %v114, %v737
  %v818 = vmul.f32 %v115, %v737
  %v819 = vmul.f32 %v116, %v737
  %v820 = vmul.f32 %v117, %v737
  %v821 = vmul.f32 %v118, %v737
  %v822 = vmul.f32 %v119, %v737
  %v823 = vmul.f32 %v120, %v737
  %v824 = vmul.f32 %v121, %v737
  %v825 = vmul.f32 %v122, %v737
  %v826 = vmul.f32 %v123, %v737
  %v827 = vmul.f32 %v124, %v737
  %v828 = vmul.f32 %v125, %v737
  %v829 = vmul.f32 %v126, %v737
  %v830 = vmul.f32 %v127, %v737
  %v831 = vmul.f32 %v128, %v737
  %v832 = vmul.f32 %v129, %v737
  %v833 = vmul.f32 %v130, %v737
  %v834 = vmul.f32 %v131, %v737
  %v835 = vmul.f32 %v132, %v737
  %v836 = vmul.f32 %v133, %v737
  %v837 = vmul.f32 %v134, %v737
  %v838 = vmul.f32 %v135, %v737
  %v839 = vmul.f32 %v136, %v737
  %v840 = vmul.f32 %v137, %v737
  %v841 = vmul.f32 %v138, %v737
  %v842 = vmul.f32 %v139, %v737
  %v843 = vmul.f32 %v140, %v737
  %v844 = vmul.f32 %v141, %v737
  %v845 = vmul.f32 %v142, %v737
  %v846 = vmul.f32 %v143, %v737
  %v847 = vmul.f32 %v144, %v737
  %v848 = vmul.f32 %v145, %v737
  %v849 = vmul.f32 %v146, %v737
  %v850 = vmul.f32 %v147, %v737
  %v851 = vmul.f32 %v148, %v737
  %v852 = vmul.f32 %v149, %v737
  %v853 = vmul.f32 %v150, %v737
  %v854 = vmul.f32 %v151, %v737
  %v855 = vmul.f32 %v152, %v737
  %v856 = vmul.f32 %v153, %v737
  %v857 = vmul.f32 %v154, %v737
  %v858 = vmul.f32 %v155, %v737
  %v859 = vmul.f32 %v156, %v737
  %v860 = vmul.f32 %v157, %v737
  %v861 = vmul.f32 %v158, %v737
  %v862 = vmul.f32 %v159, %v737
  %v863 = vmul.f32 %v160, %v737
  %v864 = vmul.f32 %v161, %v737
  %v865 = vmul.f32 %v162, %v737
  %v866 = vmul.f32 %v163, %v737
  %v867 = vmul.f32 %v164, %v737
  %v868 = vmul.f32 %v165, %v737
  %v869 = vmul.f32 %v166, %v737
  %v870 = vmul.f32 %v167, %v737
  %v871 = vmul.f32 %v168, %v737
  %v872 = vmul.f32 %v169, %v737
  %v873 = vmul.f32 %v170, %v737
  %v874 = vmul.f32 %v171, %v737
  %v875 = vmul.f32 %v172, %v737
  %v876 = vmul.f32 %v173, %v737
  %v877 = vmul.f32 %v174, %v737
  %v878 = vmul.f32 %v175, %v737
  %v879 = vmul.f32 %v176, %v737
  %v880 = vmul.f32 %v177, %v737
  %v881 = vmul.f32 %v178, %v737
  %vm1026 = vcmask 1046528
  %v1027 = vrot.slane %v738, 1
  %v1028 = vrot.slane %v739, 1
  %v1029 = vsel %vm1026, %v1027, %v1028
  %v1030 = vrot.slane %v740, 1
  %v1031 = vsel %vm1026, %v1028, %v1030
  %v1032 = vrot.slane %v741, 1
  %v1033 = vsel %vm1026, %v1030, %v1032
  %v1034 = vrot.slane %v742, 1
  %v1035 = vrot.slane %v743, 1
  %v1036 = vsel %vm1026, %v1034, %v1035
  %v1037 = vrot.slane %v744, 1
  %v1038 = vsel %vm1026, %v1035, %v1037
  %v1039 = vrot.slane %v745, 1
  %v1040 = vsel %vm1026, %v1037, %v1039
  %v1041 = vrot.slane %v746, 1
  %v1042 = vrot.slane %v747, 1
  %v1043 = vsel %vm1026, %v1041, %v1042
  %v1044 = vrot.slane %v748, 1
  %v1045 = vsel %vm1026, %v1042, %v1044
  %v1046 = vrot.slane %v749, 1
  %v1047 = vsel %vm1026, %v1044, %v1046
  %v1048 = vrot.slane %v750, 1
  %v1049 = vrot.slane %v751, 1
  %v1050 = vsel %vm1026, %v1048, %v1049
  %v1051 = vrot.slane %v752, 1
  %v1052 = vsel %vm1026, %v1049, %v1051
  %v1053 = vrot.slane %v753, 1
  %v1054 = vsel %vm1026, %v1051, %v1053
  %v1055 = vrot.slane %v754, 1
  %v1056 = vrot.slane %v755, 1
  %v1057 = vsel %vm1026, %v1055, %v1056
  %v1058 = vrot.slane %v756, 1
  %v1059 = vsel %vm1026, %v1056, %v1058
  %v1060 = vrot.slane %v757, 1
  %v1061 = vsel %vm1026, %v1058, %v1060
  %v1062 = vrot.slane %v758, 1
  %v1063 = vrot.slane %v759, 1
  %v1064 = vsel %vm1026, %v1062, %v1063
  %v1065 = vrot.slane %v760, 1
  %v1066 = vsel %vm1026, %v1063, %v1065
  %v1067 = vrot.slane %v761, 1
  %v1068 = vsel %vm1026, %v1065, %v1067
  %v1069 = vrot.slane %v762, 1
  %v1070 = vrot.slane %v763, 1
  %v1071 = vsel %vm1026, %v1069, %v1070
  %v1072 = vrot.slane %v764, 1
  %v1073 = vsel %vm1026, %v1070, %v1072
  %v1074 = vrot.slane %v765, 1
  %v1075 = vsel %vm1026, %v1072, %v1074
  %v1076 = vrot.slane %v766, 1
  %v1077 = vrot.slane %v767, 1
  %v1078 = vsel %vm1026, %v1076, %v1077
  %v1079 = vrot.slane %v768, 1
  %v1080 = vsel %vm1026, %v1077, %v1079
  %v1081 = vrot.slane %v769, 1
  %v1082 = vsel %vm1026, %v1079, %v1081
  %v1083 = vrot.slane %v770, 1
  %v1084 = vrot.slane %v771, 1
  %v1085 = vsel %vm1026, %v1083, %v1084
  %v1086 = vrot.slane %v772, 1
  %v1087 = vsel %vm1026, %v1084, %v1086
  %v1088 = vrot.slane %v773, 1
  %v1089 = vsel %vm1026, %v1086, %v1088
  %v1090 = vrot.slane %v774, 1
  %v1091 = vrot.slane %v775, 1
  %v1092 = vsel %vm1026, %v1090, %v1091
  %v1093 = vrot.slane %v776, 1
  %v1094 = vsel %vm1026, %v1091, %v1093
  %v1095 = vrot.slane %v777, 1
  %v1096 = vsel %vm1026, %v1093, %v1095
  %v1097 = vrot.slane %v778, 1
  %v1098 = vrot.slane %v779, 1
  %v1099 = vsel %vm1026, %v1097, %v1098
  %v1100 = vrot.slane %v780, 1
  %v1101 = vsel %vm1026, %v1098, %v1100
  %v1102 = vrot.slane %v781, 1
  %v1103 = vsel %vm1026, %v1100, %v1102
  %v1104 = vrot.slane %v782, 1
  %v1105 = vrot.slane %v783, 1
  %v1106 = vsel %vm1026, %v1104, %v1105
  %v1107 = vrot.slane %v784, 1
  %v1108 = vsel %vm1026, %v1105, %v1107
  %v1109 = vrot.slane %v785, 1
  %v1110 = vsel %vm1026, %v1107, %v1109
  %v1111 = vrot.slane %v786, 1
  %v1112 = vrot.slane %v787, 1
  %v1113 = vsel %vm1026, %v1111, %v1112
  %v1114 = vrot.slane %v788, 1
  %v1115 = vsel %vm1026, %v1112, %v1114
  %v1116 = vrot.slane %v789, 1
  %v1117 = vsel %vm1026, %v1114, %v1116
  %v1118 = vrot.slane %v790, 1
  %v1119 = vrot.slane %v791, 1
  %v1120 = vsel %vm1026, %v1118, %v1119
  %v1121 = vrot.slane %v792, 1
  %v1122 = vsel %vm1026, %v1119, %v1121
  %v1123 = vrot.slane %v793, 1
  %v1124 = vsel %vm1026, %v1121, %v1123
  %v1125 = vrot.slane %v794, 1
  %v1126 = vrot.slane %v795, 1
  %v1127 = vsel %vm1026, %v1125, %v1126
  %v1128 = vrot.slane %v796, 1
  %v1129 = vsel %vm1026, %v1126, %v1128
  %v1130 = vrot.slane %v797, 1
  %v1131 = vsel %vm1026, %v1128, %v1130
  %v1132 = vrot.slane %v798, 1
  %v1133 = vrot.slane %v799, 1
  %v1134 = vsel %vm1026, %v1132, %v1133
  %v1135 = vrot.slane %v800, 1
  %v1136 = vsel %vm1026, %v1133, %v1135
  %v1137 = vrot.slane %v801, 1
  %v1138 = vsel %vm1026, %v1135, %v1137
  %v1139 = vrot.slane %v802, 1
  %v1140 = vrot.slane %v803, 1
  %v1141 = vsel %vm1026, %v1139, %v1140
  %v1142 = vrot.slane %v804, 1
  %v1143 = vsel %vm1026, %v1140, %v1142
  %v1144 = vrot.slane %v805, 1
  %v1145 = vsel %vm1026, %v1142, %v1144
  %v1146 = vrot.slane %v806, 1
  %v1147 = vrot.slane %v807, 1
  %v1148 = vsel %vm1026, %v1146, %v1147
  %v1149 = vrot.slane %v808, 1
  %v1150 = vsel %vm1026, %v1147, %v1149
  %v1151 = vrot.slane %v809, 1
  %v1152 = vsel %vm1026, %v1149, %v1151
  %v1153 = vrot.slane %v810, 1
  %v1154 = vrot.slane %v811, 1
  %v1155 = vsel %vm1026, %v1153, %v1154
  %v1156 = vrot.slane %v812, 1
  %v1157 = vsel %vm1026, %v1154, %v1156
  %v1158 = vrot.slane %v813, 1
  %v1159 = vsel %vm1026, %v1156, %v1158
  %v1160 = vrot.slane %v814, 1
  %v1161 = vrot.slane %v815, 1
  %v1162 = vsel %vm1026, %v1160, %v1161
  %v1163 = vrot.slane %v816, 1
  %v1164 = vsel %vm1026, %v1161, %v1163
  %v1165 = vrot.slane %v817, 1
  %v1166 = vsel %vm1026, %v1163, %v1165
  %v1167 = vrot.slane %v818, 1
  %v1168 = vrot.slane %v819, 1
  %v1169 = vsel %vm1026, %v1167, %v1168
  %v1170 = vrot.slane %v820, 1
  %v1171 = vsel %vm1026, %v1168, %v1170
  %v1172 = vrot.slane %v821, 1
  %v1173 = vsel %vm1026, %v1170, %v1172
  %v1174 = vrot.slane %v822, 1
  %v1175 = vrot.slane %v823, 1
  %v1176 = vsel %vm1026, %v1174, %v1175
  %v1177 = vrot.slane %v824, 1
  %v1178 = vsel %vm1026, %v1175, %v1177
  %v1179 = vrot.slane %v825, 1
  %v1180 = vsel %vm1026, %v1177, %v1179
  %v1181 = vrot.slane %v826, 1
  %v1182 = vrot.slane %v827, 1
  %v1183 = vsel %vm1026, %v1181, %v1182
  %v1184 = vrot.slane %v828, 1
  %v1185 = vsel %vm1026, %v1182, %v1184
  %v1186 = vrot.slane %v829, 1
  %v1187 = vsel %vm1026, %v1184, %v1186
  %v1188 = vrot.slane %v830, 1
  %v1189 = vrot.slane %v831, 1
  %v1190 = vsel %vm1026, %v1188, %v1189
  %v1191 = vrot.slane %v832, 1
  %v1192 = vsel %vm1026, %v1189, %v1191
  %v1193 = vrot.slane %v833, 1
  %v1194 = vsel %vm1026, %v1191, %v1193
  %v1195 = vrot.slane %v834, 1
  %v1196 = vrot.slane %v835, 1
  %v1197 = vsel %vm1026, %v1195, %v1196
  %v1198 = vrot.slane %v836, 1
  %v1199 = vsel %vm1026, %v1196, %v1198
  %v1200 = vrot.slane %v837, 1
  %v1201 = vsel %vm1026, %v1198, %v1200
  %v1202 = vrot.slane %v838, 1
  %v1203 = vrot.slane %v839, 1
  %v1204 = vsel %vm1026, %v1202, %v1203
  %v1205 = vrot.slane %v840, 1
  %v1206 = vsel %vm1026, %v1203, %v1205
  %v1207 = vrot.slane %v841, 1
  %v1208 = vsel %vm1026, %v1205, %v1207
  %v1209 = vrot.slane %v842, 1
  %v1210 = vrot.slane %v843, 1
  %v1211 = vsel %vm1026, %v1209, %v1210
  %v1212 = vrot.slane %v844, 1
  %v1213 = vsel %vm1026, %v1210, %v1212
  %v1214 = vrot.slane %v845, 1
  %v1215 = vsel %vm1026, %v1212, %v1214
  %v1216 = vrot.slane %v846, 1
  %v1217 = vrot.slane %v847, 1
  %v1218 = vsel %vm1026, %v1216, %v1217
  %v1219 = vrot.slane %v848, 1
  %v1220 = vsel %vm1026, %v1217, %v1219
  %v1221 = vrot.slane %v849, 1
  %v1222 = vsel %vm1026, %v1219, %v1221
  %v1223 = vrot.slane %v850, 1
  %v1224 = vrot.slane %v851, 1
  %v1225 = vsel %vm1026, %v1223, %v1224
  %v1226 = vrot.slane %v852, 1
  %v1227 = vsel %vm1026, %v1224, %v1226
  %v1228 = vrot.slane %v853, 1
  %v1229 = vsel %vm1026, %v1226, %v1228
  %v1230 = vrot.slane %v854, 1
  %v1231 = vrot.slane %v855, 1
  %v1232 = vsel %vm1026, %v1230, %v1231
  %v1233 = vrot.slane %v856, 1
  %v1234 = vsel %vm1026, %v1231, %v1233
  %v1235 = vrot.slane %v857, 1
  %v1236 = vsel %vm1026, %v1233, %v1235
  %v1237 = vrot.slane %v858, 1
  %v1238 = vrot.slane %v859, 1
  %v1239 = vsel %vm1026, %v1237, %v1238
  %v1240 = vrot.slane %v860, 1
  %v1241 = vsel %vm1026, %v1238, %v1240
  %v1242 = vrot.slane %v861, 1
  %v1243 = vsel %vm1026, %v1240, %v1242
  %v1244 = vrot.slane %v862, 1
  %v1245 = vrot.slane %v863, 1
  %v1246 = vsel %vm1026, %v1244, %v1245
  %v1247 = vrot.slane %v864, 1
  %v1248 = vsel %vm1026, %v1245, %v1247
  %v1249 = vrot.slane %v865, 1
  %v1250 = vsel %vm1026, %v1247, %v1249
  %v1251 = vrot.slane %v866, 1
  %v1252 = vrot.slane %v867, 1
  %v1253 = vsel %vm1026, %v1251, %v1252
  %v1254 = vrot.slane %v868, 1
  %v1255 = vsel %vm1026, %v1252, %v1254
  %v1256 = vrot.slane %v869, 1
  %v1257 = vsel %vm1026, %v1254, %v1256
  %v1258 = vrot.slane %v870, 1
  %v1259 = vrot.slane %v871, 1
  %v1260 = vsel %vm1026, %v1258, %v1259
  %v1261 = vrot.slane %v872, 1
  %v1262 = vsel %vm1026, %v1259, %v1261
  %v1263 = vrot.slane %v873, 1
  %v1264 = vsel %vm1026, %v1261, %v1263
  %v1265 = vrot.slane %v874, 1
  %v1266 = vrot.slane %v875, 1
  %v1267 = vsel %vm1026, %v1265, %v1266
  %v1268 = vrot.slane %v876, 1
  %v1269 = vsel %vm1026, %v1266, %v1268
  %v1270 = vrot.slane %v877, 1
  %v1271 = vsel %vm1026, %v1268, %v1270
  %v1272 = vrot.slane %v878, 1
  %v1273 = vrot.slane %v879, 1
  %v1274 = vsel %vm1026, %v1272, %v1273
  %v1275 = vrot.slane %v880, 1
  %v1276 = vsel %vm1026, %v1273, %v1275
  %v1277 = vrot.slane %v881, 1
  %v1278 = vsel %vm1026, %v1275, %v1277
  %v1387 = vadd.f32 %v629, %v1029
  %v1388 = vadd.f32 %v630, %v1031
  %v1389 = vadd.f32 %v631, %v1033
  %v1390 = vadd.f32 %v632, %v1036
  %v1391 = vadd.f32 %v633, %v1038
  %v1392 = vadd.f32 %v634, %v1040
  %v1393 = vadd.f32 %v635, %v1043
  %v1394 = vadd.f32 %v636, %v1045
  %v1395 = vadd.f32 %v637, %v1047
  %v1396 = vadd.f32 %v638, %v1050
  %v1397 = vadd.f32 %v639, %v1052
  %v1398 = vadd.f32 %v640, %v1054
  %v1399 = vadd.f32 %v641, %v1057
  %v1400 = vadd.f32 %v642, %v1059
  %v1401 = vadd.f32 %v643, %v1061
  %v1402 = vadd.f32 %v644, %v1064
  %v1403 = vadd.f32 %v645, %v1066
  %v1404 = vadd.f32 %v646, %v1068
  %v1405 = vadd.f32 %v647, %v1071
  %v1406 = vadd.f32 %v648, %v1073
  %v1407 = vadd.f32 %v649, %v1075
  %v1408 = vadd.f32 %v650, %v1078
  %v1409 = vadd.f32 %v651, %v1080
  %v1410 = vadd.f32 %v652, %v1082
  %v1411 = vadd.f32 %v653, %v1085
  %v1412 = vadd.f32 %v654, %v1087
  %v1413 = vadd.f32 %v655, %v1089
  %v1414 = vadd.f32 %v656, %v1092
  %v1415 = vadd.f32 %v657, %v1094
  %v1416 = vadd.f32 %v658, %v1096
  %v1417 = vadd.f32 %v659, %v1099
  %v1418 = vadd.f32 %v660, %v1101
  %v1419 = vadd.f32 %v661, %v1103
  %v1420 = vadd.f32 %v662, %v1106
  %v1421 = vadd.f32 %v663, %v1108
  %v1422 = vadd.f32 %v664, %v1110
  %v1423 = vadd.f32 %v665, %v1113
  %v1424 = vadd.f32 %v666, %v1115
  %v1425 = vadd.f32 %v667, %v1117
  %v1426 = vadd.f32 %v668, %v1120
  %v1427 = vadd.f32 %v669, %v1122
  %v1428 = vadd.f32 %v670, %v1124
  %v1429 = vadd.f32 %v671, %v1127
  %v1430 = vadd.f32 %v672, %v1129
  %v1431 = vadd.f32 %v673, %v1131
  %v1432 = vadd.f32 %v674, %v1134
  %v1433 = vadd.f32 %v675, %v1136
  %v1434 = vadd.f32 %v676, %v1138
  %v1435 = vadd.f32 %v677, %v1141
  %v1436 = vadd.f32 %v678, %v1143
  %v1437 = vadd.f32 %v679, %v1145
  %v1438 = vadd.f32 %v680, %v1148
  %v1439 = vadd.f32 %v681, %v1150
  %v1440 = vadd.f32 %v682, %v1152
  %v1441 = vadd.f32 %v683, %v1155
  %v1442 = vadd.f32 %v684, %v1157
  %v1443 = vadd.f32 %v685, %v1159
  %v1444 = vadd.f32 %v686, %v1162
  %v1445 = vadd.f32 %v687, %v1164
  %v1446 = vadd.f32 %v688, %v1166
  %v1447 = vadd.f32 %v689, %v1169
  %v1448 = vadd.f32 %v690, %v1171
  %v1449 = vadd.f32 %v691, %v1173
  %v1450 = vadd.f32 %v692, %v1176
  %v1451 = vadd.f32 %v693, %v1178
  %v1452 = vadd.f32 %v694, %v1180
  %v1453 = vadd.f32 %v695, %v1183
  %v1454 = vadd.f32 %v696, %v1185
  %v1455 = vadd.f32 %v697, %v1187
  %v1456 = vadd.f32 %v698, %v1190
  %v1457 = vadd.f32 %v699, %v1192
  %v1458 = vadd.f32 %v700, %v1194
  %v1459 = vadd.f32 %v701, %v1197
  %v1460 = vadd.f32 %v702, %v1199
  %v1461 = vadd.f32 %v703, %v1201
  %v1462 = vadd.f32 %v704, %v1204
  %v1463 = vadd.f32 %v705, %v1206
  %v1464 = vadd.f32 %v706, %v1208
  %v1465 = vadd.f32 %v707, %v1211
  %v1466 = vadd.f32 %v708, %v1213
  %v1467 = vadd.f32 %v709, %v1215
  %v1468 = vadd.f32 %v710, %v1218
  %v1469 = vadd.f32 %v711, %v1220
  %v1470 = vadd.f32 %v712, %v1222
  %v1471 = vadd.f32 %v713, %v1225
  %v1472 = vadd.f32 %v714, %v1227
  %v1473 = vadd.f32 %v715, %v1229
  %v1474 = vadd.f32 %v716, %v1232
  %v1475 = vadd.f32 %v717, %v1234
  %v1476 = vadd.f32 %v718, %v1236
  %v1477 = vadd.f32 %v719, %v1239
  %v1478 = vadd.f32 %v720, %v1241
  %v1479 = vadd.f32 %v721, %v1243
  %v1480 = vadd.f32 %v722, %v1246
  %v1481 = vadd.f32 %v723, %v1248
  %v1482 = vadd.f32 %v724, %v1250
  %v1483 = vadd.f32 %v725, %v1253
  %v1484 = vadd.f32 %v726, %v1255
  %v1485 = vadd.f32 %v727, %v1257
  %v1486 = vadd.f32 %v728, %v1260
  %v1487 = vadd.f32 %v729, %v1262
  %v1488 = vadd.f32 %v730, %v1264
  %v1489 = vadd.f32 %v731, %v1267
  %v1490 = vadd.f32 %v732, %v1269
  %v1491 = vadd.f32 %v733, %v1271
  %v1492 = vadd.f32 %v734, %v1274
  %v1493 = vadd.f32 %v735, %v1276
  %v1494 = vadd.f32 %v736, %v1278
  %v1495 = vperm.slane %v188, 1
  %v1496 = vmul.f32 %v31, %v1495
  %v1497 = vmul.f32 %v32, %v1495
  %v1498 = vmul.f32 %v33, %v1495
  %v1499 = vmul.f32 %v34, %v1495
  %v1500 = vmul.f32 %v35, %v1495
  %v1501 = vmul.f32 %v36, %v1495
  %v1502 = vmul.f32 %v37, %v1495
  %v1503 = vmul.f32 %v38, %v1495
  %v1504 = vmul.f32 %v39, %v1495
  %v1505 = vmul.f32 %v40, %v1495
  %v1506 = vmul.f32 %v41, %v1495
  %v1507 = vmul.f32 %v42, %v1495
  %v1508 = vmul.f32 %v43, %v1495
  %v1509 = vmul.f32 %v44, %v1495
  %v1510 = vmul.f32 %v45, %v1495
  %v1511 = vmul.f32 %v46, %v1495
  %v1512 = vmul.f32 %v47, %v1495
  %v1513 = vmul.f32 %v48, %v1495
  %v1514 = vmul.f32 %v49, %v1495
  %v1515 = vmul.f32 %v50, %v1495
  %v1516 = vmul.f32 %v51, %v1495
  %v1517 = vmul.f32 %v52, %v1495
  %v1518 = vmul.f32 %v53, %v1495
  %v1519 = vmul.f32 %v54, %v1495
  %v1520 = vmul.f32 %v55, %v1495
  %v1521 = vmul.f32 %v56, %v1495
  %v1522 = vmul.f32 %v57, %v1495
  %v1523 = vmul.f32 %v58, %v1495
  %v1524 = vmul.f32 %v59, %v1495
  %v1525 = vmul.f32 %v60, %v1495
  %v1526 = vmul.f32 %v61, %v1495
  %v1527 = vmul.f32 %v62, %v1495
  %v1528 = vmul.f32 %v63, %v1495
  %v1529 = vmul.f32 %v64, %v1495
  %v1530 = vmul.f32 %v65, %v1495
  %v1531 = vmul.f32 %v66, %v1495
  %v1532 = vmul.f32 %v67, %v1495
  %v1533 = vmul.f32 %v68, %v1495
  %v1534 = vmul.f32 %v69, %v1495
  %v1535 = vmul.f32 %v70, %v1495
  %v1536 = vmul.f32 %v71, %v1495
  %v1537 = vmul.f32 %v72, %v1495
  %v1538 = vmul.f32 %v73, %v1495
  %v1539 = vmul.f32 %v74, %v1495
  %v1540 = vmul.f32 %v75, %v1495
  %v1541 = vmul.f32 %v76, %v1495
  %v1542 = vmul.f32 %v77, %v1495
  %v1543 = vmul.f32 %v78, %v1495
  %v1544 = vmul.f32 %v79, %v1495
  %v1545 = vmul.f32 %v80, %v1495
  %v1546 = vmul.f32 %v81, %v1495
  %v1547 = vmul.f32 %v82, %v1495
  %v1548 = vmul.f32 %v83, %v1495
  %v1549 = vmul.f32 %v84, %v1495
  %v1550 = vmul.f32 %v85, %v1495
  %v1551 = vmul.f32 %v86, %v1495
  %v1552 = vmul.f32 %v87, %v1495
  %v1553 = vmul.f32 %v88, %v1495
  %v1554 = vmul.f32 %v89, %v1495
  %v1555 = vmul.f32 %v90, %v1495
  %v1556 = vmul.f32 %v91, %v1495
  %v1557 = vmul.f32 %v92, %v1495
  %v1558 = vmul.f32 %v93, %v1495
  %v1559 = vmul.f32 %v94, %v1495
  %v1560 = vmul.f32 %v95, %v1495
  %v1561 = vmul.f32 %v96, %v1495
  %v1562 = vmul.f32 %v97, %v1495
  %v1563 = vmul.f32 %v98, %v1495
  %v1564 = vmul.f32 %v99, %v1495
  %v1565 = vmul.f32 %v100, %v1495
  %v1566 = vmul.f32 %v101, %v1495
  %v1567 = vmul.f32 %v102, %v1495
  %v1568 = vmul.f32 %v111, %v1495
  %v1569 = vmul.f32 %v112, %v1495
  %v1570 = vmul.f32 %v113, %v1495
  %v1571 = vmul.f32 %v114, %v1495
  %v1572 = vmul.f32 %v115, %v1495
  %v1573 = vmul.f32 %v116, %v1495
  %v1574 = vmul.f32 %v117, %v1495
  %v1575 = vmul.f32 %v118, %v1495
  %v1576 = vmul.f32 %v119, %v1495
  %v1577 = vmul.f32 %v120, %v1495
  %v1578 = vmul.f32 %v121, %v1495
  %v1579 = vmul.f32 %v122, %v1495
  %v1580 = vmul.f32 %v123, %v1495
  %v1581 = vmul.f32 %v124, %v1495
  %v1582 = vmul.f32 %v125, %v1495
  %v1583 = vmul.f32 %v126, %v1495
  %v1584 = vmul.f32 %v127, %v1495
  %v1585 = vmul.f32 %v128, %v1495
  %v1586 = vmul.f32 %v129, %v1495
  %v1587 = vmul.f32 %v130, %v1495
  %v1588 = vmul.f32 %v131, %v1495
  %v1589 = vmul.f32 %v132, %v1495
  %v1590 = vmul.f32 %v133, %v1495
  %v1591 = vmul.f32 %v134, %v1495
  %v1592 = vmul.f32 %v135, %v1495
  %v1593 = vmul.f32 %v136, %v1495
  %v1594 = vmul.f32 %v137, %v1495
  %v1595 = vmul.f32 %v138, %v1495
  %v1596 = vmul.f32 %v139, %v1495
  %v1597 = vmul.f32 %v140, %v1495
  %v1598 = vmul.f32 %v141, %v1495
  %v1599 = vmul.f32 %v142, %v1495
  %v1600 = vmul.f32 %v143, %v1495
  %v1601 = vmul.f32 %v144, %v1495
  %v1602 = vmul.f32 %v145, %v1495
  %v1603 = vmul.f32 %v146, %v1495
  %v1604 = vmul.f32 %v147, %v1495
  %v1605 = vmul.f32 %v148, %v1495
  %v1606 = vmul.f32 %v149, %v1495
  %v1607 = vmul.f32 %v150, %v1495
  %v1608 = vmul.f32 %v151, %v1495
  %v1609 = vmul.f32 %v152, %v1495
  %v1610 = vmul.f32 %v153, %v1495
  %v1611 = vmul.f32 %v154, %v1495
  %v1612 = vmul.f32 %v155, %v1495
  %v1613 = vmul.f32 %v156, %v1495
  %v1614 = vmul.f32 %v157, %v1495
  %v1615 = vmul.f32 %v158, %v1495
  %v1616 = vmul.f32 %v159, %v1495
  %v1617 = vmul.f32 %v160, %v1495
  %v1618 = vmul.f32 %v161, %v1495
  %v1619 = vmul.f32 %v162, %v1495
  %v1620 = vmul.f32 %v163, %v1495
  %v1621 = vmul.f32 %v164, %v1495
  %v1622 = vmul.f32 %v165, %v1495
  %v1623 = vmul.f32 %v166, %v1495
  %v1624 = vmul.f32 %v167, %v1495
  %v1625 = vmul.f32 %v168, %v1495
  %v1626 = vmul.f32 %v169, %v1495
  %v1627 = vmul.f32 %v170, %v1495
  %v1628 = vmul.f32 %v171, %v1495
  %v1629 = vmul.f32 %v172, %v1495
  %v1630 = vmul.f32 %v173, %v1495
  %v1631 = vmul.f32 %v174, %v1495
  %v1632 = vmul.f32 %v175, %v1495
  %v1633 = vmul.f32 %v176, %v1495
  %v1634 = vmul.f32 %v177, %v1495
  %v1635 = vmul.f32 %v178, %v1495
  %v1636 = vmul.f32 %v179, %v1495
  %v1637 = vmul.f32 %v180, %v1495
  %v1638 = vmul.f32 %v181, %v1495
  %v1639 = vmul.f32 %v182, %v1495
  %v1784 = vrot.slane %v1496, 1
  %v1785 = vrot.slane %v1497, 1
  %v1786 = vsel %vm1026, %v1784, %v1785
  %v1787 = vrot.slane %v1498, 1
  %v1788 = vsel %vm1026, %v1785, %v1787
  %v1789 = vrot.slane %v1499, 1
  %v1790 = vsel %vm1026, %v1787, %v1789
  %v1791 = vrot.slane %v1500, 1
  %v1792 = vrot.slane %v1501, 1
  %v1793 = vsel %vm1026, %v1791, %v1792
  %v1794 = vrot.slane %v1502, 1
  %v1795 = vsel %vm1026, %v1792, %v1794
  %v1796 = vrot.slane %v1503, 1
  %v1797 = vsel %vm1026, %v1794, %v1796
  %v1798 = vrot.slane %v1504, 1
  %v1799 = vrot.slane %v1505, 1
  %v1800 = vsel %vm1026, %v1798, %v1799
  %v1801 = vrot.slane %v1506, 1
  %v1802 = vsel %vm1026, %v1799, %v1801
  %v1803 = vrot.slane %v1507, 1
  %v1804 = vsel %vm1026, %v1801, %v1803
  %v1805 = vrot.slane %v1508, 1
  %v1806 = vrot.slane %v1509, 1
  %v1807 = vsel %vm1026, %v1805, %v1806
  %v1808 = vrot.slane %v1510, 1
  %v1809 = vsel %vm1026, %v1806, %v1808
  %v1810 = vrot.slane %v1511, 1
  %v1811 = vsel %vm1026, %v1808, %v1810
  %v1812 = vrot.slane %v1512, 1
  %v1813 = vrot.slane %v1513, 1
  %v1814 = vsel %vm1026, %v1812, %v1813
  %v1815 = vrot.slane %v1514, 1
  %v1816 = vsel %vm1026, %v1813, %v1815
  %v1817 = vrot.slane %v1515, 1
  %v1818 = vsel %vm1026, %v1815, %v1817
  %v1819 = vrot.slane %v1516, 1
  %v1820 = vrot.slane %v1517, 1
  %v1821 = vsel %vm1026, %v1819, %v1820
  %v1822 = vrot.slane %v1518, 1
  %v1823 = vsel %vm1026, %v1820, %v1822
  %v1824 = vrot.slane %v1519, 1
  %v1825 = vsel %vm1026, %v1822, %v1824
  %v1826 = vrot.slane %v1520, 1
  %v1827 = vrot.slane %v1521, 1
  %v1828 = vsel %vm1026, %v1826, %v1827
  %v1829 = vrot.slane %v1522, 1
  %v1830 = vsel %vm1026, %v1827, %v1829
  %v1831 = vrot.slane %v1523, 1
  %v1832 = vsel %vm1026, %v1829, %v1831
  %v1833 = vrot.slane %v1524, 1
  %v1834 = vrot.slane %v1525, 1
  %v1835 = vsel %vm1026, %v1833, %v1834
  %v1836 = vrot.slane %v1526, 1
  %v1837 = vsel %vm1026, %v1834, %v1836
  %v1838 = vrot.slane %v1527, 1
  %v1839 = vsel %vm1026, %v1836, %v1838
  %v1840 = vrot.slane %v1528, 1
  %v1841 = vrot.slane %v1529, 1
  %v1842 = vsel %vm1026, %v1840, %v1841
  %v1843 = vrot.slane %v1530, 1
  %v1844 = vsel %vm1026, %v1841, %v1843
  %v1845 = vrot.slane %v1531, 1
  %v1846 = vsel %vm1026, %v1843, %v1845
  %v1847 = vrot.slane %v1532, 1
  %v1848 = vrot.slane %v1533, 1
  %v1849 = vsel %vm1026, %v1847, %v1848
  %v1850 = vrot.slane %v1534, 1
  %v1851 = vsel %vm1026, %v1848, %v1850
  %v1852 = vrot.slane %v1535, 1
  %v1853 = vsel %vm1026, %v1850, %v1852
  %v1854 = vrot.slane %v1536, 1
  %v1855 = vrot.slane %v1537, 1
  %v1856 = vsel %vm1026, %v1854, %v1855
  %v1857 = vrot.slane %v1538, 1
  %v1858 = vsel %vm1026, %v1855, %v1857
  %v1859 = vrot.slane %v1539, 1
  %v1860 = vsel %vm1026, %v1857, %v1859
  %v1861 = vrot.slane %v1540, 1
  %v1862 = vrot.slane %v1541, 1
  %v1863 = vsel %vm1026, %v1861, %v1862
  %v1864 = vrot.slane %v1542, 1
  %v1865 = vsel %vm1026, %v1862, %v1864
  %v1866 = vrot.slane %v1543, 1
  %v1867 = vsel %vm1026, %v1864, %v1866
  %v1868 = vrot.slane %v1544, 1
  %v1869 = vrot.slane %v1545, 1
  %v1870 = vsel %vm1026, %v1868, %v1869
  %v1871 = vrot.slane %v1546, 1
  %v1872 = vsel %vm1026, %v1869, %v1871
  %v1873 = vrot.slane %v1547, 1
  %v1874 = vsel %vm1026, %v1871, %v1873
  %v1875 = vrot.slane %v1548, 1
  %v1876 = vrot.slane %v1549, 1
  %v1877 = vsel %vm1026, %v1875, %v1876
  %v1878 = vrot.slane %v1550, 1
  %v1879 = vsel %vm1026, %v1876, %v1878
  %v1880 = vrot.slane %v1551, 1
  %v1881 = vsel %vm1026, %v1878, %v1880
  %v1882 = vrot.slane %v1552, 1
  %v1883 = vrot.slane %v1553, 1
  %v1884 = vsel %vm1026, %v1882, %v1883
  %v1885 = vrot.slane %v1554, 1
  %v1886 = vsel %vm1026, %v1883, %v1885
  %v1887 = vrot.slane %v1555, 1
  %v1888 = vsel %vm1026, %v1885, %v1887
  %v1889 = vrot.slane %v1556, 1
  %v1890 = vrot.slane %v1557, 1
  %v1891 = vsel %vm1026, %v1889, %v1890
  %v1892 = vrot.slane %v1558, 1
  %v1893 = vsel %vm1026, %v1890, %v1892
  %v1894 = vrot.slane %v1559, 1
  %v1895 = vsel %vm1026, %v1892, %v1894
  %v1896 = vrot.slane %v1560, 1
  %v1897 = vrot.slane %v1561, 1
  %v1898 = vsel %vm1026, %v1896, %v1897
  %v1899 = vrot.slane %v1562, 1
  %v1900 = vsel %vm1026, %v1897, %v1899
  %v1901 = vrot.slane %v1563, 1
  %v1902 = vsel %vm1026, %v1899, %v1901
  %v1903 = vrot.slane %v1564, 1
  %v1904 = vrot.slane %v1565, 1
  %v1905 = vsel %vm1026, %v1903, %v1904
  %v1906 = vrot.slane %v1566, 1
  %v1907 = vsel %vm1026, %v1904, %v1906
  %v1908 = vrot.slane %v1567, 1
  %v1909 = vsel %vm1026, %v1906, %v1908
  %v1910 = vrot.slane %v1568, 1
  %v1911 = vrot.slane %v1569, 1
  %v1912 = vsel %vm1026, %v1910, %v1911
  %v1913 = vrot.slane %v1570, 1
  %v1914 = vsel %vm1026, %v1911, %v1913
  %v1915 = vrot.slane %v1571, 1
  %v1916 = vsel %vm1026, %v1913, %v1915
  %v1917 = vrot.slane %v1572, 1
  %v1918 = vrot.slane %v1573, 1
  %v1919 = vsel %vm1026, %v1917, %v1918
  %v1920 = vrot.slane %v1574, 1
  %v1921 = vsel %vm1026, %v1918, %v1920
  %v1922 = vrot.slane %v1575, 1
  %v1923 = vsel %vm1026, %v1920, %v1922
  %v1924 = vrot.slane %v1576, 1
  %v1925 = vrot.slane %v1577, 1
  %v1926 = vsel %vm1026, %v1924, %v1925
  %v1927 = vrot.slane %v1578, 1
  %v1928 = vsel %vm1026, %v1925, %v1927
  %v1929 = vrot.slane %v1579, 1
  %v1930 = vsel %vm1026, %v1927, %v1929
  %v1931 = vrot.slane %v1580, 1
  %v1932 = vrot.slane %v1581, 1
  %v1933 = vsel %vm1026, %v1931, %v1932
  %v1934 = vrot.slane %v1582, 1
  %v1935 = vsel %vm1026, %v1932, %v1934
  %v1936 = vrot.slane %v1583, 1
  %v1937 = vsel %vm1026, %v1934, %v1936
  %v1938 = vrot.slane %v1584, 1
  %v1939 = vrot.slane %v1585, 1
  %v1940 = vsel %vm1026, %v1938, %v1939
  %v1941 = vrot.slane %v1586, 1
  %v1942 = vsel %vm1026, %v1939, %v1941
  %v1943 = vrot.slane %v1587, 1
  %v1944 = vsel %vm1026, %v1941, %v1943
  %v1945 = vrot.slane %v1588, 1
  %v1946 = vrot.slane %v1589, 1
  %v1947 = vsel %vm1026, %v1945, %v1946
  %v1948 = vrot.slane %v1590, 1
  %v1949 = vsel %vm1026, %v1946, %v1948
  %v1950 = vrot.slane %v1591, 1
  %v1951 = vsel %vm1026, %v1948, %v1950
  %v1952 = vrot.slane %v1592, 1
  %v1953 = vrot.slane %v1593, 1
  %v1954 = vsel %vm1026, %v1952, %v1953
  %v1955 = vrot.slane %v1594, 1
  %v1956 = vsel %vm1026, %v1953, %v1955
  %v1957 = vrot.slane %v1595, 1
  %v1958 = vsel %vm1026, %v1955, %v1957
  %v1959 = vrot.slane %v1596, 1
  %v1960 = vrot.slane %v1597, 1
  %v1961 = vsel %vm1026, %v1959, %v1960
  %v1962 = vrot.slane %v1598, 1
  %v1963 = vsel %vm1026, %v1960, %v1962
  %v1964 = vrot.slane %v1599, 1
  %v1965 = vsel %vm1026, %v1962, %v1964
  %v1966 = vrot.slane %v1600, 1
  %v1967 = vrot.slane %v1601, 1
  %v1968 = vsel %vm1026, %v1966, %v1967
  %v1969 = vrot.slane %v1602, 1
  %v1970 = vsel %vm1026, %v1967, %v1969
  %v1971 = vrot.slane %v1603, 1
  %v1972 = vsel %vm1026, %v1969, %v1971
  %v1973 = vrot.slane %v1604, 1
  %v1974 = vrot.slane %v1605, 1
  %v1975 = vsel %vm1026, %v1973, %v1974
  %v1976 = vrot.slane %v1606, 1
  %v1977 = vsel %vm1026, %v1974, %v1976
  %v1978 = vrot.slane %v1607, 1
  %v1979 = vsel %vm1026, %v1976, %v1978
  %v1980 = vrot.slane %v1608, 1
  %v1981 = vrot.slane %v1609, 1
  %v1982 = vsel %vm1026, %v1980, %v1981
  %v1983 = vrot.slane %v1610, 1
  %v1984 = vsel %vm1026, %v1981, %v1983
  %v1985 = vrot.slane %v1611, 1
  %v1986 = vsel %vm1026, %v1983, %v1985
  %v1987 = vrot.slane %v1612, 1
  %v1988 = vrot.slane %v1613, 1
  %v1989 = vsel %vm1026, %v1987, %v1988
  %v1990 = vrot.slane %v1614, 1
  %v1991 = vsel %vm1026, %v1988, %v1990
  %v1992 = vrot.slane %v1615, 1
  %v1993 = vsel %vm1026, %v1990, %v1992
  %v1994 = vrot.slane %v1616, 1
  %v1995 = vrot.slane %v1617, 1
  %v1996 = vsel %vm1026, %v1994, %v1995
  %v1997 = vrot.slane %v1618, 1
  %v1998 = vsel %vm1026, %v1995, %v1997
  %v1999 = vrot.slane %v1619, 1
  %v2000 = vsel %vm1026, %v1997, %v1999
  %v2001 = vrot.slane %v1620, 1
  %v2002 = vrot.slane %v1621, 1
  %v2003 = vsel %vm1026, %v2001, %v2002
  %v2004 = vrot.slane %v1622, 1
  %v2005 = vsel %vm1026, %v2002, %v2004
  %v2006 = vrot.slane %v1623, 1
  %v2007 = vsel %vm1026, %v2004, %v2006
  %v2008 = vrot.slane %v1624, 1
  %v2009 = vrot.slane %v1625, 1
  %v2010 = vsel %vm1026, %v2008, %v2009
  %v2011 = vrot.slane %v1626, 1
  %v2012 = vsel %vm1026, %v2009, %v2011
  %v2013 = vrot.slane %v1627, 1
  %v2014 = vsel %vm1026, %v2011, %v2013
  %v2015 = vrot.slane %v1628, 1
  %v2016 = vrot.slane %v1629, 1
  %v2017 = vsel %vm1026, %v2015, %v2016
  %v2018 = vrot.slane %v1630, 1
  %v2019 = vsel %vm1026, %v2016, %v2018
  %v2020 = vrot.slane %v1631, 1
  %v2021 = vsel %vm1026, %v2018, %v2020
  %v2022 = vrot.slane %v1632, 1
  %v2023 = vrot.slane %v1633, 1
  %v2024 = vsel %vm1026, %v2022, %v2023
  %v2025 = vrot.slane %v1634, 1
  %v2026 = vsel %vm1026, %v2023, %v2025
  %v2027 = vrot.slane %v1635, 1
  %v2028 = vsel %vm1026, %v2025, %v2027
  %v2029 = vrot.slane %v1636, 1
  %v2030 = vrot.slane %v1637, 1
  %v2031 = vsel %vm1026, %v2029, %v2030
  %v2032 = vrot.slane %v1638, 1
  %v2033 = vsel %vm1026, %v2030, %v2032
  %v2034 = vrot.slane %v1639, 1
  %v2035 = vsel %vm1026, %v2032, %v2034
  %v2144 = vadd.f32 %v1387, %v1786
  %v2145 = vadd.f32 %v1388, %v1788
  %v2146 = vadd.f32 %v1389, %v1790
  %v2147 = vadd.f32 %v1390, %v1793
  %v2148 = vadd.f32 %v1391, %v1795
  %v2149 = vadd.f32 %v1392, %v1797
  %v2150 = vadd.f32 %v1393, %v1800
  %v2151 = vadd.f32 %v1394, %v1802
  %v2152 = vadd.f32 %v1395, %v1804
  %v2153 = vadd.f32 %v1396, %v1807
  %v2154 = vadd.f32 %v1397, %v1809
  %v2155 = vadd.f32 %v1398, %v1811
  %v2156 = vadd.f32 %v1399, %v1814
  %v2157 = vadd.f32 %v1400, %v1816
  %v2158 = vadd.f32 %v1401, %v1818
  %v2159 = vadd.f32 %v1402, %v1821
  %v2160 = vadd.f32 %v1403, %v1823
  %v2161 = vadd.f32 %v1404, %v1825
  %v2162 = vadd.f32 %v1405, %v1828
  %v2163 = vadd.f32 %v1406, %v1830
  %v2164 = vadd.f32 %v1407, %v1832
  %v2165 = vadd.f32 %v1408, %v1835
  %v2166 = vadd.f32 %v1409, %v1837
  %v2167 = vadd.f32 %v1410, %v1839
  %v2168 = vadd.f32 %v1411, %v1842
  %v2169 = vadd.f32 %v1412, %v1844
  %v2170 = vadd.f32 %v1413, %v1846
  %v2171 = vadd.f32 %v1414, %v1849
  %v2172 = vadd.f32 %v1415, %v1851
  %v2173 = vadd.f32 %v1416, %v1853
  %v2174 = vadd.f32 %v1417, %v1856
  %v2175 = vadd.f32 %v1418, %v1858
  %v2176 = vadd.f32 %v1419, %v1860
  %v2177 = vadd.f32 %v1420, %v1863
  %v2178 = vadd.f32 %v1421, %v1865
  %v2179 = vadd.f32 %v1422, %v1867
  %v2180 = vadd.f32 %v1423, %v1870
  %v2181 = vadd.f32 %v1424, %v1872
  %v2182 = vadd.f32 %v1425, %v1874
  %v2183 = vadd.f32 %v1426, %v1877
  %v2184 = vadd.f32 %v1427, %v1879
  %v2185 = vadd.f32 %v1428, %v1881
  %v2186 = vadd.f32 %v1429, %v1884
  %v2187 = vadd.f32 %v1430, %v1886
  %v2188 = vadd.f32 %v1431, %v1888
  %v2189 = vadd.f32 %v1432, %v1891
  %v2190 = vadd.f32 %v1433, %v1893
  %v2191 = vadd.f32 %v1434, %v1895
  %v2192 = vadd.f32 %v1435, %v1898
  %v2193 = vadd.f32 %v1436, %v1900
  %v2194 = vadd.f32 %v1437, %v1902
  %v2195 = vadd.f32 %v1438, %v1905
  %v2196 = vadd.f32 %v1439, %v1907
  %v2197 = vadd.f32 %v1440, %v1909
  %v2198 = vadd.f32 %v1441, %v1912
  %v2199 = vadd.f32 %v1442, %v1914
  %v2200 = vadd.f32 %v1443, %v1916
  %v2201 = vadd.f32 %v1444, %v1919
  %v2202 = vadd.f32 %v1445, %v1921
  %v2203 = vadd.f32 %v1446, %v1923
  %v2204 = vadd.f32 %v1447, %v1926
  %v2205 = vadd.f32 %v1448, %v1928
  %v2206 = vadd.f32 %v1449, %v1930
  %v2207 = vadd.f32 %v1450, %v1933
  %v2208 = vadd.f32 %v1451, %v1935
  %v2209 = vadd.f32 %v1452, %v1937
  %v2210 = vadd.f32 %v1453, %v1940
  %v2211 = vadd.f32 %v1454, %v1942
  %v2212 = vadd.f32 %v1455, %v1944
  %v2213 = vadd.f32 %v1456, %v1947
  %v2214 = vadd.f32 %v1457, %v1949
  %v2215 = vadd.f32 %v1458, %v1951
  %v2216 = vadd.f32 %v1459, %v1954
  %v2217 = vadd.f32 %v1460, %v1956
  %v2218 = vadd.f32 %v1461, %v1958
  %v2219 = vadd.f32 %v1462, %v1961
  %v2220 = vadd.f32 %v1463, %v1963
  %v2221 = vadd.f32 %v1464, %v1965
  %v2222 = vadd.f32 %v1465, %v1968
  %v2223 = vadd.f32 %v1466, %v1970
  %v2224 = vadd.f32 %v1467, %v1972
  %v2225 = vadd.f32 %v1468, %v1975
  %v2226 = vadd.f32 %v1469, %v1977
  %v2227 = vadd.f32 %v1470, %v1979
  %v2228 = vadd.f32 %v1471, %v1982
  %v2229 = vadd.f32 %v1472, %v1984
  %v2230 = vadd.f32 %v1473, %v1986
  %v2231 = vadd.f32 %v1474, %v1989
  %v2232 = vadd.f32 %v1475, %v1991
  %v2233 = vadd.f32 %v1476, %v1993
  %v2234 = vadd.f32 %v1477, %v1996
  %v2235 = vadd.f32 %v1478, %v1998
  %v2236 = vadd.f32 %v1479, %v2000
  %v2237 = vadd.f32 %v1480, %v2003
  %v2238 = vadd.f32 %v1481, %v2005
  %v2239 = vadd.f32 %v1482, %v2007
  %v2240 = vadd.f32 %v1483, %v2010
  %v2241 = vadd.f32 %v1484, %v2012
  %v2242 = vadd.f32 %v1485, %v2014
  %v2243 = vadd.f32 %v1486, %v2017
  %v2244 = vadd.f32 %v1487, %v2019
  %v2245 = vadd.f32 %v1488, %v2021
  %v2246 = vadd.f32 %v1489, %v2024
  %v2247 = vadd.f32 %v1490, %v2026
  %v2248 = vadd.f32 %v1491, %v2028
  %v2249 = vadd.f32 %v1492, %v2031
  %v2250 = vadd.f32 %v1493, %v2033
  %v2251 = vadd.f32 %v1494, %v2035
  %v2252 = vperm.slane %v189, 1
  %v2253 = vmul.f32 %v35, %v2252
  %v2254 = vmul.f32 %v36, %v2252
  %v2255 = vmul.f32 %v37, %v2252
  %v2256 = vmul.f32 %v38, %v2252
  %v2257 = vmul.f32 %v39, %v2252
  %v2258 = vmul.f32 %v40, %v2252
  %v2259 = vmul.f32 %v41, %v2252
  %v2260 = vmul.f32 %v42, %v2252
  %v2261 = vmul.f32 %v43, %v2252
  %v2262 = vmul.f32 %v44, %v2252
  %v2263 = vmul.f32 %v45, %v2252
  %v2264 = vmul.f32 %v46, %v2252
  %v2265 = vmul.f32 %v47, %v2252
  %v2266 = vmul.f32 %v48, %v2252
  %v2267 = vmul.f32 %v49, %v2252
  %v2268 = vmul.f32 %v50, %v2252
  %v2269 = vmul.f32 %v51, %v2252
  %v2270 = vmul.f32 %v52, %v2252
  %v2271 = vmul.f32 %v53, %v2252
  %v2272 = vmul.f32 %v54, %v2252
  %v2273 = vmul.f32 %v55, %v2252
  %v2274 = vmul.f32 %v56, %v2252
  %v2275 = vmul.f32 %v57, %v2252
  %v2276 = vmul.f32 %v58, %v2252
  %v2277 = vmul.f32 %v59, %v2252
  %v2278 = vmul.f32 %v60, %v2252
  %v2279 = vmul.f32 %v61, %v2252
  %v2280 = vmul.f32 %v62, %v2252
  %v2281 = vmul.f32 %v63, %v2252
  %v2282 = vmul.f32 %v64, %v2252
  %v2283 = vmul.f32 %v65, %v2252
  %v2284 = vmul.f32 %v66, %v2252
  %v2285 = vmul.f32 %v67, %v2252
  %v2286 = vmul.f32 %v68, %v2252
  %v2287 = vmul.f32 %v69, %v2252
  %v2288 = vmul.f32 %v70, %v2252
  %v2289 = vmul.f32 %v71, %v2252
  %v2290 = vmul.f32 %v72, %v2252
  %v2291 = vmul.f32 %v73, %v2252
  %v2292 = vmul.f32 %v74, %v2252
  %v2293 = vmul.f32 %v75, %v2252
  %v2294 = vmul.f32 %v76, %v2252
  %v2295 = vmul.f32 %v77, %v2252
  %v2296 = vmul.f32 %v78, %v2252
  %v2297 = vmul.f32 %v79, %v2252
  %v2298 = vmul.f32 %v80, %v2252
  %v2299 = vmul.f32 %v81, %v2252
  %v2300 = vmul.f32 %v82, %v2252
  %v2301 = vmul.f32 %v83, %v2252
  %v2302 = vmul.f32 %v84, %v2252
  %v2303 = vmul.f32 %v85, %v2252
  %v2304 = vmul.f32 %v86, %v2252
  %v2305 = vmul.f32 %v87, %v2252
  %v2306 = vmul.f32 %v88, %v2252
  %v2307 = vmul.f32 %v89, %v2252
  %v2308 = vmul.f32 %v90, %v2252
  %v2309 = vmul.f32 %v91, %v2252
  %v2310 = vmul.f32 %v92, %v2252
  %v2311 = vmul.f32 %v93, %v2252
  %v2312 = vmul.f32 %v94, %v2252
  %v2313 = vmul.f32 %v95, %v2252
  %v2314 = vmul.f32 %v96, %v2252
  %v2315 = vmul.f32 %v97, %v2252
  %v2316 = vmul.f32 %v98, %v2252
  %v2317 = vmul.f32 %v99, %v2252
  %v2318 = vmul.f32 %v100, %v2252
  %v2319 = vmul.f32 %v101, %v2252
  %v2320 = vmul.f32 %v102, %v2252
  %v2321 = vmul.f32 %v103, %v2252
  %v2322 = vmul.f32 %v104, %v2252
  %v2323 = vmul.f32 %v105, %v2252
  %v2324 = vmul.f32 %v106, %v2252
  %v2325 = vmul.f32 %v115, %v2252
  %v2326 = vmul.f32 %v116, %v2252
  %v2327 = vmul.f32 %v117, %v2252
  %v2328 = vmul.f32 %v118, %v2252
  %v2329 = vmul.f32 %v119, %v2252
  %v2330 = vmul.f32 %v120, %v2252
  %v2331 = vmul.f32 %v121, %v2252
  %v2332 = vmul.f32 %v122, %v2252
  %v2333 = vmul.f32 %v123, %v2252
  %v2334 = vmul.f32 %v124, %v2252
  %v2335 = vmul.f32 %v125, %v2252
  %v2336 = vmul.f32 %v126, %v2252
  %v2337 = vmul.f32 %v127, %v2252
  %v2338 = vmul.f32 %v128, %v2252
  %v2339 = vmul.f32 %v129, %v2252
  %v2340 = vmul.f32 %v130, %v2252
  %v2341 = vmul.f32 %v131, %v2252
  %v2342 = vmul.f32 %v132, %v2252
  %v2343 = vmul.f32 %v133, %v2252
  %v2344 = vmul.f32 %v134, %v2252
  %v2345 = vmul.f32 %v135, %v2252
  %v2346 = vmul.f32 %v136, %v2252
  %v2347 = vmul.f32 %v137, %v2252
  %v2348 = vmul.f32 %v138, %v2252
  %v2349 = vmul.f32 %v139, %v2252
  %v2350 = vmul.f32 %v140, %v2252
  %v2351 = vmul.f32 %v141, %v2252
  %v2352 = vmul.f32 %v142, %v2252
  %v2353 = vmul.f32 %v143, %v2252
  %v2354 = vmul.f32 %v144, %v2252
  %v2355 = vmul.f32 %v145, %v2252
  %v2356 = vmul.f32 %v146, %v2252
  %v2357 = vmul.f32 %v147, %v2252
  %v2358 = vmul.f32 %v148, %v2252
  %v2359 = vmul.f32 %v149, %v2252
  %v2360 = vmul.f32 %v150, %v2252
  %v2361 = vmul.f32 %v151, %v2252
  %v2362 = vmul.f32 %v152, %v2252
  %v2363 = vmul.f32 %v153, %v2252
  %v2364 = vmul.f32 %v154, %v2252
  %v2365 = vmul.f32 %v155, %v2252
  %v2366 = vmul.f32 %v156, %v2252
  %v2367 = vmul.f32 %v157, %v2252
  %v2368 = vmul.f32 %v158, %v2252
  %v2369 = vmul.f32 %v159, %v2252
  %v2370 = vmul.f32 %v160, %v2252
  %v2371 = vmul.f32 %v161, %v2252
  %v2372 = vmul.f32 %v162, %v2252
  %v2373 = vmul.f32 %v163, %v2252
  %v2374 = vmul.f32 %v164, %v2252
  %v2375 = vmul.f32 %v165, %v2252
  %v2376 = vmul.f32 %v166, %v2252
  %v2377 = vmul.f32 %v167, %v2252
  %v2378 = vmul.f32 %v168, %v2252
  %v2379 = vmul.f32 %v169, %v2252
  %v2380 = vmul.f32 %v170, %v2252
  %v2381 = vmul.f32 %v171, %v2252
  %v2382 = vmul.f32 %v172, %v2252
  %v2383 = vmul.f32 %v173, %v2252
  %v2384 = vmul.f32 %v174, %v2252
  %v2385 = vmul.f32 %v175, %v2252
  %v2386 = vmul.f32 %v176, %v2252
  %v2387 = vmul.f32 %v177, %v2252
  %v2388 = vmul.f32 %v178, %v2252
  %v2389 = vmul.f32 %v179, %v2252
  %v2390 = vmul.f32 %v180, %v2252
  %v2391 = vmul.f32 %v181, %v2252
  %v2392 = vmul.f32 %v182, %v2252
  %v2393 = vmul.f32 %v183, %v2252
  %v2394 = vmul.f32 %v184, %v2252
  %v2395 = vmul.f32 %v185, %v2252
  %v2396 = vmul.f32 %v186, %v2252
  %v2541 = vrot.slane %v2253, 1
  %v2542 = vrot.slane %v2254, 1
  %v2543 = vsel %vm1026, %v2541, %v2542
  %v2544 = vrot.slane %v2255, 1
  %v2545 = vsel %vm1026, %v2542, %v2544
  %v2546 = vrot.slane %v2256, 1
  %v2547 = vsel %vm1026, %v2544, %v2546
  %v2548 = vrot.slane %v2257, 1
  %v2549 = vrot.slane %v2258, 1
  %v2550 = vsel %vm1026, %v2548, %v2549
  %v2551 = vrot.slane %v2259, 1
  %v2552 = vsel %vm1026, %v2549, %v2551
  %v2553 = vrot.slane %v2260, 1
  %v2554 = vsel %vm1026, %v2551, %v2553
  %v2555 = vrot.slane %v2261, 1
  %v2556 = vrot.slane %v2262, 1
  %v2557 = vsel %vm1026, %v2555, %v2556
  %v2558 = vrot.slane %v2263, 1
  %v2559 = vsel %vm1026, %v2556, %v2558
  %v2560 = vrot.slane %v2264, 1
  %v2561 = vsel %vm1026, %v2558, %v2560
  %v2562 = vrot.slane %v2265, 1
  %v2563 = vrot.slane %v2266, 1
  %v2564 = vsel %vm1026, %v2562, %v2563
  %v2565 = vrot.slane %v2267, 1
  %v2566 = vsel %vm1026, %v2563, %v2565
  %v2567 = vrot.slane %v2268, 1
  %v2568 = vsel %vm1026, %v2565, %v2567
  %v2569 = vrot.slane %v2269, 1
  %v2570 = vrot.slane %v2270, 1
  %v2571 = vsel %vm1026, %v2569, %v2570
  %v2572 = vrot.slane %v2271, 1
  %v2573 = vsel %vm1026, %v2570, %v2572
  %v2574 = vrot.slane %v2272, 1
  %v2575 = vsel %vm1026, %v2572, %v2574
  %v2576 = vrot.slane %v2273, 1
  %v2577 = vrot.slane %v2274, 1
  %v2578 = vsel %vm1026, %v2576, %v2577
  %v2579 = vrot.slane %v2275, 1
  %v2580 = vsel %vm1026, %v2577, %v2579
  %v2581 = vrot.slane %v2276, 1
  %v2582 = vsel %vm1026, %v2579, %v2581
  %v2583 = vrot.slane %v2277, 1
  %v2584 = vrot.slane %v2278, 1
  %v2585 = vsel %vm1026, %v2583, %v2584
  %v2586 = vrot.slane %v2279, 1
  %v2587 = vsel %vm1026, %v2584, %v2586
  %v2588 = vrot.slane %v2280, 1
  %v2589 = vsel %vm1026, %v2586, %v2588
  %v2590 = vrot.slane %v2281, 1
  %v2591 = vrot.slane %v2282, 1
  %v2592 = vsel %vm1026, %v2590, %v2591
  %v2593 = vrot.slane %v2283, 1
  %v2594 = vsel %vm1026, %v2591, %v2593
  %v2595 = vrot.slane %v2284, 1
  %v2596 = vsel %vm1026, %v2593, %v2595
  %v2597 = vrot.slane %v2285, 1
  %v2598 = vrot.slane %v2286, 1
  %v2599 = vsel %vm1026, %v2597, %v2598
  %v2600 = vrot.slane %v2287, 1
  %v2601 = vsel %vm1026, %v2598, %v2600
  %v2602 = vrot.slane %v2288, 1
  %v2603 = vsel %vm1026, %v2600, %v2602
  %v2604 = vrot.slane %v2289, 1
  %v2605 = vrot.slane %v2290, 1
  %v2606 = vsel %vm1026, %v2604, %v2605
  %v2607 = vrot.slane %v2291, 1
  %v2608 = vsel %vm1026, %v2605, %v2607
  %v2609 = vrot.slane %v2292, 1
  %v2610 = vsel %vm1026, %v2607, %v2609
  %v2611 = vrot.slane %v2293, 1
  %v2612 = vrot.slane %v2294, 1
  %v2613 = vsel %vm1026, %v2611, %v2612
  %v2614 = vrot.slane %v2295, 1
  %v2615 = vsel %vm1026, %v2612, %v2614
  %v2616 = vrot.slane %v2296, 1
  %v2617 = vsel %vm1026, %v2614, %v2616
  %v2618 = vrot.slane %v2297, 1
  %v2619 = vrot.slane %v2298, 1
  %v2620 = vsel %vm1026, %v2618, %v2619
  %v2621 = vrot.slane %v2299, 1
  %v2622 = vsel %vm1026, %v2619, %v2621
  %v2623 = vrot.slane %v2300, 1
  %v2624 = vsel %vm1026, %v2621, %v2623
  %v2625 = vrot.slane %v2301, 1
  %v2626 = vrot.slane %v2302, 1
  %v2627 = vsel %vm1026, %v2625, %v2626
  %v2628 = vrot.slane %v2303, 1
  %v2629 = vsel %vm1026, %v2626, %v2628
  %v2630 = vrot.slane %v2304, 1
  %v2631 = vsel %vm1026, %v2628, %v2630
  %v2632 = vrot.slane %v2305, 1
  %v2633 = vrot.slane %v2306, 1
  %v2634 = vsel %vm1026, %v2632, %v2633
  %v2635 = vrot.slane %v2307, 1
  %v2636 = vsel %vm1026, %v2633, %v2635
  %v2637 = vrot.slane %v2308, 1
  %v2638 = vsel %vm1026, %v2635, %v2637
  %v2639 = vrot.slane %v2309, 1
  %v2640 = vrot.slane %v2310, 1
  %v2641 = vsel %vm1026, %v2639, %v2640
  %v2642 = vrot.slane %v2311, 1
  %v2643 = vsel %vm1026, %v2640, %v2642
  %v2644 = vrot.slane %v2312, 1
  %v2645 = vsel %vm1026, %v2642, %v2644
  %v2646 = vrot.slane %v2313, 1
  %v2647 = vrot.slane %v2314, 1
  %v2648 = vsel %vm1026, %v2646, %v2647
  %v2649 = vrot.slane %v2315, 1
  %v2650 = vsel %vm1026, %v2647, %v2649
  %v2651 = vrot.slane %v2316, 1
  %v2652 = vsel %vm1026, %v2649, %v2651
  %v2653 = vrot.slane %v2317, 1
  %v2654 = vrot.slane %v2318, 1
  %v2655 = vsel %vm1026, %v2653, %v2654
  %v2656 = vrot.slane %v2319, 1
  %v2657 = vsel %vm1026, %v2654, %v2656
  %v2658 = vrot.slane %v2320, 1
  %v2659 = vsel %vm1026, %v2656, %v2658
  %v2660 = vrot.slane %v2321, 1
  %v2661 = vrot.slane %v2322, 1
  %v2662 = vsel %vm1026, %v2660, %v2661
  %v2663 = vrot.slane %v2323, 1
  %v2664 = vsel %vm1026, %v2661, %v2663
  %v2665 = vrot.slane %v2324, 1
  %v2666 = vsel %vm1026, %v2663, %v2665
  %v2667 = vrot.slane %v2325, 1
  %v2668 = vrot.slane %v2326, 1
  %v2669 = vsel %vm1026, %v2667, %v2668
  %v2670 = vrot.slane %v2327, 1
  %v2671 = vsel %vm1026, %v2668, %v2670
  %v2672 = vrot.slane %v2328, 1
  %v2673 = vsel %vm1026, %v2670, %v2672
  %v2674 = vrot.slane %v2329, 1
  %v2675 = vrot.slane %v2330, 1
  %v2676 = vsel %vm1026, %v2674, %v2675
  %v2677 = vrot.slane %v2331, 1
  %v2678 = vsel %vm1026, %v2675, %v2677
  %v2679 = vrot.slane %v2332, 1
  %v2680 = vsel %vm1026, %v2677, %v2679
  %v2681 = vrot.slane %v2333, 1
  %v2682 = vrot.slane %v2334, 1
  %v2683 = vsel %vm1026, %v2681, %v2682
  %v2684 = vrot.slane %v2335, 1
  %v2685 = vsel %vm1026, %v2682, %v2684
  %v2686 = vrot.slane %v2336, 1
  %v2687 = vsel %vm1026, %v2684, %v2686
  %v2688 = vrot.slane %v2337, 1
  %v2689 = vrot.slane %v2338, 1
  %v2690 = vsel %vm1026, %v2688, %v2689
  %v2691 = vrot.slane %v2339, 1
  %v2692 = vsel %vm1026, %v2689, %v2691
  %v2693 = vrot.slane %v2340, 1
  %v2694 = vsel %vm1026, %v2691, %v2693
  %v2695 = vrot.slane %v2341, 1
  %v2696 = vrot.slane %v2342, 1
  %v2697 = vsel %vm1026, %v2695, %v2696
  %v2698 = vrot.slane %v2343, 1
  %v2699 = vsel %vm1026, %v2696, %v2698
  %v2700 = vrot.slane %v2344, 1
  %v2701 = vsel %vm1026, %v2698, %v2700
  %v2702 = vrot.slane %v2345, 1
  %v2703 = vrot.slane %v2346, 1
  %v2704 = vsel %vm1026, %v2702, %v2703
  %v2705 = vrot.slane %v2347, 1
  %v2706 = vsel %vm1026, %v2703, %v2705
  %v2707 = vrot.slane %v2348, 1
  %v2708 = vsel %vm1026, %v2705, %v2707
  %v2709 = vrot.slane %v2349, 1
  %v2710 = vrot.slane %v2350, 1
  %v2711 = vsel %vm1026, %v2709, %v2710
  %v2712 = vrot.slane %v2351, 1
  %v2713 = vsel %vm1026, %v2710, %v2712
  %v2714 = vrot.slane %v2352, 1
  %v2715 = vsel %vm1026, %v2712, %v2714
  %v2716 = vrot.slane %v2353, 1
  %v2717 = vrot.slane %v2354, 1
  %v2718 = vsel %vm1026, %v2716, %v2717
  %v2719 = vrot.slane %v2355, 1
  %v2720 = vsel %vm1026, %v2717, %v2719
  %v2721 = vrot.slane %v2356, 1
  %v2722 = vsel %vm1026, %v2719, %v2721
  %v2723 = vrot.slane %v2357, 1
  %v2724 = vrot.slane %v2358, 1
  %v2725 = vsel %vm1026, %v2723, %v2724
  %v2726 = vrot.slane %v2359, 1
  %v2727 = vsel %vm1026, %v2724, %v2726
  %v2728 = vrot.slane %v2360, 1
  %v2729 = vsel %vm1026, %v2726, %v2728
  %v2730 = vrot.slane %v2361, 1
  %v2731 = vrot.slane %v2362, 1
  %v2732 = vsel %vm1026, %v2730, %v2731
  %v2733 = vrot.slane %v2363, 1
  %v2734 = vsel %vm1026, %v2731, %v2733
  %v2735 = vrot.slane %v2364, 1
  %v2736 = vsel %vm1026, %v2733, %v2735
  %v2737 = vrot.slane %v2365, 1
  %v2738 = vrot.slane %v2366, 1
  %v2739 = vsel %vm1026, %v2737, %v2738
  %v2740 = vrot.slane %v2367, 1
  %v2741 = vsel %vm1026, %v2738, %v2740
  %v2742 = vrot.slane %v2368, 1
  %v2743 = vsel %vm1026, %v2740, %v2742
  %v2744 = vrot.slane %v2369, 1
  %v2745 = vrot.slane %v2370, 1
  %v2746 = vsel %vm1026, %v2744, %v2745
  %v2747 = vrot.slane %v2371, 1
  %v2748 = vsel %vm1026, %v2745, %v2747
  %v2749 = vrot.slane %v2372, 1
  %v2750 = vsel %vm1026, %v2747, %v2749
  %v2751 = vrot.slane %v2373, 1
  %v2752 = vrot.slane %v2374, 1
  %v2753 = vsel %vm1026, %v2751, %v2752
  %v2754 = vrot.slane %v2375, 1
  %v2755 = vsel %vm1026, %v2752, %v2754
  %v2756 = vrot.slane %v2376, 1
  %v2757 = vsel %vm1026, %v2754, %v2756
  %v2758 = vrot.slane %v2377, 1
  %v2759 = vrot.slane %v2378, 1
  %v2760 = vsel %vm1026, %v2758, %v2759
  %v2761 = vrot.slane %v2379, 1
  %v2762 = vsel %vm1026, %v2759, %v2761
  %v2763 = vrot.slane %v2380, 1
  %v2764 = vsel %vm1026, %v2761, %v2763
  %v2765 = vrot.slane %v2381, 1
  %v2766 = vrot.slane %v2382, 1
  %v2767 = vsel %vm1026, %v2765, %v2766
  %v2768 = vrot.slane %v2383, 1
  %v2769 = vsel %vm1026, %v2766, %v2768
  %v2770 = vrot.slane %v2384, 1
  %v2771 = vsel %vm1026, %v2768, %v2770
  %v2772 = vrot.slane %v2385, 1
  %v2773 = vrot.slane %v2386, 1
  %v2774 = vsel %vm1026, %v2772, %v2773
  %v2775 = vrot.slane %v2387, 1
  %v2776 = vsel %vm1026, %v2773, %v2775
  %v2777 = vrot.slane %v2388, 1
  %v2778 = vsel %vm1026, %v2775, %v2777
  %v2779 = vrot.slane %v2389, 1
  %v2780 = vrot.slane %v2390, 1
  %v2781 = vsel %vm1026, %v2779, %v2780
  %v2782 = vrot.slane %v2391, 1
  %v2783 = vsel %vm1026, %v2780, %v2782
  %v2784 = vrot.slane %v2392, 1
  %v2785 = vsel %vm1026, %v2782, %v2784
  %v2786 = vrot.slane %v2393, 1
  %v2787 = vrot.slane %v2394, 1
  %v2788 = vsel %vm1026, %v2786, %v2787
  %v2789 = vrot.slane %v2395, 1
  %v2790 = vsel %vm1026, %v2787, %v2789
  %v2791 = vrot.slane %v2396, 1
  %v2792 = vsel %vm1026, %v2789, %v2791
  %v2901 = vadd.f32 %v2144, %v2543
  %v2902 = vadd.f32 %v2145, %v2545
  %v2903 = vadd.f32 %v2146, %v2547
  %v2904 = vadd.f32 %v2147, %v2550
  %v2905 = vadd.f32 %v2148, %v2552
  %v2906 = vadd.f32 %v2149, %v2554
  %v2907 = vadd.f32 %v2150, %v2557
  %v2908 = vadd.f32 %v2151, %v2559
  %v2909 = vadd.f32 %v2152, %v2561
  %v2910 = vadd.f32 %v2153, %v2564
  %v2911 = vadd.f32 %v2154, %v2566
  %v2912 = vadd.f32 %v2155, %v2568
  %v2913 = vadd.f32 %v2156, %v2571
  %v2914 = vadd.f32 %v2157, %v2573
  %v2915 = vadd.f32 %v2158, %v2575
  %v2916 = vadd.f32 %v2159, %v2578
  %v2917 = vadd.f32 %v2160, %v2580
  %v2918 = vadd.f32 %v2161, %v2582
  %v2919 = vadd.f32 %v2162, %v2585
  %v2920 = vadd.f32 %v2163, %v2587
  %v2921 = vadd.f32 %v2164, %v2589
  %v2922 = vadd.f32 %v2165, %v2592
  %v2923 = vadd.f32 %v2166, %v2594
  %v2924 = vadd.f32 %v2167, %v2596
  %v2925 = vadd.f32 %v2168, %v2599
  %v2926 = vadd.f32 %v2169, %v2601
  %v2927 = vadd.f32 %v2170, %v2603
  %v2928 = vadd.f32 %v2171, %v2606
  %v2929 = vadd.f32 %v2172, %v2608
  %v2930 = vadd.f32 %v2173, %v2610
  %v2931 = vadd.f32 %v2174, %v2613
  %v2932 = vadd.f32 %v2175, %v2615
  %v2933 = vadd.f32 %v2176, %v2617
  %v2934 = vadd.f32 %v2177, %v2620
  %v2935 = vadd.f32 %v2178, %v2622
  %v2936 = vadd.f32 %v2179, %v2624
  %v2937 = vadd.f32 %v2180, %v2627
  %v2938 = vadd.f32 %v2181, %v2629
  %v2939 = vadd.f32 %v2182, %v2631
  %v2940 = vadd.f32 %v2183, %v2634
  %v2941 = vadd.f32 %v2184, %v2636
  %v2942 = vadd.f32 %v2185, %v2638
  %v2943 = vadd.f32 %v2186, %v2641
  %v2944 = vadd.f32 %v2187, %v2643
  %v2945 = vadd.f32 %v2188, %v2645
  %v2946 = vadd.f32 %v2189, %v2648
  %v2947 = vadd.f32 %v2190, %v2650
  %v2948 = vadd.f32 %v2191, %v2652
  %v2949 = vadd.f32 %v2192, %v2655
  %v2950 = vadd.f32 %v2193, %v2657
  %v2951 = vadd.f32 %v2194, %v2659
  %v2952 = vadd.f32 %v2195, %v2662
  %v2953 = vadd.f32 %v2196, %v2664
  %v2954 = vadd.f32 %v2197, %v2666
  %v2955 = vadd.f32 %v2198, %v2669
  %v2956 = vadd.f32 %v2199, %v2671
  %v2957 = vadd.f32 %v2200, %v2673
  %v2958 = vadd.f32 %v2201, %v2676
  %v2959 = vadd.f32 %v2202, %v2678
  %v2960 = vadd.f32 %v2203, %v2680
  %v2961 = vadd.f32 %v2204, %v2683
  %v2962 = vadd.f32 %v2205, %v2685
  %v2963 = vadd.f32 %v2206, %v2687
  %v2964 = vadd.f32 %v2207, %v2690
  %v2965 = vadd.f32 %v2208, %v2692
  %v2966 = vadd.f32 %v2209, %v2694
  %v2967 = vadd.f32 %v2210, %v2697
  %v2968 = vadd.f32 %v2211, %v2699
  %v2969 = vadd.f32 %v2212, %v2701
  %v2970 = vadd.f32 %v2213, %v2704
  %v2971 = vadd.f32 %v2214, %v2706
  %v2972 = vadd.f32 %v2215, %v2708
  %v2973 = vadd.f32 %v2216, %v2711
  %v2974 = vadd.f32 %v2217, %v2713
  %v2975 = vadd.f32 %v2218, %v2715
  %v2976 = vadd.f32 %v2219, %v2718
  %v2977 = vadd.f32 %v2220, %v2720
  %v2978 = vadd.f32 %v2221, %v2722
  %v2979 = vadd.f32 %v2222, %v2725
  %v2980 = vadd.f32 %v2223, %v2727
  %v2981 = vadd.f32 %v2224, %v2729
  %v2982 = vadd.f32 %v2225, %v2732
  %v2983 = vadd.f32 %v2226, %v2734
  %v2984 = vadd.f32 %v2227, %v2736
  %v2985 = vadd.f32 %v2228, %v2739
  %v2986 = vadd.f32 %v2229, %v2741
  %v2987 = vadd.f32 %v2230, %v2743
  %v2988 = vadd.f32 %v2231, %v2746
  %v2989 = vadd.f32 %v2232, %v2748
  %v2990 = vadd.f32 %v2233, %v2750
  %v2991 = vadd.f32 %v2234, %v2753
  %v2992 = vadd.f32 %v2235, %v2755
  %v2993 = vadd.f32 %v2236, %v2757
  %v2994 = vadd.f32 %v2237, %v2760
  %v2995 = vadd.f32 %v2238, %v2762
  %v2996 = vadd.f32 %v2239, %v2764
  %v2997 = vadd.f32 %v2240, %v2767
  %v2998 = vadd.f32 %v2241, %v2769
  %v2999 = vadd.f32 %v2242, %v2771
  %v3000 = vadd.f32 %v2243, %v2774
  %v3001 = vadd.f32 %v2244, %v2776
  %v3002 = vadd.f32 %v2245, %v2778
  %v3003 = vadd.f32 %v2246, %v2781
  %v3004 = vadd.f32 %v2247, %v2783
  %v3005 = vadd.f32 %v2248, %v2785
  %v3006 = vadd.f32 %v2249, %v2788
  %v3007 = vadd.f32 %v2250, %v2790
  %v3008 = vadd.f32 %v2251, %v2792
  %v3009 = vperm.slane %v187, 2
  %v3010 = vmul.f32 %v27, %v3009
  %v3011 = vmul.f32 %v28, %v3009
  %v3012 = vmul.f32 %v29, %v3009
  %v3013 = vmul.f32 %v30, %v3009
  %v3014 = vmul.f32 %v31, %v3009
  %v3015 = vmul.f32 %v32, %v3009
  %v3016 = vmul.f32 %v33, %v3009
  %v3017 = vmul.f32 %v34, %v3009
  %v3018 = vmul.f32 %v35, %v3009
  %v3019 = vmul.f32 %v36, %v3009
  %v3020 = vmul.f32 %v37, %v3009
  %v3021 = vmul.f32 %v38, %v3009
  %v3022 = vmul.f32 %v39, %v3009
  %v3023 = vmul.f32 %v40, %v3009
  %v3024 = vmul.f32 %v41, %v3009
  %v3025 = vmul.f32 %v42, %v3009
  %v3026 = vmul.f32 %v43, %v3009
  %v3027 = vmul.f32 %v44, %v3009
  %v3028 = vmul.f32 %v45, %v3009
  %v3029 = vmul.f32 %v46, %v3009
  %v3030 = vmul.f32 %v47, %v3009
  %v3031 = vmul.f32 %v48, %v3009
  %v3032 = vmul.f32 %v49, %v3009
  %v3033 = vmul.f32 %v50, %v3009
  %v3034 = vmul.f32 %v51, %v3009
  %v3035 = vmul.f32 %v52, %v3009
  %v3036 = vmul.f32 %v53, %v3009
  %v3037 = vmul.f32 %v54, %v3009
  %v3038 = vmul.f32 %v55, %v3009
  %v3039 = vmul.f32 %v56, %v3009
  %v3040 = vmul.f32 %v57, %v3009
  %v3041 = vmul.f32 %v58, %v3009
  %v3042 = vmul.f32 %v59, %v3009
  %v3043 = vmul.f32 %v60, %v3009
  %v3044 = vmul.f32 %v61, %v3009
  %v3045 = vmul.f32 %v62, %v3009
  %v3046 = vmul.f32 %v63, %v3009
  %v3047 = vmul.f32 %v64, %v3009
  %v3048 = vmul.f32 %v65, %v3009
  %v3049 = vmul.f32 %v66, %v3009
  %v3050 = vmul.f32 %v67, %v3009
  %v3051 = vmul.f32 %v68, %v3009
  %v3052 = vmul.f32 %v69, %v3009
  %v3053 = vmul.f32 %v70, %v3009
  %v3054 = vmul.f32 %v71, %v3009
  %v3055 = vmul.f32 %v72, %v3009
  %v3056 = vmul.f32 %v73, %v3009
  %v3057 = vmul.f32 %v74, %v3009
  %v3058 = vmul.f32 %v75, %v3009
  %v3059 = vmul.f32 %v76, %v3009
  %v3060 = vmul.f32 %v77, %v3009
  %v3061 = vmul.f32 %v78, %v3009
  %v3062 = vmul.f32 %v79, %v3009
  %v3063 = vmul.f32 %v80, %v3009
  %v3064 = vmul.f32 %v81, %v3009
  %v3065 = vmul.f32 %v82, %v3009
  %v3066 = vmul.f32 %v83, %v3009
  %v3067 = vmul.f32 %v84, %v3009
  %v3068 = vmul.f32 %v85, %v3009
  %v3069 = vmul.f32 %v86, %v3009
  %v3070 = vmul.f32 %v87, %v3009
  %v3071 = vmul.f32 %v88, %v3009
  %v3072 = vmul.f32 %v89, %v3009
  %v3073 = vmul.f32 %v90, %v3009
  %v3074 = vmul.f32 %v91, %v3009
  %v3075 = vmul.f32 %v92, %v3009
  %v3076 = vmul.f32 %v93, %v3009
  %v3077 = vmul.f32 %v94, %v3009
  %v3078 = vmul.f32 %v95, %v3009
  %v3079 = vmul.f32 %v96, %v3009
  %v3080 = vmul.f32 %v97, %v3009
  %v3081 = vmul.f32 %v98, %v3009
  %v3082 = vmul.f32 %v107, %v3009
  %v3083 = vmul.f32 %v108, %v3009
  %v3084 = vmul.f32 %v109, %v3009
  %v3085 = vmul.f32 %v110, %v3009
  %v3086 = vmul.f32 %v111, %v3009
  %v3087 = vmul.f32 %v112, %v3009
  %v3088 = vmul.f32 %v113, %v3009
  %v3089 = vmul.f32 %v114, %v3009
  %v3090 = vmul.f32 %v115, %v3009
  %v3091 = vmul.f32 %v116, %v3009
  %v3092 = vmul.f32 %v117, %v3009
  %v3093 = vmul.f32 %v118, %v3009
  %v3094 = vmul.f32 %v119, %v3009
  %v3095 = vmul.f32 %v120, %v3009
  %v3096 = vmul.f32 %v121, %v3009
  %v3097 = vmul.f32 %v122, %v3009
  %v3098 = vmul.f32 %v123, %v3009
  %v3099 = vmul.f32 %v124, %v3009
  %v3100 = vmul.f32 %v125, %v3009
  %v3101 = vmul.f32 %v126, %v3009
  %v3102 = vmul.f32 %v127, %v3009
  %v3103 = vmul.f32 %v128, %v3009
  %v3104 = vmul.f32 %v129, %v3009
  %v3105 = vmul.f32 %v130, %v3009
  %v3106 = vmul.f32 %v131, %v3009
  %v3107 = vmul.f32 %v132, %v3009
  %v3108 = vmul.f32 %v133, %v3009
  %v3109 = vmul.f32 %v134, %v3009
  %v3110 = vmul.f32 %v135, %v3009
  %v3111 = vmul.f32 %v136, %v3009
  %v3112 = vmul.f32 %v137, %v3009
  %v3113 = vmul.f32 %v138, %v3009
  %v3114 = vmul.f32 %v139, %v3009
  %v3115 = vmul.f32 %v140, %v3009
  %v3116 = vmul.f32 %v141, %v3009
  %v3117 = vmul.f32 %v142, %v3009
  %v3118 = vmul.f32 %v143, %v3009
  %v3119 = vmul.f32 %v144, %v3009
  %v3120 = vmul.f32 %v145, %v3009
  %v3121 = vmul.f32 %v146, %v3009
  %v3122 = vmul.f32 %v147, %v3009
  %v3123 = vmul.f32 %v148, %v3009
  %v3124 = vmul.f32 %v149, %v3009
  %v3125 = vmul.f32 %v150, %v3009
  %v3126 = vmul.f32 %v151, %v3009
  %v3127 = vmul.f32 %v152, %v3009
  %v3128 = vmul.f32 %v153, %v3009
  %v3129 = vmul.f32 %v154, %v3009
  %v3130 = vmul.f32 %v155, %v3009
  %v3131 = vmul.f32 %v156, %v3009
  %v3132 = vmul.f32 %v157, %v3009
  %v3133 = vmul.f32 %v158, %v3009
  %v3134 = vmul.f32 %v159, %v3009
  %v3135 = vmul.f32 %v160, %v3009
  %v3136 = vmul.f32 %v161, %v3009
  %v3137 = vmul.f32 %v162, %v3009
  %v3138 = vmul.f32 %v163, %v3009
  %v3139 = vmul.f32 %v164, %v3009
  %v3140 = vmul.f32 %v165, %v3009
  %v3141 = vmul.f32 %v166, %v3009
  %v3142 = vmul.f32 %v167, %v3009
  %v3143 = vmul.f32 %v168, %v3009
  %v3144 = vmul.f32 %v169, %v3009
  %v3145 = vmul.f32 %v170, %v3009
  %v3146 = vmul.f32 %v171, %v3009
  %v3147 = vmul.f32 %v172, %v3009
  %v3148 = vmul.f32 %v173, %v3009
  %v3149 = vmul.f32 %v174, %v3009
  %v3150 = vmul.f32 %v175, %v3009
  %v3151 = vmul.f32 %v176, %v3009
  %v3152 = vmul.f32 %v177, %v3009
  %v3153 = vmul.f32 %v178, %v3009
  %vm3298 = vcmask 1045504
  %v3299 = vrot.slane %v3010, 2
  %v3300 = vrot.slane %v3011, 2
  %v3301 = vsel %vm3298, %v3299, %v3300
  %v3302 = vrot.slane %v3012, 2
  %v3303 = vsel %vm3298, %v3300, %v3302
  %v3304 = vrot.slane %v3013, 2
  %v3305 = vsel %vm3298, %v3302, %v3304
  %v3306 = vrot.slane %v3014, 2
  %v3307 = vrot.slane %v3015, 2
  %v3308 = vsel %vm3298, %v3306, %v3307
  %v3309 = vrot.slane %v3016, 2
  %v3310 = vsel %vm3298, %v3307, %v3309
  %v3311 = vrot.slane %v3017, 2
  %v3312 = vsel %vm3298, %v3309, %v3311
  %v3313 = vrot.slane %v3018, 2
  %v3314 = vrot.slane %v3019, 2
  %v3315 = vsel %vm3298, %v3313, %v3314
  %v3316 = vrot.slane %v3020, 2
  %v3317 = vsel %vm3298, %v3314, %v3316
  %v3318 = vrot.slane %v3021, 2
  %v3319 = vsel %vm3298, %v3316, %v3318
  %v3320 = vrot.slane %v3022, 2
  %v3321 = vrot.slane %v3023, 2
  %v3322 = vsel %vm3298, %v3320, %v3321
  %v3323 = vrot.slane %v3024, 2
  %v3324 = vsel %vm3298, %v3321, %v3323
  %v3325 = vrot.slane %v3025, 2
  %v3326 = vsel %vm3298, %v3323, %v3325
  %v3327 = vrot.slane %v3026, 2
  %v3328 = vrot.slane %v3027, 2
  %v3329 = vsel %vm3298, %v3327, %v3328
  %v3330 = vrot.slane %v3028, 2
  %v3331 = vsel %vm3298, %v3328, %v3330
  %v3332 = vrot.slane %v3029, 2
  %v3333 = vsel %vm3298, %v3330, %v3332
  %v3334 = vrot.slane %v3030, 2
  %v3335 = vrot.slane %v3031, 2
  %v3336 = vsel %vm3298, %v3334, %v3335
  %v3337 = vrot.slane %v3032, 2
  %v3338 = vsel %vm3298, %v3335, %v3337
  %v3339 = vrot.slane %v3033, 2
  %v3340 = vsel %vm3298, %v3337, %v3339
  %v3341 = vrot.slane %v3034, 2
  %v3342 = vrot.slane %v3035, 2
  %v3343 = vsel %vm3298, %v3341, %v3342
  %v3344 = vrot.slane %v3036, 2
  %v3345 = vsel %vm3298, %v3342, %v3344
  %v3346 = vrot.slane %v3037, 2
  %v3347 = vsel %vm3298, %v3344, %v3346
  %v3348 = vrot.slane %v3038, 2
  %v3349 = vrot.slane %v3039, 2
  %v3350 = vsel %vm3298, %v3348, %v3349
  %v3351 = vrot.slane %v3040, 2
  %v3352 = vsel %vm3298, %v3349, %v3351
  %v3353 = vrot.slane %v3041, 2
  %v3354 = vsel %vm3298, %v3351, %v3353
  %v3355 = vrot.slane %v3042, 2
  %v3356 = vrot.slane %v3043, 2
  %v3357 = vsel %vm3298, %v3355, %v3356
  %v3358 = vrot.slane %v3044, 2
  %v3359 = vsel %vm3298, %v3356, %v3358
  %v3360 = vrot.slane %v3045, 2
  %v3361 = vsel %vm3298, %v3358, %v3360
  %v3362 = vrot.slane %v3046, 2
  %v3363 = vrot.slane %v3047, 2
  %v3364 = vsel %vm3298, %v3362, %v3363
  %v3365 = vrot.slane %v3048, 2
  %v3366 = vsel %vm3298, %v3363, %v3365
  %v3367 = vrot.slane %v3049, 2
  %v3368 = vsel %vm3298, %v3365, %v3367
  %v3369 = vrot.slane %v3050, 2
  %v3370 = vrot.slane %v3051, 2
  %v3371 = vsel %vm3298, %v3369, %v3370
  %v3372 = vrot.slane %v3052, 2
  %v3373 = vsel %vm3298, %v3370, %v3372
  %v3374 = vrot.slane %v3053, 2
  %v3375 = vsel %vm3298, %v3372, %v3374
  %v3376 = vrot.slane %v3054, 2
  %v3377 = vrot.slane %v3055, 2
  %v3378 = vsel %vm3298, %v3376, %v3377
  %v3379 = vrot.slane %v3056, 2
  %v3380 = vsel %vm3298, %v3377, %v3379
  %v3381 = vrot.slane %v3057, 2
  %v3382 = vsel %vm3298, %v3379, %v3381
  %v3383 = vrot.slane %v3058, 2
  %v3384 = vrot.slane %v3059, 2
  %v3385 = vsel %vm3298, %v3383, %v3384
  %v3386 = vrot.slane %v3060, 2
  %v3387 = vsel %vm3298, %v3384, %v3386
  %v3388 = vrot.slane %v3061, 2
  %v3389 = vsel %vm3298, %v3386, %v3388
  %v3390 = vrot.slane %v3062, 2
  %v3391 = vrot.slane %v3063, 2
  %v3392 = vsel %vm3298, %v3390, %v3391
  %v3393 = vrot.slane %v3064, 2
  %v3394 = vsel %vm3298, %v3391, %v3393
  %v3395 = vrot.slane %v3065, 2
  %v3396 = vsel %vm3298, %v3393, %v3395
  %v3397 = vrot.slane %v3066, 2
  %v3398 = vrot.slane %v3067, 2
  %v3399 = vsel %vm3298, %v3397, %v3398
  %v3400 = vrot.slane %v3068, 2
  %v3401 = vsel %vm3298, %v3398, %v3400
  %v3402 = vrot.slane %v3069, 2
  %v3403 = vsel %vm3298, %v3400, %v3402
  %v3404 = vrot.slane %v3070, 2
  %v3405 = vrot.slane %v3071, 2
  %v3406 = vsel %vm3298, %v3404, %v3405
  %v3407 = vrot.slane %v3072, 2
  %v3408 = vsel %vm3298, %v3405, %v3407
  %v3409 = vrot.slane %v3073, 2
  %v3410 = vsel %vm3298, %v3407, %v3409
  %v3411 = vrot.slane %v3074, 2
  %v3412 = vrot.slane %v3075, 2
  %v3413 = vsel %vm3298, %v3411, %v3412
  %v3414 = vrot.slane %v3076, 2
  %v3415 = vsel %vm3298, %v3412, %v3414
  %v3416 = vrot.slane %v3077, 2
  %v3417 = vsel %vm3298, %v3414, %v3416
  %v3418 = vrot.slane %v3078, 2
  %v3419 = vrot.slane %v3079, 2
  %v3420 = vsel %vm3298, %v3418, %v3419
  %v3421 = vrot.slane %v3080, 2
  %v3422 = vsel %vm3298, %v3419, %v3421
  %v3423 = vrot.slane %v3081, 2
  %v3424 = vsel %vm3298, %v3421, %v3423
  %v3425 = vrot.slane %v3082, 2
  %v3426 = vrot.slane %v3083, 2
  %v3427 = vsel %vm3298, %v3425, %v3426
  %v3428 = vrot.slane %v3084, 2
  %v3429 = vsel %vm3298, %v3426, %v3428
  %v3430 = vrot.slane %v3085, 2
  %v3431 = vsel %vm3298, %v3428, %v3430
  %v3432 = vrot.slane %v3086, 2
  %v3433 = vrot.slane %v3087, 2
  %v3434 = vsel %vm3298, %v3432, %v3433
  %v3435 = vrot.slane %v3088, 2
  %v3436 = vsel %vm3298, %v3433, %v3435
  %v3437 = vrot.slane %v3089, 2
  %v3438 = vsel %vm3298, %v3435, %v3437
  %v3439 = vrot.slane %v3090, 2
  %v3440 = vrot.slane %v3091, 2
  %v3441 = vsel %vm3298, %v3439, %v3440
  %v3442 = vrot.slane %v3092, 2
  %v3443 = vsel %vm3298, %v3440, %v3442
  %v3444 = vrot.slane %v3093, 2
  %v3445 = vsel %vm3298, %v3442, %v3444
  %v3446 = vrot.slane %v3094, 2
  %v3447 = vrot.slane %v3095, 2
  %v3448 = vsel %vm3298, %v3446, %v3447
  %v3449 = vrot.slane %v3096, 2
  %v3450 = vsel %vm3298, %v3447, %v3449
  %v3451 = vrot.slane %v3097, 2
  %v3452 = vsel %vm3298, %v3449, %v3451
  %v3453 = vrot.slane %v3098, 2
  %v3454 = vrot.slane %v3099, 2
  %v3455 = vsel %vm3298, %v3453, %v3454
  %v3456 = vrot.slane %v3100, 2
  %v3457 = vsel %vm3298, %v3454, %v3456
  %v3458 = vrot.slane %v3101, 2
  %v3459 = vsel %vm3298, %v3456, %v3458
  %v3460 = vrot.slane %v3102, 2
  %v3461 = vrot.slane %v3103, 2
  %v3462 = vsel %vm3298, %v3460, %v3461
  %v3463 = vrot.slane %v3104, 2
  %v3464 = vsel %vm3298, %v3461, %v3463
  %v3465 = vrot.slane %v3105, 2
  %v3466 = vsel %vm3298, %v3463, %v3465
  %v3467 = vrot.slane %v3106, 2
  %v3468 = vrot.slane %v3107, 2
  %v3469 = vsel %vm3298, %v3467, %v3468
  %v3470 = vrot.slane %v3108, 2
  %v3471 = vsel %vm3298, %v3468, %v3470
  %v3472 = vrot.slane %v3109, 2
  %v3473 = vsel %vm3298, %v3470, %v3472
  %v3474 = vrot.slane %v3110, 2
  %v3475 = vrot.slane %v3111, 2
  %v3476 = vsel %vm3298, %v3474, %v3475
  %v3477 = vrot.slane %v3112, 2
  %v3478 = vsel %vm3298, %v3475, %v3477
  %v3479 = vrot.slane %v3113, 2
  %v3480 = vsel %vm3298, %v3477, %v3479
  %v3481 = vrot.slane %v3114, 2
  %v3482 = vrot.slane %v3115, 2
  %v3483 = vsel %vm3298, %v3481, %v3482
  %v3484 = vrot.slane %v3116, 2
  %v3485 = vsel %vm3298, %v3482, %v3484
  %v3486 = vrot.slane %v3117, 2
  %v3487 = vsel %vm3298, %v3484, %v3486
  %v3488 = vrot.slane %v3118, 2
  %v3489 = vrot.slane %v3119, 2
  %v3490 = vsel %vm3298, %v3488, %v3489
  %v3491 = vrot.slane %v3120, 2
  %v3492 = vsel %vm3298, %v3489, %v3491
  %v3493 = vrot.slane %v3121, 2
  %v3494 = vsel %vm3298, %v3491, %v3493
  %v3495 = vrot.slane %v3122, 2
  %v3496 = vrot.slane %v3123, 2
  %v3497 = vsel %vm3298, %v3495, %v3496
  %v3498 = vrot.slane %v3124, 2
  %v3499 = vsel %vm3298, %v3496, %v3498
  %v3500 = vrot.slane %v3125, 2
  %v3501 = vsel %vm3298, %v3498, %v3500
  %v3502 = vrot.slane %v3126, 2
  %v3503 = vrot.slane %v3127, 2
  %v3504 = vsel %vm3298, %v3502, %v3503
  %v3505 = vrot.slane %v3128, 2
  %v3506 = vsel %vm3298, %v3503, %v3505
  %v3507 = vrot.slane %v3129, 2
  %v3508 = vsel %vm3298, %v3505, %v3507
  %v3509 = vrot.slane %v3130, 2
  %v3510 = vrot.slane %v3131, 2
  %v3511 = vsel %vm3298, %v3509, %v3510
  %v3512 = vrot.slane %v3132, 2
  %v3513 = vsel %vm3298, %v3510, %v3512
  %v3514 = vrot.slane %v3133, 2
  %v3515 = vsel %vm3298, %v3512, %v3514
  %v3516 = vrot.slane %v3134, 2
  %v3517 = vrot.slane %v3135, 2
  %v3518 = vsel %vm3298, %v3516, %v3517
  %v3519 = vrot.slane %v3136, 2
  %v3520 = vsel %vm3298, %v3517, %v3519
  %v3521 = vrot.slane %v3137, 2
  %v3522 = vsel %vm3298, %v3519, %v3521
  %v3523 = vrot.slane %v3138, 2
  %v3524 = vrot.slane %v3139, 2
  %v3525 = vsel %vm3298, %v3523, %v3524
  %v3526 = vrot.slane %v3140, 2
  %v3527 = vsel %vm3298, %v3524, %v3526
  %v3528 = vrot.slane %v3141, 2
  %v3529 = vsel %vm3298, %v3526, %v3528
  %v3530 = vrot.slane %v3142, 2
  %v3531 = vrot.slane %v3143, 2
  %v3532 = vsel %vm3298, %v3530, %v3531
  %v3533 = vrot.slane %v3144, 2
  %v3534 = vsel %vm3298, %v3531, %v3533
  %v3535 = vrot.slane %v3145, 2
  %v3536 = vsel %vm3298, %v3533, %v3535
  %v3537 = vrot.slane %v3146, 2
  %v3538 = vrot.slane %v3147, 2
  %v3539 = vsel %vm3298, %v3537, %v3538
  %v3540 = vrot.slane %v3148, 2
  %v3541 = vsel %vm3298, %v3538, %v3540
  %v3542 = vrot.slane %v3149, 2
  %v3543 = vsel %vm3298, %v3540, %v3542
  %v3544 = vrot.slane %v3150, 2
  %v3545 = vrot.slane %v3151, 2
  %v3546 = vsel %vm3298, %v3544, %v3545
  %v3547 = vrot.slane %v3152, 2
  %v3548 = vsel %vm3298, %v3545, %v3547
  %v3549 = vrot.slane %v3153, 2
  %v3550 = vsel %vm3298, %v3547, %v3549
  %v3659 = vadd.f32 %v2901, %v3301
  %v3660 = vadd.f32 %v2902, %v3303
  %v3661 = vadd.f32 %v2903, %v3305
  %v3662 = vadd.f32 %v2904, %v3308
  %v3663 = vadd.f32 %v2905, %v3310
  %v3664 = vadd.f32 %v2906, %v3312
  %v3665 = vadd.f32 %v2907, %v3315
  %v3666 = vadd.f32 %v2908, %v3317
  %v3667 = vadd.f32 %v2909, %v3319
  %v3668 = vadd.f32 %v2910, %v3322
  %v3669 = vadd.f32 %v2911, %v3324
  %v3670 = vadd.f32 %v2912, %v3326
  %v3671 = vadd.f32 %v2913, %v3329
  %v3672 = vadd.f32 %v2914, %v3331
  %v3673 = vadd.f32 %v2915, %v3333
  %v3674 = vadd.f32 %v2916, %v3336
  %v3675 = vadd.f32 %v2917, %v3338
  %v3676 = vadd.f32 %v2918, %v3340
  %v3677 = vadd.f32 %v2919, %v3343
  %v3678 = vadd.f32 %v2920, %v3345
  %v3679 = vadd.f32 %v2921, %v3347
  %v3680 = vadd.f32 %v2922, %v3350
  %v3681 = vadd.f32 %v2923, %v3352
  %v3682 = vadd.f32 %v2924, %v3354
  %v3683 = vadd.f32 %v2925, %v3357
  %v3684 = vadd.f32 %v2926, %v3359
  %v3685 = vadd.f32 %v2927, %v3361
  %v3686 = vadd.f32 %v2928, %v3364
  %v3687 = vadd.f32 %v2929, %v3366
  %v3688 = vadd.f32 %v2930, %v3368
  %v3689 = vadd.f32 %v2931, %v3371
  %v3690 = vadd.f32 %v2932, %v3373
  %v3691 = vadd.f32 %v2933, %v3375
  %v3692 = vadd.f32 %v2934, %v3378
  %v3693 = vadd.f32 %v2935, %v3380
  %v3694 = vadd.f32 %v2936, %v3382
  %v3695 = vadd.f32 %v2937, %v3385
  %v3696 = vadd.f32 %v2938, %v3387
  %v3697 = vadd.f32 %v2939, %v3389
  %v3698 = vadd.f32 %v2940, %v3392
  %v3699 = vadd.f32 %v2941, %v3394
  %v3700 = vadd.f32 %v2942, %v3396
  %v3701 = vadd.f32 %v2943, %v3399
  %v3702 = vadd.f32 %v2944, %v3401
  %v3703 = vadd.f32 %v2945, %v3403
  %v3704 = vadd.f32 %v2946, %v3406
  %v3705 = vadd.f32 %v2947, %v3408
  %v3706 = vadd.f32 %v2948, %v3410
  %v3707 = vadd.f32 %v2949, %v3413
  %v3708 = vadd.f32 %v2950, %v3415
  %v3709 = vadd.f32 %v2951, %v3417
  %v3710 = vadd.f32 %v2952, %v3420
  %v3711 = vadd.f32 %v2953, %v3422
  %v3712 = vadd.f32 %v2954, %v3424
  %v3713 = vadd.f32 %v2955, %v3427
  %v3714 = vadd.f32 %v2956, %v3429
  %v3715 = vadd.f32 %v2957, %v3431
  %v3716 = vadd.f32 %v2958, %v3434
  %v3717 = vadd.f32 %v2959, %v3436
  %v3718 = vadd.f32 %v2960, %v3438
  %v3719 = vadd.f32 %v2961, %v3441
  %v3720 = vadd.f32 %v2962, %v3443
  %v3721 = vadd.f32 %v2963, %v3445
  %v3722 = vadd.f32 %v2964, %v3448
  %v3723 = vadd.f32 %v2965, %v3450
  %v3724 = vadd.f32 %v2966, %v3452
  %v3725 = vadd.f32 %v2967, %v3455
  %v3726 = vadd.f32 %v2968, %v3457
  %v3727 = vadd.f32 %v2969, %v3459
  %v3728 = vadd.f32 %v2970, %v3462
  %v3729 = vadd.f32 %v2971, %v3464
  %v3730 = vadd.f32 %v2972, %v3466
  %v3731 = vadd.f32 %v2973, %v3469
  %v3732 = vadd.f32 %v2974, %v3471
  %v3733 = vadd.f32 %v2975, %v3473
  %v3734 = vadd.f32 %v2976, %v3476
  %v3735 = vadd.f32 %v2977, %v3478
  %v3736 = vadd.f32 %v2978, %v3480
  %v3737 = vadd.f32 %v2979, %v3483
  %v3738 = vadd.f32 %v2980, %v3485
  %v3739 = vadd.f32 %v2981, %v3487
  %v3740 = vadd.f32 %v2982, %v3490
  %v3741 = vadd.f32 %v2983, %v3492
  %v3742 = vadd.f32 %v2984, %v3494
  %v3743 = vadd.f32 %v2985, %v3497
  %v3744 = vadd.f32 %v2986, %v3499
  %v3745 = vadd.f32 %v2987, %v3501
  %v3746 = vadd.f32 %v2988, %v3504
  %v3747 = vadd.f32 %v2989, %v3506
  %v3748 = vadd.f32 %v2990, %v3508
  %v3749 = vadd.f32 %v2991, %v3511
  %v3750 = vadd.f32 %v2992, %v3513
  %v3751 = vadd.f32 %v2993, %v3515
  %v3752 = vadd.f32 %v2994, %v3518
  %v3753 = vadd.f32 %v2995, %v3520
  %v3754 = vadd.f32 %v2996, %v3522
  %v3755 = vadd.f32 %v2997, %v3525
  %v3756 = vadd.f32 %v2998, %v3527
  %v3757 = vadd.f32 %v2999, %v3529
  %v3758 = vadd.f32 %v3000, %v3532
  %v3759 = vadd.f32 %v3001, %v3534
  %v3760 = vadd.f32 %v3002, %v3536
  %v3761 = vadd.f32 %v3003, %v3539
  %v3762 = vadd.f32 %v3004, %v3541
  %v3763 = vadd.f32 %v3005, %v3543
  %v3764 = vadd.f32 %v3006, %v3546
  %v3765 = vadd.f32 %v3007, %v3548
  %v3766 = vadd.f32 %v3008, %v3550
  %v3767 = vperm.slane %v188, 2
  %v3768 = vmul.f32 %v31, %v3767
  %v3769 = vmul.f32 %v32, %v3767
  %v3770 = vmul.f32 %v33, %v3767
  %v3771 = vmul.f32 %v34, %v3767
  %v3772 = vmul.f32 %v35, %v3767
  %v3773 = vmul.f32 %v36, %v3767
  %v3774 = vmul.f32 %v37, %v3767
  %v3775 = vmul.f32 %v38, %v3767
  %v3776 = vmul.f32 %v39, %v3767
  %v3777 = vmul.f32 %v40, %v3767
  %v3778 = vmul.f32 %v41, %v3767
  %v3779 = vmul.f32 %v42, %v3767
  %v3780 = vmul.f32 %v43, %v3767
  %v3781 = vmul.f32 %v44, %v3767
  %v3782 = vmul.f32 %v45, %v3767
  %v3783 = vmul.f32 %v46, %v3767
  %v3784 = vmul.f32 %v47, %v3767
  %v3785 = vmul.f32 %v48, %v3767
  %v3786 = vmul.f32 %v49, %v3767
  %v3787 = vmul.f32 %v50, %v3767
  %v3788 = vmul.f32 %v51, %v3767
  %v3789 = vmul.f32 %v52, %v3767
  %v3790 = vmul.f32 %v53, %v3767
  %v3791 = vmul.f32 %v54, %v3767
  %v3792 = vmul.f32 %v55, %v3767
  %v3793 = vmul.f32 %v56, %v3767
  %v3794 = vmul.f32 %v57, %v3767
  %v3795 = vmul.f32 %v58, %v3767
  %v3796 = vmul.f32 %v59, %v3767
  %v3797 = vmul.f32 %v60, %v3767
  %v3798 = vmul.f32 %v61, %v3767
  %v3799 = vmul.f32 %v62, %v3767
  %v3800 = vmul.f32 %v63, %v3767
  %v3801 = vmul.f32 %v64, %v3767
  %v3802 = vmul.f32 %v65, %v3767
  %v3803 = vmul.f32 %v66, %v3767
  %v3804 = vmul.f32 %v67, %v3767
  %v3805 = vmul.f32 %v68, %v3767
  %v3806 = vmul.f32 %v69, %v3767
  %v3807 = vmul.f32 %v70, %v3767
  %v3808 = vmul.f32 %v71, %v3767
  %v3809 = vmul.f32 %v72, %v3767
  %v3810 = vmul.f32 %v73, %v3767
  %v3811 = vmul.f32 %v74, %v3767
  %v3812 = vmul.f32 %v75, %v3767
  %v3813 = vmul.f32 %v76, %v3767
  %v3814 = vmul.f32 %v77, %v3767
  %v3815 = vmul.f32 %v78, %v3767
  %v3816 = vmul.f32 %v79, %v3767
  %v3817 = vmul.f32 %v80, %v3767
  %v3818 = vmul.f32 %v81, %v3767
  %v3819 = vmul.f32 %v82, %v3767
  %v3820 = vmul.f32 %v83, %v3767
  %v3821 = vmul.f32 %v84, %v3767
  %v3822 = vmul.f32 %v85, %v3767
  %v3823 = vmul.f32 %v86, %v3767
  %v3824 = vmul.f32 %v87, %v3767
  %v3825 = vmul.f32 %v88, %v3767
  %v3826 = vmul.f32 %v89, %v3767
  %v3827 = vmul.f32 %v90, %v3767
  %v3828 = vmul.f32 %v91, %v3767
  %v3829 = vmul.f32 %v92, %v3767
  %v3830 = vmul.f32 %v93, %v3767
  %v3831 = vmul.f32 %v94, %v3767
  %v3832 = vmul.f32 %v95, %v3767
  %v3833 = vmul.f32 %v96, %v3767
  %v3834 = vmul.f32 %v97, %v3767
  %v3835 = vmul.f32 %v98, %v3767
  %v3836 = vmul.f32 %v99, %v3767
  %v3837 = vmul.f32 %v100, %v3767
  %v3838 = vmul.f32 %v101, %v3767
  %v3839 = vmul.f32 %v102, %v3767
  %v3840 = vmul.f32 %v111, %v3767
  %v3841 = vmul.f32 %v112, %v3767
  %v3842 = vmul.f32 %v113, %v3767
  %v3843 = vmul.f32 %v114, %v3767
  %v3844 = vmul.f32 %v115, %v3767
  %v3845 = vmul.f32 %v116, %v3767
  %v3846 = vmul.f32 %v117, %v3767
  %v3847 = vmul.f32 %v118, %v3767
  %v3848 = vmul.f32 %v119, %v3767
  %v3849 = vmul.f32 %v120, %v3767
  %v3850 = vmul.f32 %v121, %v3767
  %v3851 = vmul.f32 %v122, %v3767
  %v3852 = vmul.f32 %v123, %v3767
  %v3853 = vmul.f32 %v124, %v3767
  %v3854 = vmul.f32 %v125, %v3767
  %v3855 = vmul.f32 %v126, %v3767
  %v3856 = vmul.f32 %v127, %v3767
  %v3857 = vmul.f32 %v128, %v3767
  %v3858 = vmul.f32 %v129, %v3767
  %v3859 = vmul.f32 %v130, %v3767
  %v3860 = vmul.f32 %v131, %v3767
  %v3861 = vmul.f32 %v132, %v3767
  %v3862 = vmul.f32 %v133, %v3767
  %v3863 = vmul.f32 %v134, %v3767
  %v3864 = vmul.f32 %v135, %v3767
  %v3865 = vmul.f32 %v136, %v3767
  %v3866 = vmul.f32 %v137, %v3767
  %v3867 = vmul.f32 %v138, %v3767
  %v3868 = vmul.f32 %v139, %v3767
  %v3869 = vmul.f32 %v140, %v3767
  %v3870 = vmul.f32 %v141, %v3767
  %v3871 = vmul.f32 %v142, %v3767
  %v3872 = vmul.f32 %v143, %v3767
  %v3873 = vmul.f32 %v144, %v3767
  %v3874 = vmul.f32 %v145, %v3767
  %v3875 = vmul.f32 %v146, %v3767
  %v3876 = vmul.f32 %v147, %v3767
  %v3877 = vmul.f32 %v148, %v3767
  %v3878 = vmul.f32 %v149, %v3767
  %v3879 = vmul.f32 %v150, %v3767
  %v3880 = vmul.f32 %v151, %v3767
  %v3881 = vmul.f32 %v152, %v3767
  %v3882 = vmul.f32 %v153, %v3767
  %v3883 = vmul.f32 %v154, %v3767
  %v3884 = vmul.f32 %v155, %v3767
  %v3885 = vmul.f32 %v156, %v3767
  %v3886 = vmul.f32 %v157, %v3767
  %v3887 = vmul.f32 %v158, %v3767
  %v3888 = vmul.f32 %v159, %v3767
  %v3889 = vmul.f32 %v160, %v3767
  %v3890 = vmul.f32 %v161, %v3767
  %v3891 = vmul.f32 %v162, %v3767
  %v3892 = vmul.f32 %v163, %v3767
  %v3893 = vmul.f32 %v164, %v3767
  %v3894 = vmul.f32 %v165, %v3767
  %v3895 = vmul.f32 %v166, %v3767
  %v3896 = vmul.f32 %v167, %v3767
  %v3897 = vmul.f32 %v168, %v3767
  %v3898 = vmul.f32 %v169, %v3767
  %v3899 = vmul.f32 %v170, %v3767
  %v3900 = vmul.f32 %v171, %v3767
  %v3901 = vmul.f32 %v172, %v3767
  %v3902 = vmul.f32 %v173, %v3767
  %v3903 = vmul.f32 %v174, %v3767
  %v3904 = vmul.f32 %v175, %v3767
  %v3905 = vmul.f32 %v176, %v3767
  %v3906 = vmul.f32 %v177, %v3767
  %v3907 = vmul.f32 %v178, %v3767
  %v3908 = vmul.f32 %v179, %v3767
  %v3909 = vmul.f32 %v180, %v3767
  %v3910 = vmul.f32 %v181, %v3767
  %v3911 = vmul.f32 %v182, %v3767
  %v4056 = vrot.slane %v3768, 2
  %v4057 = vrot.slane %v3769, 2
  %v4058 = vsel %vm3298, %v4056, %v4057
  %v4059 = vrot.slane %v3770, 2
  %v4060 = vsel %vm3298, %v4057, %v4059
  %v4061 = vrot.slane %v3771, 2
  %v4062 = vsel %vm3298, %v4059, %v4061
  %v4063 = vrot.slane %v3772, 2
  %v4064 = vrot.slane %v3773, 2
  %v4065 = vsel %vm3298, %v4063, %v4064
  %v4066 = vrot.slane %v3774, 2
  %v4067 = vsel %vm3298, %v4064, %v4066
  %v4068 = vrot.slane %v3775, 2
  %v4069 = vsel %vm3298, %v4066, %v4068
  %v4070 = vrot.slane %v3776, 2
  %v4071 = vrot.slane %v3777, 2
  %v4072 = vsel %vm3298, %v4070, %v4071
  %v4073 = vrot.slane %v3778, 2
  %v4074 = vsel %vm3298, %v4071, %v4073
  %v4075 = vrot.slane %v3779, 2
  %v4076 = vsel %vm3298, %v4073, %v4075
  %v4077 = vrot.slane %v3780, 2
  %v4078 = vrot.slane %v3781, 2
  %v4079 = vsel %vm3298, %v4077, %v4078
  %v4080 = vrot.slane %v3782, 2
  %v4081 = vsel %vm3298, %v4078, %v4080
  %v4082 = vrot.slane %v3783, 2
  %v4083 = vsel %vm3298, %v4080, %v4082
  %v4084 = vrot.slane %v3784, 2
  %v4085 = vrot.slane %v3785, 2
  %v4086 = vsel %vm3298, %v4084, %v4085
  %v4087 = vrot.slane %v3786, 2
  %v4088 = vsel %vm3298, %v4085, %v4087
  %v4089 = vrot.slane %v3787, 2
  %v4090 = vsel %vm3298, %v4087, %v4089
  %v4091 = vrot.slane %v3788, 2
  %v4092 = vrot.slane %v3789, 2
  %v4093 = vsel %vm3298, %v4091, %v4092
  %v4094 = vrot.slane %v3790, 2
  %v4095 = vsel %vm3298, %v4092, %v4094
  %v4096 = vrot.slane %v3791, 2
  %v4097 = vsel %vm3298, %v4094, %v4096
  %v4098 = vrot.slane %v3792, 2
  %v4099 = vrot.slane %v3793, 2
  %v4100 = vsel %vm3298, %v4098, %v4099
  %v4101 = vrot.slane %v3794, 2
  %v4102 = vsel %vm3298, %v4099, %v4101
  %v4103 = vrot.slane %v3795, 2
  %v4104 = vsel %vm3298, %v4101, %v4103
  %v4105 = vrot.slane %v3796, 2
  %v4106 = vrot.slane %v3797, 2
  %v4107 = vsel %vm3298, %v4105, %v4106
  %v4108 = vrot.slane %v3798, 2
  %v4109 = vsel %vm3298, %v4106, %v4108
  %v4110 = vrot.slane %v3799, 2
  %v4111 = vsel %vm3298, %v4108, %v4110
  %v4112 = vrot.slane %v3800, 2
  %v4113 = vrot.slane %v3801, 2
  %v4114 = vsel %vm3298, %v4112, %v4113
  %v4115 = vrot.slane %v3802, 2
  %v4116 = vsel %vm3298, %v4113, %v4115
  %v4117 = vrot.slane %v3803, 2
  %v4118 = vsel %vm3298, %v4115, %v4117
  %v4119 = vrot.slane %v3804, 2
  %v4120 = vrot.slane %v3805, 2
  %v4121 = vsel %vm3298, %v4119, %v4120
  %v4122 = vrot.slane %v3806, 2
  %v4123 = vsel %vm3298, %v4120, %v4122
  %v4124 = vrot.slane %v3807, 2
  %v4125 = vsel %vm3298, %v4122, %v4124
  %v4126 = vrot.slane %v3808, 2
  %v4127 = vrot.slane %v3809, 2
  %v4128 = vsel %vm3298, %v4126, %v4127
  %v4129 = vrot.slane %v3810, 2
  %v4130 = vsel %vm3298, %v4127, %v4129
  %v4131 = vrot.slane %v3811, 2
  %v4132 = vsel %vm3298, %v4129, %v4131
  %v4133 = vrot.slane %v3812, 2
  %v4134 = vrot.slane %v3813, 2
  %v4135 = vsel %vm3298, %v4133, %v4134
  %v4136 = vrot.slane %v3814, 2
  %v4137 = vsel %vm3298, %v4134, %v4136
  %v4138 = vrot.slane %v3815, 2
  %v4139 = vsel %vm3298, %v4136, %v4138
  %v4140 = vrot.slane %v3816, 2
  %v4141 = vrot.slane %v3817, 2
  %v4142 = vsel %vm3298, %v4140, %v4141
  %v4143 = vrot.slane %v3818, 2
  %v4144 = vsel %vm3298, %v4141, %v4143
  %v4145 = vrot.slane %v3819, 2
  %v4146 = vsel %vm3298, %v4143, %v4145
  %v4147 = vrot.slane %v3820, 2
  %v4148 = vrot.slane %v3821, 2
  %v4149 = vsel %vm3298, %v4147, %v4148
  %v4150 = vrot.slane %v3822, 2
  %v4151 = vsel %vm3298, %v4148, %v4150
  %v4152 = vrot.slane %v3823, 2
  %v4153 = vsel %vm3298, %v4150, %v4152
  %v4154 = vrot.slane %v3824, 2
  %v4155 = vrot.slane %v3825, 2
  %v4156 = vsel %vm3298, %v4154, %v4155
  %v4157 = vrot.slane %v3826, 2
  %v4158 = vsel %vm3298, %v4155, %v4157
  %v4159 = vrot.slane %v3827, 2
  %v4160 = vsel %vm3298, %v4157, %v4159
  %v4161 = vrot.slane %v3828, 2
  %v4162 = vrot.slane %v3829, 2
  %v4163 = vsel %vm3298, %v4161, %v4162
  %v4164 = vrot.slane %v3830, 2
  %v4165 = vsel %vm3298, %v4162, %v4164
  %v4166 = vrot.slane %v3831, 2
  %v4167 = vsel %vm3298, %v4164, %v4166
  %v4168 = vrot.slane %v3832, 2
  %v4169 = vrot.slane %v3833, 2
  %v4170 = vsel %vm3298, %v4168, %v4169
  %v4171 = vrot.slane %v3834, 2
  %v4172 = vsel %vm3298, %v4169, %v4171
  %v4173 = vrot.slane %v3835, 2
  %v4174 = vsel %vm3298, %v4171, %v4173
  %v4175 = vrot.slane %v3836, 2
  %v4176 = vrot.slane %v3837, 2
  %v4177 = vsel %vm3298, %v4175, %v4176
  %v4178 = vrot.slane %v3838, 2
  %v4179 = vsel %vm3298, %v4176, %v4178
  %v4180 = vrot.slane %v3839, 2
  %v4181 = vsel %vm3298, %v4178, %v4180
  %v4182 = vrot.slane %v3840, 2
  %v4183 = vrot.slane %v3841, 2
  %v4184 = vsel %vm3298, %v4182, %v4183
  %v4185 = vrot.slane %v3842, 2
  %v4186 = vsel %vm3298, %v4183, %v4185
  %v4187 = vrot.slane %v3843, 2
  %v4188 = vsel %vm3298, %v4185, %v4187
  %v4189 = vrot.slane %v3844, 2
  %v4190 = vrot.slane %v3845, 2
  %v4191 = vsel %vm3298, %v4189, %v4190
  %v4192 = vrot.slane %v3846, 2
  %v4193 = vsel %vm3298, %v4190, %v4192
  %v4194 = vrot.slane %v3847, 2
  %v4195 = vsel %vm3298, %v4192, %v4194
  %v4196 = vrot.slane %v3848, 2
  %v4197 = vrot.slane %v3849, 2
  %v4198 = vsel %vm3298, %v4196, %v4197
  %v4199 = vrot.slane %v3850, 2
  %v4200 = vsel %vm3298, %v4197, %v4199
  %v4201 = vrot.slane %v3851, 2
  %v4202 = vsel %vm3298, %v4199, %v4201
  %v4203 = vrot.slane %v3852, 2
  %v4204 = vrot.slane %v3853, 2
  %v4205 = vsel %vm3298, %v4203, %v4204
  %v4206 = vrot.slane %v3854, 2
  %v4207 = vsel %vm3298, %v4204, %v4206
  %v4208 = vrot.slane %v3855, 2
  %v4209 = vsel %vm3298, %v4206, %v4208
  %v4210 = vrot.slane %v3856, 2
  %v4211 = vrot.slane %v3857, 2
  %v4212 = vsel %vm3298, %v4210, %v4211
  %v4213 = vrot.slane %v3858, 2
  %v4214 = vsel %vm3298, %v4211, %v4213
  %v4215 = vrot.slane %v3859, 2
  %v4216 = vsel %vm3298, %v4213, %v4215
  %v4217 = vrot.slane %v3860, 2
  %v4218 = vrot.slane %v3861, 2
  %v4219 = vsel %vm3298, %v4217, %v4218
  %v4220 = vrot.slane %v3862, 2
  %v4221 = vsel %vm3298, %v4218, %v4220
  %v4222 = vrot.slane %v3863, 2
  %v4223 = vsel %vm3298, %v4220, %v4222
  %v4224 = vrot.slane %v3864, 2
  %v4225 = vrot.slane %v3865, 2
  %v4226 = vsel %vm3298, %v4224, %v4225
  %v4227 = vrot.slane %v3866, 2
  %v4228 = vsel %vm3298, %v4225, %v4227
  %v4229 = vrot.slane %v3867, 2
  %v4230 = vsel %vm3298, %v4227, %v4229
  %v4231 = vrot.slane %v3868, 2
  %v4232 = vrot.slane %v3869, 2
  %v4233 = vsel %vm3298, %v4231, %v4232
  %v4234 = vrot.slane %v3870, 2
  %v4235 = vsel %vm3298, %v4232, %v4234
  %v4236 = vrot.slane %v3871, 2
  %v4237 = vsel %vm3298, %v4234, %v4236
  %v4238 = vrot.slane %v3872, 2
  %v4239 = vrot.slane %v3873, 2
  %v4240 = vsel %vm3298, %v4238, %v4239
  %v4241 = vrot.slane %v3874, 2
  %v4242 = vsel %vm3298, %v4239, %v4241
  %v4243 = vrot.slane %v3875, 2
  %v4244 = vsel %vm3298, %v4241, %v4243
  %v4245 = vrot.slane %v3876, 2
  %v4246 = vrot.slane %v3877, 2
  %v4247 = vsel %vm3298, %v4245, %v4246
  %v4248 = vrot.slane %v3878, 2
  %v4249 = vsel %vm3298, %v4246, %v4248
  %v4250 = vrot.slane %v3879, 2
  %v4251 = vsel %vm3298, %v4248, %v4250
  %v4252 = vrot.slane %v3880, 2
  %v4253 = vrot.slane %v3881, 2
  %v4254 = vsel %vm3298, %v4252, %v4253
  %v4255 = vrot.slane %v3882, 2
  %v4256 = vsel %vm3298, %v4253, %v4255
  %v4257 = vrot.slane %v3883, 2
  %v4258 = vsel %vm3298, %v4255, %v4257
  %v4259 = vrot.slane %v3884, 2
  %v4260 = vrot.slane %v3885, 2
  %v4261 = vsel %vm3298, %v4259, %v4260
  %v4262 = vrot.slane %v3886, 2
  %v4263 = vsel %vm3298, %v4260, %v4262
  %v4264 = vrot.slane %v3887, 2
  %v4265 = vsel %vm3298, %v4262, %v4264
  %v4266 = vrot.slane %v3888, 2
  %v4267 = vrot.slane %v3889, 2
  %v4268 = vsel %vm3298, %v4266, %v4267
  %v4269 = vrot.slane %v3890, 2
  %v4270 = vsel %vm3298, %v4267, %v4269
  %v4271 = vrot.slane %v3891, 2
  %v4272 = vsel %vm3298, %v4269, %v4271
  %v4273 = vrot.slane %v3892, 2
  %v4274 = vrot.slane %v3893, 2
  %v4275 = vsel %vm3298, %v4273, %v4274
  %v4276 = vrot.slane %v3894, 2
  %v4277 = vsel %vm3298, %v4274, %v4276
  %v4278 = vrot.slane %v3895, 2
  %v4279 = vsel %vm3298, %v4276, %v4278
  %v4280 = vrot.slane %v3896, 2
  %v4281 = vrot.slane %v3897, 2
  %v4282 = vsel %vm3298, %v4280, %v4281
  %v4283 = vrot.slane %v3898, 2
  %v4284 = vsel %vm3298, %v4281, %v4283
  %v4285 = vrot.slane %v3899, 2
  %v4286 = vsel %vm3298, %v4283, %v4285
  %v4287 = vrot.slane %v3900, 2
  %v4288 = vrot.slane %v3901, 2
  %v4289 = vsel %vm3298, %v4287, %v4288
  %v4290 = vrot.slane %v3902, 2
  %v4291 = vsel %vm3298, %v4288, %v4290
  %v4292 = vrot.slane %v3903, 2
  %v4293 = vsel %vm3298, %v4290, %v4292
  %v4294 = vrot.slane %v3904, 2
  %v4295 = vrot.slane %v3905, 2
  %v4296 = vsel %vm3298, %v4294, %v4295
  %v4297 = vrot.slane %v3906, 2
  %v4298 = vsel %vm3298, %v4295, %v4297
  %v4299 = vrot.slane %v3907, 2
  %v4300 = vsel %vm3298, %v4297, %v4299
  %v4301 = vrot.slane %v3908, 2
  %v4302 = vrot.slane %v3909, 2
  %v4303 = vsel %vm3298, %v4301, %v4302
  %v4304 = vrot.slane %v3910, 2
  %v4305 = vsel %vm3298, %v4302, %v4304
  %v4306 = vrot.slane %v3911, 2
  %v4307 = vsel %vm3298, %v4304, %v4306
  %v4416 = vadd.f32 %v3659, %v4058
  %v4417 = vadd.f32 %v3660, %v4060
  %v4418 = vadd.f32 %v3661, %v4062
  %v4419 = vadd.f32 %v3662, %v4065
  %v4420 = vadd.f32 %v3663, %v4067
  %v4421 = vadd.f32 %v3664, %v4069
  %v4422 = vadd.f32 %v3665, %v4072
  %v4423 = vadd.f32 %v3666, %v4074
  %v4424 = vadd.f32 %v3667, %v4076
  %v4425 = vadd.f32 %v3668, %v4079
  %v4426 = vadd.f32 %v3669, %v4081
  %v4427 = vadd.f32 %v3670, %v4083
  %v4428 = vadd.f32 %v3671, %v4086
  %v4429 = vadd.f32 %v3672, %v4088
  %v4430 = vadd.f32 %v3673, %v4090
  %v4431 = vadd.f32 %v3674, %v4093
  %v4432 = vadd.f32 %v3675, %v4095
  %v4433 = vadd.f32 %v3676, %v4097
  %v4434 = vadd.f32 %v3677, %v4100
  %v4435 = vadd.f32 %v3678, %v4102
  %v4436 = vadd.f32 %v3679, %v4104
  %v4437 = vadd.f32 %v3680, %v4107
  %v4438 = vadd.f32 %v3681, %v4109
  %v4439 = vadd.f32 %v3682, %v4111
  %v4440 = vadd.f32 %v3683, %v4114
  %v4441 = vadd.f32 %v3684, %v4116
  %v4442 = vadd.f32 %v3685, %v4118
  %v4443 = vadd.f32 %v3686, %v4121
  %v4444 = vadd.f32 %v3687, %v4123
  %v4445 = vadd.f32 %v3688, %v4125
  %v4446 = vadd.f32 %v3689, %v4128
  %v4447 = vadd.f32 %v3690, %v4130
  %v4448 = vadd.f32 %v3691, %v4132
  %v4449 = vadd.f32 %v3692, %v4135
  %v4450 = vadd.f32 %v3693, %v4137
  %v4451 = vadd.f32 %v3694, %v4139
  %v4452 = vadd.f32 %v3695, %v4142
  %v4453 = vadd.f32 %v3696, %v4144
  %v4454 = vadd.f32 %v3697, %v4146
  %v4455 = vadd.f32 %v3698, %v4149
  %v4456 = vadd.f32 %v3699, %v4151
  %v4457 = vadd.f32 %v3700, %v4153
  %v4458 = vadd.f32 %v3701, %v4156
  %v4459 = vadd.f32 %v3702, %v4158
  %v4460 = vadd.f32 %v3703, %v4160
  %v4461 = vadd.f32 %v3704, %v4163
  %v4462 = vadd.f32 %v3705, %v4165
  %v4463 = vadd.f32 %v3706, %v4167
  %v4464 = vadd.f32 %v3707, %v4170
  %v4465 = vadd.f32 %v3708, %v4172
  %v4466 = vadd.f32 %v3709, %v4174
  %v4467 = vadd.f32 %v3710, %v4177
  %v4468 = vadd.f32 %v3711, %v4179
  %v4469 = vadd.f32 %v3712, %v4181
  %v4470 = vadd.f32 %v3713, %v4184
  %v4471 = vadd.f32 %v3714, %v4186
  %v4472 = vadd.f32 %v3715, %v4188
  %v4473 = vadd.f32 %v3716, %v4191
  %v4474 = vadd.f32 %v3717, %v4193
  %v4475 = vadd.f32 %v3718, %v4195
  %v4476 = vadd.f32 %v3719, %v4198
  %v4477 = vadd.f32 %v3720, %v4200
  %v4478 = vadd.f32 %v3721, %v4202
  %v4479 = vadd.f32 %v3722, %v4205
  %v4480 = vadd.f32 %v3723, %v4207
  %v4481 = vadd.f32 %v3724, %v4209
  %v4482 = vadd.f32 %v3725, %v4212
  %v4483 = vadd.f32 %v3726, %v4214
  %v4484 = vadd.f32 %v3727, %v4216
  %v4485 = vadd.f32 %v3728, %v4219
  %v4486 = vadd.f32 %v3729, %v4221
  %v4487 = vadd.f32 %v3730, %v4223
  %v4488 = vadd.f32 %v3731, %v4226
  %v4489 = vadd.f32 %v3732, %v4228
  %v4490 = vadd.f32 %v3733, %v4230
  %v4491 = vadd.f32 %v3734, %v4233
  %v4492 = vadd.f32 %v3735, %v4235
  %v4493 = vadd.f32 %v3736, %v4237
  %v4494 = vadd.f32 %v3737, %v4240
  %v4495 = vadd.f32 %v3738, %v4242
  %v4496 = vadd.f32 %v3739, %v4244
  %v4497 = vadd.f32 %v3740, %v4247
  %v4498 = vadd.f32 %v3741, %v4249
  %v4499 = vadd.f32 %v3742, %v4251
  %v4500 = vadd.f32 %v3743, %v4254
  %v4501 = vadd.f32 %v3744, %v4256
  %v4502 = vadd.f32 %v3745, %v4258
  %v4503 = vadd.f32 %v3746, %v4261
  %v4504 = vadd.f32 %v3747, %v4263
  %v4505 = vadd.f32 %v3748, %v4265
  %v4506 = vadd.f32 %v3749, %v4268
  %v4507 = vadd.f32 %v3750, %v4270
  %v4508 = vadd.f32 %v3751, %v4272
  %v4509 = vadd.f32 %v3752, %v4275
  %v4510 = vadd.f32 %v3753, %v4277
  %v4511 = vadd.f32 %v3754, %v4279
  %v4512 = vadd.f32 %v3755, %v4282
  %v4513 = vadd.f32 %v3756, %v4284
  %v4514 = vadd.f32 %v3757, %v4286
  %v4515 = vadd.f32 %v3758, %v4289
  %v4516 = vadd.f32 %v3759, %v4291
  %v4517 = vadd.f32 %v3760, %v4293
  %v4518 = vadd.f32 %v3761, %v4296
  %v4519 = vadd.f32 %v3762, %v4298
  %v4520 = vadd.f32 %v3763, %v4300
  %v4521 = vadd.f32 %v3764, %v4303
  %v4522 = vadd.f32 %v3765, %v4305
  %v4523 = vadd.f32 %v3766, %v4307
  %v4524 = vperm.slane %v189, 2
  %v4525 = vmul.f32 %v35, %v4524
  %v4526 = vmul.f32 %v36, %v4524
  %v4527 = vmul.f32 %v37, %v4524
  %v4528 = vmul.f32 %v38, %v4524
  %v4529 = vmul.f32 %v39, %v4524
  %v4530 = vmul.f32 %v40, %v4524
  %v4531 = vmul.f32 %v41, %v4524
  %v4532 = vmul.f32 %v42, %v4524
  %v4533 = vmul.f32 %v43, %v4524
  %v4534 = vmul.f32 %v44, %v4524
  %v4535 = vmul.f32 %v45, %v4524
  %v4536 = vmul.f32 %v46, %v4524
  %v4537 = vmul.f32 %v47, %v4524
  %v4538 = vmul.f32 %v48, %v4524
  %v4539 = vmul.f32 %v49, %v4524
  %v4540 = vmul.f32 %v50, %v4524
  %v4541 = vmul.f32 %v51, %v4524
  %v4542 = vmul.f32 %v52, %v4524
  %v4543 = vmul.f32 %v53, %v4524
  %v4544 = vmul.f32 %v54, %v4524
  %v4545 = vmul.f32 %v55, %v4524
  %v4546 = vmul.f32 %v56, %v4524
  %v4547 = vmul.f32 %v57, %v4524
  %v4548 = vmul.f32 %v58, %v4524
  %v4549 = vmul.f32 %v59, %v4524
  %v4550 = vmul.f32 %v60, %v4524
  %v4551 = vmul.f32 %v61, %v4524
  %v4552 = vmul.f32 %v62, %v4524
  %v4553 = vmul.f32 %v63, %v4524
  %v4554 = vmul.f32 %v64, %v4524
  %v4555 = vmul.f32 %v65, %v4524
  %v4556 = vmul.f32 %v66, %v4524
  %v4557 = vmul.f32 %v67, %v4524
  %v4558 = vmul.f32 %v68, %v4524
  %v4559 = vmul.f32 %v69, %v4524
  %v4560 = vmul.f32 %v70, %v4524
  %v4561 = vmul.f32 %v71, %v4524
  %v4562 = vmul.f32 %v72, %v4524
  %v4563 = vmul.f32 %v73, %v4524
  %v4564 = vmul.f32 %v74, %v4524
  %v4565 = vmul.f32 %v75, %v4524
  %v4566 = vmul.f32 %v76, %v4524
  %v4567 = vmul.f32 %v77, %v4524
  %v4568 = vmul.f32 %v78, %v4524
  %v4569 = vmul.f32 %v79, %v4524
  %v4570 = vmul.f32 %v80, %v4524
  %v4571 = vmul.f32 %v81, %v4524
  %v4572 = vmul.f32 %v82, %v4524
  %v4573 = vmul.f32 %v83, %v4524
  %v4574 = vmul.f32 %v84, %v4524
  %v4575 = vmul.f32 %v85, %v4524
  %v4576 = vmul.f32 %v86, %v4524
  %v4577 = vmul.f32 %v87, %v4524
  %v4578 = vmul.f32 %v88, %v4524
  %v4579 = vmul.f32 %v89, %v4524
  %v4580 = vmul.f32 %v90, %v4524
  %v4581 = vmul.f32 %v91, %v4524
  %v4582 = vmul.f32 %v92, %v4524
  %v4583 = vmul.f32 %v93, %v4524
  %v4584 = vmul.f32 %v94, %v4524
  %v4585 = vmul.f32 %v95, %v4524
  %v4586 = vmul.f32 %v96, %v4524
  %v4587 = vmul.f32 %v97, %v4524
  %v4588 = vmul.f32 %v98, %v4524
  %v4589 = vmul.f32 %v99, %v4524
  %v4590 = vmul.f32 %v100, %v4524
  %v4591 = vmul.f32 %v101, %v4524
  %v4592 = vmul.f32 %v102, %v4524
  %v4593 = vmul.f32 %v103, %v4524
  %v4594 = vmul.f32 %v104, %v4524
  %v4595 = vmul.f32 %v105, %v4524
  %v4596 = vmul.f32 %v106, %v4524
  %v4597 = vmul.f32 %v115, %v4524
  %v4598 = vmul.f32 %v116, %v4524
  %v4599 = vmul.f32 %v117, %v4524
  %v4600 = vmul.f32 %v118, %v4524
  %v4601 = vmul.f32 %v119, %v4524
  %v4602 = vmul.f32 %v120, %v4524
  %v4603 = vmul.f32 %v121, %v4524
  %v4604 = vmul.f32 %v122, %v4524
  %v4605 = vmul.f32 %v123, %v4524
  %v4606 = vmul.f32 %v124, %v4524
  %v4607 = vmul.f32 %v125, %v4524
  %v4608 = vmul.f32 %v126, %v4524
  %v4609 = vmul.f32 %v127, %v4524
  %v4610 = vmul.f32 %v128, %v4524
  %v4611 = vmul.f32 %v129, %v4524
  %v4612 = vmul.f32 %v130, %v4524
  %v4613 = vmul.f32 %v131, %v4524
  %v4614 = vmul.f32 %v132, %v4524
  %v4615 = vmul.f32 %v133, %v4524
  %v4616 = vmul.f32 %v134, %v4524
  %v4617 = vmul.f32 %v135, %v4524
  %v4618 = vmul.f32 %v136, %v4524
  %v4619 = vmul.f32 %v137, %v4524
  %v4620 = vmul.f32 %v138, %v4524
  %v4621 = vmul.f32 %v139, %v4524
  %v4622 = vmul.f32 %v140, %v4524
  %v4623 = vmul.f32 %v141, %v4524
  %v4624 = vmul.f32 %v142, %v4524
  %v4625 = vmul.f32 %v143, %v4524
  %v4626 = vmul.f32 %v144, %v4524
  %v4627 = vmul.f32 %v145, %v4524
  %v4628 = vmul.f32 %v146, %v4524
  %v4629 = vmul.f32 %v147, %v4524
  %v4630 = vmul.f32 %v148, %v4524
  %v4631 = vmul.f32 %v149, %v4524
  %v4632 = vmul.f32 %v150, %v4524
  %v4633 = vmul.f32 %v151, %v4524
  %v4634 = vmul.f32 %v152, %v4524
  %v4635 = vmul.f32 %v153, %v4524
  %v4636 = vmul.f32 %v154, %v4524
  %v4637 = vmul.f32 %v155, %v4524
  %v4638 = vmul.f32 %v156, %v4524
  %v4639 = vmul.f32 %v157, %v4524
  %v4640 = vmul.f32 %v158, %v4524
  %v4641 = vmul.f32 %v159, %v4524
  %v4642 = vmul.f32 %v160, %v4524
  %v4643 = vmul.f32 %v161, %v4524
  %v4644 = vmul.f32 %v162, %v4524
  %v4645 = vmul.f32 %v163, %v4524
  %v4646 = vmul.f32 %v164, %v4524
  %v4647 = vmul.f32 %v165, %v4524
  %v4648 = vmul.f32 %v166, %v4524
  %v4649 = vmul.f32 %v167, %v4524
  %v4650 = vmul.f32 %v168, %v4524
  %v4651 = vmul.f32 %v169, %v4524
  %v4652 = vmul.f32 %v170, %v4524
  %v4653 = vmul.f32 %v171, %v4524
  %v4654 = vmul.f32 %v172, %v4524
  %v4655 = vmul.f32 %v173, %v4524
  %v4656 = vmul.f32 %v174, %v4524
  %v4657 = vmul.f32 %v175, %v4524
  %v4658 = vmul.f32 %v176, %v4524
  %v4659 = vmul.f32 %v177, %v4524
  %v4660 = vmul.f32 %v178, %v4524
  %v4661 = vmul.f32 %v179, %v4524
  %v4662 = vmul.f32 %v180, %v4524
  %v4663 = vmul.f32 %v181, %v4524
  %v4664 = vmul.f32 %v182, %v4524
  %v4665 = vmul.f32 %v183, %v4524
  %v4666 = vmul.f32 %v184, %v4524
  %v4667 = vmul.f32 %v185, %v4524
  %v4668 = vmul.f32 %v186, %v4524
  %v4813 = vrot.slane %v4525, 2
  %v4814 = vrot.slane %v4526, 2
  %v4815 = vsel %vm3298, %v4813, %v4814
  %v4816 = vrot.slane %v4527, 2
  %v4817 = vsel %vm3298, %v4814, %v4816
  %v4818 = vrot.slane %v4528, 2
  %v4819 = vsel %vm3298, %v4816, %v4818
  %v4820 = vrot.slane %v4529, 2
  %v4821 = vrot.slane %v4530, 2
  %v4822 = vsel %vm3298, %v4820, %v4821
  %v4823 = vrot.slane %v4531, 2
  %v4824 = vsel %vm3298, %v4821, %v4823
  %v4825 = vrot.slane %v4532, 2
  %v4826 = vsel %vm3298, %v4823, %v4825
  %v4827 = vrot.slane %v4533, 2
  %v4828 = vrot.slane %v4534, 2
  %v4829 = vsel %vm3298, %v4827, %v4828
  %v4830 = vrot.slane %v4535, 2
  %v4831 = vsel %vm3298, %v4828, %v4830
  %v4832 = vrot.slane %v4536, 2
  %v4833 = vsel %vm3298, %v4830, %v4832
  %v4834 = vrot.slane %v4537, 2
  %v4835 = vrot.slane %v4538, 2
  %v4836 = vsel %vm3298, %v4834, %v4835
  %v4837 = vrot.slane %v4539, 2
  %v4838 = vsel %vm3298, %v4835, %v4837
  %v4839 = vrot.slane %v4540, 2
  %v4840 = vsel %vm3298, %v4837, %v4839
  %v4841 = vrot.slane %v4541, 2
  %v4842 = vrot.slane %v4542, 2
  %v4843 = vsel %vm3298, %v4841, %v4842
  %v4844 = vrot.slane %v4543, 2
  %v4845 = vsel %vm3298, %v4842, %v4844
  %v4846 = vrot.slane %v4544, 2
  %v4847 = vsel %vm3298, %v4844, %v4846
  %v4848 = vrot.slane %v4545, 2
  %v4849 = vrot.slane %v4546, 2
  %v4850 = vsel %vm3298, %v4848, %v4849
  %v4851 = vrot.slane %v4547, 2
  %v4852 = vsel %vm3298, %v4849, %v4851
  %v4853 = vrot.slane %v4548, 2
  %v4854 = vsel %vm3298, %v4851, %v4853
  %v4855 = vrot.slane %v4549, 2
  %v4856 = vrot.slane %v4550, 2
  %v4857 = vsel %vm3298, %v4855, %v4856
  %v4858 = vrot.slane %v4551, 2
  %v4859 = vsel %vm3298, %v4856, %v4858
  %v4860 = vrot.slane %v4552, 2
  %v4861 = vsel %vm3298, %v4858, %v4860
  %v4862 = vrot.slane %v4553, 2
  %v4863 = vrot.slane %v4554, 2
  %v4864 = vsel %vm3298, %v4862, %v4863
  %v4865 = vrot.slane %v4555, 2
  %v4866 = vsel %vm3298, %v4863, %v4865
  %v4867 = vrot.slane %v4556, 2
  %v4868 = vsel %vm3298, %v4865, %v4867
  %v4869 = vrot.slane %v4557, 2
  %v4870 = vrot.slane %v4558, 2
  %v4871 = vsel %vm3298, %v4869, %v4870
  %v4872 = vrot.slane %v4559, 2
  %v4873 = vsel %vm3298, %v4870, %v4872
  %v4874 = vrot.slane %v4560, 2
  %v4875 = vsel %vm3298, %v4872, %v4874
  %v4876 = vrot.slane %v4561, 2
  %v4877 = vrot.slane %v4562, 2
  %v4878 = vsel %vm3298, %v4876, %v4877
  %v4879 = vrot.slane %v4563, 2
  %v4880 = vsel %vm3298, %v4877, %v4879
  %v4881 = vrot.slane %v4564, 2
  %v4882 = vsel %vm3298, %v4879, %v4881
  %v4883 = vrot.slane %v4565, 2
  %v4884 = vrot.slane %v4566, 2
  %v4885 = vsel %vm3298, %v4883, %v4884
  %v4886 = vrot.slane %v4567, 2
  %v4887 = vsel %vm3298, %v4884, %v4886
  %v4888 = vrot.slane %v4568, 2
  %v4889 = vsel %vm3298, %v4886, %v4888
  %v4890 = vrot.slane %v4569, 2
  %v4891 = vrot.slane %v4570, 2
  %v4892 = vsel %vm3298, %v4890, %v4891
  %v4893 = vrot.slane %v4571, 2
  %v4894 = vsel %vm3298, %v4891, %v4893
  %v4895 = vrot.slane %v4572, 2
  %v4896 = vsel %vm3298, %v4893, %v4895
  %v4897 = vrot.slane %v4573, 2
  %v4898 = vrot.slane %v4574, 2
  %v4899 = vsel %vm3298, %v4897, %v4898
  %v4900 = vrot.slane %v4575, 2
  %v4901 = vsel %vm3298, %v4898, %v4900
  %v4902 = vrot.slane %v4576, 2
  %v4903 = vsel %vm3298, %v4900, %v4902
  %v4904 = vrot.slane %v4577, 2
  %v4905 = vrot.slane %v4578, 2
  %v4906 = vsel %vm3298, %v4904, %v4905
  %v4907 = vrot.slane %v4579, 2
  %v4908 = vsel %vm3298, %v4905, %v4907
  %v4909 = vrot.slane %v4580, 2
  %v4910 = vsel %vm3298, %v4907, %v4909
  %v4911 = vrot.slane %v4581, 2
  %v4912 = vrot.slane %v4582, 2
  %v4913 = vsel %vm3298, %v4911, %v4912
  %v4914 = vrot.slane %v4583, 2
  %v4915 = vsel %vm3298, %v4912, %v4914
  %v4916 = vrot.slane %v4584, 2
  %v4917 = vsel %vm3298, %v4914, %v4916
  %v4918 = vrot.slane %v4585, 2
  %v4919 = vrot.slane %v4586, 2
  %v4920 = vsel %vm3298, %v4918, %v4919
  %v4921 = vrot.slane %v4587, 2
  %v4922 = vsel %vm3298, %v4919, %v4921
  %v4923 = vrot.slane %v4588, 2
  %v4924 = vsel %vm3298, %v4921, %v4923
  %v4925 = vrot.slane %v4589, 2
  %v4926 = vrot.slane %v4590, 2
  %v4927 = vsel %vm3298, %v4925, %v4926
  %v4928 = vrot.slane %v4591, 2
  %v4929 = vsel %vm3298, %v4926, %v4928
  %v4930 = vrot.slane %v4592, 2
  %v4931 = vsel %vm3298, %v4928, %v4930
  %v4932 = vrot.slane %v4593, 2
  %v4933 = vrot.slane %v4594, 2
  %v4934 = vsel %vm3298, %v4932, %v4933
  %v4935 = vrot.slane %v4595, 2
  %v4936 = vsel %vm3298, %v4933, %v4935
  %v4937 = vrot.slane %v4596, 2
  %v4938 = vsel %vm3298, %v4935, %v4937
  %v4939 = vrot.slane %v4597, 2
  %v4940 = vrot.slane %v4598, 2
  %v4941 = vsel %vm3298, %v4939, %v4940
  %v4942 = vrot.slane %v4599, 2
  %v4943 = vsel %vm3298, %v4940, %v4942
  %v4944 = vrot.slane %v4600, 2
  %v4945 = vsel %vm3298, %v4942, %v4944
  %v4946 = vrot.slane %v4601, 2
  %v4947 = vrot.slane %v4602, 2
  %v4948 = vsel %vm3298, %v4946, %v4947
  %v4949 = vrot.slane %v4603, 2
  %v4950 = vsel %vm3298, %v4947, %v4949
  %v4951 = vrot.slane %v4604, 2
  %v4952 = vsel %vm3298, %v4949, %v4951
  %v4953 = vrot.slane %v4605, 2
  %v4954 = vrot.slane %v4606, 2
  %v4955 = vsel %vm3298, %v4953, %v4954
  %v4956 = vrot.slane %v4607, 2
  %v4957 = vsel %vm3298, %v4954, %v4956
  %v4958 = vrot.slane %v4608, 2
  %v4959 = vsel %vm3298, %v4956, %v4958
  %v4960 = vrot.slane %v4609, 2
  %v4961 = vrot.slane %v4610, 2
  %v4962 = vsel %vm3298, %v4960, %v4961
  %v4963 = vrot.slane %v4611, 2
  %v4964 = vsel %vm3298, %v4961, %v4963
  %v4965 = vrot.slane %v4612, 2
  %v4966 = vsel %vm3298, %v4963, %v4965
  %v4967 = vrot.slane %v4613, 2
  %v4968 = vrot.slane %v4614, 2
  %v4969 = vsel %vm3298, %v4967, %v4968
  %v4970 = vrot.slane %v4615, 2
  %v4971 = vsel %vm3298, %v4968, %v4970
  %v4972 = vrot.slane %v4616, 2
  %v4973 = vsel %vm3298, %v4970, %v4972
  %v4974 = vrot.slane %v4617, 2
  %v4975 = vrot.slane %v4618, 2
  %v4976 = vsel %vm3298, %v4974, %v4975
  %v4977 = vrot.slane %v4619, 2
  %v4978 = vsel %vm3298, %v4975, %v4977
  %v4979 = vrot.slane %v4620, 2
  %v4980 = vsel %vm3298, %v4977, %v4979
  %v4981 = vrot.slane %v4621, 2
  %v4982 = vrot.slane %v4622, 2
  %v4983 = vsel %vm3298, %v4981, %v4982
  %v4984 = vrot.slane %v4623, 2
  %v4985 = vsel %vm3298, %v4982, %v4984
  %v4986 = vrot.slane %v4624, 2
  %v4987 = vsel %vm3298, %v4984, %v4986
  %v4988 = vrot.slane %v4625, 2
  %v4989 = vrot.slane %v4626, 2
  %v4990 = vsel %vm3298, %v4988, %v4989
  %v4991 = vrot.slane %v4627, 2
  %v4992 = vsel %vm3298, %v4989, %v4991
  %v4993 = vrot.slane %v4628, 2
  %v4994 = vsel %vm3298, %v4991, %v4993
  %v4995 = vrot.slane %v4629, 2
  %v4996 = vrot.slane %v4630, 2
  %v4997 = vsel %vm3298, %v4995, %v4996
  %v4998 = vrot.slane %v4631, 2
  %v4999 = vsel %vm3298, %v4996, %v4998
  %v5000 = vrot.slane %v4632, 2
  %v5001 = vsel %vm3298, %v4998, %v5000
  %v5002 = vrot.slane %v4633, 2
  %v5003 = vrot.slane %v4634, 2
  %v5004 = vsel %vm3298, %v5002, %v5003
  %v5005 = vrot.slane %v4635, 2
  %v5006 = vsel %vm3298, %v5003, %v5005
  %v5007 = vrot.slane %v4636, 2
  %v5008 = vsel %vm3298, %v5005, %v5007
  %v5009 = vrot.slane %v4637, 2
  %v5010 = vrot.slane %v4638, 2
  %v5011 = vsel %vm3298, %v5009, %v5010
  %v5012 = vrot.slane %v4639, 2
  %v5013 = vsel %vm3298, %v5010, %v5012
  %v5014 = vrot.slane %v4640, 2
  %v5015 = vsel %vm3298, %v5012, %v5014
  %v5016 = vrot.slane %v4641, 2
  %v5017 = vrot.slane %v4642, 2
  %v5018 = vsel %vm3298, %v5016, %v5017
  %v5019 = vrot.slane %v4643, 2
  %v5020 = vsel %vm3298, %v5017, %v5019
  %v5021 = vrot.slane %v4644, 2
  %v5022 = vsel %vm3298, %v5019, %v5021
  %v5023 = vrot.slane %v4645, 2
  %v5024 = vrot.slane %v4646, 2
  %v5025 = vsel %vm3298, %v5023, %v5024
  %v5026 = vrot.slane %v4647, 2
  %v5027 = vsel %vm3298, %v5024, %v5026
  %v5028 = vrot.slane %v4648, 2
  %v5029 = vsel %vm3298, %v5026, %v5028
  %v5030 = vrot.slane %v4649, 2
  %v5031 = vrot.slane %v4650, 2
  %v5032 = vsel %vm3298, %v5030, %v5031
  %v5033 = vrot.slane %v4651, 2
  %v5034 = vsel %vm3298, %v5031, %v5033
  %v5035 = vrot.slane %v4652, 2
  %v5036 = vsel %vm3298, %v5033, %v5035
  %v5037 = vrot.slane %v4653, 2
  %v5038 = vrot.slane %v4654, 2
  %v5039 = vsel %vm3298, %v5037, %v5038
  %v5040 = vrot.slane %v4655, 2
  %v5041 = vsel %vm3298, %v5038, %v5040
  %v5042 = vrot.slane %v4656, 2
  %v5043 = vsel %vm3298, %v5040, %v5042
  %v5044 = vrot.slane %v4657, 2
  %v5045 = vrot.slane %v4658, 2
  %v5046 = vsel %vm3298, %v5044, %v5045
  %v5047 = vrot.slane %v4659, 2
  %v5048 = vsel %vm3298, %v5045, %v5047
  %v5049 = vrot.slane %v4660, 2
  %v5050 = vsel %vm3298, %v5047, %v5049
  %v5051 = vrot.slane %v4661, 2
  %v5052 = vrot.slane %v4662, 2
  %v5053 = vsel %vm3298, %v5051, %v5052
  %v5054 = vrot.slane %v4663, 2
  %v5055 = vsel %vm3298, %v5052, %v5054
  %v5056 = vrot.slane %v4664, 2
  %v5057 = vsel %vm3298, %v5054, %v5056
  %v5058 = vrot.slane %v4665, 2
  %v5059 = vrot.slane %v4666, 2
  %v5060 = vsel %vm3298, %v5058, %v5059
  %v5061 = vrot.slane %v4667, 2
  %v5062 = vsel %vm3298, %v5059, %v5061
  %v5063 = vrot.slane %v4668, 2
  %v5064 = vsel %vm3298, %v5061, %v5063
  %v5173 = vadd.f32 %v4416, %v4815
  %v5174 = vadd.f32 %v4417, %v4817
  %v5175 = vadd.f32 %v4418, %v4819
  %v5176 = vadd.f32 %v4419, %v4822
  %v5177 = vadd.f32 %v4420, %v4824
  %v5178 = vadd.f32 %v4421, %v4826
  %v5179 = vadd.f32 %v4422, %v4829
  %v5180 = vadd.f32 %v4423, %v4831
  %v5181 = vadd.f32 %v4424, %v4833
  %v5182 = vadd.f32 %v4425, %v4836
  %v5183 = vadd.f32 %v4426, %v4838
  %v5184 = vadd.f32 %v4427, %v4840
  %v5185 = vadd.f32 %v4428, %v4843
  %v5186 = vadd.f32 %v4429, %v4845
  %v5187 = vadd.f32 %v4430, %v4847
  %v5188 = vadd.f32 %v4431, %v4850
  %v5189 = vadd.f32 %v4432, %v4852
  %v5190 = vadd.f32 %v4433, %v4854
  %v5191 = vadd.f32 %v4434, %v4857
  %v5192 = vadd.f32 %v4435, %v4859
  %v5193 = vadd.f32 %v4436, %v4861
  %v5194 = vadd.f32 %v4437, %v4864
  %v5195 = vadd.f32 %v4438, %v4866
  %v5196 = vadd.f32 %v4439, %v4868
  %v5197 = vadd.f32 %v4440, %v4871
  %v5198 = vadd.f32 %v4441, %v4873
  %v5199 = vadd.f32 %v4442, %v4875
  %v5200 = vadd.f32 %v4443, %v4878
  %v5201 = vadd.f32 %v4444, %v4880
  %v5202 = vadd.f32 %v4445, %v4882
  %v5203 = vadd.f32 %v4446, %v4885
  %v5204 = vadd.f32 %v4447, %v4887
  %v5205 = vadd.f32 %v4448, %v4889
  %v5206 = vadd.f32 %v4449, %v4892
  %v5207 = vadd.f32 %v4450, %v4894
  %v5208 = vadd.f32 %v4451, %v4896
  %v5209 = vadd.f32 %v4452, %v4899
  %v5210 = vadd.f32 %v4453, %v4901
  %v5211 = vadd.f32 %v4454, %v4903
  %v5212 = vadd.f32 %v4455, %v4906
  %v5213 = vadd.f32 %v4456, %v4908
  %v5214 = vadd.f32 %v4457, %v4910
  %v5215 = vadd.f32 %v4458, %v4913
  %v5216 = vadd.f32 %v4459, %v4915
  %v5217 = vadd.f32 %v4460, %v4917
  %v5218 = vadd.f32 %v4461, %v4920
  %v5219 = vadd.f32 %v4462, %v4922
  %v5220 = vadd.f32 %v4463, %v4924
  %v5221 = vadd.f32 %v4464, %v4927
  %v5222 = vadd.f32 %v4465, %v4929
  %v5223 = vadd.f32 %v4466, %v4931
  %v5224 = vadd.f32 %v4467, %v4934
  %v5225 = vadd.f32 %v4468, %v4936
  %v5226 = vadd.f32 %v4469, %v4938
  %v5227 = vadd.f32 %v4470, %v4941
  %v5228 = vadd.f32 %v4471, %v4943
  %v5229 = vadd.f32 %v4472, %v4945
  %v5230 = vadd.f32 %v4473, %v4948
  %v5231 = vadd.f32 %v4474, %v4950
  %v5232 = vadd.f32 %v4475, %v4952
  %v5233 = vadd.f32 %v4476, %v4955
  %v5234 = vadd.f32 %v4477, %v4957
  %v5235 = vadd.f32 %v4478, %v4959
  %v5236 = vadd.f32 %v4479, %v4962
  %v5237 = vadd.f32 %v4480, %v4964
  %v5238 = vadd.f32 %v4481, %v4966
  %v5239 = vadd.f32 %v4482, %v4969
  %v5240 = vadd.f32 %v4483, %v4971
  %v5241 = vadd.f32 %v4484, %v4973
  %v5242 = vadd.f32 %v4485, %v4976
  %v5243 = vadd.f32 %v4486, %v4978
  %v5244 = vadd.f32 %v4487, %v4980
  %v5245 = vadd.f32 %v4488, %v4983
  %v5246 = vadd.f32 %v4489, %v4985
  %v5247 = vadd.f32 %v4490, %v4987
  %v5248 = vadd.f32 %v4491, %v4990
  %v5249 = vadd.f32 %v4492, %v4992
  %v5250 = vadd.f32 %v4493, %v4994
  %v5251 = vadd.f32 %v4494, %v4997
  %v5252 = vadd.f32 %v4495, %v4999
  %v5253 = vadd.f32 %v4496, %v5001
  %v5254 = vadd.f32 %v4497, %v5004
  %v5255 = vadd.f32 %v4498, %v5006
  %v5256 = vadd.f32 %v4499, %v5008
  %v5257 = vadd.f32 %v4500, %v5011
  %v5258 = vadd.f32 %v4501, %v5013
  %v5259 = vadd.f32 %v4502, %v5015
  %v5260 = vadd.f32 %v4503, %v5018
  %v5261 = vadd.f32 %v4504, %v5020
  %v5262 = vadd.f32 %v4505, %v5022
  %v5263 = vadd.f32 %v4506, %v5025
  %v5264 = vadd.f32 %v4507, %v5027
  %v5265 = vadd.f32 %v4508, %v5029
  %v5266 = vadd.f32 %v4509, %v5032
  %v5267 = vadd.f32 %v4510, %v5034
  %v5268 = vadd.f32 %v4511, %v5036
  %v5269 = vadd.f32 %v4512, %v5039
  %v5270 = vadd.f32 %v4513, %v5041
  %v5271 = vadd.f32 %v4514, %v5043
  %v5272 = vadd.f32 %v4515, %v5046
  %v5273 = vadd.f32 %v4516, %v5048
  %v5274 = vadd.f32 %v4517, %v5050
  %v5275 = vadd.f32 %v4518, %v5053
  %v5276 = vadd.f32 %v4519, %v5055
  %v5277 = vadd.f32 %v4520, %v5057
  %v5278 = vadd.f32 %v4521, %v5060
  %v5279 = vadd.f32 %v4522, %v5062
  %v5280 = vadd.f32 %v4523, %v5064
  %v5281 = vperm.slane %v193, 0
  %v5282 = vadd.f32 %v5173, %v5281
  %v5283 = vadd.f32 %v5174, %v5281
  %v5284 = vadd.f32 %v5175, %v5281
  %v5285 = vadd.f32 %v5176, %v5281
  %v5286 = vadd.f32 %v5177, %v5281
  %v5287 = vadd.f32 %v5178, %v5281
  %v5288 = vadd.f32 %v5179, %v5281
  %v5289 = vadd.f32 %v5180, %v5281
  %v5290 = vadd.f32 %v5181, %v5281
  %v5291 = vadd.f32 %v5182, %v5281
  %v5292 = vadd.f32 %v5183, %v5281
  %v5293 = vadd.f32 %v5184, %v5281
  %v5294 = vadd.f32 %v5185, %v5281
  %v5295 = vadd.f32 %v5186, %v5281
  %v5296 = vadd.f32 %v5187, %v5281
  %v5297 = vadd.f32 %v5188, %v5281
  %v5298 = vadd.f32 %v5189, %v5281
  %v5299 = vadd.f32 %v5190, %v5281
  %v5300 = vadd.f32 %v5191, %v5281
  %v5301 = vadd.f32 %v5192, %v5281
  %v5302 = vadd.f32 %v5193, %v5281
  %v5303 = vadd.f32 %v5194, %v5281
  %v5304 = vadd.f32 %v5195, %v5281
  %v5305 = vadd.f32 %v5196, %v5281
  %v5306 = vadd.f32 %v5197, %v5281
  %v5307 = vadd.f32 %v5198, %v5281
  %v5308 = vadd.f32 %v5199, %v5281
  %v5309 = vadd.f32 %v5200, %v5281
  %v5310 = vadd.f32 %v5201, %v5281
  %v5311 = vadd.f32 %v5202, %v5281
  %v5312 = vadd.f32 %v5203, %v5281
  %v5313 = vadd.f32 %v5204, %v5281
  %v5314 = vadd.f32 %v5205, %v5281
  %v5315 = vadd.f32 %v5206, %v5281
  %v5316 = vadd.f32 %v5207, %v5281
  %v5317 = vadd.f32 %v5208, %v5281
  %v5318 = vadd.f32 %v5209, %v5281
  %v5319 = vadd.f32 %v5210, %v5281
  %v5320 = vadd.f32 %v5211, %v5281
  %v5321 = vadd.f32 %v5212, %v5281
  %v5322 = vadd.f32 %v5213, %v5281
  %v5323 = vadd.f32 %v5214, %v5281
  %v5324 = vadd.f32 %v5215, %v5281
  %v5325 = vadd.f32 %v5216, %v5281
  %v5326 = vadd.f32 %v5217, %v5281
  %v5327 = vadd.f32 %v5218, %v5281
  %v5328 = vadd.f32 %v5219, %v5281
  %v5329 = vadd.f32 %v5220, %v5281
  %v5330 = vadd.f32 %v5221, %v5281
  %v5331 = vadd.f32 %v5222, %v5281
  %v5332 = vadd.f32 %v5223, %v5281
  %v5333 = vadd.f32 %v5224, %v5281
  %v5334 = vadd.f32 %v5225, %v5281
  %v5335 = vadd.f32 %v5226, %v5281
  %v5336 = vadd.f32 %v5227, %v5281
  %v5337 = vadd.f32 %v5228, %v5281
  %v5338 = vadd.f32 %v5229, %v5281
  %v5339 = vadd.f32 %v5230, %v5281
  %v5340 = vadd.f32 %v5231, %v5281
  %v5341 = vadd.f32 %v5232, %v5281
  %v5342 = vadd.f32 %v5233, %v5281
  %v5343 = vadd.f32 %v5234, %v5281
  %v5344 = vadd.f32 %v5235, %v5281
  %v5345 = vadd.f32 %v5236, %v5281
  %v5346 = vadd.f32 %v5237, %v5281
  %v5347 = vadd.f32 %v5238, %v5281
  %v5348 = vadd.f32 %v5239, %v5281
  %v5349 = vadd.f32 %v5240, %v5281
  %v5350 = vadd.f32 %v5241, %v5281
  %v5351 = vadd.f32 %v5242, %v5281
  %v5352 = vadd.f32 %v5243, %v5281
  %v5353 = vadd.f32 %v5244, %v5281
  %v5354 = vadd.f32 %v5245, %v5281
  %v5355 = vadd.f32 %v5246, %v5281
  %v5356 = vadd.f32 %v5247, %v5281
  %v5357 = vadd.f32 %v5248, %v5281
  %v5358 = vadd.f32 %v5249, %v5281
  %v5359 = vadd.f32 %v5250, %v5281
  %v5360 = vadd.f32 %v5251, %v5281
  %v5361 = vadd.f32 %v5252, %v5281
  %v5362 = vadd.f32 %v5253, %v5281
  %v5363 = vadd.f32 %v5254, %v5281
  %v5364 = vadd.f32 %v5255, %v5281
  %v5365 = vadd.f32 %v5256, %v5281
  %v5366 = vadd.f32 %v5257, %v5281
  %v5367 = vadd.f32 %v5258, %v5281
  %v5368 = vadd.f32 %v5259, %v5281
  %v5369 = vadd.f32 %v5260, %v5281
  %v5370 = vadd.f32 %v5261, %v5281
  %v5371 = vadd.f32 %v5262, %v5281
  %v5372 = vadd.f32 %v5263, %v5281
  %v5373 = vadd.f32 %v5264, %v5281
  %v5374 = vadd.f32 %v5265, %v5281
  %v5375 = vadd.f32 %v5266, %v5281
  %v5376 = vadd.f32 %v5267, %v5281
  %v5377 = vadd.f32 %v5268, %v5281
  %v5378 = vadd.f32 %v5269, %v5281
  %v5379 = vadd.f32 %v5270, %v5281
  %v5380 = vadd.f32 %v5271, %v5281
  %v5381 = vadd.f32 %v5272, %v5281
  %v5382 = vadd.f32 %v5273, %v5281
  %v5383 = vadd.f32 %v5274, %v5281
  %v5384 = vadd.f32 %v5275, %v5281
  %v5385 = vadd.f32 %v5276, %v5281
  %v5386 = vadd.f32 %v5277, %v5281
  %v5387 = vadd.f32 %v5278, %v5281
  %v5388 = vadd.f32 %v5279, %v5281
  %v5389 = vadd.f32 %v5280, %v5281
  %v5390 = vmax.f32 %v5282, 0.0
  %v5391 = vmax.f32 %v5283, 0.0
  %v5392 = vmax.f32 %v5284, 0.0
  %v5393 = vmax.f32 %v5285, 0.0
  %v5394 = vmax.f32 %v5286, 0.0
  %v5395 = vmax.f32 %v5287, 0.0
  %v5396 = vmax.f32 %v5288, 0.0
  %v5397 = vmax.f32 %v5289, 0.0
  %v5398 = vmax.f32 %v5290, 0.0
  %v5399 = vmax.f32 %v5291, 0.0
  %v5400 = vmax.f32 %v5292, 0.0
  %v5401 = vmax.f32 %v5293, 0.0
  %v5402 = vmax.f32 %v5294, 0.0
  %v5403 = vmax.f32 %v5295, 0.0
  %v5404 = vmax.f32 %v5296, 0.0
  %v5405 = vmax.f32 %v5297, 0.0
  %v5406 = vmax.f32 %v5298, 0.0
  %v5407 = vmax.f32 %v5299, 0.0
  %v5408 = vmax.f32 %v5300, 0.0
  %v5409 = vmax.f32 %v5301, 0.0
  %v5410 = vmax.f32 %v5302, 0.0
  %v5411 = vmax.f32 %v5303, 0.0
  %v5412 = vmax.f32 %v5304, 0.0
  %v5413 = vmax.f32 %v5305, 0.0
  %v5414 = vmax.f32 %v5306, 0.0
  %v5415 = vmax.f32 %v5307, 0.0
  %v5416 = vmax.f32 %v5308, 0.0
  %v5417 = vmax.f32 %v5309, 0.0
  %v5418 = vmax.f32 %v5310, 0.0
  %v5419 = vmax.f32 %v5311, 0.0
  %v5420 = vmax.f32 %v5312, 0.0
  %v5421 = vmax.f32 %v5313, 0.0
  %v5422 = vmax.f32 %v5314, 0.0
  %v5423 = vmax.f32 %v5315, 0.0
  %v5424 = vmax.f32 %v5316, 0.0
  %v5425 = vmax.f32 %v5317, 0.0
  %v5426 = vmax.f32 %v5318, 0.0
  %v5427 = vmax.f32 %v5319, 0.0
  %v5428 = vmax.f32 %v5320, 0.0
  %v5429 = vmax.f32 %v5321, 0.0
  %v5430 = vmax.f32 %v5322, 0.0
  %v5431 = vmax.f32 %v5323, 0.0
  %v5432 = vmax.f32 %v5324, 0.0
  %v5433 = vmax.f32 %v5325, 0.0
  %v5434 = vmax.f32 %v5326, 0.0
  %v5435 = vmax.f32 %v5327, 0.0
  %v5436 = vmax.f32 %v5328, 0.0
  %v5437 = vmax.f32 %v5329, 0.0
  %v5438 = vmax.f32 %v5330, 0.0
  %v5439 = vmax.f32 %v5331, 0.0
  %v5440 = vmax.f32 %v5332, 0.0
  %v5441 = vmax.f32 %v5333, 0.0
  %v5442 = vmax.f32 %v5334, 0.0
  %v5443 = vmax.f32 %v5335, 0.0
  %v5444 = vmax.f32 %v5336, 0.0
  %v5445 = vmax.f32 %v5337, 0.0
  %v5446 = vmax.f32 %v5338, 0.0
  %v5447 = vmax.f32 %v5339, 0.0
  %v5448 = vmax.f32 %v5340, 0.0
  %v5449 = vmax.f32 %v5341, 0.0
  %v5450 = vmax.f32 %v5342, 0.0
  %v5451 = vmax.f32 %v5343, 0.0
  %v5452 = vmax.f32 %v5344, 0.0
  %v5453 = vmax.f32 %v5345, 0.0
  %v5454 = vmax.f32 %v5346, 0.0
  %v5455 = vmax.f32 %v5347, 0.0
  %v5456 = vmax.f32 %v5348, 0.0
  %v5457 = vmax.f32 %v5349, 0.0
  %v5458 = vmax.f32 %v5350, 0.0
  %v5459 = vmax.f32 %v5351, 0.0
  %v5460 = vmax.f32 %v5352, 0.0
  %v5461 = vmax.f32 %v5353, 0.0
  %v5462 = vmax.f32 %v5354, 0.0
  %v5463 = vmax.f32 %v5355, 0.0
  %v5464 = vmax.f32 %v5356, 0.0
  %v5465 = vmax.f32 %v5357, 0.0
  %v5466 = vmax.f32 %v5358, 0.0
  %v5467 = vmax.f32 %v5359, 0.0
  %v5468 = vmax.f32 %v5360, 0.0
  %v5469 = vmax.f32 %v5361, 0.0
  %v5470 = vmax.f32 %v5362, 0.0
  %v5471 = vmax.f32 %v5363, 0.0
  %v5472 = vmax.f32 %v5364, 0.0
  %v5473 = vmax.f32 %v5365, 0.0
  %v5474 = vmax.f32 %v5366, 0.0
  %v5475 = vmax.f32 %v5367, 0.0
  %v5476 = vmax.f32 %v5368, 0.0
  %v5477 = vmax.f32 %v5369, 0.0
  %v5478 = vmax.f32 %v5370, 0.0
  %v5479 = vmax.f32 %v5371, 0.0
  %v5480 = vmax.f32 %v5372, 0.0
  %v5481 = vmax.f32 %v5373, 0.0
  %v5482 = vmax.f32 %v5374, 0.0
  %v5483 = vmax.f32 %v5375, 0.0
  %v5484 = vmax.f32 %v5376, 0.0
  %v5485 = vmax.f32 %v5377, 0.0
  %v5486 = vmax.f32 %v5378, 0.0
  %v5487 = vmax.f32 %v5379, 0.0
  %v5488 = vmax.f32 %v5380, 0.0
  %v5489 = vmax.f32 %v5381, 0.0
  %v5490 = vmax.f32 %v5382, 0.0
  %v5491 = vmax.f32 %v5383, 0.0
  %v5492 = vmax.f32 %v5384, 0.0
  %v5493 = vmax.f32 %v5385, 0.0
  %v5494 = vmax.f32 %v5386, 0.0
  %v5495 = vmax.f32 %v5387, 0.0
  %v5496 = vmax.f32 %v5388, 0.0
  %v5497 = vmax.f32 %v5389, 0.0
  %v5498 = vpack.c.bf16 %v5391, %v5390
  %v5499 = vpack.c.bf16 %v5393, %v5392
  %v5500 = vpack.c.bf16 %v5395, %v5394
  %v5501 = vpack.c.bf16 %v5397, %v5396
  %v5502 = vpack.c.bf16 %v5399, %v5398
  %v5503 = vpack.c.bf16 %v5401, %v5400
  %v5504 = vpack.c.bf16 %v5403, %v5402
  %v5505 = vpack.c.bf16 %v5405, %v5404
  %v5506 = vpack.c.bf16 %v5407, %v5406
  %v5507 = vpack.c.bf16 %v5409, %v5408
  %v5508 = vpack.c.bf16 %v5411, %v5410
  %v5509 = vpack.c.bf16 %v5413, %v5412
  %v5510 = vpack.c.bf16 %v5415, %v5414
  %v5511 = vpack.c.bf16 %v5417, %v5416
  %v5512 = vpack.c.bf16 %v5419, %v5418
  %v5513 = vpack.c.bf16 %v5421, %v5420
  %v5514 = vpack.c.bf16 %v5423, %v5422
  %v5515 = vpack.c.bf16 %v5425, %v5424
  %v5516 = vpack.c.bf16 %v5427, %v5426
  %v5517 = vpack.c.bf16 %v5429, %v5428
  %v5518 = vpack.c.bf16 %v5431, %v5430
  %v5519 = vpack.c.bf16 %v5433, %v5432
  %v5520 = vpack.c.bf16 %v5435, %v5434
  %v5521 = vpack.c.bf16 %v5437, %v5436
  %v5522 = vpack.c.bf16 %v5439, %v5438
  %v5523 = vpack.c.bf16 %v5441, %v5440
  %v5524 = vpack.c.bf16 %v5443, %v5442
  %v5525 = vpack.c.bf16 %v5445, %v5444
  %v5526 = vpack.c.bf16 %v5447, %v5446
  %v5527 = vpack.c.bf16 %v5449, %v5448
  %v5528 = vpack.c.bf16 %v5451, %v5450
  %v5529 = vpack.c.bf16 %v5453, %v5452
  %v5530 = vpack.c.bf16 %v5455, %v5454
  %v5531 = vpack.c.bf16 %v5457, %v5456
  %v5532 = vpack.c.bf16 %v5459, %v5458
  %v5533 = vpack.c.bf16 %v5461, %v5460
  %v5534 = vpack.c.bf16 %v5463, %v5462
  %v5535 = vpack.c.bf16 %v5465, %v5464
  %v5536 = vpack.c.bf16 %v5467, %v5466
  %v5537 = vpack.c.bf16 %v5469, %v5468
  %v5538 = vpack.c.bf16 %v5471, %v5470
  %v5539 = vpack.c.bf16 %v5473, %v5472
  %v5540 = vpack.c.bf16 %v5475, %v5474
  %v5541 = vpack.c.bf16 %v5477, %v5476
  %v5542 = vpack.c.bf16 %v5479, %v5478
  %v5543 = vpack.c.bf16 %v5481, %v5480
  %v5544 = vpack.c.bf16 %v5483, %v5482
  %v5545 = vpack.c.bf16 %v5485, %v5484
  %v5546 = vpack.c.bf16 %v5487, %v5486
  %v5547 = vpack.c.bf16 %v5489, %v5488
  %v5548 = vpack.c.bf16 %v5491, %v5490
  %v5549 = vpack.c.bf16 %v5493, %v5492
  %v5550 = vpack.c.bf16 %v5495, %v5494
  %v5551 = vpack.c.bf16 %v5497, %v5496
  %v5552 = vld [vmem:[%s3] sm:$0xf]
  %v5553 = vld [vmem:[%s3 + $0x4] sm:$0xf]
  %v5554 = vld [vmem:[%s3 + $0x8] sm:$0xf]
  %v5555 = vld [vmem:[%s3 + $0xc] sm:$0xf]
  %v5556 = vperm.slane %v193, 1
  %v5561 = vunpack.c.l.b16 %v5552
  %v5562 = vunpack.c.l.b16 %v5553
  %v5563 = vunpack.c.l.b16 %v5554
  %v5564 = vunpack.c.l.b16 %v5555
  %v5565 = vpack.c.b16 %v5562, %v5561
  %v5566 = vpack.c.b16 %v5564, %v5563
  %vm5569 = vcmask 261120
  %v5571 = vsel %vm5569, %v5498, 0
  %v5574 = vsel %vm5569, %v5499, 0
  %v5577 = vsel %vm5569, %v5500, 0
  %v5580 = vsel %vm5569, %v5501, 0
  %v5583 = vsel %vm5569, %v5502, 0
  %v5586 = vsel %vm5569, %v5503, 0
  %v5589 = vsel %vm5569, %v5504, 0
  %v5592 = vsel %vm5569, %v5505, 0
  %v5595 = vsel %vm5569, %v5506, 0
  %v5598 = vsel %vm5569, %v5507, 0
  %v5601 = vsel %vm5569, %v5508, 0
  %v5604 = vsel %vm5569, %v5509, 0
  %v5607 = vsel %vm5569, %v5510, 0
  %v5610 = vsel %vm5569, %v5511, 0
  %v5613 = vsel %vm5569, %v5512, 0
  %v5616 = vsel %vm5569, %v5513, 0
  %v5619 = vsel %vm5569, %v5514, 0
  %v5622 = vsel %vm5569, %v5515, 0
  %v5625 = vsel %vm5569, %v5516, 0
  %v5628 = vsel %vm5569, %v5517, 0
  %v5631 = vsel %vm5569, %v5518, 0
  %v5634 = vsel %vm5569, %v5519, 0
  %v5637 = vsel %vm5569, %v5520, 0
  %v5640 = vsel %vm5569, %v5521, 0
  %v5643 = vsel %vm5569, %v5522, 0
  %v5646 = vsel %vm5569, %v5523, 0
  %v5649 = vsel %vm5569, %v5524, 0
  %v5652 = vsel %vm5569, %v5525, 0
  %v5655 = vsel %vm5569, %v5526, 0
  %v5658 = vsel %vm5569, %v5527, 0
  %v5661 = vsel %vm5569, %v5528, 0
  %v5664 = vsel %vm5569, %v5529, 0
  %v5667 = vsel %vm5569, %v5530, 0
  %v5670 = vsel %vm5569, %v5531, 0
  %v5673 = vsel %vm5569, %v5532, 0
  %v5676 = vsel %vm5569, %v5533, 0
  %v5679 = vsel %vm5569, %v5534, 0
  %v5682 = vsel %vm5569, %v5535, 0
  %v5685 = vsel %vm5569, %v5536, 0
  %v5688 = vsel %vm5569, %v5537, 0
  %v5691 = vsel %vm5569, %v5538, 0
  %v5694 = vsel %vm5569, %v5539, 0
  %v5697 = vsel %vm5569, %v5540, 0
  %v5700 = vsel %vm5569, %v5541, 0
  %v5703 = vsel %vm5569, %v5542, 0
  %v5706 = vsel %vm5569, %v5543, 0
  %v5709 = vsel %vm5569, %v5544, 0
  %v5712 = vsel %vm5569, %v5545, 0
  %v5715 = vsel %vm5569, %v5546, 0
  %v5718 = vsel %vm5569, %v5547, 0
  %v5721 = vsel %vm5569, %v5548, 0
  %v5724 = vsel %vm5569, %v5549, 0
  %v5727 = vsel %vm5569, %v5550, 0
  %v5730 = vsel %vm5569, %v5551, 0
  %5732 = vmatpush.bf16.msra.mxu0 0
  %5733 = vmatpush.bf16.msra.mxu0 0
  %5734 = vmatpush.bf16.msra.mxu0 0
  %5735 = vmatpush.bf16.msra.mxu0 0
  %5736 = vmatpush.bf16.msra.mxu0 0
  %5737 = vmatpush.bf16.msra.mxu0 0
  %5738 = vmatpush.bf16.msra.mxu0 %v5566
  %5739 = vmatpush.bf16.msra.mxu0 %v5565
  %5740 = vmatmul.bf16.gmra.mxu0 %v5571
  %v5741 = vpop.f32.mrf.mxu0
  %v5742 = vadd.f32 %v5556, %v5741
  %v5743 = vpop.f32.mrf.mxu0
  %v5744 = vadd.f32 %v5556, %v5743
  %5745 = vmatmul.bf16.gmra.mxu0 %v5574
  %v5746 = vpop.f32.mrf.mxu0
  %v5747 = vadd.f32 %v5556, %v5746
  %v5748 = vpop.f32.mrf.mxu0
  %v5749 = vadd.f32 %v5556, %v5748
  %5750 = vmatmul.bf16.gmra.mxu0 %v5577
  %v5751 = vpop.f32.mrf.mxu0
  %v5752 = vadd.f32 %v5556, %v5751
  %v5753 = vpop.f32.mrf.mxu0
  %v5754 = vadd.f32 %v5556, %v5753
  %5755 = vmatmul.bf16.gmra.mxu0 %v5580
  %v5756 = vpop.f32.mrf.mxu0
  %v5757 = vadd.f32 %v5556, %v5756
  %v5758 = vpop.f32.mrf.mxu0
  %v5759 = vadd.f32 %v5556, %v5758
  %5760 = vmatmul.bf16.gmra.mxu0 %v5583
  %v5761 = vpop.f32.mrf.mxu0
  %v5762 = vadd.f32 %v5556, %v5761
  %v5763 = vpop.f32.mrf.mxu0
  %v5764 = vadd.f32 %v5556, %v5763
  %5765 = vmatmul.bf16.gmra.mxu0 %v5586
  %v5766 = vpop.f32.mrf.mxu0
  %v5767 = vadd.f32 %v5556, %v5766
  %v5768 = vpop.f32.mrf.mxu0
  %v5769 = vadd.f32 %v5556, %v5768
  %5770 = vmatmul.bf16.gmra.mxu0 %v5589
  %v5771 = vpop.f32.mrf.mxu0
  %v5772 = vadd.f32 %v5556, %v5771
  %v5773 = vpop.f32.mrf.mxu0
  %v5774 = vadd.f32 %v5556, %v5773
  %5775 = vmatmul.bf16.gmra.mxu0 %v5592
  %v5776 = vpop.f32.mrf.mxu0
  %v5777 = vadd.f32 %v5556, %v5776
  %v5778 = vpop.f32.mrf.mxu0
  %v5779 = vadd.f32 %v5556, %v5778
  %5780 = vmatmul.bf16.gmra.mxu0 %v5595
  %v5781 = vpop.f32.mrf.mxu0
  %v5782 = vadd.f32 %v5556, %v5781
  %v5783 = vpop.f32.mrf.mxu0
  %v5784 = vadd.f32 %v5556, %v5783
  %5785 = vmatmul.bf16.gmra.mxu0 %v5598
  %v5786 = vpop.f32.mrf.mxu0
  %v5787 = vadd.f32 %v5556, %v5786
  %v5788 = vpop.f32.mrf.mxu0
  %v5789 = vadd.f32 %v5556, %v5788
  %5790 = vmatmul.bf16.gmra.mxu0 %v5601
  %v5791 = vpop.f32.mrf.mxu0
  %v5792 = vadd.f32 %v5556, %v5791
  %v5793 = vpop.f32.mrf.mxu0
  %v5794 = vadd.f32 %v5556, %v5793
  %5795 = vmatmul.bf16.gmra.mxu0 %v5604
  %v5796 = vpop.f32.mrf.mxu0
  %v5797 = vadd.f32 %v5556, %v5796
  %v5798 = vpop.f32.mrf.mxu0
  %v5799 = vadd.f32 %v5556, %v5798
  %5800 = vmatmul.bf16.gmra.mxu0 %v5607
  %v5801 = vpop.f32.mrf.mxu0
  %v5802 = vadd.f32 %v5556, %v5801
  %v5803 = vpop.f32.mrf.mxu0
  %v5804 = vadd.f32 %v5556, %v5803
  %5805 = vmatmul.bf16.gmra.mxu0 %v5610
  %v5806 = vpop.f32.mrf.mxu0
  %v5807 = vadd.f32 %v5556, %v5806
  %v5808 = vpop.f32.mrf.mxu0
  %v5809 = vadd.f32 %v5556, %v5808
  %5810 = vmatmul.bf16.gmra.mxu0 %v5613
  %v5811 = vpop.f32.mrf.mxu0
  %v5812 = vadd.f32 %v5556, %v5811
  %v5813 = vpop.f32.mrf.mxu0
  %v5814 = vadd.f32 %v5556, %v5813
  %5815 = vmatmul.bf16.gmra.mxu0 %v5616
  %v5816 = vpop.f32.mrf.mxu0
  %v5817 = vadd.f32 %v5556, %v5816
  %v5818 = vpop.f32.mrf.mxu0
  %v5819 = vadd.f32 %v5556, %v5818
  %5820 = vmatmul.bf16.gmra.mxu0 %v5619
  %v5821 = vpop.f32.mrf.mxu0
  %v5822 = vadd.f32 %v5556, %v5821
  %v5823 = vpop.f32.mrf.mxu0
  %v5824 = vadd.f32 %v5556, %v5823
  %5825 = vmatmul.bf16.gmra.mxu0 %v5622
  %v5826 = vpop.f32.mrf.mxu0
  %v5827 = vadd.f32 %v5556, %v5826
  %v5828 = vpop.f32.mrf.mxu0
  %v5829 = vadd.f32 %v5556, %v5828
  %5830 = vmatmul.bf16.gmra.mxu0 %v5625
  %v5831 = vpop.f32.mrf.mxu0
  %v5832 = vadd.f32 %v5556, %v5831
  %v5833 = vpop.f32.mrf.mxu0
  %v5834 = vadd.f32 %v5556, %v5833
  %5835 = vmatmul.bf16.gmra.mxu0 %v5628
  %v5836 = vpop.f32.mrf.mxu0
  %v5837 = vadd.f32 %v5556, %v5836
  %v5838 = vpop.f32.mrf.mxu0
  %v5839 = vadd.f32 %v5556, %v5838
  %5840 = vmatmul.bf16.gmra.mxu0 %v5631
  %v5841 = vpop.f32.mrf.mxu0
  %v5842 = vadd.f32 %v5556, %v5841
  %v5843 = vpop.f32.mrf.mxu0
  %v5844 = vadd.f32 %v5556, %v5843
  %5845 = vmatmul.bf16.gmra.mxu0 %v5634
  %v5846 = vpop.f32.mrf.mxu0
  %v5847 = vadd.f32 %v5556, %v5846
  %v5848 = vpop.f32.mrf.mxu0
  %v5849 = vadd.f32 %v5556, %v5848
  %5850 = vmatmul.bf16.gmra.mxu0 %v5637
  %v5851 = vpop.f32.mrf.mxu0
  %v5852 = vadd.f32 %v5556, %v5851
  %v5853 = vpop.f32.mrf.mxu0
  %v5854 = vadd.f32 %v5556, %v5853
  %5855 = vmatmul.bf16.gmra.mxu0 %v5640
  %v5856 = vpop.f32.mrf.mxu0
  %v5857 = vadd.f32 %v5556, %v5856
  %v5858 = vpop.f32.mrf.mxu0
  %v5859 = vadd.f32 %v5556, %v5858
  %5860 = vmatmul.bf16.gmra.mxu0 %v5643
  %v5861 = vpop.f32.mrf.mxu0
  %v5862 = vadd.f32 %v5556, %v5861
  %v5863 = vpop.f32.mrf.mxu0
  %v5864 = vadd.f32 %v5556, %v5863
  %5865 = vmatmul.bf16.gmra.mxu0 %v5646
  %v5866 = vpop.f32.mrf.mxu0
  %v5867 = vadd.f32 %v5556, %v5866
  %v5868 = vpop.f32.mrf.mxu0
  %v5869 = vadd.f32 %v5556, %v5868
  %5870 = vmatmul.bf16.gmra.mxu0 %v5649
  %v5871 = vpop.f32.mrf.mxu0
  %v5872 = vadd.f32 %v5556, %v5871
  %v5873 = vpop.f32.mrf.mxu0
  %v5874 = vadd.f32 %v5556, %v5873
  %5875 = vmatmul.bf16.gmra.mxu0 %v5652
  %v5876 = vpop.f32.mrf.mxu0
  %v5877 = vadd.f32 %v5556, %v5876
  %v5878 = vpop.f32.mrf.mxu0
  %v5879 = vadd.f32 %v5556, %v5878
  %5880 = vmatmul.bf16.gmra.mxu0 %v5655
  %v5881 = vpop.f32.mrf.mxu0
  %v5882 = vadd.f32 %v5556, %v5881
  %v5883 = vpop.f32.mrf.mxu0
  %v5884 = vadd.f32 %v5556, %v5883
  %5885 = vmatmul.bf16.gmra.mxu0 %v5658
  %v5886 = vpop.f32.mrf.mxu0
  %v5887 = vadd.f32 %v5556, %v5886
  %v5888 = vpop.f32.mrf.mxu0
  %v5889 = vadd.f32 %v5556, %v5888
  %5890 = vmatmul.bf16.gmra.mxu0 %v5661
  %v5891 = vpop.f32.mrf.mxu0
  %v5892 = vadd.f32 %v5556, %v5891
  %v5893 = vpop.f32.mrf.mxu0
  %v5894 = vadd.f32 %v5556, %v5893
  %5895 = vmatmul.bf16.gmra.mxu0 %v5664
  %v5896 = vpop.f32.mrf.mxu0
  %v5897 = vadd.f32 %v5556, %v5896
  %v5898 = vpop.f32.mrf.mxu0
  %v5899 = vadd.f32 %v5556, %v5898
  %5900 = vmatmul.bf16.gmra.mxu0 %v5667
  %v5901 = vpop.f32.mrf.mxu0
  %v5902 = vadd.f32 %v5556, %v5901
  %v5903 = vpop.f32.mrf.mxu0
  %v5904 = vadd.f32 %v5556, %v5903
  %5905 = vmatmul.bf16.gmra.mxu0 %v5670
  %v5906 = vpop.f32.mrf.mxu0
  %v5907 = vadd.f32 %v5556, %v5906
  %v5908 = vpop.f32.mrf.mxu0
  %v5909 = vadd.f32 %v5556, %v5908
  %5910 = vmatmul.bf16.gmra.mxu0 %v5673
  %v5911 = vpop.f32.mrf.mxu0
  %v5912 = vadd.f32 %v5556, %v5911
  %v5913 = vpop.f32.mrf.mxu0
  %v5914 = vadd.f32 %v5556, %v5913
  %5915 = vmatmul.bf16.gmra.mxu0 %v5676
  %v5916 = vpop.f32.mrf.mxu0
  %v5917 = vadd.f32 %v5556, %v5916
  %v5918 = vpop.f32.mrf.mxu0
  %v5919 = vadd.f32 %v5556, %v5918
  %5920 = vmatmul.bf16.gmra.mxu0 %v5679
  %v5921 = vpop.f32.mrf.mxu0
  %v5922 = vadd.f32 %v5556, %v5921
  %v5923 = vpop.f32.mrf.mxu0
  %v5924 = vadd.f32 %v5556, %v5923
  %5925 = vmatmul.bf16.gmra.mxu0 %v5682
  %v5926 = vpop.f32.mrf.mxu0
  %v5927 = vadd.f32 %v5556, %v5926
  %v5928 = vpop.f32.mrf.mxu0
  %v5929 = vadd.f32 %v5556, %v5928
  %5930 = vmatmul.bf16.gmra.mxu0 %v5685
  %v5931 = vpop.f32.mrf.mxu0
  %v5932 = vadd.f32 %v5556, %v5931
  %v5933 = vpop.f32.mrf.mxu0
  %v5934 = vadd.f32 %v5556, %v5933
  %5935 = vmatmul.bf16.gmra.mxu0 %v5688
  %v5936 = vpop.f32.mrf.mxu0
  %v5937 = vadd.f32 %v5556, %v5936
  %v5938 = vpop.f32.mrf.mxu0
  %v5939 = vadd.f32 %v5556, %v5938
  %5940 = vmatmul.bf16.gmra.mxu0 %v5691
  %v5941 = vpop.f32.mrf.mxu0
  %v5942 = vadd.f32 %v5556, %v5941
  %v5943 = vpop.f32.mrf.mxu0
  %v5944 = vadd.f32 %v5556, %v5943
  %5945 = vmatmul.bf16.gmra.mxu0 %v5694
  %v5946 = vpop.f32.mrf.mxu0
  %v5947 = vadd.f32 %v5556, %v5946
  %v5948 = vpop.f32.mrf.mxu0
  %v5949 = vadd.f32 %v5556, %v5948
  %5950 = vmatmul.bf16.gmra.mxu0 %v5697
  %v5951 = vpop.f32.mrf.mxu0
  %v5952 = vadd.f32 %v5556, %v5951
  %v5953 = vpop.f32.mrf.mxu0
  %v5954 = vadd.f32 %v5556, %v5953
  %5955 = vmatmul.bf16.gmra.mxu0 %v5700
  %v5956 = vpop.f32.mrf.mxu0
  %v5957 = vadd.f32 %v5556, %v5956
  %v5958 = vpop.f32.mrf.mxu0
  %v5959 = vadd.f32 %v5556, %v5958
  %5960 = vmatmul.bf16.gmra.mxu0 %v5703
  %v5961 = vpop.f32.mrf.mxu0
  %v5962 = vadd.f32 %v5556, %v5961
  %v5963 = vpop.f32.mrf.mxu0
  %v5964 = vadd.f32 %v5556, %v5963
  %5965 = vmatmul.bf16.gmra.mxu0 %v5706
  %v5966 = vpop.f32.mrf.mxu0
  %v5967 = vadd.f32 %v5556, %v5966
  %v5968 = vpop.f32.mrf.mxu0
  %v5969 = vadd.f32 %v5556, %v5968
  %5970 = vmatmul.bf16.gmra.mxu0 %v5709
  %v5971 = vpop.f32.mrf.mxu0
  %v5972 = vadd.f32 %v5556, %v5971
  %v5973 = vpop.f32.mrf.mxu0
  %v5974 = vadd.f32 %v5556, %v5973
  %5975 = vmatmul.bf16.gmra.mxu0 %v5712
  %v5976 = vpop.f32.mrf.mxu0
  %v5977 = vadd.f32 %v5556, %v5976
  %v5978 = vpop.f32.mrf.mxu0
  %v5979 = vadd.f32 %v5556, %v5978
  %5980 = vmatmul.bf16.gmra.mxu0 %v5715
  %v5981 = vpop.f32.mrf.mxu0
  %v5982 = vadd.f32 %v5556, %v5981
  %v5983 = vpop.f32.mrf.mxu0
  %v5984 = vadd.f32 %v5556, %v5983
  %5985 = vmatmul.bf16.gmra.mxu0 %v5718
  %v5986 = vpop.f32.mrf.mxu0
  %v5987 = vadd.f32 %v5556, %v5986
  %v5988 = vpop.f32.mrf.mxu0
  %v5989 = vadd.f32 %v5556, %v5988
  %5990 = vmatmul.bf16.gmra.mxu0 %v5721
  %v5991 = vpop.f32.mrf.mxu0
  %v5992 = vadd.f32 %v5556, %v5991
  %v5993 = vpop.f32.mrf.mxu0
  %v5994 = vadd.f32 %v5556, %v5993
  %5995 = vmatmul.bf16.gmra.mxu0 %v5724
  %v5996 = vpop.f32.mrf.mxu0
  %v5997 = vadd.f32 %v5556, %v5996
  %v5998 = vpop.f32.mrf.mxu0
  %v5999 = vadd.f32 %v5556, %v5998
  %6000 = vmatmul.bf16.gmra.mxu0 %v5727
  %v6001 = vpop.f32.mrf.mxu0
  %v6002 = vadd.f32 %v5556, %v6001
  %v6003 = vpop.f32.mrf.mxu0
  %v6004 = vadd.f32 %v5556, %v6003
  %6005 = vmatmul.bf16.gmra.mxu0 %v5730
  %v6006 = vpop.f32.mrf.mxu0
  %v6007 = vadd.f32 %v5556, %v6006
  %v6008 = vpop.f32.mrf.mxu0
  %v6009 = vadd.f32 %v5556, %v6008
  %6010 = vdwg.mxu0
  %v6011 = vmax.f32 %v5742, 0.0
  %v6012 = vmax.f32 %v5744, 0.0
  %v6013 = vmax.f32 %v5747, 0.0
  %v6014 = vmax.f32 %v5749, 0.0
  %v6015 = vmax.f32 %v5752, 0.0
  %v6016 = vmax.f32 %v5754, 0.0
  %v6017 = vmax.f32 %v5757, 0.0
  %v6018 = vmax.f32 %v5759, 0.0
  %v6019 = vmax.f32 %v5762, 0.0
  %v6020 = vmax.f32 %v5764, 0.0
  %v6021 = vmax.f32 %v5767, 0.0
  %v6022 = vmax.f32 %v5769, 0.0
  %v6023 = vmax.f32 %v5772, 0.0
  %v6024 = vmax.f32 %v5774, 0.0
  %v6025 = vmax.f32 %v5777, 0.0
  %v6026 = vmax.f32 %v5779, 0.0
  %v6027 = vmax.f32 %v5782, 0.0
  %v6028 = vmax.f32 %v5784, 0.0
  %v6029 = vmax.f32 %v5787, 0.0
  %v6030 = vmax.f32 %v5789, 0.0
  %v6031 = vmax.f32 %v5792, 0.0
  %v6032 = vmax.f32 %v5794, 0.0
  %v6033 = vmax.f32 %v5797, 0.0
  %v6034 = vmax.f32 %v5799, 0.0
  %v6035 = vmax.f32 %v5802, 0.0
  %v6036 = vmax.f32 %v5804, 0.0
  %v6037 = vmax.f32 %v5807, 0.0
  %v6038 = vmax.f32 %v5809, 0.0
  %v6039 = vmax.f32 %v5812, 0.0
  %v6040 = vmax.f32 %v5814, 0.0
  %v6041 = vmax.f32 %v5817, 0.0
  %v6042 = vmax.f32 %v5819, 0.0
  %v6043 = vmax.f32 %v5822, 0.0
  %v6044 = vmax.f32 %v5824, 0.0
  %v6045 = vmax.f32 %v5827, 0.0
  %v6046 = vmax.f32 %v5829, 0.0
  %v6047 = vmax.f32 %v5832, 0.0
  %v6048 = vmax.f32 %v5834, 0.0
  %v6049 = vmax.f32 %v5837, 0.0
  %v6050 = vmax.f32 %v5839, 0.0
  %v6051 = vmax.f32 %v5842, 0.0
  %v6052 = vmax.f32 %v5844, 0.0
  %v6053 = vmax.f32 %v5847, 0.0
  %v6054 = vmax.f32 %v5849, 0.0
  %v6055 = vmax.f32 %v5852, 0.0
  %v6056 = vmax.f32 %v5854, 0.0
  %v6057 = vmax.f32 %v5857, 0.0
  %v6058 = vmax.f32 %v5859, 0.0
  %v6059 = vmax.f32 %v5862, 0.0
  %v6060 = vmax.f32 %v5864, 0.0
  %v6061 = vmax.f32 %v5867, 0.0
  %v6062 = vmax.f32 %v5869, 0.0
  %v6063 = vmax.f32 %v5872, 0.0
  %v6064 = vmax.f32 %v5874, 0.0
  %v6065 = vmax.f32 %v5877, 0.0
  %v6066 = vmax.f32 %v5879, 0.0
  %v6067 = vmax.f32 %v5882, 0.0
  %v6068 = vmax.f32 %v5884, 0.0
  %v6069 = vmax.f32 %v5887, 0.0
  %v6070 = vmax.f32 %v5889, 0.0
  %v6071 = vmax.f32 %v5892, 0.0
  %v6072 = vmax.f32 %v5894, 0.0
  %v6073 = vmax.f32 %v5897, 0.0
  %v6074 = vmax.f32 %v5899, 0.0
  %v6075 = vmax.f32 %v5902, 0.0
  %v6076 = vmax.f32 %v5904, 0.0
  %v6077 = vmax.f32 %v5907, 0.0
  %v6078 = vmax.f32 %v5909, 0.0
  %v6079 = vmax.f32 %v5912, 0.0
  %v6080 = vmax.f32 %v5914, 0.0
  %v6081 = vmax.f32 %v5917, 0.0
  %v6082 = vmax.f32 %v5919, 0.0
  %v6083 = vmax.f32 %v5922, 0.0
  %v6084 = vmax.f32 %v5924, 0.0
  %v6085 = vmax.f32 %v5927, 0.0
  %v6086 = vmax.f32 %v5929, 0.0
  %v6087 = vmax.f32 %v5932, 0.0
  %v6088 = vmax.f32 %v5934, 0.0
  %v6089 = vmax.f32 %v5937, 0.0
  %v6090 = vmax.f32 %v5939, 0.0
  %v6091 = vmax.f32 %v5942, 0.0
  %v6092 = vmax.f32 %v5944, 0.0
  %v6093 = vmax.f32 %v5947, 0.0
  %v6094 = vmax.f32 %v5949, 0.0
  %v6095 = vmax.f32 %v5952, 0.0
  %v6096 = vmax.f32 %v5954, 0.0
  %v6097 = vmax.f32 %v5957, 0.0
  %v6098 = vmax.f32 %v5959, 0.0
  %v6099 = vmax.f32 %v5962, 0.0
  %v6100 = vmax.f32 %v5964, 0.0
  %v6101 = vmax.f32 %v5967, 0.0
  %v6102 = vmax.f32 %v5969, 0.0
  %v6103 = vmax.f32 %v5972, 0.0
  %v6104 = vmax.f32 %v5974, 0.0
  %v6105 = vmax.f32 %v5977, 0.0
  %v6106 = vmax.f32 %v5979, 0.0
  %v6107 = vmax.f32 %v5982, 0.0
  %v6108 = vmax.f32 %v5984, 0.0
  %v6109 = vmax.f32 %v5987, 0.0
  %v6110 = vmax.f32 %v5989, 0.0
  %v6111 = vmax.f32 %v5992, 0.0
  %v6112 = vmax.f32 %v5994, 0.0
  %v6113 = vmax.f32 %v5997, 0.0
  %v6114 = vmax.f32 %v5999, 0.0
  %v6115 = vmax.f32 %v6002, 0.0
  %v6116 = vmax.f32 %v6004, 0.0
  %v6117 = vmax.f32 %v6007, 0.0
  %v6118 = vmax.f32 %v6009, 0.0
  %v6119 = vld [vmem:[%s1] sm:$0xff]
  %v6120 = vld [vmem:[%s1 + $0x8] sm:$0xff]
  %v6121 = vld [vmem:[%s1 + $0x10] sm:$0xff]
  %v6122 = vld [vmem:[%s1 + $0x18] sm:$0xff]
  %v6123 = vld [vmem:[%s1 + $0x20] sm:$0xff]
  %v6124 = vld [vmem:[%s1 + $0x28] sm:$0xff]
  %v6125 = vld [vmem:[%s1 + $0x30] sm:$0xff]
  %v6126 = vld [vmem:[%s1 + $0x38] sm:$0xff]
  %v6127 = vld [vmem:[%s1 + $0x40] sm:$0xff]
  %v6128 = vld [vmem:[%s1 + $0x48] sm:$0xff]
  %v6129 = vld [vmem:[%s1 + $0x50] sm:$0xff]
  %v6130 = vld [vmem:[%s1 + $0x58] sm:$0xff]
  %v6131 = vld [vmem:[%s1 + $0x60] sm:$0xff]
  %v6132 = vld [vmem:[%s1 + $0x68] sm:$0xff]
  %v6133 = vld [vmem:[%s1 + $0x70] sm:$0xff]
  %v6134 = vld [vmem:[%s1 + $0x78] sm:$0xff]
  %v6135 = vld [vmem:[%s1 + $0x80] sm:$0xff]
  %v6136 = vld [vmem:[%s1 + $0x88] sm:$0xff]
  %v6137 = vld [vmem:[%s1 + $0x90] sm:$0xff]
  %v6138 = vld [vmem:[%s1 + $0x98] sm:$0xff]
  %v6139 = vld [vmem:[%s1 + $0xa0] sm:$0xff]
  %v6140 = vld [vmem:[%s1 + $0xa8] sm:$0xff]
  %v6141 = vld [vmem:[%s1 + $0xb0] sm:$0xff]
  %v6142 = vld [vmem:[%s1 + $0xb8] sm:$0xff]
  %v6143 = vld [vmem:[%s1 + $0xc0] sm:$0xff]
  %v6144 = vld [vmem:[%s1 + $0xc8] sm:$0xff]
  %v6145 = vld [vmem:[%s1 + $0xd0] sm:$0xff]
  %v6146 = vld [vmem:[%s1 + $0xd8] sm:$0xff]
  %v6147 = vld [vmem:[%s1 + $0xe0] sm:$0xff]
  %v6148 = vld [vmem:[%s1 + $0xe8] sm:$0xff]
  %v6149 = vld [vmem:[%s1 + $0xf0] sm:$0xff]
  %v6150 = vld [vmem:[%s1 + $0xf8] sm:$0xff]
  %v6151 = vld [vmem:[%s1 + $0x100] sm:$0xff]
  %v6152 = vld [vmem:[%s1 + $0x108] sm:$0xff]
  %v6153 = vld [vmem:[%s1 + $0x110] sm:$0xff]
  %v6154 = vld [vmem:[%s1 + $0x118] sm:$0xff]
  %v6155 = vld [vmem:[%s1 + $0x120] sm:$0xff]
  %v6156 = vld [vmem:[%s1 + $0x128] sm:$0xff]
  %v6157 = vld [vmem:[%s1 + $0x130] sm:$0xff]
  %v6158 = vld [vmem:[%s1 + $0x138] sm:$0xff]
  %v6159 = vld [vmem:[%s1 + $0x140] sm:$0xff]
  %v6160 = vld [vmem:[%s1 + $0x148] sm:$0xff]
  %v6161 = vld [vmem:[%s1 + $0x150] sm:$0xff]
  %v6162 = vld [vmem:[%s1 + $0x158] sm:$0xff]
  %v6163 = vld [vmem:[%s1 + $0x160] sm:$0xff]
  %v6164 = vld [vmem:[%s1 + $0x168] sm:$0xff]
  %v6165 = vld [vmem:[%s1 + $0x170] sm:$0xff]
  %v6166 = vld [vmem:[%s1 + $0x178] sm:$0xff]
  %v6167 = vld [vmem:[%s1 + $0x180] sm:$0xff]
  %v6168 = vld [vmem:[%s1 + $0x188] sm:$0xff]
  %v6169 = vld [vmem:[%s1 + $0x190] sm:$0xff]
  %v6170 = vld [vmem:[%s1 + $0x198] sm:$0xff]
  %v6171 = vld [vmem:[%s1 + $0x1a0] sm:$0xff]
  %v6172 = vld [vmem:[%s1 + $0x1a8] sm:$0xff]
  %6174 = vset.pattern.permute.xlu0 0
  %6175 = vperm.xlu0 %6174, %v6119
  %v6176 = vpop.permute.xlu0 %6175
  %6179 = vset.pattern.permute.xlu0 0
  %6180 = vperm.xlu0 %6179, %v6120
  %v6181 = vpop.permute.xlu0 %6180
  %6184 = vset.pattern.permute.xlu0 0
  %6185 = vperm.xlu0 %6184, %v6121
  %v6186 = vpop.permute.xlu0 %6185
  %6189 = vset.pattern.permute.xlu0 0
  %6190 = vperm.xlu0 %6189, %v6122
  %v6191 = vpop.permute.xlu0 %6190
  %6194 = vset.pattern.permute.xlu0 0
  %6195 = vperm.xlu0 %6194, %v6123
  %v6196 = vpop.permute.xlu0 %6195
  %6199 = vset.pattern.permute.xlu0 0
  %6200 = vperm.xlu0 %6199, %v6124
  %v6201 = vpop.permute.xlu0 %6200
  %6204 = vset.pattern.permute.xlu0 0
  %6205 = vperm.xlu0 %6204, %v6125
  %v6206 = vpop.permute.xlu0 %6205
  %6209 = vset.pattern.permute.xlu0 0
  %6210 = vperm.xlu0 %6209, %v6126
  %v6211 = vpop.permute.xlu0 %6210
  %6214 = vset.pattern.permute.xlu0 0
  %6215 = vperm.xlu0 %6214, %v6127
  %v6216 = vpop.permute.xlu0 %6215
  %6219 = vset.pattern.permute.xlu0 0
  %6220 = vperm.xlu0 %6219, %v6128
  %v6221 = vpop.permute.xlu0 %6220
  %6224 = vset.pattern.permute.xlu0 0
  %6225 = vperm.xlu0 %6224, %v6129
  %v6226 = vpop.permute.xlu0 %6225
  %6229 = vset.pattern.permute.xlu0 0
  %6230 = vperm.xlu0 %6229, %v6130
  %v6231 = vpop.permute.xlu0 %6230
  %6234 = vset.pattern.permute.xlu0 0
  %6235 = vperm.xlu0 %6234, %v6131
  %v6236 = vpop.permute.xlu0 %6235
  %6239 = vset.pattern.permute.xlu0 0
  %6240 = vperm.xlu0 %6239, %v6132
  %v6241 = vpop.permute.xlu0 %6240
  %6244 = vset.pattern.permute.xlu0 0
  %6245 = vperm.xlu0 %6244, %v6133
  %v6246 = vpop.permute.xlu0 %6245
  %6249 = vset.pattern.permute.xlu0 0
  %6250 = vperm.xlu0 %6249, %v6134
  %v6251 = vpop.permute.xlu0 %6250
  %6254 = vset.pattern.permute.xlu0 0
  %6255 = vperm.xlu0 %6254, %v6135
  %v6256 = vpop.permute.xlu0 %6255
  %6259 = vset.pattern.permute.xlu0 0
  %6260 = vperm.xlu0 %6259, %v6136
  %v6261 = vpop.permute.xlu0 %6260
  %6264 = vset.pattern.permute.xlu0 0
  %6265 = vperm.xlu0 %6264, %v6137
  %v6266 = vpop.permute.xlu0 %6265
  %6269 = vset.pattern.permute.xlu0 0
  %6270 = vperm.xlu0 %6269, %v6138
  %v6271 = vpop.permute.xlu0 %6270
  %6274 = vset.pattern.permute.xlu0 0
  %6275 = vperm.xlu0 %6274, %v6139
  %v6276 = vpop.permute.xlu0 %6275
  %6279 = vset.pattern.permute.xlu0 0
  %6280 = vperm.xlu0 %6279, %v6140
  %v6281 = vpop.permute.xlu0 %6280
  %6284 = vset.pattern.permute.xlu0 0
  %6285 = vperm.xlu0 %6284, %v6141
  %v6286 = vpop.permute.xlu0 %6285
  %6289 = vset.pattern.permute.xlu0 0
  %6290 = vperm.xlu0 %6289, %v6142
  %v6291 = vpop.permute.xlu0 %6290
  %6294 = vset.pattern.permute.xlu0 0
  %6295 = vperm.xlu0 %6294, %v6143
  %v6296 = vpop.permute.xlu0 %6295
  %6299 = vset.pattern.permute.xlu0 0
  %6300 = vperm.xlu0 %6299, %v6144
  %v6301 = vpop.permute.xlu0 %6300
  %6304 = vset.pattern.permute.xlu0 0
  %6305 = vperm.xlu0 %6304, %v6145
  %v6306 = vpop.permute.xlu0 %6305
  %6309 = vset.pattern.permute.xlu0 0
  %6310 = vperm.xlu0 %6309, %v6146
  %v6311 = vpop.permute.xlu0 %6310
  %6314 = vset.pattern.permute.xlu0 0
  %6315 = vperm.xlu0 %6314, %v6147
  %v6316 = vpop.permute.xlu0 %6315
  %6319 = vset.pattern.permute.xlu0 0
  %6320 = vperm.xlu0 %6319, %v6148
  %v6321 = vpop.permute.xlu0 %6320
  %6324 = vset.pattern.permute.xlu0 0
  %6325 = vperm.xlu0 %6324, %v6149
  %v6326 = vpop.permute.xlu0 %6325
  %6329 = vset.pattern.permute.xlu0 0
  %6330 = vperm.xlu0 %6329, %v6150
  %v6331 = vpop.permute.xlu0 %6330
  %6334 = vset.pattern.permute.xlu0 0
  %6335 = vperm.xlu0 %6334, %v6151
  %v6336 = vpop.permute.xlu0 %6335
  %6339 = vset.pattern.permute.xlu0 0
  %6340 = vperm.xlu0 %6339, %v6152
  %v6341 = vpop.permute.xlu0 %6340
  %6344 = vset.pattern.permute.xlu0 0
  %6345 = vperm.xlu0 %6344, %v6153
  %v6346 = vpop.permute.xlu0 %6345
  %6349 = vset.pattern.permute.xlu0 0
  %6350 = vperm.xlu0 %6349, %v6154
  %v6351 = vpop.permute.xlu0 %6350
  %6354 = vset.pattern.permute.xlu0 0
  %6355 = vperm.xlu0 %6354, %v6155
  %v6356 = vpop.permute.xlu0 %6355
  %6359 = vset.pattern.permute.xlu0 0
  %6360 = vperm.xlu0 %6359, %v6156
  %v6361 = vpop.permute.xlu0 %6360
  %6364 = vset.pattern.permute.xlu0 0
  %6365 = vperm.xlu0 %6364, %v6157
  %v6366 = vpop.permute.xlu0 %6365
  %6369 = vset.pattern.permute.xlu0 0
  %6370 = vperm.xlu0 %6369, %v6158
  %v6371 = vpop.permute.xlu0 %6370
  %6374 = vset.pattern.permute.xlu0 0
  %6375 = vperm.xlu0 %6374, %v6159
  %v6376 = vpop.permute.xlu0 %6375
  %6379 = vset.pattern.permute.xlu0 0
  %6380 = vperm.xlu0 %6379, %v6160
  %v6381 = vpop.permute.xlu0 %6380
  %6384 = vset.pattern.permute.xlu0 0
  %6385 = vperm.xlu0 %6384, %v6161
  %v6386 = vpop.permute.xlu0 %6385
  %6389 = vset.pattern.permute.xlu0 0
  %6390 = vperm.xlu0 %6389, %v6162
  %v6391 = vpop.permute.xlu0 %6390
  %6394 = vset.pattern.permute.xlu0 0
  %6395 = vperm.xlu0 %6394, %v6163
  %v6396 = vpop.permute.xlu0 %6395
  %6399 = vset.pattern.permute.xlu0 0
  %6400 = vperm.xlu0 %6399, %v6164
  %v6401 = vpop.permute.xlu0 %6400
  %6404 = vset.pattern.permute.xlu0 0
  %6405 = vperm.xlu0 %6404, %v6165
  %v6406 = vpop.permute.xlu0 %6405
  %6409 = vset.pattern.permute.xlu0 0
  %6410 = vperm.xlu0 %6409, %v6166
  %v6411 = vpop.permute.xlu0 %6410
  %6414 = vset.pattern.permute.xlu0 0
  %6415 = vperm.xlu0 %6414, %v6167
  %v6416 = vpop.permute.xlu0 %6415
  %6419 = vset.pattern.permute.xlu0 0
  %6420 = vperm.xlu0 %6419, %v6168
  %v6421 = vpop.permute.xlu0 %6420
  %6424 = vset.pattern.permute.xlu0 0
  %6425 = vperm.xlu0 %6424, %v6169
  %v6426 = vpop.permute.xlu0 %6425
  %6429 = vset.pattern.permute.xlu0 0
  %6430 = vperm.xlu0 %6429, %v6170
  %v6431 = vpop.permute.xlu0 %6430
  %6434 = vset.pattern.permute.xlu0 0
  %6435 = vperm.xlu0 %6434, %v6171
  %v6436 = vpop.permute.xlu0 %6435
  %6439 = vset.pattern.permute.xlu0 0
  %6440 = vperm.xlu0 %6439, %v6172
  %v6441 = vpop.permute.xlu0 %6440
  %v6443 = vmul.f32 %v6011, %v6176
  %v6444 = vmul.f32 %v6012, %v6181
  %v6445 = vmul.f32 %v6013, %v6186
  %v6446 = vmul.f32 %v6014, %v6191
  %v6447 = vmul.f32 %v6015, %v6196
  %v6448 = vmul.f32 %v6016, %v6201
  %v6449 = vmul.f32 %v6017, %v6206
  %v6450 = vmul.f32 %v6018, %v6211
  %v6451 = vmul.f32 %v6019, %v6216
  %v6452 = vmul.f32 %v6020, %v6221
  %v6453 = vmul.f32 %v6021, %v6226
  %v6454 = vmul.f32 %v6022, %v6231
  %v6455 = vmul.f32 %v6023, %v6236
  %v6456 = vmul.f32 %v6024, %v6241
  %v6457 = vmul.f32 %v6025, %v6246
  %v6458 = vmul.f32 %v6026, %v6251
  %v6459 = vmul.f32 %v6027, %v6256
  %v6460 = vmul.f32 %v6028, %v6261
  %v6461 = vmul.f32 %v6029, %v6266
  %v6462 = vmul.f32 %v6030, %v6271
  %v6463 = vmul.f32 %v6031, %v6276
  %v6464 = vmul.f32 %v6032, %v6281
  %v6465 = vmul.f32 %v6033, %v6286
  %v6466 = vmul.f32 %v6034, %v6291
  %v6467 = vmul.f32 %v6035, %v6296
  %v6468 = vmul.f32 %v6036, %v6301
  %v6469 = vmul.f32 %v6037, %v6306
  %v6470 = vmul.f32 %v6038, %v6311
  %v6471 = vmul.f32 %v6039, %v6316
  %v6472 = vmul.f32 %v6040, %v6321
  %v6473 = vmul.f32 %v6041, %v6326
  %v6474 = vmul.f32 %v6042, %v6331
  %v6475 = vmul.f32 %v6043, %v6336
  %v6476 = vmul.f32 %v6044, %v6341
  %v6477 = vmul.f32 %v6045, %v6346
  %v6478 = vmul.f32 %v6046, %v6351
  %v6479 = vmul.f32 %v6047, %v6356
  %v6480 = vmul.f32 %v6048, %v6361
  %v6481 = vmul.f32 %v6049, %v6366
  %v6482 = vmul.f32 %v6050, %v6371
  %v6483 = vmul.f32 %v6051, %v6376
  %v6484 = vmul.f32 %v6052, %v6381
  %v6485 = vmul.f32 %v6053, %v6386
  %v6486 = vmul.f32 %v6054, %v6391
  %v6487 = vmul.f32 %v6055, %v6396
  %v6488 = vmul.f32 %v6056, %v6401
  %v6489 = vmul.f32 %v6057, %v6406
  %v6490 = vmul.f32 %v6058, %v6411
  %v6491 = vmul.f32 %v6059, %v6416
  %v6492 = vmul.f32 %v6060, %v6421
  %v6493 = vmul.f32 %v6061, %v6426
  %v6494 = vmul.f32 %v6062, %v6431
  %v6495 = vmul.f32 %v6063, %v6436
  %v6496 = vmul.f32 %v6064, %v6441
  %v6497 = vmul.f32 %v6065, %v6176
  %v6498 = vmul.f32 %v6066, %v6181
  %v6499 = vmul.f32 %v6067, %v6186
  %v6500 = vmul.f32 %v6068, %v6191
  %v6501 = vmul.f32 %v6069, %v6196
  %v6502 = vmul.f32 %v6070, %v6201
  %v6503 = vmul.f32 %v6071, %v6206
  %v6504 = vmul.f32 %v6072, %v6211
  %v6505 = vmul.f32 %v6073, %v6216
  %v6506 = vmul.f32 %v6074, %v6221
  %v6507 = vmul.f32 %v6075, %v6226
  %v6508 = vmul.f32 %v6076, %v6231
  %v6509 = vmul.f32 %v6077, %v6236
  %v6510 = vmul.f32 %v6078, %v6241
  %v6511 = vmul.f32 %v6079, %v6246
  %v6512 = vmul.f32 %v6080, %v6251
  %v6513 = vmul.f32 %v6081, %v6256
  %v6514 = vmul.f32 %v6082, %v6261
  %v6515 = vmul.f32 %v6083, %v6266
  %v6516 = vmul.f32 %v6084, %v6271
  %v6517 = vmul.f32 %v6085, %v6276
  %v6518 = vmul.f32 %v6086, %v6281
  %v6519 = vmul.f32 %v6087, %v6286
  %v6520 = vmul.f32 %v6088, %v6291
  %v6521 = vmul.f32 %v6089, %v6296
  %v6522 = vmul.f32 %v6090, %v6301
  %v6523 = vmul.f32 %v6091, %v6306
  %v6524 = vmul.f32 %v6092, %v6311
  %v6525 = vmul.f32 %v6093, %v6316
  %v6526 = vmul.f32 %v6094, %v6321
  %v6527 = vmul.f32 %v6095, %v6326
  %v6528 = vmul.f32 %v6096, %v6331
  %v6529 = vmul.f32 %v6097, %v6336
  %v6530 = vmul.f32 %v6098, %v6341
  %v6531 = vmul.f32 %v6099, %v6346
  %v6532 = vmul.f32 %v6100, %v6351
  %v6533 = vmul.f32 %v6101, %v6356
  %v6534 = vmul.f32 %v6102, %v6361
  %v6535 = vmul.f32 %v6103, %v6366
  %v6536 = vmul.f32 %v6104, %v6371
  %v6537 = vmul.f32 %v6105, %v6376
  %v6538 = vmul.f32 %v6106, %v6381
  %v6539 = vmul.f32 %v6107, %v6386
  %v6540 = vmul.f32 %v6108, %v6391
  %v6541 = vmul.f32 %v6109, %v6396
  %v6542 = vmul.f32 %v6110, %v6401
  %v6543 = vmul.f32 %v6111, %v6406
  %v6544 = vmul.f32 %v6112, %v6411
  %v6545 = vmul.f32 %v6113, %v6416
  %v6546 = vmul.f32 %v6114, %v6421
  %v6547 = vmul.f32 %v6115, %v6426
  %v6548 = vmul.f32 %v6116, %v6431
  %v6549 = vmul.f32 %v6117, %v6436
  %v6550 = vmul.f32 %v6118, %v6441
  %v6551 = vperm.slane %v190, 0
  %v6552 = vmul.f32 %v6443, %v6551
  %v6553 = vmul.f32 %v6444, %v6551
  %v6554 = vmul.f32 %v6446, %v6551
  %v6555 = vmul.f32 %v6447, %v6551
  %v6556 = vmul.f32 %v6449, %v6551
  %v6557 = vmul.f32 %v6450, %v6551
  %v6558 = vmul.f32 %v6452, %v6551
  %v6559 = vmul.f32 %v6453, %v6551
  %v6560 = vmul.f32 %v6455, %v6551
  %v6561 = vmul.f32 %v6456, %v6551
  %v6562 = vmul.f32 %v6458, %v6551
  %v6563 = vmul.f32 %v6459, %v6551
  %v6564 = vmul.f32 %v6461, %v6551
  %v6565 = vmul.f32 %v6462, %v6551
  %v6566 = vmul.f32 %v6464, %v6551
  %v6567 = vmul.f32 %v6465, %v6551
  %v6568 = vmul.f32 %v6467, %v6551
  %v6569 = vmul.f32 %v6468, %v6551
  %v6570 = vmul.f32 %v6470, %v6551
  %v6571 = vmul.f32 %v6471, %v6551
  %v6572 = vmul.f32 %v6473, %v6551
  %v6573 = vmul.f32 %v6474, %v6551
  %v6574 = vmul.f32 %v6476, %v6551
  %v6575 = vmul.f32 %v6477, %v6551
  %v6576 = vmul.f32 %v6479, %v6551
  %v6577 = vmul.f32 %v6480, %v6551
  %v6578 = vmul.f32 %v6482, %v6551
  %v6579 = vmul.f32 %v6483, %v6551
  %v6580 = vmul.f32 %v6485, %v6551
  %v6581 = vmul.f32 %v6486, %v6551
  %v6582 = vmul.f32 %v6488, %v6551
  %v6583 = vmul.f32 %v6489, %v6551
  %v6584 = vmul.f32 %v6497, %v6551
  %v6585 = vmul.f32 %v6498, %v6551
  %v6586 = vmul.f32 %v6500, %v6551
  %v6587 = vmul.f32 %v6501, %v6551
  %v6588 = vmul.f32 %v6503, %v6551
  %v6589 = vmul.f32 %v6504, %v6551
  %v6590 = vmul.f32 %v6506, %v6551
  %v6591 = vmul.f32 %v6507, %v6551
  %v6592 = vmul.f32 %v6509, %v6551
  %v6593 = vmul.f32 %v6510, %v6551
  %v6594 = vmul.f32 %v6512, %v6551
  %v6595 = vmul.f32 %v6513, %v6551
  %v6596 = vmul.f32 %v6515, %v6551
  %v6597 = vmul.f32 %v6516, %v6551
  %v6598 = vmul.f32 %v6518, %v6551
  %v6599 = vmul.f32 %v6519, %v6551
  %v6600 = vmul.f32 %v6521, %v6551
  %v6601 = vmul.f32 %v6522, %v6551
  %v6602 = vmul.f32 %v6524, %v6551
  %v6603 = vmul.f32 %v6525, %v6551
  %v6604 = vmul.f32 %v6527, %v6551
  %v6605 = vmul.f32 %v6528, %v6551
  %v6606 = vmul.f32 %v6530, %v6551
  %v6607 = vmul.f32 %v6531, %v6551
  %v6608 = vmul.f32 %v6533, %v6551
  %v6609 = vmul.f32 %v6534, %v6551
  %v6610 = vmul.f32 %v6536, %v6551
  %v6611 = vmul.f32 %v6537, %v6551
  %v6612 = vmul.f32 %v6539, %v6551
  %v6613 = vmul.f32 %v6540, %v6551
  %v6614 = vmul.f32 %v6542, %v6551
  %v6615 = vmul.f32 %v6543, %v6551
  %v6616 = vperm.slane %v191, 0
  %v6617 = vmul.f32 %v6446, %v6616
  %v6618 = vmul.f32 %v6447, %v6616
  %v6619 = vmul.f32 %v6449, %v6616
  %v6620 = vmul.f32 %v6450, %v6616
  %v6621 = vmul.f32 %v6452, %v6616
  %v6622 = vmul.f32 %v6453, %v6616
  %v6623 = vmul.f32 %v6455, %v6616
  %v6624 = vmul.f32 %v6456, %v6616
  %v6625 = vmul.f32 %v6458, %v6616
  %v6626 = vmul.f32 %v6459, %v6616
  %v6627 = vmul.f32 %v6461, %v6616
  %v6628 = vmul.f32 %v6462, %v6616
  %v6629 = vmul.f32 %v6464, %v6616
  %v6630 = vmul.f32 %v6465, %v6616
  %v6631 = vmul.f32 %v6467, %v6616
  %v6632 = vmul.f32 %v6468, %v6616
  %v6633 = vmul.f32 %v6470, %v6616
  %v6634 = vmul.f32 %v6471, %v6616
  %v6635 = vmul.f32 %v6473, %v6616
  %v6636 = vmul.f32 %v6474, %v6616
  %v6637 = vmul.f32 %v6476, %v6616
  %v6638 = vmul.f32 %v6477, %v6616
  %v6639 = vmul.f32 %v6479, %v6616
  %v6640 = vmul.f32 %v6480, %v6616
  %v6641 = vmul.f32 %v6482, %v6616
  %v6642 = vmul.f32 %v6483, %v6616
  %v6643 = vmul.f32 %v6485, %v6616
  %v6644 = vmul.f32 %v6486, %v6616
  %v6645 = vmul.f32 %v6488, %v6616
  %v6646 = vmul.f32 %v6489, %v6616
  %v6647 = vmul.f32 %v6491, %v6616
  %v6648 = vmul.f32 %v6492, %v6616
  %v6649 = vmul.f32 %v6500, %v6616
  %v6650 = vmul.f32 %v6501, %v6616
  %v6651 = vmul.f32 %v6503, %v6616
  %v6652 = vmul.f32 %v6504, %v6616
  %v6653 = vmul.f32 %v6506, %v6616
  %v6654 = vmul.f32 %v6507, %v6616
  %v6655 = vmul.f32 %v6509, %v6616
  %v6656 = vmul.f32 %v6510, %v6616
  %v6657 = vmul.f32 %v6512, %v6616
  %v6658 = vmul.f32 %v6513, %v6616
  %v6659 = vmul.f32 %v6515, %v6616
  %v6660 = vmul.f32 %v6516, %v6616
  %v6661 = vmul.f32 %v6518, %v6616
  %v6662 = vmul.f32 %v6519, %v6616
  %v6663 = vmul.f32 %v6521, %v6616
  %v6664 = vmul.f32 %v6522, %v6616
  %v6665 = vmul.f32 %v6524, %v6616
  %v6666 = vmul.f32 %v6525, %v6616
  %v6667 = vmul.f32 %v6527, %v6616
  %v6668 = vmul.f32 %v6528, %v6616
  %v6669 = vmul.f32 %v6530, %v6616
  %v6670 = vmul.f32 %v6531, %v6616
  %v6671 = vmul.f32 %v6533, %v6616
  %v6672 = vmul.f32 %v6534, %v6616
  %v6673 = vmul.f32 %v6536, %v6616
  %v6674 = vmul.f32 %v6537, %v6616
  %v6675 = vmul.f32 %v6539, %v6616
  %v6676 = vmul.f32 %v6540, %v6616
  %v6677 = vmul.f32 %v6542, %v6616
  %v6678 = vmul.f32 %v6543, %v6616
  %v6679 = vmul.f32 %v6545, %v6616
  %v6680 = vmul.f32 %v6546, %v6616
  %v6681 = vadd.f32 %v6552, %v6617
  %v6682 = vadd.f32 %v6553, %v6618
  %v6683 = vadd.f32 %v6554, %v6619
  %v6684 = vadd.f32 %v6555, %v6620
  %v6685 = vadd.f32 %v6556, %v6621
  %v6686 = vadd.f32 %v6557, %v6622
  %v6687 = vadd.f32 %v6558, %v6623
  %v6688 = vadd.f32 %v6559, %v6624
  %v6689 = vadd.f32 %v6560, %v6625
  %v6690 = vadd.f32 %v6561, %v6626
  %v6691 = vadd.f32 %v6562, %v6627
  %v6692 = vadd.f32 %v6563, %v6628
  %v6693 = vadd.f32 %v6564, %v6629
  %v6694 = vadd.f32 %v6565, %v6630
  %v6695 = vadd.f32 %v6566, %v6631
  %v6696 = vadd.f32 %v6567, %v6632
  %v6697 = vadd.f32 %v6568, %v6633
  %v6698 = vadd.f32 %v6569, %v6634
  %v6699 = vadd.f32 %v6570, %v6635
  %v6700 = vadd.f32 %v6571, %v6636
  %v6701 = vadd.f32 %v6572, %v6637
  %v6702 = vadd.f32 %v6573, %v6638
  %v6703 = vadd.f32 %v6574, %v6639
  %v6704 = vadd.f32 %v6575, %v6640
  %v6705 = vadd.f32 %v6576, %v6641
  %v6706 = vadd.f32 %v6577, %v6642
  %v6707 = vadd.f32 %v6578, %v6643
  %v6708 = vadd.f32 %v6579, %v6644
  %v6709 = vadd.f32 %v6580, %v6645
  %v6710 = vadd.f32 %v6581, %v6646
  %v6711 = vadd.f32 %v6582, %v6647
  %v6712 = vadd.f32 %v6583, %v6648
  %v6713 = vadd.f32 %v6584, %v6649
  %v6714 = vadd.f32 %v6585, %v6650
  %v6715 = vadd.f32 %v6586, %v6651
  %v6716 = vadd.f32 %v6587, %v6652
  %v6717 = vadd.f32 %v6588, %v6653
  %v6718 = vadd.f32 %v6589, %v6654
  %v6719 = vadd.f32 %v6590, %v6655
  %v6720 = vadd.f32 %v6591, %v6656
  %v6721 = vadd.f32 %v6592, %v6657
  %v6722 = vadd.f32 %v6593, %v6658
  %v6723 = vadd.f32 %v6594, %v6659
  %v6724 = vadd.f32 %v6595, %v6660
  %v6725 = vadd.f32 %v6596, %v6661
  %v6726 = vadd.f32 %v6597, %v6662
  %v6727 = vadd.f32 %v6598, %v6663
  %v6728 = vadd.f32 %v6599, %v6664
  %v6729 = vadd.f32 %v6600, %v6665
  %v6730 = vadd.f32 %v6601, %v6666
  %v6731 = vadd.f32 %v6602, %v6667
  %v6732 = vadd.f32 %v6603, %v6668
  %v6733 = vadd.f32 %v6604, %v6669
  %v6734 = vadd.f32 %v6605, %v6670
  %v6735 = vadd.f32 %v6606, %v6671
  %v6736 = vadd.f32 %v6607, %v6672
  %v6737 = vadd.f32 %v6608, %v6673
  %v6738 = vadd.f32 %v6609, %v6674
  %v6739 = vadd.f32 %v6610, %v6675
  %v6740 = vadd.f32 %v6611, %v6676
  %v6741 = vadd.f32 %v6612, %v6677
  %v6742 = vadd.f32 %v6613, %v6678
  %v6743 = vadd.f32 %v6614, %v6679
  %v6744 = vadd.f32 %v6615, %v6680
  %v6745 = vperm.slane %v192, 0
  %v6746 = vmul.f32 %v6449, %v6745
  %v6747 = vmul.f32 %v6450, %v6745
  %v6748 = vmul.f32 %v6452, %v6745
  %v6749 = vmul.f32 %v6453, %v6745
  %v6750 = vmul.f32 %v6455, %v6745
  %v6751 = vmul.f32 %v6456, %v6745
  %v6752 = vmul.f32 %v6458, %v6745
  %v6753 = vmul.f32 %v6459, %v6745
  %v6754 = vmul.f32 %v6461, %v6745
  %v6755 = vmul.f32 %v6462, %v6745
  %v6756 = vmul.f32 %v6464, %v6745
  %v6757 = vmul.f32 %v6465, %v6745
  %v6758 = vmul.f32 %v6467, %v6745
  %v6759 = vmul.f32 %v6468, %v6745
  %v6760 = vmul.f32 %v6470, %v6745
  %v6761 = vmul.f32 %v6471, %v6745
  %v6762 = vmul.f32 %v6473, %v6745
  %v6763 = vmul.f32 %v6474, %v6745
  %v6764 = vmul.f32 %v6476, %v6745
  %v6765 = vmul.f32 %v6477, %v6745
  %v6766 = vmul.f32 %v6479, %v6745
  %v6767 = vmul.f32 %v6480, %v6745
  %v6768 = vmul.f32 %v6482, %v6745
  %v6769 = vmul.f32 %v6483, %v6745
  %v6770 = vmul.f32 %v6485, %v6745
  %v6771 = vmul.f32 %v6486, %v6745
  %v6772 = vmul.f32 %v6488, %v6745
  %v6773 = vmul.f32 %v6489, %v6745
  %v6774 = vmul.f32 %v6491, %v6745
  %v6775 = vmul.f32 %v6492, %v6745
  %v6776 = vmul.f32 %v6494, %v6745
  %v6777 = vmul.f32 %v6495, %v6745
  %v6778 = vmul.f32 %v6503, %v6745
  %v6779 = vmul.f32 %v6504, %v6745
  %v6780 = vmul.f32 %v6506, %v6745
  %v6781 = vmul.f32 %v6507, %v6745
  %v6782 = vmul.f32 %v6509, %v6745
  %v6783 = vmul.f32 %v6510, %v6745
  %v6784 = vmul.f32 %v6512, %v6745
  %v6785 = vmul.f32 %v6513, %v6745
  %v6786 = vmul.f32 %v6515, %v6745
  %v6787 = vmul.f32 %v6516, %v6745
  %v6788 = vmul.f32 %v6518, %v6745
  %v6789 = vmul.f32 %v6519, %v6745
  %v6790 = vmul.f32 %v6521, %v6745
  %v6791 = vmul.f32 %v6522, %v6745
  %v6792 = vmul.f32 %v6524, %v6745
  %v6793 = vmul.f32 %v6525, %v6745
  %v6794 = vmul.f32 %v6527, %v6745
  %v6795 = vmul.f32 %v6528, %v6745
  %v6796 = vmul.f32 %v6530, %v6745
  %v6797 = vmul.f32 %v6531, %v6745
  %v6798 = vmul.f32 %v6533, %v6745
  %v6799 = vmul.f32 %v6534, %v6745
  %v6800 = vmul.f32 %v6536, %v6745
  %v6801 = vmul.f32 %v6537, %v6745
  %v6802 = vmul.f32 %v6539, %v6745
  %v6803 = vmul.f32 %v6540, %v6745
  %v6804 = vmul.f32 %v6542, %v6745
  %v6805 = vmul.f32 %v6543, %v6745
  %v6806 = vmul.f32 %v6545, %v6745
  %v6807 = vmul.f32 %v6546, %v6745
  %v6808 = vmul.f32 %v6548, %v6745
  %v6809 = vmul.f32 %v6549, %v6745
  %v6810 = vadd.f32 %v6681, %v6746
  %v6811 = vadd.f32 %v6682, %v6747
  %v6812 = vadd.f32 %v6683, %v6748
  %v6813 = vadd.f32 %v6684, %v6749
  %v6814 = vadd.f32 %v6685, %v6750
  %v6815 = vadd.f32 %v6686, %v6751
  %v6816 = vadd.f32 %v6687, %v6752
  %v6817 = vadd.f32 %v6688, %v6753
  %v6818 = vadd.f32 %v6689, %v6754
  %v6819 = vadd.f32 %v6690, %v6755
  %v6820 = vadd.f32 %v6691, %v6756
  %v6821 = vadd.f32 %v6692, %v6757
  %v6822 = vadd.f32 %v6693, %v6758
  %v6823 = vadd.f32 %v6694, %v6759
  %v6824 = vadd.f32 %v6695, %v6760
  %v6825 = vadd.f32 %v6696, %v6761
  %v6826 = vadd.f32 %v6697, %v6762
  %v6827 = vadd.f32 %v6698, %v6763
  %v6828 = vadd.f32 %v6699, %v6764
  %v6829 = vadd.f32 %v6700, %v6765
  %v6830 = vadd.f32 %v6701, %v6766
  %v6831 = vadd.f32 %v6702, %v6767
  %v6832 = vadd.f32 %v6703, %v6768
  %v6833 = vadd.f32 %v6704, %v6769
  %v6834 = vadd.f32 %v6705, %v6770
  %v6835 = vadd.f32 %v6706, %v6771
  %v6836 = vadd.f32 %v6707, %v6772
  %v6837 = vadd.f32 %v6708, %v6773
  %v6838 = vadd.f32 %v6709, %v6774
  %v6839 = vadd.f32 %v6710, %v6775
  %v6840 = vadd.f32 %v6711, %v6776
  %v6841 = vadd.f32 %v6712, %v6777
  %v6842 = vadd.f32 %v6713, %v6778
  %v6843 = vadd.f32 %v6714, %v6779
  %v6844 = vadd.f32 %v6715, %v6780
  %v6845 = vadd.f32 %v6716, %v6781
  %v6846 = vadd.f32 %v6717, %v6782
  %v6847 = vadd.f32 %v6718, %v6783
  %v6848 = vadd.f32 %v6719, %v6784
  %v6849 = vadd.f32 %v6720, %v6785
  %v6850 = vadd.f32 %v6721, %v6786
  %v6851 = vadd.f32 %v6722, %v6787
  %v6852 = vadd.f32 %v6723, %v6788
  %v6853 = vadd.f32 %v6724, %v6789
  %v6854 = vadd.f32 %v6725, %v6790
  %v6855 = vadd.f32 %v6726, %v6791
  %v6856 = vadd.f32 %v6727, %v6792
  %v6857 = vadd.f32 %v6728, %v6793
  %v6858 = vadd.f32 %v6729, %v6794
  %v6859 = vadd.f32 %v6730, %v6795
  %v6860 = vadd.f32 %v6731, %v6796
  %v6861 = vadd.f32 %v6732, %v6797
  %v6862 = vadd.f32 %v6733, %v6798
  %v6863 = vadd.f32 %v6734, %v6799
  %v6864 = vadd.f32 %v6735, %v6800
  %v6865 = vadd.f32 %v6736, %v6801
  %v6866 = vadd.f32 %v6737, %v6802
  %v6867 = vadd.f32 %v6738, %v6803
  %v6868 = vadd.f32 %v6739, %v6804
  %v6869 = vadd.f32 %v6740, %v6805
  %v6870 = vadd.f32 %v6741, %v6806
  %v6871 = vadd.f32 %v6742, %v6807
  %v6872 = vadd.f32 %v6743, %v6808
  %v6873 = vadd.f32 %v6744, %v6809
  %v6874 = vperm.slane %v190, 1
  %v6875 = vmul.f32 %v6443, %v6874
  %v6876 = vmul.f32 %v6444, %v6874
  %v6877 = vmul.f32 %v6445, %v6874
  %v6878 = vmul.f32 %v6446, %v6874
  %v6879 = vmul.f32 %v6447, %v6874
  %v6880 = vmul.f32 %v6448, %v6874
  %v6881 = vmul.f32 %v6449, %v6874
  %v6882 = vmul.f32 %v6450, %v6874
  %v6883 = vmul.f32 %v6451, %v6874
  %v6884 = vmul.f32 %v6452, %v6874
  %v6885 = vmul.f32 %v6453, %v6874
  %v6886 = vmul.f32 %v6454, %v6874
  %v6887 = vmul.f32 %v6455, %v6874
  %v6888 = vmul.f32 %v6456, %v6874
  %v6889 = vmul.f32 %v6457, %v6874
  %v6890 = vmul.f32 %v6458, %v6874
  %v6891 = vmul.f32 %v6459, %v6874
  %v6892 = vmul.f32 %v6460, %v6874
  %v6893 = vmul.f32 %v6461, %v6874
  %v6894 = vmul.f32 %v6462, %v6874
  %v6895 = vmul.f32 %v6463, %v6874
  %v6896 = vmul.f32 %v6464, %v6874
  %v6897 = vmul.f32 %v6465, %v6874
  %v6898 = vmul.f32 %v6466, %v6874
  %v6899 = vmul.f32 %v6467, %v6874
  %v6900 = vmul.f32 %v6468, %v6874
  %v6901 = vmul.f32 %v6469, %v6874
  %v6902 = vmul.f32 %v6470, %v6874
  %v6903 = vmul.f32 %v6471, %v6874
  %v6904 = vmul.f32 %v6472, %v6874
  %v6905 = vmul.f32 %v6473, %v6874
  %v6906 = vmul.f32 %v6474, %v6874
  %v6907 = vmul.f32 %v6475, %v6874
  %v6908 = vmul.f32 %v6476, %v6874
  %v6909 = vmul.f32 %v6477, %v6874
  %v6910 = vmul.f32 %v6478, %v6874
  %v6911 = vmul.f32 %v6479, %v6874
  %v6912 = vmul.f32 %v6480, %v6874
  %v6913 = vmul.f32 %v6481, %v6874
  %v6914 = vmul.f32 %v6482, %v6874
  %v6915 = vmul.f32 %v6483, %v6874
  %v6916 = vmul.f32 %v6484, %v6874
  %v6917 = vmul.f32 %v6485, %v6874
  %v6918 = vmul.f32 %v6486, %v6874
  %v6919 = vmul.f32 %v6487, %v6874
  %v6920 = vmul.f32 %v6488, %v6874
  %v6921 = vmul.f32 %v6489, %v6874
  %v6922 = vmul.f32 %v6490, %v6874
  %v6923 = vmul.f32 %v6497, %v6874
  %v6924 = vmul.f32 %v6498, %v6874
  %v6925 = vmul.f32 %v6499, %v6874
  %v6926 = vmul.f32 %v6500, %v6874
  %v6927 = vmul.f32 %v6501, %v6874
  %v6928 = vmul.f32 %v6502, %v6874
  %v6929 = vmul.f32 %v6503, %v6874
  %v6930 = vmul.f32 %v6504, %v6874
  %v6931 = vmul.f32 %v6505, %v6874
  %v6932 = vmul.f32 %v6506, %v6874
  %v6933 = vmul.f32 %v6507, %v6874
  %v6934 = vmul.f32 %v6508, %v6874
  %v6935 = vmul.f32 %v6509, %v6874
  %v6936 = vmul.f32 %v6510, %v6874
  %v6937 = vmul.f32 %v6511, %v6874
  %v6938 = vmul.f32 %v6512, %v6874
  %v6939 = vmul.f32 %v6513, %v6874
  %v6940 = vmul.f32 %v6514, %v6874
  %v6941 = vmul.f32 %v6515, %v6874
  %v6942 = vmul.f32 %v6516, %v6874
  %v6943 = vmul.f32 %v6517, %v6874
  %v6944 = vmul.f32 %v6518, %v6874
  %v6945 = vmul.f32 %v6519, %v6874
  %v6946 = vmul.f32 %v6520, %v6874
  %v6947 = vmul.f32 %v6521, %v6874
  %v6948 = vmul.f32 %v6522, %v6874
  %v6949 = vmul.f32 %v6523, %v6874
  %v6950 = vmul.f32 %v6524, %v6874
  %v6951 = vmul.f32 %v6525, %v6874
  %v6952 = vmul.f32 %v6526, %v6874
  %v6953 = vmul.f32 %v6527, %v6874
  %v6954 = vmul.f32 %v6528, %v6874
  %v6955 = vmul.f32 %v6529, %v6874
  %v6956 = vmul.f32 %v6530, %v6874
  %v6957 = vmul.f32 %v6531, %v6874
  %v6958 = vmul.f32 %v6532, %v6874
  %v6959 = vmul.f32 %v6533, %v6874
  %v6960 = vmul.f32 %v6534, %v6874
  %v6961 = vmul.f32 %v6535, %v6874
  %v6962 = vmul.f32 %v6536, %v6874
  %v6963 = vmul.f32 %v6537, %v6874
  %v6964 = vmul.f32 %v6538, %v6874
  %v6965 = vmul.f32 %v6539, %v6874
  %v6966 = vmul.f32 %v6540, %v6874
  %v6967 = vmul.f32 %v6541, %v6874
  %v6968 = vmul.f32 %v6542, %v6874
  %v6969 = vmul.f32 %v6543, %v6874
  %v6970 = vmul.f32 %v6544, %v6874
  %v7067 = vrot.slane %v6875, 1
  %v7068 = vrot.slane %v6876, 1
  %v7069 = vsel %vm1026, %v7067, %v7068
  %v7070 = vrot.slane %v6877, 1
  %v7071 = vsel %vm1026, %v7068, %v7070
  %v7072 = vrot.slane %v6878, 1
  %v7073 = vrot.slane %v6879, 1
  %v7074 = vsel %vm1026, %v7072, %v7073
  %v7075 = vrot.slane %v6880, 1
  %v7076 = vsel %vm1026, %v7073, %v7075
  %v7077 = vrot.slane %v6881, 1
  %v7078 = vrot.slane %v6882, 1
  %v7079 = vsel %vm1026, %v7077, %v7078
  %v7080 = vrot.slane %v6883, 1
  %v7081 = vsel %vm1026, %v7078, %v7080
  %v7082 = vrot.slane %v6884, 1
  %v7083 = vrot.slane %v6885, 1
  %v7084 = vsel %vm1026, %v7082, %v7083
  %v7085 = vrot.slane %v6886, 1
  %v7086 = vsel %vm1026, %v7083, %v7085
  %v7087 = vrot.slane %v6887, 1
  %v7088 = vrot.slane %v6888, 1
  %v7089 = vsel %vm1026, %v7087, %v7088
  %v7090 = vrot.slane %v6889, 1
  %v7091 = vsel %vm1026, %v7088, %v7090
  %v7092 = vrot.slane %v6890, 1
  %v7093 = vrot.slane %v6891, 1
  %v7094 = vsel %vm1026, %v7092, %v7093
  %v7095 = vrot.slane %v6892, 1
  %v7096 = vsel %vm1026, %v7093, %v7095
  %v7097 = vrot.slane %v6893, 1
  %v7098 = vrot.slane %v6894, 1
  %v7099 = vsel %vm1026, %v7097, %v7098
  %v7100 = vrot.slane %v6895, 1
  %v7101 = vsel %vm1026, %v7098, %v7100
  %v7102 = vrot.slane %v6896, 1
  %v7103 = vrot.slane %v6897, 1
  %v7104 = vsel %vm1026, %v7102, %v7103
  %v7105 = vrot.slane %v6898, 1
  %v7106 = vsel %vm1026, %v7103, %v7105
  %v7107 = vrot.slane %v6899, 1
  %v7108 = vrot.slane %v6900, 1
  %v7109 = vsel %vm1026, %v7107, %v7108
  %v7110 = vrot.slane %v6901, 1
  %v7111 = vsel %vm1026, %v7108, %v7110
  %v7112 = vrot.slane %v6902, 1
  %v7113 = vrot.slane %v6903, 1
  %v7114 = vsel %vm1026, %v7112, %v7113
  %v7115 = vrot.slane %v6904, 1
  %v7116 = vsel %vm1026, %v7113, %v7115
  %v7117 = vrot.slane %v6905, 1
  %v7118 = vrot.slane %v6906, 1
  %v7119 = vsel %vm1026, %v7117, %v7118
  %v7120 = vrot.slane %v6907, 1
  %v7121 = vsel %vm1026, %v7118, %v7120
  %v7122 = vrot.slane %v6908, 1
  %v7123 = vrot.slane %v6909, 1
  %v7124 = vsel %vm1026, %v7122, %v7123
  %v7125 = vrot.slane %v6910, 1
  %v7126 = vsel %vm1026, %v7123, %v7125
  %v7127 = vrot.slane %v6911, 1
  %v7128 = vrot.slane %v6912, 1
  %v7129 = vsel %vm1026, %v7127, %v7128
  %v7130 = vrot.slane %v6913, 1
  %v7131 = vsel %vm1026, %v7128, %v7130
  %v7132 = vrot.slane %v6914, 1
  %v7133 = vrot.slane %v6915, 1
  %v7134 = vsel %vm1026, %v7132, %v7133
  %v7135 = vrot.slane %v6916, 1
  %v7136 = vsel %vm1026, %v7133, %v7135
  %v7137 = vrot.slane %v6917, 1
  %v7138 = vrot.slane %v6918, 1
  %v7139 = vsel %vm1026, %v7137, %v7138
  %v7140 = vrot.slane %v6919, 1
  %v7141 = vsel %vm1026, %v7138, %v7140
  %v7142 = vrot.slane %v6920, 1
  %v7143 = vrot.slane %v6921, 1
  %v7144 = vsel %vm1026, %v7142, %v7143
  %v7145 = vrot.slane %v6922, 1
  %v7146 = vsel %vm1026, %v7143, %v7145
  %v7147 = vrot.slane %v6923, 1
  %v7148 = vrot.slane %v6924, 1
  %v7149 = vsel %vm1026, %v7147, %v7148
  %v7150 = vrot.slane %v6925, 1
  %v7151 = vsel %vm1026, %v7148, %v7150
  %v7152 = vrot.slane %v6926, 1
  %v7153 = vrot.slane %v6927, 1
  %v7154 = vsel %vm1026, %v7152, %v7153
  %v7155 = vrot.slane %v6928, 1
  %v7156 = vsel %vm1026, %v7153, %v7155
  %v7157 = vrot.slane %v6929, 1
  %v7158 = vrot.slane %v6930, 1
  %v7159 = vsel %vm1026, %v7157, %v7158
  %v7160 = vrot.slane %v6931, 1
  %v7161 = vsel %vm1026, %v7158, %v7160
  %v7162 = vrot.slane %v6932, 1
  %v7163 = vrot.slane %v6933, 1
  %v7164 = vsel %vm1026, %v7162, %v7163
  %v7165 = vrot.slane %v6934, 1
  %v7166 = vsel %vm1026, %v7163, %v7165
  %v7167 = vrot.slane %v6935, 1
  %v7168 = vrot.slane %v6936, 1
  %v7169 = vsel %vm1026, %v7167, %v7168
  %v7170 = vrot.slane %v6937, 1
  %v7171 = vsel %vm1026, %v7168, %v7170
  %v7172 = vrot.slane %v6938, 1
  %v7173 = vrot.slane %v6939, 1
  %v7174 = vsel %vm1026, %v7172, %v7173
  %v7175 = vrot.slane %v6940, 1
  %v7176 = vsel %vm1026, %v7173, %v7175
  %v7177 = vrot.slane %v6941, 1
  %v7178 = vrot.slane %v6942, 1
  %v7179 = vsel %vm1026, %v7177, %v7178
  %v7180 = vrot.slane %v6943, 1
  %v7181 = vsel %vm1026, %v7178, %v7180
  %v7182 = vrot.slane %v6944, 1
  %v7183 = vrot.slane %v6945, 1
  %v7184 = vsel %vm1026, %v7182, %v7183
  %v7185 = vrot.slane %v6946, 1
  %v7186 = vsel %vm1026, %v7183, %v7185
  %v7187 = vrot.slane %v6947, 1
  %v7188 = vrot.slane %v6948, 1
  %v7189 = vsel %vm1026, %v7187, %v7188
  %v7190 = vrot.slane %v6949, 1
  %v7191 = vsel %vm1026, %v7188, %v7190
  %v7192 = vrot.slane %v6950, 1
  %v7193 = vrot.slane %v6951, 1
  %v7194 = vsel %vm1026, %v7192, %v7193
  %v7195 = vrot.slane %v6952, 1
  %v7196 = vsel %vm1026, %v7193, %v7195
  %v7197 = vrot.slane %v6953, 1
  %v7198 = vrot.slane %v6954, 1
  %v7199 = vsel %vm1026, %v7197, %v7198
  %v7200 = vrot.slane %v6955, 1
  %v7201 = vsel %vm1026, %v7198, %v7200
  %v7202 = vrot.slane %v6956, 1
  %v7203 = vrot.slane %v6957, 1
  %v7204 = vsel %vm1026, %v7202, %v7203
  %v7205 = vrot.slane %v6958, 1
  %v7206 = vsel %vm1026, %v7203, %v7205
  %v7207 = vrot.slane %v6959, 1
  %v7208 = vrot.slane %v6960, 1
  %v7209 = vsel %vm1026, %v7207, %v7208
  %v7210 = vrot.slane %v6961, 1
  %v7211 = vsel %vm1026, %v7208, %v7210
  %v7212 = vrot.slane %v6962, 1
  %v7213 = vrot.slane %v6963, 1
  %v7214 = vsel %vm1026, %v7212, %v7213
  %v7215 = vrot.slane %v6964, 1
  %v7216 = vsel %vm1026, %v7213, %v7215
  %v7217 = vrot.slane %v6965, 1
  %v7218 = vrot.slane %v6966, 1
  %v7219 = vsel %vm1026, %v7217, %v7218
  %v7220 = vrot.slane %v6967, 1
  %v7221 = vsel %vm1026, %v7218, %v7220
  %v7222 = vrot.slane %v6968, 1
  %v7223 = vrot.slane %v6969, 1
  %v7224 = vsel %vm1026, %v7222, %v7223
  %v7225 = vrot.slane %v6970, 1
  %v7226 = vsel %vm1026, %v7223, %v7225
  %v7291 = vadd.f32 %v6810, %v7069
  %v7292 = vadd.f32 %v6811, %v7071
  %v7293 = vadd.f32 %v6812, %v7074
  %v7294 = vadd.f32 %v6813, %v7076
  %v7295 = vadd.f32 %v6814, %v7079
  %v7296 = vadd.f32 %v6815, %v7081
  %v7297 = vadd.f32 %v6816, %v7084
  %v7298 = vadd.f32 %v6817, %v7086
  %v7299 = vadd.f32 %v6818, %v7089
  %v7300 = vadd.f32 %v6819, %v7091
  %v7301 = vadd.f32 %v6820, %v7094
  %v7302 = vadd.f32 %v6821, %v7096
  %v7303 = vadd.f32 %v6822, %v7099
  %v7304 = vadd.f32 %v6823, %v7101
  %v7305 = vadd.f32 %v6824, %v7104
  %v7306 = vadd.f32 %v6825, %v7106
  %v7307 = vadd.f32 %v6826, %v7109
  %v7308 = vadd.f32 %v6827, %v7111
  %v7309 = vadd.f32 %v6828, %v7114
  %v7310 = vadd.f32 %v6829, %v7116
  %v7311 = vadd.f32 %v6830, %v7119
  %v7312 = vadd.f32 %v6831, %v7121
  %v7313 = vadd.f32 %v6832, %v7124
  %v7314 = vadd.f32 %v6833, %v7126
  %v7315 = vadd.f32 %v6834, %v7129
  %v7316 = vadd.f32 %v6835, %v7131
  %v7317 = vadd.f32 %v6836, %v7134
  %v7318 = vadd.f32 %v6837, %v7136
  %v7319 = vadd.f32 %v6838, %v7139
  %v7320 = vadd.f32 %v6839, %v7141
  %v7321 = vadd.f32 %v6840, %v7144
  %v7322 = vadd.f32 %v6841, %v7146
  %v7323 = vadd.f32 %v6842, %v7149
  %v7324 = vadd.f32 %v6843, %v7151
  %v7325 = vadd.f32 %v6844, %v7154
  %v7326 = vadd.f32 %v6845, %v7156
  %v7327 = vadd.f32 %v6846, %v7159
  %v7328 = vadd.f32 %v6847, %v7161
  %v7329 = vadd.f32 %v6848, %v7164
  %v7330 = vadd.f32 %v6849, %v7166
  %v7331 = vadd.f32 %v6850, %v7169
  %v7332 = vadd.f32 %v6851, %v7171
  %v7333 = vadd.f32 %v6852, %v7174
  %v7334 = vadd.f32 %v6853, %v7176
  %v7335 = vadd.f32 %v6854, %v7179
  %v7336 = vadd.f32 %v6855, %v7181
  %v7337 = vadd.f32 %v6856, %v7184
  %v7338 = vadd.f32 %v6857, %v7186
  %v7339 = vadd.f32 %v6858, %v7189
  %v7340 = vadd.f32 %v6859, %v7191
  %v7341 = vadd.f32 %v6860, %v7194
  %v7342 = vadd.f32 %v6861, %v7196
  %v7343 = vadd.f32 %v6862, %v7199
  %v7344 = vadd.f32 %v6863, %v7201
  %v7345 = vadd.f32 %v6864, %v7204
  %v7346 = vadd.f32 %v6865, %v7206
  %v7347 = vadd.f32 %v6866, %v7209
  %v7348 = vadd.f32 %v6867, %v7211
  %v7349 = vadd.f32 %v6868, %v7214
  %v7350 = vadd.f32 %v6869, %v7216
  %v7351 = vadd.f32 %v6870, %v7219
  %v7352 = vadd.f32 %v6871, %v7221
  %v7353 = vadd.f32 %v6872, %v7224
  %v7354 = vadd.f32 %v6873, %v7226
  %v7355 = vperm.slane %v191, 1
  %v7356 = vmul.f32 %v6446, %v7355
  %v7357 = vmul.f32 %v6447, %v7355
  %v7358 = vmul.f32 %v6448, %v7355
  %v7359 = vmul.f32 %v6449, %v7355
  %v7360 = vmul.f32 %v6450, %v7355
  %v7361 = vmul.f32 %v6451, %v7355
  %v7362 = vmul.f32 %v6452, %v7355
  %v7363 = vmul.f32 %v6453, %v7355
  %v7364 = vmul.f32 %v6454, %v7355
  %v7365 = vmul.f32 %v6455, %v7355
  %v7366 = vmul.f32 %v6456, %v7355
  %v7367 = vmul.f32 %v6457, %v7355
  %v7368 = vmul.f32 %v6458, %v7355
  %v7369 = vmul.f32 %v6459, %v7355
  %v7370 = vmul.f32 %v6460, %v7355
  %v7371 = vmul.f32 %v6461, %v7355
  %v7372 = vmul.f32 %v6462, %v7355
  %v7373 = vmul.f32 %v6463, %v7355
  %v7374 = vmul.f32 %v6464, %v7355
  %v7375 = vmul.f32 %v6465, %v7355
  %v7376 = vmul.f32 %v6466, %v7355
  %v7377 = vmul.f32 %v6467, %v7355
  %v7378 = vmul.f32 %v6468, %v7355
  %v7379 = vmul.f32 %v6469, %v7355
  %v7380 = vmul.f32 %v6470, %v7355
  %v7381 = vmul.f32 %v6471, %v7355
  %v7382 = vmul.f32 %v6472, %v7355
  %v7383 = vmul.f32 %v6473, %v7355
  %v7384 = vmul.f32 %v6474, %v7355
  %v7385 = vmul.f32 %v6475, %v7355
  %v7386 = vmul.f32 %v6476, %v7355
  %v7387 = vmul.f32 %v6477, %v7355
  %v7388 = vmul.f32 %v6478, %v7355
  %v7389 = vmul.f32 %v6479, %v7355
  %v7390 = vmul.f32 %v6480, %v7355
  %v7391 = vmul.f32 %v6481, %v7355
  %v7392 = vmul.f32 %v6482, %v7355
  %v7393 = vmul.f32 %v6483, %v7355
  %v7394 = vmul.f32 %v6484, %v7355
  %v7395 = vmul.f32 %v6485, %v7355
  %v7396 = vmul.f32 %v6486, %v7355
  %v7397 = vmul.f32 %v6487, %v7355
  %v7398 = vmul.f32 %v6488, %v7355
  %v7399 = vmul.f32 %v6489, %v7355
  %v7400 = vmul.f32 %v6490, %v7355
  %v7401 = vmul.f32 %v6491, %v7355
  %v7402 = vmul.f32 %v6492, %v7355
  %v7403 = vmul.f32 %v6493, %v7355
  %v7404 = vmul.f32 %v6500, %v7355
  %v7405 = vmul.f32 %v6501, %v7355
  %v7406 = vmul.f32 %v6502, %v7355
  %v7407 = vmul.f32 %v6503, %v7355
  %v7408 = vmul.f32 %v6504, %v7355
  %v7409 = vmul.f32 %v6505, %v7355
  %v7410 = vmul.f32 %v6506, %v7355
  %v7411 = vmul.f32 %v6507, %v7355
  %v7412 = vmul.f32 %v6508, %v7355
  %v7413 = vmul.f32 %v6509, %v7355
  %v7414 = vmul.f32 %v6510, %v7355
  %v7415 = vmul.f32 %v6511, %v7355
  %v7416 = vmul.f32 %v6512, %v7355
  %v7417 = vmul.f32 %v6513, %v7355
  %v7418 = vmul.f32 %v6514, %v7355
  %v7419 = vmul.f32 %v6515, %v7355
  %v7420 = vmul.f32 %v6516, %v7355
  %v7421 = vmul.f32 %v6517, %v7355
  %v7422 = vmul.f32 %v6518, %v7355
  %v7423 = vmul.f32 %v6519, %v7355
  %v7424 = vmul.f32 %v6520, %v7355
  %v7425 = vmul.f32 %v6521, %v7355
  %v7426 = vmul.f32 %v6522, %v7355
  %v7427 = vmul.f32 %v6523, %v7355
  %v7428 = vmul.f32 %v6524, %v7355
  %v7429 = vmul.f32 %v6525, %v7355
  %v7430 = vmul.f32 %v6526, %v7355
  %v7431 = vmul.f32 %v6527, %v7355
  %v7432 = vmul.f32 %v6528, %v7355
  %v7433 = vmul.f32 %v6529, %v7355
  %v7434 = vmul.f32 %v6530, %v7355
  %v7435 = vmul.f32 %v6531, %v7355
  %v7436 = vmul.f32 %v6532, %v7355
  %v7437 = vmul.f32 %v6533, %v7355
  %v7438 = vmul.f32 %v6534, %v7355
  %v7439 = vmul.f32 %v6535, %v7355
  %v7440 = vmul.f32 %v6536, %v7355
  %v7441 = vmul.f32 %v6537, %v7355
  %v7442 = vmul.f32 %v6538, %v7355
  %v7443 = vmul.f32 %v6539, %v7355
  %v7444 = vmul.f32 %v6540, %v7355
  %v7445 = vmul.f32 %v6541, %v7355
  %v7446 = vmul.f32 %v6542, %v7355
  %v7447 = vmul.f32 %v6543, %v7355
  %v7448 = vmul.f32 %v6544, %v7355
  %v7449 = vmul.f32 %v6545, %v7355
  %v7450 = vmul.f32 %v6546, %v7355
  %v7451 = vmul.f32 %v6547, %v7355
  %v7548 = vrot.slane %v7356, 1
  %v7549 = vrot.slane %v7357, 1
  %v7550 = vsel %vm1026, %v7548, %v7549
  %v7551 = vrot.slane %v7358, 1
  %v7552 = vsel %vm1026, %v7549, %v7551
  %v7553 = vrot.slane %v7359, 1
  %v7554 = vrot.slane %v7360, 1
  %v7555 = vsel %vm1026, %v7553, %v7554
  %v7556 = vrot.slane %v7361, 1
  %v7557 = vsel %vm1026, %v7554, %v7556
  %v7558 = vrot.slane %v7362, 1
  %v7559 = vrot.slane %v7363, 1
  %v7560 = vsel %vm1026, %v7558, %v7559
  %v7561 = vrot.slane %v7364, 1
  %v7562 = vsel %vm1026, %v7559, %v7561
  %v7563 = vrot.slane %v7365, 1
  %v7564 = vrot.slane %v7366, 1
  %v7565 = vsel %vm1026, %v7563, %v7564
  %v7566 = vrot.slane %v7367, 1
  %v7567 = vsel %vm1026, %v7564, %v7566
  %v7568 = vrot.slane %v7368, 1
  %v7569 = vrot.slane %v7369, 1
  %v7570 = vsel %vm1026, %v7568, %v7569
  %v7571 = vrot.slane %v7370, 1
  %v7572 = vsel %vm1026, %v7569, %v7571
  %v7573 = vrot.slane %v7371, 1
  %v7574 = vrot.slane %v7372, 1
  %v7575 = vsel %vm1026, %v7573, %v7574
  %v7576 = vrot.slane %v7373, 1
  %v7577 = vsel %vm1026, %v7574, %v7576
  %v7578 = vrot.slane %v7374, 1
  %v7579 = vrot.slane %v7375, 1
  %v7580 = vsel %vm1026, %v7578, %v7579
  %v7581 = vrot.slane %v7376, 1
  %v7582 = vsel %vm1026, %v7579, %v7581
  %v7583 = vrot.slane %v7377, 1
  %v7584 = vrot.slane %v7378, 1
  %v7585 = vsel %vm1026, %v7583, %v7584
  %v7586 = vrot.slane %v7379, 1
  %v7587 = vsel %vm1026, %v7584, %v7586
  %v7588 = vrot.slane %v7380, 1
  %v7589 = vrot.slane %v7381, 1
  %v7590 = vsel %vm1026, %v7588, %v7589
  %v7591 = vrot.slane %v7382, 1
  %v7592 = vsel %vm1026, %v7589, %v7591
  %v7593 = vrot.slane %v7383, 1
  %v7594 = vrot.slane %v7384, 1
  %v7595 = vsel %vm1026, %v7593, %v7594
  %v7596 = vrot.slane %v7385, 1
  %v7597 = vsel %vm1026, %v7594, %v7596
  %v7598 = vrot.slane %v7386, 1
  %v7599 = vrot.slane %v7387, 1
  %v7600 = vsel %vm1026, %v7598, %v7599
  %v7601 = vrot.slane %v7388, 1
  %v7602 = vsel %vm1026, %v7599, %v7601
  %v7603 = vrot.slane %v7389, 1
  %v7604 = vrot.slane %v7390, 1
  %v7605 = vsel %vm1026, %v7603, %v7604
  %v7606 = vrot.slane %v7391, 1
  %v7607 = vsel %vm1026, %v7604, %v7606
  %v7608 = vrot.slane %v7392, 1
  %v7609 = vrot.slane %v7393, 1
  %v7610 = vsel %vm1026, %v7608, %v7609
  %v7611 = vrot.slane %v7394, 1
  %v7612 = vsel %vm1026, %v7609, %v7611
  %v7613 = vrot.slane %v7395, 1
  %v7614 = vrot.slane %v7396, 1
  %v7615 = vsel %vm1026, %v7613, %v7614
  %v7616 = vrot.slane %v7397, 1
  %v7617 = vsel %vm1026, %v7614, %v7616
  %v7618 = vrot.slane %v7398, 1
  %v7619 = vrot.slane %v7399, 1
  %v7620 = vsel %vm1026, %v7618, %v7619
  %v7621 = vrot.slane %v7400, 1
  %v7622 = vsel %vm1026, %v7619, %v7621
  %v7623 = vrot.slane %v7401, 1
  %v7624 = vrot.slane %v7402, 1
  %v7625 = vsel %vm1026, %v7623, %v7624
  %v7626 = vrot.slane %v7403, 1
  %v7627 = vsel %vm1026, %v7624, %v7626
  %v7628 = vrot.slane %v7404, 1
  %v7629 = vrot.slane %v7405, 1
  %v7630 = vsel %vm1026, %v7628, %v7629
  %v7631 = vrot.slane %v7406, 1
  %v7632 = vsel %vm1026, %v7629, %v7631
  %v7633 = vrot.slane %v7407, 1
  %v7634 = vrot.slane %v7408, 1
  %v7635 = vsel %vm1026, %v7633, %v7634
  %v7636 = vrot.slane %v7409, 1
  %v7637 = vsel %vm1026, %v7634, %v7636
  %v7638 = vrot.slane %v7410, 1
  %v7639 = vrot.slane %v7411, 1
  %v7640 = vsel %vm1026, %v7638, %v7639
  %v7641 = vrot.slane %v7412, 1
  %v7642 = vsel %vm1026, %v7639, %v7641
  %v7643 = vrot.slane %v7413, 1
  %v7644 = vrot.slane %v7414, 1
  %v7645 = vsel %vm1026, %v7643, %v7644
  %v7646 = vrot.slane %v7415, 1
  %v7647 = vsel %vm1026, %v7644, %v7646
  %v7648 = vrot.slane %v7416, 1
  %v7649 = vrot.slane %v7417, 1
  %v7650 = vsel %vm1026, %v7648, %v7649
  %v7651 = vrot.slane %v7418, 1
  %v7652 = vsel %vm1026, %v7649, %v7651
  %v7653 = vrot.slane %v7419, 1
  %v7654 = vrot.slane %v7420, 1
  %v7655 = vsel %vm1026, %v7653, %v7654
  %v7656 = vrot.slane %v7421, 1
  %v7657 = vsel %vm1026, %v7654, %v7656
  %v7658 = vrot.slane %v7422, 1
  %v7659 = vrot.slane %v7423, 1
  %v7660 = vsel %vm1026, %v7658, %v7659
  %v7661 = vrot.slane %v7424, 1
  %v7662 = vsel %vm1026, %v7659, %v7661
  %v7663 = vrot.slane %v7425, 1
  %v7664 = vrot.slane %v7426, 1
  %v7665 = vsel %vm1026, %v7663, %v7664
  %v7666 = vrot.slane %v7427, 1
  %v7667 = vsel %vm1026, %v7664, %v7666
  %v7668 = vrot.slane %v7428, 1
  %v7669 = vrot.slane %v7429, 1
  %v7670 = vsel %vm1026, %v7668, %v7669
  %v7671 = vrot.slane %v7430, 1
  %v7672 = vsel %vm1026, %v7669, %v7671
  %v7673 = vrot.slane %v7431, 1
  %v7674 = vrot.slane %v7432, 1
  %v7675 = vsel %vm1026, %v7673, %v7674
  %v7676 = vrot.slane %v7433, 1
  %v7677 = vsel %vm1026, %v7674, %v7676
  %v7678 = vrot.slane %v7434, 1
  %v7679 = vrot.slane %v7435, 1
  %v7680 = vsel %vm1026, %v7678, %v7679
  %v7681 = vrot.slane %v7436, 1
  %v7682 = vsel %vm1026, %v7679, %v7681
  %v7683 = vrot.slane %v7437, 1
  %v7684 = vrot.slane %v7438, 1
  %v7685 = vsel %vm1026, %v7683, %v7684
  %v7686 = vrot.slane %v7439, 1
  %v7687 = vsel %vm1026, %v7684, %v7686
  %v7688 = vrot.slane %v7440, 1
  %v7689 = vrot.slane %v7441, 1
  %v7690 = vsel %vm1026, %v7688, %v7689
  %v7691 = vrot.slane %v7442, 1
  %v7692 = vsel %vm1026, %v7689, %v7691
  %v7693 = vrot.slane %v7443, 1
  %v7694 = vrot.slane %v7444, 1
  %v7695 = vsel %vm1026, %v7693, %v7694
  %v7696 = vrot.slane %v7445, 1
  %v7697 = vsel %vm1026, %v7694, %v7696
  %v7698 = vrot.slane %v7446, 1
  %v7699 = vrot.slane %v7447, 1
  %v7700 = vsel %vm1026, %v7698, %v7699
  %v7701 = vrot.slane %v7448, 1
  %v7702 = vsel %vm1026, %v7699, %v7701
  %v7703 = vrot.slane %v7449, 1
  %v7704 = vrot.slane %v7450, 1
  %v7705 = vsel %vm1026, %v7703, %v7704
  %v7706 = vrot.slane %v7451, 1
  %v7707 = vsel %vm1026, %v7704, %v7706
  %v7772 = vadd.f32 %v7291, %v7550
  %v7773 = vadd.f32 %v7292, %v7552
  %v7774 = vadd.f32 %v7293, %v7555
  %v7775 = vadd.f32 %v7294, %v7557
  %v7776 = vadd.f32 %v7295, %v7560
  %v7777 = vadd.f32 %v7296, %v7562
  %v7778 = vadd.f32 %v7297, %v7565
  %v7779 = vadd.f32 %v7298, %v7567
  %v7780 = vadd.f32 %v7299, %v7570
  %v7781 = vadd.f32 %v7300, %v7572
  %v7782 = vadd.f32 %v7301, %v7575
  %v7783 = vadd.f32 %v7302, %v7577
  %v7784 = vadd.f32 %v7303, %v7580
  %v7785 = vadd.f32 %v7304, %v7582
  %v7786 = vadd.f32 %v7305, %v7585
  %v7787 = vadd.f32 %v7306, %v7587
  %v7788 = vadd.f32 %v7307, %v7590
  %v7789 = vadd.f32 %v7308, %v7592
  %v7790 = vadd.f32 %v7309, %v7595
  %v7791 = vadd.f32 %v7310, %v7597
  %v7792 = vadd.f32 %v7311, %v7600
  %v7793 = vadd.f32 %v7312, %v7602
  %v7794 = vadd.f32 %v7313, %v7605
  %v7795 = vadd.f32 %v7314, %v7607
  %v7796 = vadd.f32 %v7315, %v7610
  %v7797 = vadd.f32 %v7316, %v7612
  %v7798 = vadd.f32 %v7317, %v7615
  %v7799 = vadd.f32 %v7318, %v7617
  %v7800 = vadd.f32 %v7319, %v7620
  %v7801 = vadd.f32 %v7320, %v7622
  %v7802 = vadd.f32 %v7321, %v7625
  %v7803 = vadd.f32 %v7322, %v7627
  %v7804 = vadd.f32 %v7323, %v7630
  %v7805 = vadd.f32 %v7324, %v7632
  %v7806 = vadd.f32 %v7325, %v7635
  %v7807 = vadd.f32 %v7326, %v7637
  %v7808 = vadd.f32 %v7327, %v7640
  %v7809 = vadd.f32 %v7328, %v7642
  %v7810 = vadd.f32 %v7329, %v7645
  %v7811 = vadd.f32 %v7330, %v7647
  %v7812 = vadd.f32 %v7331, %v7650
  %v7813 = vadd.f32 %v7332, %v7652
  %v7814 = vadd.f32 %v7333, %v7655
  %v7815 = vadd.f32 %v7334, %v7657
  %v7816 = vadd.f32 %v7335, %v7660
  %v7817 = vadd.f32 %v7336, %v7662
  %v7818 = vadd.f32 %v7337, %v7665
  %v7819 = vadd.f32 %v7338, %v7667
  %v7820 = vadd.f32 %v7339, %v7670
  %v7821 = vadd.f32 %v7340, %v7672
  %v7822 = vadd.f32 %v7341, %v7675
  %v7823 = vadd.f32 %v7342, %v7677
  %v7824 = vadd.f32 %v7343, %v7680
  %v7825 = vadd.f32 %v7344, %v7682
  %v7826 = vadd.f32 %v7345, %v7685
  %v7827 = vadd.f32 %v7346, %v7687
  %v7828 = vadd.f32 %v7347, %v7690
  %v7829 = vadd.f32 %v7348, %v7692
  %v7830 = vadd.f32 %v7349, %v7695
  %v7831 = vadd.f32 %v7350, %v7697
  %v7832 = vadd.f32 %v7351, %v7700
  %v7833 = vadd.f32 %v7352, %v7702
  %v7834 = vadd.f32 %v7353, %v7705
  %v7835 = vadd.f32 %v7354, %v7707
  %v7836 = vperm.slane %v192, 1
  %v7837 = vmul.f32 %v6449, %v7836
  %v7838 = vmul.f32 %v6450, %v7836
  %v7839 = vmul.f32 %v6451, %v7836
  %v7840 = vmul.f32 %v6452, %v7836
  %v7841 = vmul.f32 %v6453, %v7836
  %v7842 = vmul.f32 %v6454, %v7836
  %v7843 = vmul.f32 %v6455, %v7836
  %v7844 = vmul.f32 %v6456, %v7836
  %v7845 = vmul.f32 %v6457, %v7836
  %v7846 = vmul.f32 %v6458, %v7836
  %v7847 = vmul.f32 %v6459, %v7836
  %v7848 = vmul.f32 %v6460, %v7836
  %v7849 = vmul.f32 %v6461, %v7836
  %v7850 = vmul.f32 %v6462, %v7836
  %v7851 = vmul.f32 %v6463, %v7836
  %v7852 = vmul.f32 %v6464, %v7836
  %v7853 = vmul.f32 %v6465, %v7836
  %v7854 = vmul.f32 %v6466, %v7836
  %v7855 = vmul.f32 %v6467, %v7836
  %v7856 = vmul.f32 %v6468, %v7836
  %v7857 = vmul.f32 %v6469, %v7836
  %v7858 = vmul.f32 %v6470, %v7836
  %v7859 = vmul.f32 %v6471, %v7836
  %v7860 = vmul.f32 %v6472, %v7836
  %v7861 = vmul.f32 %v6473, %v7836
  %v7862 = vmul.f32 %v6474, %v7836
  %v7863 = vmul.f32 %v6475, %v7836
  %v7864 = vmul.f32 %v6476, %v7836
  %v7865 = vmul.f32 %v6477, %v7836
  %v7866 = vmul.f32 %v6478, %v7836
  %v7867 = vmul.f32 %v6479, %v7836
  %v7868 = vmul.f32 %v6480, %v7836
  %v7869 = vmul.f32 %v6481, %v7836
  %v7870 = vmul.f32 %v6482, %v7836
  %v7871 = vmul.f32 %v6483, %v7836
  %v7872 = vmul.f32 %v6484, %v7836
  %v7873 = vmul.f32 %v6485, %v7836
  %v7874 = vmul.f32 %v6486, %v7836
  %v7875 = vmul.f32 %v6487, %v7836
  %v7876 = vmul.f32 %v6488, %v7836
  %v7877 = vmul.f32 %v6489, %v7836
  %v7878 = vmul.f32 %v6490, %v7836
  %v7879 = vmul.f32 %v6491, %v7836
  %v7880 = vmul.f32 %v6492, %v7836
  %v7881 = vmul.f32 %v6493, %v7836
  %v7882 = vmul.f32 %v6494, %v7836
  %v7883 = vmul.f32 %v6495, %v7836
  %v7884 = vmul.f32 %v6496, %v7836
  %v7885 = vmul.f32 %v6503, %v7836
  %v7886 = vmul.f32 %v6504, %v7836
  %v7887 = vmul.f32 %v6505, %v7836
  %v7888 = vmul.f32 %v6506, %v7836
  %v7889 = vmul.f32 %v6507, %v7836
  %v7890 = vmul.f32 %v6508, %v7836
  %v7891 = vmul.f32 %v6509, %v7836
  %v7892 = vmul.f32 %v6510, %v7836
  %v7893 = vmul.f32 %v6511, %v7836
  %v7894 = vmul.f32 %v6512, %v7836
  %v7895 = vmul.f32 %v6513, %v7836
  %v7896 = vmul.f32 %v6514, %v7836
  %v7897 = vmul.f32 %v6515, %v7836
  %v7898 = vmul.f32 %v6516, %v7836
  %v7899 = vmul.f32 %v6517, %v7836
  %v7900 = vmul.f32 %v6518, %v7836
  %v7901 = vmul.f32 %v6519, %v7836
  %v7902 = vmul.f32 %v6520, %v7836
  %v7903 = vmul.f32 %v6521, %v7836
  %v7904 = vmul.f32 %v6522, %v7836
  %v7905 = vmul.f32 %v6523, %v7836
  %v7906 = vmul.f32 %v6524, %v7836
  %v7907 = vmul.f32 %v6525, %v7836
  %v7908 = vmul.f32 %v6526, %v7836
  %v7909 = vmul.f32 %v6527, %v7836
  %v7910 = vmul.f32 %v6528, %v7836
  %v7911 = vmul.f32 %v6529, %v7836
  %v7912 = vmul.f32 %v6530, %v7836
  %v7913 = vmul.f32 %v6531, %v7836
  %v7914 = vmul.f32 %v6532, %v7836
  %v7915 = vmul.f32 %v6533, %v7836
  %v7916 = vmul.f32 %v6534, %v7836
  %v7917 = vmul.f32 %v6535, %v7836
  %v7918 = vmul.f32 %v6536, %v7836
  %v7919 = vmul.f32 %v6537, %v7836
  %v7920 = vmul.f32 %v6538, %v7836
  %v7921 = vmul.f32 %v6539, %v7836
  %v7922 = vmul.f32 %v6540, %v7836
  %v7923 = vmul.f32 %v6541, %v7836
  %v7924 = vmul.f32 %v6542, %v7836
  %v7925 = vmul.f32 %v6543, %v7836
  %v7926 = vmul.f32 %v6544, %v7836
  %v7927 = vmul.f32 %v6545, %v7836
  %v7928 = vmul.f32 %v6546, %v7836
  %v7929 = vmul.f32 %v6547, %v7836
  %v7930 = vmul.f32 %v6548, %v7836
  %v7931 = vmul.f32 %v6549, %v7836
  %v7932 = vmul.f32 %v6550, %v7836
  %v8029 = vrot.slane %v7837, 1
  %v8030 = vrot.slane %v7838, 1
  %v8031 = vsel %vm1026, %v8029, %v8030
  %v8032 = vrot.slane %v7839, 1
  %v8033 = vsel %vm1026, %v8030, %v8032
  %v8034 = vrot.slane %v7840, 1
  %v8035 = vrot.slane %v7841, 1
  %v8036 = vsel %vm1026, %v8034, %v8035
  %v8037 = vrot.slane %v7842, 1
  %v8038 = vsel %vm1026, %v8035, %v8037
  %v8039 = vrot.slane %v7843, 1
  %v8040 = vrot.slane %v7844, 1
  %v8041 = vsel %vm1026, %v8039, %v8040
  %v8042 = vrot.slane %v7845, 1
  %v8043 = vsel %vm1026, %v8040, %v8042
  %v8044 = vrot.slane %v7846, 1
  %v8045 = vrot.slane %v7847, 1
  %v8046 = vsel %vm1026, %v8044, %v8045
  %v8047 = vrot.slane %v7848, 1
  %v8048 = vsel %vm1026, %v8045, %v8047
  %v8049 = vrot.slane %v7849, 1
  %v8050 = vrot.slane %v7850, 1
  %v8051 = vsel %vm1026, %v8049, %v8050
  %v8052 = vrot.slane %v7851, 1
  %v8053 = vsel %vm1026, %v8050, %v8052
  %v8054 = vrot.slane %v7852, 1
  %v8055 = vrot.slane %v7853, 1
  %v8056 = vsel %vm1026, %v8054, %v8055
  %v8057 = vrot.slane %v7854, 1
  %v8058 = vsel %vm1026, %v8055, %v8057
  %v8059 = vrot.slane %v7855, 1
  %v8060 = vrot.slane %v7856, 1
  %v8061 = vsel %vm1026, %v8059, %v8060
  %v8062 = vrot.slane %v7857, 1
  %v8063 = vsel %vm1026, %v8060, %v8062
  %v8064 = vrot.slane %v7858, 1
  %v8065 = vrot.slane %v7859, 1
  %v8066 = vsel %vm1026, %v8064, %v8065
  %v8067 = vrot.slane %v7860, 1
  %v8068 = vsel %vm1026, %v8065, %v8067
  %v8069 = vrot.slane %v7861, 1
  %v8070 = vrot.slane %v7862, 1
  %v8071 = vsel %vm1026, %v8069, %v8070
  %v8072 = vrot.slane %v7863, 1
  %v8073 = vsel %vm1026, %v8070, %v8072
  %v8074 = vrot.slane %v7864, 1
  %v8075 = vrot.slane %v7865, 1
  %v8076 = vsel %vm1026, %v8074, %v8075
  %v8077 = vrot.slane %v7866, 1
  %v8078 = vsel %vm1026, %v8075, %v8077
  %v8079 = vrot.slane %v7867, 1
  %v8080 = vrot.slane %v7868, 1
  %v8081 = vsel %vm1026, %v8079, %v8080
  %v8082 = vrot.slane %v7869, 1
  %v8083 = vsel %vm1026, %v8080, %v8082
  %v8084 = vrot.slane %v7870, 1
  %v8085 = vrot.slane %v7871, 1
  %v8086 = vsel %vm1026, %v8084, %v8085
  %v8087 = vrot.slane %v7872, 1
  %v8088 = vsel %vm1026, %v8085, %v8087
  %v8089 = vrot.slane %v7873, 1
  %v8090 = vrot.slane %v7874, 1
  %v8091 = vsel %vm1026, %v8089, %v8090
  %v8092 = vrot.slane %v7875, 1
  %v8093 = vsel %vm1026, %v8090, %v8092
  %v8094 = vrot.slane %v7876, 1
  %v8095 = vrot.slane %v7877, 1
  %v8096 = vsel %vm1026, %v8094, %v8095
  %v8097 = vrot.slane %v7878, 1
  %v8098 = vsel %vm1026, %v8095, %v8097
  %v8099 = vrot.slane %v7879, 1
  %v8100 = vrot.slane %v7880, 1
  %v8101 = vsel %vm1026, %v8099, %v8100
  %v8102 = vrot.slane %v7881, 1
  %v8103 = vsel %vm1026, %v8100, %v8102
  %v8104 = vrot.slane %v7882, 1
  %v8105 = vrot.slane %v7883, 1
  %v8106 = vsel %vm1026, %v8104, %v8105
  %v8107 = vrot.slane %v7884, 1
  %v8108 = vsel %vm1026, %v8105, %v8107
  %v8109 = vrot.slane %v7885, 1
  %v8110 = vrot.slane %v7886, 1
  %v8111 = vsel %vm1026, %v8109, %v8110
  %v8112 = vrot.slane %v7887, 1
  %v8113 = vsel %vm1026, %v8110, %v8112
  %v8114 = vrot.slane %v7888, 1
  %v8115 = vrot.slane %v7889, 1
  %v8116 = vsel %vm1026, %v8114, %v8115
  %v8117 = vrot.slane %v7890, 1
  %v8118 = vsel %vm1026, %v8115, %v8117
  %v8119 = vrot.slane %v7891, 1
  %v8120 = vrot.slane %v7892, 1
  %v8121 = vsel %vm1026, %v8119, %v8120
  %v8122 = vrot.slane %v7893, 1
  %v8123 = vsel %vm1026, %v8120, %v8122
  %v8124 = vrot.slane %v7894, 1
  %v8125 = vrot.slane %v7895, 1
  %v8126 = vsel %vm1026, %v8124, %v8125
  %v8127 = vrot.slane %v7896, 1
  %v8128 = vsel %vm1026, %v8125, %v8127
  %v8129 = vrot.slane %v7897, 1
  %v8130 = vrot.slane %v7898, 1
  %v8131 = vsel %vm1026, %v8129, %v8130
  %v8132 = vrot.slane %v7899, 1
  %v8133 = vsel %vm1026, %v8130, %v8132
  %v8134 = vrot.slane %v7900, 1
  %v8135 = vrot.slane %v7901, 1
  %v8136 = vsel %vm1026, %v8134, %v8135
  %v8137 = vrot.slane %v7902, 1
  %v8138 = vsel %vm1026, %v8135, %v8137
  %v8139 = vrot.slane %v7903, 1
  %v8140 = vrot.slane %v7904, 1
  %v8141 = vsel %vm1026, %v8139, %v8140
  %v8142 = vrot.slane %v7905, 1
  %v8143 = vsel %vm1026, %v8140, %v8142
  %v8144 = vrot.slane %v7906, 1
  %v8145 = vrot.slane %v7907, 1
  %v8146 = vsel %vm1026, %v8144, %v8145
  %v8147 = vrot.slane %v7908, 1
  %v8148 = vsel %vm1026, %v8145, %v8147
  %v8149 = vrot.slane %v7909, 1
  %v8150 = vrot.slane %v7910, 1
  %v8151 = vsel %vm1026, %v8149, %v8150
  %v8152 = vrot.slane %v7911, 1
  %v8153 = vsel %vm1026, %v8150, %v8152
  %v8154 = vrot.slane %v7912, 1
  %v8155 = vrot.slane %v7913, 1
  %v8156 = vsel %vm1026, %v8154, %v8155
  %v8157 = vrot.slane %v7914, 1
  %v8158 = vsel %vm1026, %v8155, %v8157
  %v8159 = vrot.slane %v7915, 1
  %v8160 = vrot.slane %v7916, 1
  %v8161 = vsel %vm1026, %v8159, %v8160
  %v8162 = vrot.slane %v7917, 1
  %v8163 = vsel %vm1026, %v8160, %v8162
  %v8164 = vrot.slane %v7918, 1
  %v8165 = vrot.slane %v7919, 1
  %v8166 = vsel %vm1026, %v8164, %v8165
  %v8167 = vrot.slane %v7920, 1
  %v8168 = vsel %vm1026, %v8165, %v8167
  %v8169 = vrot.slane %v7921, 1
  %v8170 = vrot.slane %v7922, 1
  %v8171 = vsel %vm1026, %v8169, %v8170
  %v8172 = vrot.slane %v7923, 1
  %v8173 = vsel %vm1026, %v8170, %v8172
  %v8174 = vrot.slane %v7924, 1
  %v8175 = vrot.slane %v7925, 1
  %v8176 = vsel %vm1026, %v8174, %v8175
  %v8177 = vrot.slane %v7926, 1
  %v8178 = vsel %vm1026, %v8175, %v8177
  %v8179 = vrot.slane %v7927, 1
  %v8180 = vrot.slane %v7928, 1
  %v8181 = vsel %vm1026, %v8179, %v8180
  %v8182 = vrot.slane %v7929, 1
  %v8183 = vsel %vm1026, %v8180, %v8182
  %v8184 = vrot.slane %v7930, 1
  %v8185 = vrot.slane %v7931, 1
  %v8186 = vsel %vm1026, %v8184, %v8185
  %v8187 = vrot.slane %v7932, 1
  %v8188 = vsel %vm1026, %v8185, %v8187
  %v8253 = vadd.f32 %v7772, %v8031
  %v8254 = vadd.f32 %v7773, %v8033
  %v8255 = vadd.f32 %v7774, %v8036
  %v8256 = vadd.f32 %v7775, %v8038
  %v8257 = vadd.f32 %v7776, %v8041
  %v8258 = vadd.f32 %v7777, %v8043
  %v8259 = vadd.f32 %v7778, %v8046
  %v8260 = vadd.f32 %v7779, %v8048
  %v8261 = vadd.f32 %v7780, %v8051
  %v8262 = vadd.f32 %v7781, %v8053
  %v8263 = vadd.f32 %v7782, %v8056
  %v8264 = vadd.f32 %v7783, %v8058
  %v8265 = vadd.f32 %v7784, %v8061
  %v8266 = vadd.f32 %v7785, %v8063
  %v8267 = vadd.f32 %v7786, %v8066
  %v8268 = vadd.f32 %v7787, %v8068
  %v8269 = vadd.f32 %v7788, %v8071
  %v8270 = vadd.f32 %v7789, %v8073
  %v8271 = vadd.f32 %v7790, %v8076
  %v8272 = vadd.f32 %v7791, %v8078
  %v8273 = vadd.f32 %v7792, %v8081
  %v8274 = vadd.f32 %v7793, %v8083
  %v8275 = vadd.f32 %v7794, %v8086
  %v8276 = vadd.f32 %v7795, %v8088
  %v8277 = vadd.f32 %v7796, %v8091
  %v8278 = vadd.f32 %v7797, %v8093
  %v8279 = vadd.f32 %v7798, %v8096
  %v8280 = vadd.f32 %v7799, %v8098
  %v8281 = vadd.f32 %v7800, %v8101
  %v8282 = vadd.f32 %v7801, %v8103
  %v8283 = vadd.f32 %v7802, %v8106
  %v8284 = vadd.f32 %v7803, %v8108
  %v8285 = vadd.f32 %v7804, %v8111
  %v8286 = vadd.f32 %v7805, %v8113
  %v8287 = vadd.f32 %v7806, %v8116
  %v8288 = vadd.f32 %v7807, %v8118
  %v8289 = vadd.f32 %v7808, %v8121
  %v8290 = vadd.f32 %v7809, %v8123
  %v8291 = vadd.f32 %v7810, %v8126
  %v8292 = vadd.f32 %v7811, %v8128
  %v8293 = vadd.f32 %v7812, %v8131
  %v8294 = vadd.f32 %v7813, %v8133
  %v8295 = vadd.f32 %v7814, %v8136
  %v8296 = vadd.f32 %v7815, %v8138
  %v8297 = vadd.f32 %v7816, %v8141
  %v8298 = vadd.f32 %v7817, %v8143
  %v8299 = vadd.f32 %v7818, %v8146
  %v8300 = vadd.f32 %v7819, %v8148
  %v8301 = vadd.f32 %v7820, %v8151
  %v8302 = vadd.f32 %v7821, %v8153
  %v8303 = vadd.f32 %v7822, %v8156
  %v8304 = vadd.f32 %v7823, %v8158
  %v8305 = vadd.f32 %v7824, %v8161
  %v8306 = vadd.f32 %v7825, %v8163
  %v8307 = vadd.f32 %v7826, %v8166
  %v8308 = vadd.f32 %v7827, %v8168
  %v8309 = vadd.f32 %v7828, %v8171
  %v8310 = vadd.f32 %v7829, %v8173
  %v8311 = vadd.f32 %v7830, %v8176
  %v8312 = vadd.f32 %v7831, %v8178
  %v8313 = vadd.f32 %v7832, %v8181
  %v8314 = vadd.f32 %v7833, %v8183
  %v8315 = vadd.f32 %v7834, %v8186
  %v8316 = vadd.f32 %v7835, %v8188
  %v8317 = vperm.slane %v190, 2
  %v8318 = vmul.f32 %v6443, %v8317
  %v8319 = vmul.f32 %v6444, %v8317
  %v8320 = vmul.f32 %v6445, %v8317
  %v8321 = vmul.f32 %v6446, %v8317
  %v8322 = vmul.f32 %v6447, %v8317
  %v8323 = vmul.f32 %v6448, %v8317
  %v8324 = vmul.f32 %v6449, %v8317
  %v8325 = vmul.f32 %v6450, %v8317
  %v8326 = vmul.f32 %v6451, %v8317
  %v8327 = vmul.f32 %v6452, %v8317
  %v8328 = vmul.f32 %v6453, %v8317
  %v8329 = vmul.f32 %v6454, %v8317
  %v8330 = vmul.f32 %v6455, %v8317
  %v8331 = vmul.f32 %v6456, %v8317
  %v8332 = vmul.f32 %v6457, %v8317
  %v8333 = vmul.f32 %v6458, %v8317
  %v8334 = vmul.f32 %v6459, %v8317
  %v8335 = vmul.f32 %v6460, %v8317
  %v8336 = vmul.f32 %v6461, %v8317
  %v8337 = vmul.f32 %v6462, %v8317
  %v8338 = vmul.f32 %v6463, %v8317
  %v8339 = vmul.f32 %v6464, %v8317
  %v8340 = vmul.f32 %v6465, %v8317
  %v8341 = vmul.f32 %v6466, %v8317
  %v8342 = vmul.f32 %v6467, %v8317
  %v8343 = vmul.f32 %v6468, %v8317
  %v8344 = vmul.f32 %v6469, %v8317
  %v8345 = vmul.f32 %v6470, %v8317
  %v8346 = vmul.f32 %v6471, %v8317
  %v8347 = vmul.f32 %v6472, %v8317
  %v8348 = vmul.f32 %v6473, %v8317
  %v8349 = vmul.f32 %v6474, %v8317
  %v8350 = vmul.f32 %v6475, %v8317
  %v8351 = vmul.f32 %v6476, %v8317
  %v8352 = vmul.f32 %v6477, %v8317
  %v8353 = vmul.f32 %v6478, %v8317
  %v8354 = vmul.f32 %v6479, %v8317
  %v8355 = vmul.f32 %v6480, %v8317
  %v8356 = vmul.f32 %v6481, %v8317
  %v8357 = vmul.f32 %v6482, %v8317
  %v8358 = vmul.f32 %v6483, %v8317
  %v8359 = vmul.f32 %v6484, %v8317
  %v8360 = vmul.f32 %v6485, %v8317
  %v8361 = vmul.f32 %v6486, %v8317
  %v8362 = vmul.f32 %v6487, %v8317
  %v8363 = vmul.f32 %v6488, %v8317
  %v8364 = vmul.f32 %v6489, %v8317
  %v8365 = vmul.f32 %v6490, %v8317
  %v8366 = vmul.f32 %v6497, %v8317
  %v8367 = vmul.f32 %v6498, %v8317
  %v8368 = vmul.f32 %v6499, %v8317
  %v8369 = vmul.f32 %v6500, %v8317
  %v8370 = vmul.f32 %v6501, %v8317
  %v8371 = vmul.f32 %v6502, %v8317
  %v8372 = vmul.f32 %v6503, %v8317
  %v8373 = vmul.f32 %v6504, %v8317
  %v8374 = vmul.f32 %v6505, %v8317
  %v8375 = vmul.f32 %v6506, %v8317
  %v8376 = vmul.f32 %v6507, %v8317
  %v8377 = vmul.f32 %v6508, %v8317
  %v8378 = vmul.f32 %v6509, %v8317
  %v8379 = vmul.f32 %v6510, %v8317
  %v8380 = vmul.f32 %v6511, %v8317
  %v8381 = vmul.f32 %v6512, %v8317
  %v8382 = vmul.f32 %v6513, %v8317
  %v8383 = vmul.f32 %v6514, %v8317
  %v8384 = vmul.f32 %v6515, %v8317
  %v8385 = vmul.f32 %v6516, %v8317
  %v8386 = vmul.f32 %v6517, %v8317
  %v8387 = vmul.f32 %v6518, %v8317
  %v8388 = vmul.f32 %v6519, %v8317
  %v8389 = vmul.f32 %v6520, %v8317
  %v8390 = vmul.f32 %v6521, %v8317
  %v8391 = vmul.f32 %v6522, %v8317
  %v8392 = vmul.f32 %v6523, %v8317
  %v8393 = vmul.f32 %v6524, %v8317
  %v8394 = vmul.f32 %v6525, %v8317
  %v8395 = vmul.f32 %v6526, %v8317
  %v8396 = vmul.f32 %v6527, %v8317
  %v8397 = vmul.f32 %v6528, %v8317
  %v8398 = vmul.f32 %v6529, %v8317
  %v8399 = vmul.f32 %v6530, %v8317
  %v8400 = vmul.f32 %v6531, %v8317
  %v8401 = vmul.f32 %v6532, %v8317
  %v8402 = vmul.f32 %v6533, %v8317
  %v8403 = vmul.f32 %v6534, %v8317
  %v8404 = vmul.f32 %v6535, %v8317
  %v8405 = vmul.f32 %v6536, %v8317
  %v8406 = vmul.f32 %v6537, %v8317
  %v8407 = vmul.f32 %v6538, %v8317
  %v8408 = vmul.f32 %v6539, %v8317
  %v8409 = vmul.f32 %v6540, %v8317
  %v8410 = vmul.f32 %v6541, %v8317
  %v8411 = vmul.f32 %v6542, %v8317
  %v8412 = vmul.f32 %v6543, %v8317
  %v8413 = vmul.f32 %v6544, %v8317
  %v8510 = vrot.slane %v8318, 2
  %v8511 = vrot.slane %v8319, 2
  %v8512 = vsel %vm3298, %v8510, %v8511
  %v8513 = vrot.slane %v8320, 2
  %v8514 = vsel %vm3298, %v8511, %v8513
  %v8515 = vrot.slane %v8321, 2
  %v8516 = vrot.slane %v8322, 2
  %v8517 = vsel %vm3298, %v8515, %v8516
  %v8518 = vrot.slane %v8323, 2
  %v8519 = vsel %vm3298, %v8516, %v8518
  %v8520 = vrot.slane %v8324, 2
  %v8521 = vrot.slane %v8325, 2
  %v8522 = vsel %vm3298, %v8520, %v8521
  %v8523 = vrot.slane %v8326, 2
  %v8524 = vsel %vm3298, %v8521, %v8523
  %v8525 = vrot.slane %v8327, 2
  %v8526 = vrot.slane %v8328, 2
  %v8527 = vsel %vm3298, %v8525, %v8526
  %v8528 = vrot.slane %v8329, 2
  %v8529 = vsel %vm3298, %v8526, %v8528
  %v8530 = vrot.slane %v8330, 2
  %v8531 = vrot.slane %v8331, 2
  %v8532 = vsel %vm3298, %v8530, %v8531
  %v8533 = vrot.slane %v8332, 2
  %v8534 = vsel %vm3298, %v8531, %v8533
  %v8535 = vrot.slane %v8333, 2
  %v8536 = vrot.slane %v8334, 2
  %v8537 = vsel %vm3298, %v8535, %v8536
  %v8538 = vrot.slane %v8335, 2
  %v8539 = vsel %vm3298, %v8536, %v8538
  %v8540 = vrot.slane %v8336, 2
  %v8541 = vrot.slane %v8337, 2
  %v8542 = vsel %vm3298, %v8540, %v8541
  %v8543 = vrot.slane %v8338, 2
  %v8544 = vsel %vm3298, %v8541, %v8543
  %v8545 = vrot.slane %v8339, 2
  %v8546 = vrot.slane %v8340, 2
  %v8547 = vsel %vm3298, %v8545, %v8546
  %v8548 = vrot.slane %v8341, 2
  %v8549 = vsel %vm3298, %v8546, %v8548
  %v8550 = vrot.slane %v8342, 2
  %v8551 = vrot.slane %v8343, 2
  %v8552 = vsel %vm3298, %v8550, %v8551
  %v8553 = vrot.slane %v8344, 2
  %v8554 = vsel %vm3298, %v8551, %v8553
  %v8555 = vrot.slane %v8345, 2
  %v8556 = vrot.slane %v8346, 2
  %v8557 = vsel %vm3298, %v8555, %v8556
  %v8558 = vrot.slane %v8347, 2
  %v8559 = vsel %vm3298, %v8556, %v8558
  %v8560 = vrot.slane %v8348, 2
  %v8561 = vrot.slane %v8349, 2
  %v8562 = vsel %vm3298, %v8560, %v8561
  %v8563 = vrot.slane %v8350, 2
  %v8564 = vsel %vm3298, %v8561, %v8563
  %v8565 = vrot.slane %v8351, 2
  %v8566 = vrot.slane %v8352, 2
  %v8567 = vsel %vm3298, %v8565, %v8566
  %v8568 = vrot.slane %v8353, 2
  %v8569 = vsel %vm3298, %v8566, %v8568
  %v8570 = vrot.slane %v8354, 2
  %v8571 = vrot.slane %v8355, 2
  %v8572 = vsel %vm3298, %v8570, %v8571
  %v8573 = vrot.slane %v8356, 2
  %v8574 = vsel %vm3298, %v8571, %v8573
  %v8575 = vrot.slane %v8357, 2
  %v8576 = vrot.slane %v8358, 2
  %v8577 = vsel %vm3298, %v8575, %v8576
  %v8578 = vrot.slane %v8359, 2
  %v8579 = vsel %vm3298, %v8576, %v8578
  %v8580 = vrot.slane %v8360, 2
  %v8581 = vrot.slane %v8361, 2
  %v8582 = vsel %vm3298, %v8580, %v8581
  %v8583 = vrot.slane %v8362, 2
  %v8584 = vsel %vm3298, %v8581, %v8583
  %v8585 = vrot.slane %v8363, 2
  %v8586 = vrot.slane %v8364, 2
  %v8587 = vsel %vm3298, %v8585, %v8586
  %v8588 = vrot.slane %v8365, 2
  %v8589 = vsel %vm3298, %v8586, %v8588
  %v8590 = vrot.slane %v8366, 2
  %v8591 = vrot.slane %v8367, 2
  %v8592 = vsel %vm3298, %v8590, %v8591
  %v8593 = vrot.slane %v8368, 2
  %v8594 = vsel %vm3298, %v8591, %v8593
  %v8595 = vrot.slane %v8369, 2
  %v8596 = vrot.slane %v8370, 2
  %v8597 = vsel %vm3298, %v8595, %v8596
  %v8598 = vrot.slane %v8371, 2
  %v8599 = vsel %vm3298, %v8596, %v8598
  %v8600 = vrot.slane %v8372, 2
  %v8601 = vrot.slane %v8373, 2
  %v8602 = vsel %vm3298, %v8600, %v8601
  %v8603 = vrot.slane %v8374, 2
  %v8604 = vsel %vm3298, %v8601, %v8603
  %v8605 = vrot.slane %v8375, 2
  %v8606 = vrot.slane %v8376, 2
  %v8607 = vsel %vm3298, %v8605, %v8606
  %v8608 = vrot.slane %v8377, 2
  %v8609 = vsel %vm3298, %v8606, %v8608
  %v8610 = vrot.slane %v8378, 2
  %v8611 = vrot.slane %v8379, 2
  %v8612 = vsel %vm3298, %v8610, %v8611
  %v8613 = vrot.slane %v8380, 2
  %v8614 = vsel %vm3298, %v8611, %v8613
  %v8615 = vrot.slane %v8381, 2
  %v8616 = vrot.slane %v8382, 2
  %v8617 = vsel %vm3298, %v8615, %v8616
  %v8618 = vrot.slane %v8383, 2
  %v8619 = vsel %vm3298, %v8616, %v8618
  %v8620 = vrot.slane %v8384, 2
  %v8621 = vrot.slane %v8385, 2
  %v8622 = vsel %vm3298, %v8620, %v8621
  %v8623 = vrot.slane %v8386, 2
  %v8624 = vsel %vm3298, %v8621, %v8623
  %v8625 = vrot.slane %v8387, 2
  %v8626 = vrot.slane %v8388, 2
  %v8627 = vsel %vm3298, %v8625, %v8626
  %v8628 = vrot.slane %v8389, 2
  %v8629 = vsel %vm3298, %v8626, %v8628
  %v8630 = vrot.slane %v8390, 2
  %v8631 = vrot.slane %v8391, 2
  %v8632 = vsel %vm3298, %v8630, %v8631
  %v8633 = vrot.slane %v8392, 2
  %v8634 = vsel %vm3298, %v8631, %v8633
  %v8635 = vrot.slane %v8393, 2
  %v8636 = vrot.slane %v8394, 2
  %v8637 = vsel %vm3298, %v8635, %v8636
  %v8638 = vrot.slane %v8395, 2
  %v8639 = vsel %vm3298, %v8636, %v8638
  %v8640 = vrot.slane %v8396, 2
  %v8641 = vrot.slane %v8397, 2
  %v8642 = vsel %vm3298, %v8640, %v8641
  %v8643 = vrot.slane %v8398, 2
  %v8644 = vsel %vm3298, %v8641, %v8643
  %v8645 = vrot.slane %v8399, 2
  %v8646 = vrot.slane %v8400, 2
  %v8647 = vsel %vm3298, %v8645, %v8646
  %v8648 = vrot.slane %v8401, 2
  %v8649 = vsel %vm3298, %v8646, %v8648
  %v8650 = vrot.slane %v8402, 2
  %v8651 = vrot.slane %v8403, 2
  %v8652 = vsel %vm3298, %v8650, %v8651
  %v8653 = vrot.slane %v8404, 2
  %v8654 = vsel %vm3298, %v8651, %v8653
  %v8655 = vrot.slane %v8405, 2
  %v8656 = vrot.slane %v8406, 2
  %v8657 = vsel %vm3298, %v8655, %v8656
  %v8658 = vrot.slane %v8407, 2
  %v8659 = vsel %vm3298, %v8656, %v8658
  %v8660 = vrot.slane %v8408, 2
  %v8661 = vrot.slane %v8409, 2
  %v8662 = vsel %vm3298, %v8660, %v8661
  %v8663 = vrot.slane %v8410, 2
  %v8664 = vsel %vm3298, %v8661, %v8663
  %v8665 = vrot.slane %v8411, 2
  %v8666 = vrot.slane %v8412, 2
  %v8667 = vsel %vm3298, %v8665, %v8666
  %v8668 = vrot.slane %v8413, 2
  %v8669 = vsel %vm3298, %v8666, %v8668
  %v8734 = vadd.f32 %v8253, %v8512
  %v8735 = vadd.f32 %v8254, %v8514
  %v8736 = vadd.f32 %v8255, %v8517
  %v8737 = vadd.f32 %v8256, %v8519
  %v8738 = vadd.f32 %v8257, %v8522
  %v8739 = vadd.f32 %v8258, %v8524
  %v8740 = vadd.f32 %v8259, %v8527
  %v8741 = vadd.f32 %v8260, %v8529
  %v8742 = vadd.f32 %v8261, %v8532
  %v8743 = vadd.f32 %v8262, %v8534
  %v8744 = vadd.f32 %v8263, %v8537
  %v8745 = vadd.f32 %v8264, %v8539
  %v8746 = vadd.f32 %v8265, %v8542
  %v8747 = vadd.f32 %v8266, %v8544
  %v8748 = vadd.f32 %v8267, %v8547
  %v8749 = vadd.f32 %v8268, %v8549
  %v8750 = vadd.f32 %v8269, %v8552
  %v8751 = vadd.f32 %v8270, %v8554
  %v8752 = vadd.f32 %v8271, %v8557
  %v8753 = vadd.f32 %v8272, %v8559
  %v8754 = vadd.f32 %v8273, %v8562
  %v8755 = vadd.f32 %v8274, %v8564
  %v8756 = vadd.f32 %v8275, %v8567
  %v8757 = vadd.f32 %v8276, %v8569
  %v8758 = vadd.f32 %v8277, %v8572
  %v8759 = vadd.f32 %v8278, %v8574
  %v8760 = vadd.f32 %v8279, %v8577
  %v8761 = vadd.f32 %v8280, %v8579
  %v8762 = vadd.f32 %v8281, %v8582
  %v8763 = vadd.f32 %v8282, %v8584
  %v8764 = vadd.f32 %v8283, %v8587
  %v8765 = vadd.f32 %v8284, %v8589
  %v8766 = vadd.f32 %v8285, %v8592
  %v8767 = vadd.f32 %v8286, %v8594
  %v8768 = vadd.f32 %v8287, %v8597
  %v8769 = vadd.f32 %v8288, %v8599
  %v8770 = vadd.f32 %v8289, %v8602
  %v8771 = vadd.f32 %v8290, %v8604
  %v8772 = vadd.f32 %v8291, %v8607
  %v8773 = vadd.f32 %v8292, %v8609
  %v8774 = vadd.f32 %v8293, %v8612
  %v8775 = vadd.f32 %v8294, %v8614
  %v8776 = vadd.f32 %v8295, %v8617
  %v8777 = vadd.f32 %v8296, %v8619
  %v8778 = vadd.f32 %v8297, %v8622
  %v8779 = vadd.f32 %v8298, %v8624
  %v8780 = vadd.f32 %v8299, %v8627
  %v8781 = vadd.f32 %v8300, %v8629
  %v8782 = vadd.f32 %v8301, %v8632
  %v8783 = vadd.f32 %v8302, %v8634
  %v8784 = vadd.f32 %v8303, %v8637
  %v8785 = vadd.f32 %v8304, %v8639
  %v8786 = vadd.f32 %v8305, %v8642
  %v8787 = vadd.f32 %v8306, %v8644
  %v8788 = vadd.f32 %v8307, %v8647
  %v8789 = vadd.f32 %v8308, %v8649
  %v8790 = vadd.f32 %v8309, %v8652
  %v8791 = vadd.f32 %v8310, %v8654
  %v8792 = vadd.f32 %v8311, %v8657
  %v8793 = vadd.f32 %v8312, %v8659
  %v8794 = vadd.f32 %v8313, %v8662
  %v8795 = vadd.f32 %v8314, %v8664
  %v8796 = vadd.f32 %v8315, %v8667
  %v8797 = vadd.f32 %v8316, %v8669
  %v8798 = vperm.slane %v191, 2
  %v8799 = vmul.f32 %v6446, %v8798
  %v8800 = vmul.f32 %v6447, %v8798
  %v8801 = vmul.f32 %v6448, %v8798
  %v8802 = vmul.f32 %v6449, %v8798
  %v8803 = vmul.f32 %v6450, %v8798
  %v8804 = vmul.f32 %v6451, %v8798
  %v8805 = vmul.f32 %v6452, %v8798
  %v8806 = vmul.f32 %v6453, %v8798
  %v8807 = vmul.f32 %v6454, %v8798
  %v8808 = vmul.f32 %v6455, %v8798
  %v8809 = vmul.f32 %v6456, %v8798
  %v8810 = vmul.f32 %v6457, %v8798
  %v8811 = vmul.f32 %v6458, %v8798
  %v8812 = vmul.f32 %v6459, %v8798
  %v8813 = vmul.f32 %v6460, %v8798
  %v8814 = vmul.f32 %v6461, %v8798
  %v8815 = vmul.f32 %v6462, %v8798
  %v8816 = vmul.f32 %v6463, %v8798
  %v8817 = vmul.f32 %v6464, %v8798
  %v8818 = vmul.f32 %v6465, %v8798
  %v8819 = vmul.f32 %v6466, %v8798
  %v8820 = vmul.f32 %v6467, %v8798
  %v8821 = vmul.f32 %v6468, %v8798
  %v8822 = vmul.f32 %v6469, %v8798
  %v8823 = vmul.f32 %v6470, %v8798
  %v8824 = vmul.f32 %v6471, %v8798
  %v8825 = vmul.f32 %v6472, %v8798
  %v8826 = vmul.f32 %v6473, %v8798
  %v8827 = vmul.f32 %v6474, %v8798
  %v8828 = vmul.f32 %v6475, %v8798
  %v8829 = vmul.f32 %v6476, %v8798
  %v8830 = vmul.f32 %v6477, %v8798
  %v8831 = vmul.f32 %v6478, %v8798
  %v8832 = vmul.f32 %v6479, %v8798
  %v8833 = vmul.f32 %v6480, %v8798
  %v8834 = vmul.f32 %v6481, %v8798
  %v8835 = vmul.f32 %v6482, %v8798
  %v8836 = vmul.f32 %v6483, %v8798
  %v8837 = vmul.f32 %v6484, %v8798
  %v8838 = vmul.f32 %v6485, %v8798
  %v8839 = vmul.f32 %v6486, %v8798
  %v8840 = vmul.f32 %v6487, %v8798
  %v8841 = vmul.f32 %v6488, %v8798
  %v8842 = vmul.f32 %v6489, %v8798
  %v8843 = vmul.f32 %v6490, %v8798
  %v8844 = vmul.f32 %v6491, %v8798
  %v8845 = vmul.f32 %v6492, %v8798
  %v8846 = vmul.f32 %v6493, %v8798
  %v8847 = vmul.f32 %v6500, %v8798
  %v8848 = vmul.f32 %v6501, %v8798
  %v8849 = vmul.f32 %v6502, %v8798
  %v8850 = vmul.f32 %v6503, %v8798
  %v8851 = vmul.f32 %v6504, %v8798
  %v8852 = vmul.f32 %v6505, %v8798
  %v8853 = vmul.f32 %v6506, %v8798
  %v8854 = vmul.f32 %v6507, %v8798
  %v8855 = vmul.f32 %v6508, %v8798
  %v8856 = vmul.f32 %v6509, %v8798
  %v8857 = vmul.f32 %v6510, %v8798
  %v8858 = vmul.f32 %v6511, %v8798
  %v8859 = vmul.f32 %v6512, %v8798
  %v8860 = vmul.f32 %v6513, %v8798
  %v8861 = vmul.f32 %v6514, %v8798
  %v8862 = vmul.f32 %v6515, %v8798
  %v8863 = vmul.f32 %v6516, %v8798
  %v8864 = vmul.f32 %v6517, %v8798
  %v8865 = vmul.f32 %v6518, %v8798
  %v8866 = vmul.f32 %v6519, %v8798
  %v8867 = vmul.f32 %v6520, %v8798
  %v8868 = vmul.f32 %v6521, %v8798
  %v8869 = vmul.f32 %v6522, %v8798
  %v8870 = vmul.f32 %v6523, %v8798
  %v8871 = vmul.f32 %v6524, %v8798
  %v8872 = vmul.f32 %v6525, %v8798
  %v8873 = vmul.f32 %v6526, %v8798
  %v8874 = vmul.f32 %v6527, %v8798
  %v8875 = vmul.f32 %v6528, %v8798
  %v8876 = vmul.f32 %v6529, %v8798
  %v8877 = vmul.f32 %v6530, %v8798
  %v8878 = vmul.f32 %v6531, %v8798
  %v8879 = vmul.f32 %v6532, %v8798
  %v8880 = vmul.f32 %v6533, %v8798
  %v8881 = vmul.f32 %v6534, %v8798
  %v8882 = vmul.f32 %v6535, %v8798
  %v8883 = vmul.f32 %v6536, %v8798
  %v8884 = vmul.f32 %v6537, %v8798
  %v8885 = vmul.f32 %v6538, %v8798
  %v8886 = vmul.f32 %v6539, %v8798
  %v8887 = vmul.f32 %v6540, %v8798
  %v8888 = vmul.f32 %v6541, %v8798
  %v8889 = vmul.f32 %v6542, %v8798
  %v8890 = vmul.f32 %v6543, %v8798
  %v8891 = vmul.f32 %v6544, %v8798
  %v8892 = vmul.f32 %v6545, %v8798
  %v8893 = vmul.f32 %v6546, %v8798
  %v8894 = vmul.f32 %v6547, %v8798
  %v8991 = vrot.slane %v8799, 2
  %v8992 = vrot.slane %v8800, 2
  %v8993 = vsel %vm3298, %v8991, %v8992
  %v8994 = vrot.slane %v8801, 2
  %v8995 = vsel %vm3298, %v8992, %v8994
  %v8996 = vrot.slane %v8802, 2
  %v8997 = vrot.slane %v8803, 2
  %v8998 = vsel %vm3298, %v8996, %v8997
  %v8999 = vrot.slane %v8804, 2
  %v9000 = vsel %vm3298, %v8997, %v8999
  %v9001 = vrot.slane %v8805, 2
  %v9002 = vrot.slane %v8806, 2
  %v9003 = vsel %vm3298, %v9001, %v9002
  %v9004 = vrot.slane %v8807, 2
  %v9005 = vsel %vm3298, %v9002, %v9004
  %v9006 = vrot.slane %v8808, 2
  %v9007 = vrot.slane %v8809, 2
  %v9008 = vsel %vm3298, %v9006, %v9007
  %v9009 = vrot.slane %v8810, 2
  %v9010 = vsel %vm3298, %v9007, %v9009
  %v9011 = vrot.slane %v8811, 2
  %v9012 = vrot.slane %v8812, 2
  %v9013 = vsel %vm3298, %v9011, %v9012
  %v9014 = vrot.slane %v8813, 2
  %v9015 = vsel %vm3298, %v9012, %v9014
  %v9016 = vrot.slane %v8814, 2
  %v9017 = vrot.slane %v8815, 2
  %v9018 = vsel %vm3298, %v9016, %v9017
  %v9019 = vrot.slane %v8816, 2
  %v9020 = vsel %vm3298, %v9017, %v9019
  %v9021 = vrot.slane %v8817, 2
  %v9022 = vrot.slane %v8818, 2
  %v9023 = vsel %vm3298, %v9021, %v9022
  %v9024 = vrot.slane %v8819, 2
  %v9025 = vsel %vm3298, %v9022, %v9024
  %v9026 = vrot.slane %v8820, 2
  %v9027 = vrot.slane %v8821, 2
  %v9028 = vsel %vm3298, %v9026, %v9027
  %v9029 = vrot.slane %v8822, 2
  %v9030 = vsel %vm3298, %v9027, %v9029
  %v9031 = vrot.slane %v8823, 2
  %v9032 = vrot.slane %v8824, 2
  %v9033 = vsel %vm3298, %v9031, %v9032
  %v9034 = vrot.slane %v8825, 2
  %v9035 = vsel %vm3298, %v9032, %v9034
  %v9036 = vrot.slane %v8826, 2
  %v9037 = vrot.slane %v8827, 2
  %v9038 = vsel %vm3298, %v9036, %v9037
  %v9039 = vrot.slane %v8828, 2
  %v9040 = vsel %vm3298, %v9037, %v9039
  %v9041 = vrot.slane %v8829, 2
  %v9042 = vrot.slane %v8830, 2
  %v9043 = vsel %vm3298, %v9041, %v9042
  %v9044 = vrot.slane %v8831, 2
  %v9045 = vsel %vm3298, %v9042, %v9044
  %v9046 = vrot.slane %v8832, 2
  %v9047 = vrot.slane %v8833, 2
  %v9048 = vsel %vm3298, %v9046, %v9047
  %v9049 = vrot.slane %v8834, 2
  %v9050 = vsel %vm3298, %v9047, %v9049
  %v9051 = vrot.slane %v8835, 2
  %v9052 = vrot.slane %v8836, 2
  %v9053 = vsel %vm3298, %v9051, %v9052
  %v9054 = vrot.slane %v8837, 2
  %v9055 = vsel %vm3298, %v9052, %v9054
  %v9056 = vrot.slane %v8838, 2
  %v9057 = vrot.slane %v8839, 2
  %v9058 = vsel %vm3298, %v9056, %v9057
  %v9059 = vrot.slane %v8840, 2
  %v9060 = vsel %vm3298, %v9057, %v9059
  %v9061 = vrot.slane %v8841, 2
  %v9062 = vrot.slane %v8842, 2
  %v9063 = vsel %vm3298, %v9061, %v9062
  %v9064 = vrot.slane %v8843, 2
  %v9065 = vsel %vm3298, %v9062, %v9064
  %v9066 = vrot.slane %v8844, 2
  %v9067 = vrot.slane %v8845, 2
  %v9068 = vsel %vm3298, %v9066, %v9067
  %v9069 = vrot.slane %v8846, 2
  %v9070 = vsel %vm3298, %v9067, %v9069
  %v9071 = vrot.slane %v8847, 2
  %v9072 = vrot.slane %v8848, 2
  %v9073 = vsel %vm3298, %v9071, %v9072
  %v9074 = vrot.slane %v8849, 2
  %v9075 = vsel %vm3298, %v9072, %v9074
  %v9076 = vrot.slane %v8850, 2
  %v9077 = vrot.slane %v8851, 2
  %v9078 = vsel %vm3298, %v9076, %v9077
  %v9079 = vrot.slane %v8852, 2
  %v9080 = vsel %vm3298, %v9077, %v9079
  %v9081 = vrot.slane %v8853, 2
  %v9082 = vrot.slane %v8854, 2
  %v9083 = vsel %vm3298, %v9081, %v9082
  %v9084 = vrot.slane %v8855, 2
  %v9085 = vsel %vm3298, %v9082, %v9084
  %v9086 = vrot.slane %v8856, 2
  %v9087 = vrot.slane %v8857, 2
  %v9088 = vsel %vm3298, %v9086, %v9087
  %v9089 = vrot.slane %v8858, 2
  %v9090 = vsel %vm3298, %v9087, %v9089
  %v9091 = vrot.slane %v8859, 2
  %v9092 = vrot.slane %v8860, 2
  %v9093 = vsel %vm3298, %v9091, %v9092
  %v9094 = vrot.slane %v8861, 2
  %v9095 = vsel %vm3298, %v9092, %v9094
  %v9096 = vrot.slane %v8862, 2
  %v9097 = vrot.slane %v8863, 2
  %v9098 = vsel %vm3298, %v9096, %v9097
  %v9099 = vrot.slane %v8864, 2
  %v9100 = vsel %vm3298, %v9097, %v9099
  %v9101 = vrot.slane %v8865, 2
  %v9102 = vrot.slane %v8866, 2
  %v9103 = vsel %vm3298, %v9101, %v9102
  %v9104 = vrot.slane %v8867, 2
  %v9105 = vsel %vm3298, %v9102, %v9104
  %v9106 = vrot.slane %v8868, 2
  %v9107 = vrot.slane %v8869, 2
  %v9108 = vsel %vm3298, %v9106, %v9107
  %v9109 = vrot.slane %v8870, 2
  %v9110 = vsel %vm3298, %v9107, %v9109
  %v9111 = vrot.slane %v8871, 2
  %v9112 = vrot.slane %v8872, 2
  %v9113 = vsel %vm3298, %v9111, %v9112
  %v9114 = vrot.slane %v8873, 2
  %v9115 = vsel %vm3298, %v9112, %v9114
  %v9116 = vrot.slane %v8874, 2
  %v9117 = vrot.slane %v8875, 2
  %v9118 = vsel %vm3298, %v9116, %v9117
  %v9119 = vrot.slane %v8876, 2
  %v9120 = vsel %vm3298, %v9117, %v9119
  %v9121 = vrot.slane %v8877, 2
  %v9122 = vrot.slane %v8878, 2
  %v9123 = vsel %vm3298, %v9121, %v9122
  %v9124 = vrot.slane %v8879, 2
  %v9125 = vsel %vm3298, %v9122, %v9124
  %v9126 = vrot.slane %v8880, 2
  %v9127 = vrot.slane %v8881, 2
  %v9128 = vsel %vm3298, %v9126, %v9127
  %v9129 = vrot.slane %v8882, 2
  %v9130 = vsel %vm3298, %v9127, %v9129
  %v9131 = vrot.slane %v8883, 2
  %v9132 = vrot.slane %v8884, 2
  %v9133 = vsel %vm3298, %v9131, %v9132
  %v9134 = vrot.slane %v8885, 2
  %v9135 = vsel %vm3298, %v9132, %v9134
  %v9136 = vrot.slane %v8886, 2
  %v9137 = vrot.slane %v8887, 2
  %v9138 = vsel %vm3298, %v9136, %v9137
  %v9139 = vrot.slane %v8888, 2
  %v9140 = vsel %vm3298, %v9137, %v9139
  %v9141 = vrot.slane %v8889, 2
  %v9142 = vrot.slane %v8890, 2
  %v9143 = vsel %vm3298, %v9141, %v9142
  %v9144 = vrot.slane %v8891, 2
  %v9145 = vsel %vm3298, %v9142, %v9144
  %v9146 = vrot.slane %v8892, 2
  %v9147 = vrot.slane %v8893, 2
  %v9148 = vsel %vm3298, %v9146, %v9147
  %v9149 = vrot.slane %v8894, 2
  %v9150 = vsel %vm3298, %v9147, %v9149
  %v9215 = vadd.f32 %v8734, %v8993
  %v9216 = vadd.f32 %v8735, %v8995
  %v9217 = vadd.f32 %v8736, %v8998
  %v9218 = vadd.f32 %v8737, %v9000
  %v9219 = vadd.f32 %v8738, %v9003
  %v9220 = vadd.f32 %v8739, %v9005
  %v9221 = vadd.f32 %v8740, %v9008
  %v9222 = vadd.f32 %v8741, %v9010
  %v9223 = vadd.f32 %v8742, %v9013
  %v9224 = vadd.f32 %v8743, %v9015
  %v9225 = vadd.f32 %v8744, %v9018
  %v9226 = vadd.f32 %v8745, %v9020
  %v9227 = vadd.f32 %v8746, %v9023
  %v9228 = vadd.f32 %v8747, %v9025
  %v9229 = vadd.f32 %v8748, %v9028
  %v9230 = vadd.f32 %v8749, %v9030
  %v9231 = vadd.f32 %v8750, %v9033
  %v9232 = vadd.f32 %v8751, %v9035
  %v9233 = vadd.f32 %v8752, %v9038
  %v9234 = vadd.f32 %v8753, %v9040
  %v9235 = vadd.f32 %v8754, %v9043
  %v9236 = vadd.f32 %v8755, %v9045
  %v9237 = vadd.f32 %v8756, %v9048
  %v9238 = vadd.f32 %v8757, %v9050
  %v9239 = vadd.f32 %v8758, %v9053
  %v9240 = vadd.f32 %v8759, %v9055
  %v9241 = vadd.f32 %v8760, %v9058
  %v9242 = vadd.f32 %v8761, %v9060
  %v9243 = vadd.f32 %v8762, %v9063
  %v9244 = vadd.f32 %v8763, %v9065
  %v9245 = vadd.f32 %v8764, %v9068
  %v9246 = vadd.f32 %v8765, %v9070
  %v9247 = vadd.f32 %v8766, %v9073
  %v9248 = vadd.f32 %v8767, %v9075
  %v9249 = vadd.f32 %v8768, %v9078
  %v9250 = vadd.f32 %v8769, %v9080
  %v9251 = vadd.f32 %v8770, %v9083
  %v9252 = vadd.f32 %v8771, %v9085
  %v9253 = vadd.f32 %v8772, %v9088
  %v9254 = vadd.f32 %v8773, %v9090
  %v9255 = vadd.f32 %v8774, %v9093
  %v9256 = vadd.f32 %v8775, %v9095
  %v9257 = vadd.f32 %v8776, %v9098
  %v9258 = vadd.f32 %v8777, %v9100
  %v9259 = vadd.f32 %v8778, %v9103
  %v9260 = vadd.f32 %v8779, %v9105
  %v9261 = vadd.f32 %v8780, %v9108
  %v9262 = vadd.f32 %v8781, %v9110
  %v9263 = vadd.f32 %v8782, %v9113
  %v9264 = vadd.f32 %v8783, %v9115
  %v9265 = vadd.f32 %v8784, %v9118
  %v9266 = vadd.f32 %v8785, %v9120
  %v9267 = vadd.f32 %v8786, %v9123
  %v9268 = vadd.f32 %v8787, %v9125
  %v9269 = vadd.f32 %v8788, %v9128
  %v9270 = vadd.f32 %v8789, %v9130
  %v9271 = vadd.f32 %v8790, %v9133
  %v9272 = vadd.f32 %v8791, %v9135
  %v9273 = vadd.f32 %v8792, %v9138
  %v9274 = vadd.f32 %v8793, %v9140
  %v9275 = vadd.f32 %v8794, %v9143
  %v9276 = vadd.f32 %v8795, %v9145
  %v9277 = vadd.f32 %v8796, %v9148
  %v9278 = vadd.f32 %v8797, %v9150
  %v9279 = vperm.slane %v192, 2
  %v9280 = vmul.f32 %v6449, %v9279
  %v9281 = vmul.f32 %v6450, %v9279
  %v9282 = vmul.f32 %v6451, %v9279
  %v9283 = vmul.f32 %v6452, %v9279
  %v9284 = vmul.f32 %v6453, %v9279
  %v9285 = vmul.f32 %v6454, %v9279
  %v9286 = vmul.f32 %v6455, %v9279
  %v9287 = vmul.f32 %v6456, %v9279
  %v9288 = vmul.f32 %v6457, %v9279
  %v9289 = vmul.f32 %v6458, %v9279
  %v9290 = vmul.f32 %v6459, %v9279
  %v9291 = vmul.f32 %v6460, %v9279
  %v9292 = vmul.f32 %v6461, %v9279
  %v9293 = vmul.f32 %v6462, %v9279
  %v9294 = vmul.f32 %v6463, %v9279
  %v9295 = vmul.f32 %v6464, %v9279
  %v9296 = vmul.f32 %v6465, %v9279
  %v9297 = vmul.f32 %v6466, %v9279
  %v9298 = vmul.f32 %v6467, %v9279
  %v9299 = vmul.f32 %v6468, %v9279
  %v9300 = vmul.f32 %v6469, %v9279
  %v9301 = vmul.f32 %v6470, %v9279
  %v9302 = vmul.f32 %v6471, %v9279
  %v9303 = vmul.f32 %v6472, %v9279
  %v9304 = vmul.f32 %v6473, %v9279
  %v9305 = vmul.f32 %v6474, %v9279
  %v9306 = vmul.f32 %v6475, %v9279
  %v9307 = vmul.f32 %v6476, %v9279
  %v9308 = vmul.f32 %v6477, %v9279
  %v9309 = vmul.f32 %v6478, %v9279
  %v9310 = vmul.f32 %v6479, %v9279
  %v9311 = vmul.f32 %v6480, %v9279
  %v9312 = vmul.f32 %v6481, %v9279
  %v9313 = vmul.f32 %v6482, %v9279
  %v9314 = vmul.f32 %v6483, %v9279
  %v9315 = vmul.f32 %v6484, %v9279
  %v9316 = vmul.f32 %v6485, %v9279
  %v9317 = vmul.f32 %v6486, %v9279
  %v9318 = vmul.f32 %v6487, %v9279
  %v9319 = vmul.f32 %v6488, %v9279
  %v9320 = vmul.f32 %v6489, %v9279
  %v9321 = vmul.f32 %v6490, %v9279
  %v9322 = vmul.f32 %v6491, %v9279
  %v9323 = vmul.f32 %v6492, %v9279
  %v9324 = vmul.f32 %v6493, %v9279
  %v9325 = vmul.f32 %v6494, %v9279
  %v9326 = vmul.f32 %v6495, %v9279
  %v9327 = vmul.f32 %v6496, %v9279
  %v9328 = vmul.f32 %v6503, %v9279
  %v9329 = vmul.f32 %v6504, %v9279
  %v9330 = vmul.f32 %v6505, %v9279
  %v9331 = vmul.f32 %v6506, %v9279
  %v9332 = vmul.f32 %v6507, %v9279
  %v9333 = vmul.f32 %v6508, %v9279
  %v9334 = vmul.f32 %v6509, %v9279
  %v9335 = vmul.f32 %v6510, %v9279
  %v9336 = vmul.f32 %v6511, %v9279
  %v9337 = vmul.f32 %v6512, %v9279
  %v9338 = vmul.f32 %v6513, %v9279
  %v9339 = vmul.f32 %v6514, %v9279
  %v9340 = vmul.f32 %v6515, %v9279
  %v9341 = vmul.f32 %v6516, %v9279
  %v9342 = vmul.f32 %v6517, %v9279
  %v9343 = vmul.f32 %v6518, %v9279
  %v9344 = vmul.f32 %v6519, %v9279
  %v9345 = vmul.f32 %v6520, %v9279
  %v9346 = vmul.f32 %v6521, %v9279
  %v9347 = vmul.f32 %v6522, %v9279
  %v9348 = vmul.f32 %v6523, %v9279
  %v9349 = vmul.f32 %v6524, %v9279
  %v9350 = vmul.f32 %v6525, %v9279
  %v9351 = vmul.f32 %v6526, %v9279
  %v9352 = vmul.f32 %v6527, %v9279
  %v9353 = vmul.f32 %v6528, %v9279
  %v9354 = vmul.f32 %v6529, %v9279
  %v9355 = vmul.f32 %v6530, %v9279
  %v9356 = vmul.f32 %v6531, %v9279
  %v9357 = vmul.f32 %v6532, %v9279
  %v9358 = vmul.f32 %v6533, %v9279
  %v9359 = vmul.f32 %v6534, %v9279
  %v9360 = vmul.f32 %v6535, %v9279
  %v9361 = vmul.f32 %v6536, %v9279
  %v9362 = vmul.f32 %v6537, %v9279
  %v9363 = vmul.f32 %v6538, %v9279
  %v9364 = vmul.f32 %v6539, %v9279
  %v9365 = vmul.f32 %v6540, %v9279
  %v9366 = vmul.f32 %v6541, %v9279
  %v9367 = vmul.f32 %v6542, %v9279
  %v9368 = vmul.f32 %v6543, %v9279
  %v9369 = vmul.f32 %v6544, %v9279
  %v9370 = vmul.f32 %v6545, %v9279
  %v9371 = vmul.f32 %v6546, %v9279
  %v9372 = vmul.f32 %v6547, %v9279
  %v9373 = vmul.f32 %v6548, %v9279
  %v9374 = vmul.f32 %v6549, %v9279
  %v9375 = vmul.f32 %v6550, %v9279
  %v9472 = vrot.slane %v9280, 2
  %v9473 = vrot.slane %v9281, 2
  %v9474 = vsel %vm3298, %v9472, %v9473
  %v9475 = vrot.slane %v9282, 2
  %v9476 = vsel %vm3298, %v9473, %v9475
  %v9477 = vrot.slane %v9283, 2
  %v9478 = vrot.slane %v9284, 2
  %v9479 = vsel %vm3298, %v9477, %v9478
  %v9480 = vrot.slane %v9285, 2
  %v9481 = vsel %vm3298, %v9478, %v9480
  %v9482 = vrot.slane %v9286, 2
  %v9483 = vrot.slane %v9287, 2
  %v9484 = vsel %vm3298, %v9482, %v9483
  %v9485 = vrot.slane %v9288, 2
  %v9486 = vsel %vm3298, %v9483, %v9485
  %v9487 = vrot.slane %v9289, 2
  %v9488 = vrot.slane %v9290, 2
  %v9489 = vsel %vm3298, %v9487, %v9488
  %v9490 = vrot.slane %v9291, 2
  %v9491 = vsel %vm3298, %v9488, %v9490
  %v9492 = vrot.slane %v9292, 2
  %v9493 = vrot.slane %v9293, 2
  %v9494 = vsel %vm3298, %v9492, %v9493
  %v9495 = vrot.slane %v9294, 2
  %v9496 = vsel %vm3298, %v9493, %v9495
  %v9497 = vrot.slane %v9295, 2
  %v9498 = vrot.slane %v9296, 2
  %v9499 = vsel %vm3298, %v9497, %v9498
  %v9500 = vrot.slane %v9297, 2
  %v9501 = vsel %vm3298, %v9498, %v9500
  %v9502 = vrot.slane %v9298, 2
  %v9503 = vrot.slane %v9299, 2
  %v9504 = vsel %vm3298, %v9502, %v9503
  %v9505 = vrot.slane %v9300, 2
  %v9506 = vsel %vm3298, %v9503, %v9505
  %v9507 = vrot.slane %v9301, 2
  %v9508 = vrot.slane %v9302, 2
  %v9509 = vsel %vm3298, %v9507, %v9508
  %v9510 = vrot.slane %v9303, 2
  %v9511 = vsel %vm3298, %v9508, %v9510
  %v9512 = vrot.slane %v9304, 2
  %v9513 = vrot.slane %v9305, 2
  %v9514 = vsel %vm3298, %v9512, %v9513
  %v9515 = vrot.slane %v9306, 2
  %v9516 = vsel %vm3298, %v9513, %v9515
  %v9517 = vrot.slane %v9307, 2
  %v9518 = vrot.slane %v9308, 2
  %v9519 = vsel %vm3298, %v9517, %v9518
  %v9520 = vrot.slane %v9309, 2
  %v9521 = vsel %vm3298, %v9518, %v9520
  %v9522 = vrot.slane %v9310, 2
  %v9523 = vrot.slane %v9311, 2
  %v9524 = vsel %vm3298, %v9522, %v9523
  %v9525 = vrot.slane %v9312, 2
  %v9526 = vsel %vm3298, %v9523, %v9525
  %v9527 = vrot.slane %v9313, 2
  %v9528 = vrot.slane %v9314, 2
  %v9529 = vsel %vm3298, %v9527, %v9528
  %v9530 = vrot.slane %v9315, 2
  %v9531 = vsel %vm3298, %v9528, %v9530
  %v9532 = vrot.slane %v9316, 2
  %v9533 = vrot.slane %v9317, 2
  %v9534 = vsel %vm3298, %v9532, %v9533
  %v9535 = vrot.slane %v9318, 2
  %v9536 = vsel %vm3298, %v9533, %v9535
  %v9537 = vrot.slane %v9319, 2
  %v9538 = vrot.slane %v9320, 2
  %v9539 = vsel %vm3298, %v9537, %v9538
  %v9540 = vrot.slane %v9321, 2
  %v9541 = vsel %vm3298, %v9538, %v9540
  %v9542 = vrot.slane %v9322, 2
  %v9543 = vrot.slane %v9323, 2
  %v9544 = vsel %vm3298, %v9542, %v9543
  %v9545 = vrot.slane %v9324, 2
  %v9546 = vsel %vm3298, %v9543, %v9545
  %v9547 = vrot.slane %v9325, 2
  %v9548 = vrot.slane %v9326, 2
  %v9549 = vsel %vm3298, %v9547, %v9548
  %v9550 = vrot.slane %v9327, 2
  %v9551 = vsel %vm3298, %v9548, %v9550
  %v9552 = vrot.slane %v9328, 2
  %v9553 = vrot.slane %v9329, 2
  %v9554 = vsel %vm3298, %v9552, %v9553
  %v9555 = vrot.slane %v9330, 2
  %v9556 = vsel %vm3298, %v9553, %v9555
  %v9557 = vrot.slane %v9331, 2
  %v9558 = vrot.slane %v9332, 2
  %v9559 = vsel %vm3298, %v9557, %v9558
  %v9560 = vrot.slane %v9333, 2
  %v9561 = vsel %vm3298, %v9558, %v9560
  %v9562 = vrot.slane %v9334, 2
  %v9563 = vrot.slane %v9335, 2
  %v9564 = vsel %vm3298, %v9562, %v9563
  %v9565 = vrot.slane %v9336, 2
  %v9566 = vsel %vm3298, %v9563, %v9565
  %v9567 = vrot.slane %v9337, 2
  %v9568 = vrot.slane %v9338, 2
  %v9569 = vsel %vm3298, %v9567, %v9568
  %v9570 = vrot.slane %v9339, 2
  %v9571 = vsel %vm3298, %v9568, %v9570
  %v9572 = vrot.slane %v9340, 2
  %v9573 = vrot.slane %v9341, 2
  %v9574 = vsel %vm3298, %v9572, %v9573
  %v9575 = vrot.slane %v9342, 2
  %v9576 = vsel %vm3298, %v9573, %v9575
  %v9577 = vrot.slane %v9343, 2
  %v9578 = vrot.slane %v9344, 2
  %v9579 = vsel %vm3298, %v9577, %v9578
  %v9580 = vrot.slane %v9345, 2
  %v9581 = vsel %vm3298, %v9578, %v9580
  %v9582 = vrot.slane %v9346, 2
  %v9583 = vrot.slane %v9347, 2
  %v9584 = vsel %vm3298, %v9582, %v9583
  %v9585 = vrot.slane %v9348, 2
  %v9586 = vsel %vm3298, %v9583, %v9585
  %v9587 = vrot.slane %v9349, 2
  %v9588 = vrot.slane %v9350, 2
  %v9589 = vsel %vm3298, %v9587, %v9588
  %v9590 = vrot.slane %v9351, 2
  %v9591 = vsel %vm3298, %v9588, %v9590
  %v9592 = vrot.slane %v9352, 2
  %v9593 = vrot.slane %v9353, 2
  %v9594 = vsel %vm3298, %v9592, %v9593
  %v9595 = vrot.slane %v9354, 2
  %v9596 = vsel %vm3298, %v9593, %v9595
  %v9597 = vrot.slane %v9355, 2
  %v9598 = vrot.slane %v9356, 2
  %v9599 = vsel %vm3298, %v9597, %v9598
  %v9600 = vrot.slane %v9357, 2
  %v9601 = vsel %vm3298, %v9598, %v9600
  %v9602 = vrot.slane %v9358, 2
  %v9603 = vrot.slane %v9359, 2
  %v9604 = vsel %vm3298, %v9602, %v9603
  %v9605 = vrot.slane %v9360, 2
  %v9606 = vsel %vm3298, %v9603, %v9605
  %v9607 = vrot.slane %v9361, 2
  %v9608 = vrot.slane %v9362, 2
  %v9609 = vsel %vm3298, %v9607, %v9608
  %v9610 = vrot.slane %v9363, 2
  %v9611 = vsel %vm3298, %v9608, %v9610
  %v9612 = vrot.slane %v9364, 2
  %v9613 = vrot.slane %v9365, 2
  %v9614 = vsel %vm3298, %v9612, %v9613
  %v9615 = vrot.slane %v9366, 2
  %v9616 = vsel %vm3298, %v9613, %v9615
  %v9617 = vrot.slane %v9367, 2
  %v9618 = vrot.slane %v9368, 2
  %v9619 = vsel %vm3298, %v9617, %v9618
  %v9620 = vrot.slane %v9369, 2
  %v9621 = vsel %vm3298, %v9618, %v9620
  %v9622 = vrot.slane %v9370, 2
  %v9623 = vrot.slane %v9371, 2
  %v9624 = vsel %vm3298, %v9622, %v9623
  %v9625 = vrot.slane %v9372, 2
  %v9626 = vsel %vm3298, %v9623, %v9625
  %v9627 = vrot.slane %v9373, 2
  %v9628 = vrot.slane %v9374, 2
  %v9629 = vsel %vm3298, %v9627, %v9628
  %v9630 = vrot.slane %v9375, 2
  %v9631 = vsel %vm3298, %v9628, %v9630
  %v9696 = vadd.f32 %v9215, %v9474
  %v9697 = vadd.f32 %v9216, %v9476
  %v9698 = vadd.f32 %v9217, %v9479
  %v9699 = vadd.f32 %v9218, %v9481
  %v9700 = vadd.f32 %v9219, %v9484
  %v9701 = vadd.f32 %v9220, %v9486
  %v9702 = vadd.f32 %v9221, %v9489
  %v9703 = vadd.f32 %v9222, %v9491
  %v9704 = vadd.f32 %v9223, %v9494
  %v9705 = vadd.f32 %v9224, %v9496
  %v9706 = vadd.f32 %v9225, %v9499
  %v9707 = vadd.f32 %v9226, %v9501
  %v9708 = vadd.f32 %v9227, %v9504
  %v9709 = vadd.f32 %v9228, %v9506
  %v9710 = vadd.f32 %v9229, %v9509
  %v9711 = vadd.f32 %v9230, %v9511
  %v9712 = vadd.f32 %v9231, %v9514
  %v9713 = vadd.f32 %v9232, %v9516
  %v9714 = vadd.f32 %v9233, %v9519
  %v9715 = vadd.f32 %v9234, %v9521
  %v9716 = vadd.f32 %v9235, %v9524
  %v9717 = vadd.f32 %v9236, %v9526
  %v9718 = vadd.f32 %v9237, %v9529
  %v9719 = vadd.f32 %v9238, %v9531
  %v9720 = vadd.f32 %v9239, %v9534
  %v9721 = vadd.f32 %v9240, %v9536
  %v9722 = vadd.f32 %v9241, %v9539
  %v9723 = vadd.f32 %v9242, %v9541
  %v9724 = vadd.f32 %v9243, %v9544
  %v9725 = vadd.f32 %v9244, %v9546
  %v9726 = vadd.f32 %v9245, %v9549
  %v9727 = vadd.f32 %v9246, %v9551
  %v9728 = vadd.f32 %v9247, %v9554
  %v9729 = vadd.f32 %v9248, %v9556
  %v9730 = vadd.f32 %v9249, %v9559
  %v9731 = vadd.f32 %v9250, %v9561
  %v9732 = vadd.f32 %v9251, %v9564
  %v9733 = vadd.f32 %v9252, %v9566
  %v9734 = vadd.f32 %v9253, %v9569
  %v9735 = vadd.f32 %v9254, %v9571
  %v9736 = vadd.f32 %v9255, %v9574
  %v9737 = vadd.f32 %v9256, %v9576
  %v9738 = vadd.f32 %v9257, %v9579
  %v9739 = vadd.f32 %v9258, %v9581
  %v9740 = vadd.f32 %v9259, %v9584
  %v9741 = vadd.f32 %v9260, %v9586
  %v9742 = vadd.f32 %v9261, %v9589
  %v9743 = vadd.f32 %v9262, %v9591
  %v9744 = vadd.f32 %v9263, %v9594
  %v9745 = vadd.f32 %v9264, %v9596
  %v9746 = vadd.f32 %v9265, %v9599
  %v9747 = vadd.f32 %v9266, %v9601
  %v9748 = vadd.f32 %v9267, %v9604
  %v9749 = vadd.f32 %v9268, %v9606
  %v9750 = vadd.f32 %v9269, %v9609
  %v9751 = vadd.f32 %v9270, %v9611
  %v9752 = vadd.f32 %v9271, %v9614
  %v9753 = vadd.f32 %v9272, %v9616
  %v9754 = vadd.f32 %v9273, %v9619
  %v9755 = vadd.f32 %v9274, %v9621
  %v9756 = vadd.f32 %v9275, %v9624
  %v9757 = vadd.f32 %v9276, %v9626
  %v9758 = vadd.f32 %v9277, %v9629
  %v9759 = vadd.f32 %v9278, %v9631
  %v9760 = vperm.slane %v193, 2
  %v9761 = vadd.f32 %v9696, %v9760
  %v9762 = vadd.f32 %v9697, %v9760
  %v9763 = vadd.f32 %v9698, %v9760
  %v9764 = vadd.f32 %v9699, %v9760
  %v9765 = vadd.f32 %v9700, %v9760
  %v9766 = vadd.f32 %v9701, %v9760
  %v9767 = vadd.f32 %v9702, %v9760
  %v9768 = vadd.f32 %v9703, %v9760
  %v9769 = vadd.f32 %v9704, %v9760
  %v9770 = vadd.f32 %v9705, %v9760
  %v9771 = vadd.f32 %v9706, %v9760
  %v9772 = vadd.f32 %v9707, %v9760
  %v9773 = vadd.f32 %v9708, %v9760
  %v9774 = vadd.f32 %v9709, %v9760
  %v9775 = vadd.f32 %v9710, %v9760
  %v9776 = vadd.f32 %v9711, %v9760
  %v9777 = vadd.f32 %v9712, %v9760
  %v9778 = vadd.f32 %v9713, %v9760
  %v9779 = vadd.f32 %v9714, %v9760
  %v9780 = vadd.f32 %v9715, %v9760
  %v9781 = vadd.f32 %v9716, %v9760
  %v9782 = vadd.f32 %v9717, %v9760
  %v9783 = vadd.f32 %v9718, %v9760
  %v9784 = vadd.f32 %v9719, %v9760
  %v9785 = vadd.f32 %v9720, %v9760
  %v9786 = vadd.f32 %v9721, %v9760
  %v9787 = vadd.f32 %v9722, %v9760
  %v9788 = vadd.f32 %v9723, %v9760
  %v9789 = vadd.f32 %v9724, %v9760
  %v9790 = vadd.f32 %v9725, %v9760
  %v9791 = vadd.f32 %v9726, %v9760
  %v9792 = vadd.f32 %v9727, %v9760
  %v9793 = vadd.f32 %v9728, %v9760
  %v9794 = vadd.f32 %v9729, %v9760
  %v9795 = vadd.f32 %v9730, %v9760
  %v9796 = vadd.f32 %v9731, %v9760
  %v9797 = vadd.f32 %v9732, %v9760
  %v9798 = vadd.f32 %v9733, %v9760
  %v9799 = vadd.f32 %v9734, %v9760
  %v9800 = vadd.f32 %v9735, %v9760
  %v9801 = vadd.f32 %v9736, %v9760
  %v9802 = vadd.f32 %v9737, %v9760
  %v9803 = vadd.f32 %v9738, %v9760
  %v9804 = vadd.f32 %v9739, %v9760
  %v9805 = vadd.f32 %v9740, %v9760
  %v9806 = vadd.f32 %v9741, %v9760
  %v9807 = vadd.f32 %v9742, %v9760
  %v9808 = vadd.f32 %v9743, %v9760
  %v9809 = vadd.f32 %v9744, %v9760
  %v9810 = vadd.f32 %v9745, %v9760
  %v9811 = vadd.f32 %v9746, %v9760
  %v9812 = vadd.f32 %v9747, %v9760
  %v9813 = vadd.f32 %v9748, %v9760
  %v9814 = vadd.f32 %v9749, %v9760
  %v9815 = vadd.f32 %v9750, %v9760
  %v9816 = vadd.f32 %v9751, %v9760
  %v9817 = vadd.f32 %v9752, %v9760
  %v9818 = vadd.f32 %v9753, %v9760
  %v9819 = vadd.f32 %v9754, %v9760
  %v9820 = vadd.f32 %v9755, %v9760
  %v9821 = vadd.f32 %v9756, %v9760
  %v9822 = vadd.f32 %v9757, %v9760
  %v9823 = vadd.f32 %v9758, %v9760
  %v9824 = vadd.f32 %v9759, %v9760
  %v9825 = vmax.f32 %v9761, 0.0
  %v9826 = vmax.f32 %v9762, 0.0
  %v9827 = vmax.f32 %v9763, 0.0
  %v9828 = vmax.f32 %v9764, 0.0
  %v9829 = vmax.f32 %v9765, 0.0
  %v9830 = vmax.f32 %v9766, 0.0
  %v9831 = vmax.f32 %v9767, 0.0
  %v9832 = vmax.f32 %v9768, 0.0
  %v9833 = vmax.f32 %v9769, 0.0
  %v9834 = vmax.f32 %v9770, 0.0
  %v9835 = vmax.f32 %v9771, 0.0
  %v9836 = vmax.f32 %v9772, 0.0
  %v9837 = vmax.f32 %v9773, 0.0
  %v9838 = vmax.f32 %v9774, 0.0
  %v9839 = vmax.f32 %v9775, 0.0
  %v9840 = vmax.f32 %v9776, 0.0
  %v9841 = vmax.f32 %v9777, 0.0
  %v9842 = vmax.f32 %v9778, 0.0
  %v9843 = vmax.f32 %v9779, 0.0
  %v9844 = vmax.f32 %v9780, 0.0
  %v9845 = vmax.f32 %v9781, 0.0
  %v9846 = vmax.f32 %v9782, 0.0
  %v9847 = vmax.f32 %v9783, 0.0
  %v9848 = vmax.f32 %v9784, 0.0
  %v9849 = vmax.f32 %v9785, 0.0
  %v9850 = vmax.f32 %v9786, 0.0
  %v9851 = vmax.f32 %v9787, 0.0
  %v9852 = vmax.f32 %v9788, 0.0
  %v9853 = vmax.f32 %v9789, 0.0
  %v9854 = vmax.f32 %v9790, 0.0
  %v9855 = vmax.f32 %v9791, 0.0
  %v9856 = vmax.f32 %v9792, 0.0
  %v9857 = vmax.f32 %v9793, 0.0
  %v9858 = vmax.f32 %v9794, 0.0
  %v9859 = vmax.f32 %v9795, 0.0
  %v9860 = vmax.f32 %v9796, 0.0
  %v9861 = vmax.f32 %v9797, 0.0
  %v9862 = vmax.f32 %v9798, 0.0
  %v9863 = vmax.f32 %v9799, 0.0
  %v9864 = vmax.f32 %v9800, 0.0
  %v9865 = vmax.f32 %v9801, 0.0
  %v9866 = vmax.f32 %v9802, 0.0
  %v9867 = vmax.f32 %v9803, 0.0
  %v9868 = vmax.f32 %v9804, 0.0
  %v9869 = vmax.f32 %v9805, 0.0
  %v9870 = vmax.f32 %v9806, 0.0
  %v9871 = vmax.f32 %v9807, 0.0
  %v9872 = vmax.f32 %v9808, 0.0
  %v9873 = vmax.f32 %v9809, 0.0
  %v9874 = vmax.f32 %v9810, 0.0
  %v9875 = vmax.f32 %v9811, 0.0
  %v9876 = vmax.f32 %v9812, 0.0
  %v9877 = vmax.f32 %v9813, 0.0
  %v9878 = vmax.f32 %v9814, 0.0
  %v9879 = vmax.f32 %v9815, 0.0
  %v9880 = vmax.f32 %v9816, 0.0
  %v9881 = vmax.f32 %v9817, 0.0
  %v9882 = vmax.f32 %v9818, 0.0
  %v9883 = vmax.f32 %v9819, 0.0
  %v9884 = vmax.f32 %v9820, 0.0
  %v9885 = vmax.f32 %v9821, 0.0
  %v9886 = vmax.f32 %v9822, 0.0
  %v9887 = vmax.f32 %v9823, 0.0
  %v9888 = vmax.f32 %v9824, 0.0
  %v9889 = vpack.c.bf16 %v9826, %v9825
  %v9890 = vpack.c.bf16 %v9828, %v9827
  %v9891 = vpack.c.bf16 %v9830, %v9829
  %v9892 = vpack.c.bf16 %v9832, %v9831
  %v9893 = vpack.c.bf16 %v9834, %v9833
  %v9894 = vpack.c.bf16 %v9836, %v9835
  %v9895 = vpack.c.bf16 %v9838, %v9837
  %v9896 = vpack.c.bf16 %v9840, %v9839
  %v9897 = vpack.c.bf16 %v9842, %v9841
  %v9898 = vpack.c.bf16 %v9844, %v9843
  %v9899 = vpack.c.bf16 %v9846, %v9845
  %v9900 = vpack.c.bf16 %v9848, %v9847
  %v9901 = vpack.c.bf16 %v9850, %v9849
  %v9902 = vpack.c.bf16 %v9852, %v9851
  %v9903 = vpack.c.bf16 %v9854, %v9853
  %v9904 = vpack.c.bf16 %v9856, %v9855
  %v9905 = vpack.c.bf16 %v9858, %v9857
  %v9906 = vpack.c.bf16 %v9860, %v9859
  %v9907 = vpack.c.bf16 %v9862, %v9861
  %v9908 = vpack.c.bf16 %v9864, %v9863
  %v9909 = vpack.c.bf16 %v9866, %v9865
  %v9910 = vpack.c.bf16 %v9868, %v9867
  %v9911 = vpack.c.bf16 %v9870, %v9869
  %v9912 = vpack.c.bf16 %v9872, %v9871
  %v9913 = vpack.c.bf16 %v9874, %v9873
  %v9914 = vpack.c.bf16 %v9876, %v9875
  %v9915 = vpack.c.bf16 %v9878, %v9877
  %v9916 = vpack.c.bf16 %v9880, %v9879
  %v9917 = vpack.c.bf16 %v9882, %v9881
  %v9918 = vpack.c.bf16 %v9884, %v9883
  %v9919 = vpack.c.bf16 %v9886, %v9885
  %v9920 = vpack.c.bf16 %v9888, %v9887
  %v9921 = vld [vmem:[%s5] sm:$0xf]
  %v9922 = vld [vmem:[%s5 + $0x4] sm:$0xf]
  %v9923 = vld [vmem:[%s5 + $0x8] sm:$0xf]
  %v9924 = vld [vmem:[%s5 + $0xc] sm:$0xf]
  %v9925 = vld [vmem:[%s5 + $0x10] sm:$0xf]
  %v9926 = vld [vmem:[%s5 + $0x14] sm:$0xf]
  %v9927 = vld [vmem:[%s5 + $0x18] sm:$0xf]
  %v9928 = vld [vmem:[%s5 + $0x1c] sm:$0xf]
  %v9929 = vld [vmem:[%s5 + $0x20] sm:$0xf]
  %v9930 = vld [vmem:[%s5 + $0x24] sm:$0xf]
  %v9931 = vld [vmem:[%s5 + $0x28] sm:$0xf]
  %v9932 = vld [vmem:[%s5 + $0x2c] sm:$0xf]
  %v9933 = vld [vmem:[%s5 + $0x30] sm:$0xf]
  %v9934 = vld [vmem:[%s5 + $0x34] sm:$0xf]
  %v9935 = vld [vmem:[%s5 + $0x38] sm:$0xf]
  %v9936 = vld [vmem:[%s5 + $0x3c] sm:$0xf]
  %v9937 = vperm.slane %v193, 3
  %v9954 = vunpack.c.l.b16 %v9921
  %v9955 = vunpack.c.l.b16 %v9922
  %v9956 = vunpack.c.l.b16 %v9923
  %v9957 = vunpack.c.l.b16 %v9924
  %v9958 = vunpack.c.l.b16 %v9925
  %v9959 = vunpack.c.l.b16 %v9926
  %v9960 = vunpack.c.l.b16 %v9927
  %v9961 = vunpack.c.l.b16 %v9928
  %v9962 = vunpack.c.l.b16 %v9929
  %v9963 = vunpack.c.l.b16 %v9930
  %v9964 = vunpack.c.l.b16 %v9931
  %v9965 = vunpack.c.l.b16 %v9932
  %v9966 = vunpack.c.l.b16 %v9933
  %v9967 = vunpack.c.l.b16 %v9934
  %v9968 = vunpack.c.l.b16 %v9935
  %v9969 = vunpack.c.l.b16 %v9936
  %v9970 = vpack.c.b16 %v9955, %v9954
  %v9971 = vpack.c.b16 %v9957, %v9956
  %v9972 = vpack.c.b16 %v9959, %v9958
  %v9973 = vpack.c.b16 %v9961, %v9960
  %v9974 = vpack.c.b16 %v9963, %v9962
  %v9975 = vpack.c.b16 %v9965, %v9964
  %v9976 = vpack.c.b16 %v9967, %v9966
  %v9977 = vpack.c.b16 %v9969, %v9968
  %9986 = vmatpush.bf16.msra.mxu0 %v9977
  %9987 = vmatpush.bf16.msra.mxu0 %v9976
  %9988 = vmatpush.bf16.msra.mxu0 %v9975
  %9989 = vmatpush.bf16.msra.mxu0 %v9974
  %9990 = vmatpush.bf16.msra.mxu0 %v9973
  %9991 = vmatpush.bf16.msra.mxu0 %v9972
  %9992 = vmatpush.bf16.msra.mxu0 %v9971
  %9993 = vmatpush.bf16.msra.mxu0 %v9970
  %9994 = vmatmul.bf16.gmra.mxu0 %v9889
  %v9995 = vpop.f32.mrf.mxu0
  %v9996 = vadd.f32 %v9937, %v9995
  %v9997 = vpop.f32.mrf.mxu0
  %v9998 = vadd.f32 %v9937, %v9997
  %9999 = vmatmul.bf16.gmra.mxu0 %v9890
  %v10000 = vpop.f32.mrf.mxu0
  %v10001 = vadd.f32 %v9937, %v10000
  %v10002 = vpop.f32.mrf.mxu0
  %v10003 = vadd.f32 %v9937, %v10002
  %10004 = vmatmul.bf16.gmra.mxu0 %v9891
  %v10005 = vpop.f32.mrf.mxu0
  %v10006 = vadd.f32 %v9937, %v10005
  %v10007 = vpop.f32.mrf.mxu0
  %v10008 = vadd.f32 %v9937, %v10007
  %10009 = vmatmul.bf16.gmra.mxu0 %v9892
  %v10010 = vpop.f32.mrf.mxu0
  %v10011 = vadd.f32 %v9937, %v10010
  %v10012 = vpop.f32.mrf.mxu0
  %v10013 = vadd.f32 %v9937, %v10012
  %10014 = vmatmul.bf16.gmra.mxu0 %v9893
  %v10015 = vpop.f32.mrf.mxu0
  %v10016 = vadd.f32 %v9937, %v10015
  %v10017 = vpop.f32.mrf.mxu0
  %v10018 = vadd.f32 %v9937, %v10017
  %10019 = vmatmul.bf16.gmra.mxu0 %v9894
  %v10020 = vpop.f32.mrf.mxu0
  %v10021 = vadd.f32 %v9937, %v10020
  %v10022 = vpop.f32.mrf.mxu0
  %v10023 = vadd.f32 %v9937, %v10022
  %10024 = vmatmul.bf16.gmra.mxu0 %v9895
  %v10025 = vpop.f32.mrf.mxu0
  %v10026 = vadd.f32 %v9937, %v10025
  %v10027 = vpop.f32.mrf.mxu0
  %v10028 = vadd.f32 %v9937, %v10027
  %10029 = vmatmul.bf16.gmra.mxu0 %v9896
  %v10030 = vpop.f32.mrf.mxu0
  %v10031 = vadd.f32 %v9937, %v10030
  %v10032 = vpop.f32.mrf.mxu0
  %v10033 = vadd.f32 %v9937, %v10032
  %10034 = vmatmul.bf16.gmra.mxu0 %v9897
  %v10035 = vpop.f32.mrf.mxu0
  %v10036 = vadd.f32 %v9937, %v10035
  %v10037 = vpop.f32.mrf.mxu0
  %v10038 = vadd.f32 %v9937, %v10037
  %10039 = vmatmul.bf16.gmra.mxu0 %v9898
  %v10040 = vpop.f32.mrf.mxu0
  %v10041 = vadd.f32 %v9937, %v10040
  %v10042 = vpop.f32.mrf.mxu0
  %v10043 = vadd.f32 %v9937, %v10042
  %10044 = vmatmul.bf16.gmra.mxu0 %v9899
  %v10045 = vpop.f32.mrf.mxu0
  %v10046 = vadd.f32 %v9937, %v10045
  %v10047 = vpop.f32.mrf.mxu0
  %v10048 = vadd.f32 %v9937, %v10047
  %10049 = vmatmul.bf16.gmra.mxu0 %v9900
  %v10050 = vpop.f32.mrf.mxu0
  %v10051 = vadd.f32 %v9937, %v10050
  %v10052 = vpop.f32.mrf.mxu0
  %v10053 = vadd.f32 %v9937, %v10052
  %10054 = vmatmul.bf16.gmra.mxu0 %v9901
  %v10055 = vpop.f32.mrf.mxu0
  %v10056 = vadd.f32 %v9937, %v10055
  %v10057 = vpop.f32.mrf.mxu0
  %v10058 = vadd.f32 %v9937, %v10057
  %10059 = vmatmul.bf16.gmra.mxu0 %v9902
  %v10060 = vpop.f32.mrf.mxu0
  %v10061 = vadd.f32 %v9937, %v10060
  %v10062 = vpop.f32.mrf.mxu0
  %v10063 = vadd.f32 %v9937, %v10062
  %10064 = vmatmul.bf16.gmra.mxu0 %v9903
  %v10065 = vpop.f32.mrf.mxu0
  %v10066 = vadd.f32 %v9937, %v10065
  %v10067 = vpop.f32.mrf.mxu0
  %v10068 = vadd.f32 %v9937, %v10067
  %10069 = vmatmul.bf16.gmra.mxu0 %v9904
  %v10070 = vpop.f32.mrf.mxu0
  %v10071 = vadd.f32 %v9937, %v10070
  %v10072 = vpop.f32.mrf.mxu0
  %v10073 = vadd.f32 %v9937, %v10072
  %10074 = vmatmul.bf16.gmra.mxu0 %v9905
  %v10075 = vpop.f32.mrf.mxu0
  %v10076 = vadd.f32 %v9937, %v10075
  %v10077 = vpop.f32.mrf.mxu0
  %v10078 = vadd.f32 %v9937, %v10077
  %10079 = vmatmul.bf16.gmra.mxu0 %v9906
  %v10080 = vpop.f32.mrf.mxu0
  %v10081 = vadd.f32 %v9937, %v10080
  %v10082 = vpop.f32.mrf.mxu0
  %v10083 = vadd.f32 %v9937, %v10082
  %10084 = vmatmul.bf16.gmra.mxu0 %v9907
  %v10085 = vpop.f32.mrf.mxu0
  %v10086 = vadd.f32 %v9937, %v10085
  %v10087 = vpop.f32.mrf.mxu0
  %v10088 = vadd.f32 %v9937, %v10087
  %10089 = vmatmul.bf16.gmra.mxu0 %v9908
  %v10090 = vpop.f32.mrf.mxu0
  %v10091 = vadd.f32 %v9937, %v10090
  %v10092 = vpop.f32.mrf.mxu0
  %v10093 = vadd.f32 %v9937, %v10092
  %10094 = vmatmul.bf16.gmra.mxu0 %v9909
  %v10095 = vpop.f32.mrf.mxu0
  %v10096 = vadd.f32 %v9937, %v10095
  %v10097 = vpop.f32.mrf.mxu0
  %v10098 = vadd.f32 %v9937, %v10097
  %10099 = vmatmul.bf16.gmra.mxu0 %v9910
  %v10100 = vpop.f32.mrf.mxu0
  %v10101 = vadd.f32 %v9937, %v10100
  %v10102 = vpop.f32.mrf.mxu0
  %v10103 = vadd.f32 %v9937, %v10102
  %10104 = vmatmul.bf16.gmra.mxu0 %v9911
  %v10105 = vpop.f32.mrf.mxu0
  %v10106 = vadd.f32 %v9937, %v10105
  %v10107 = vpop.f32.mrf.mxu0
  %v10108 = vadd.f32 %v9937, %v10107
  %10109 = vmatmul.bf16.gmra.mxu0 %v9912
  %v10110 = vpop.f32.mrf.mxu0
  %v10111 = vadd.f32 %v9937, %v10110
  %v10112 = vpop.f32.mrf.mxu0
  %v10113 = vadd.f32 %v9937, %v10112
  %10114 = vmatmul.bf16.gmra.mxu0 %v9913
  %v10115 = vpop.f32.mrf.mxu0
  %v10116 = vadd.f32 %v9937, %v10115
  %v10117 = vpop.f32.mrf.mxu0
  %v10118 = vadd.f32 %v9937, %v10117
  %10119 = vmatmul.bf16.gmra.mxu0 %v9914
  %v10120 = vpop.f32.mrf.mxu0
  %v10121 = vadd.f32 %v9937, %v10120
  %v10122 = vpop.f32.mrf.mxu0
  %v10123 = vadd.f32 %v9937, %v10122
  %10124 = vmatmul.bf16.gmra.mxu0 %v9915
  %v10125 = vpop.f32.mrf.mxu0
  %v10126 = vadd.f32 %v9937, %v10125
  %v10127 = vpop.f32.mrf.mxu0
  %v10128 = vadd.f32 %v9937, %v10127
  %10129 = vmatmul.bf16.gmra.mxu0 %v9916
  %v10130 = vpop.f32.mrf.mxu0
  %v10131 = vadd.f32 %v9937, %v10130
  %v10132 = vpop.f32.mrf.mxu0
  %v10133 = vadd.f32 %v9937, %v10132
  %10134 = vmatmul.bf16.gmra.mxu0 %v9917
  %v10135 = vpop.f32.mrf.mxu0
  %v10136 = vadd.f32 %v9937, %v10135
  %v10137 = vpop.f32.mrf.mxu0
  %v10138 = vadd.f32 %v9937, %v10137
  %10139 = vmatmul.bf16.gmra.mxu0 %v9918
  %v10140 = vpop.f32.mrf.mxu0
  %v10141 = vadd.f32 %v9937, %v10140
  %v10142 = vpop.f32.mrf.mxu0
  %v10143 = vadd.f32 %v9937, %v10142
  %10144 = vmatmul.bf16.gmra.mxu0 %v9919
  %v10145 = vpop.f32.mrf.mxu0
  %v10146 = vadd.f32 %v9937, %v10145
  %v10147 = vpop.f32.mrf.mxu0
  %v10148 = vadd.f32 %v9937, %v10147
  %10149 = vmatmul.bf16.gmra.mxu0 %v9920
  %v10150 = vpop.f32.mrf.mxu0
  %v10151 = vadd.f32 %v9937, %v10150
  %v10152 = vpop.f32.mrf.mxu0
  %v10153 = vadd.f32 %v9937, %v10152
  %10154 = vdwg.mxu0
  %v10155 = vmax.f32 %v9996, 0.0
  %v10156 = vmax.f32 %v9998, 0.0
  %v10157 = vmax.f32 %v10001, 0.0
  %v10158 = vmax.f32 %v10003, 0.0
  %v10159 = vmax.f32 %v10006, 0.0
  %v10160 = vmax.f32 %v10008, 0.0
  %v10161 = vmax.f32 %v10011, 0.0
  %v10162 = vmax.f32 %v10013, 0.0
  %v10163 = vmax.f32 %v10016, 0.0
  %v10164 = vmax.f32 %v10018, 0.0
  %v10165 = vmax.f32 %v10021, 0.0
  %v10166 = vmax.f32 %v10023, 0.0
  %v10167 = vmax.f32 %v10026, 0.0
  %v10168 = vmax.f32 %v10028, 0.0
  %v10169 = vmax.f32 %v10031, 0.0
  %v10170 = vmax.f32 %v10033, 0.0
  %v10171 = vmax.f32 %v10036, 0.0
  %v10172 = vmax.f32 %v10038, 0.0
  %v10173 = vmax.f32 %v10041, 0.0
  %v10174 = vmax.f32 %v10043, 0.0
  %v10175 = vmax.f32 %v10046, 0.0
  %v10176 = vmax.f32 %v10048, 0.0
  %v10177 = vmax.f32 %v10051, 0.0
  %v10178 = vmax.f32 %v10053, 0.0
  %v10179 = vmax.f32 %v10056, 0.0
  %v10180 = vmax.f32 %v10058, 0.0
  %v10181 = vmax.f32 %v10061, 0.0
  %v10182 = vmax.f32 %v10063, 0.0
  %v10183 = vmax.f32 %v10066, 0.0
  %v10184 = vmax.f32 %v10068, 0.0
  %v10185 = vmax.f32 %v10071, 0.0
  %v10186 = vmax.f32 %v10073, 0.0
  %v10187 = vmax.f32 %v10076, 0.0
  %v10188 = vmax.f32 %v10078, 0.0
  %v10189 = vmax.f32 %v10081, 0.0
  %v10190 = vmax.f32 %v10083, 0.0
  %v10191 = vmax.f32 %v10086, 0.0
  %v10192 = vmax.f32 %v10088, 0.0
  %v10193 = vmax.f32 %v10091, 0.0
  %v10194 = vmax.f32 %v10093, 0.0
  %v10195 = vmax.f32 %v10096, 0.0
  %v10196 = vmax.f32 %v10098, 0.0
  %v10197 = vmax.f32 %v10101, 0.0
  %v10198 = vmax.f32 %v10103, 0.0
  %v10199 = vmax.f32 %v10106, 0.0
  %v10200 = vmax.f32 %v10108, 0.0
  %v10201 = vmax.f32 %v10111, 0.0
  %v10202 = vmax.f32 %v10113, 0.0
  %v10203 = vmax.f32 %v10116, 0.0
  %v10204 = vmax.f32 %v10118, 0.0
  %v10205 = vmax.f32 %v10121, 0.0
  %v10206 = vmax.f32 %v10123, 0.0
  %v10207 = vmax.f32 %v10126, 0.0
  %v10208 = vmax.f32 %v10128, 0.0
  %v10209 = vmax.f32 %v10131, 0.0
  %v10210 = vmax.f32 %v10133, 0.0
  %v10211 = vmax.f32 %v10136, 0.0
  %v10212 = vmax.f32 %v10138, 0.0
  %v10213 = vmax.f32 %v10141, 0.0
  %v10214 = vmax.f32 %v10143, 0.0
  %v10215 = vmax.f32 %v10146, 0.0
  %v10216 = vmax.f32 %v10148, 0.0
  %v10217 = vmax.f32 %v10151, 0.0
  %v10218 = vmax.f32 %v10153, 0.0
  %10219 = vxpose.xlu0.b32.start [1/16] %v10155, 128
  %10220 = vxpose.xlu0.b32.cont [2/16] %v10156, 128
  %10221 = vxpose.xlu0.b32.cont [3/16] %v10157, 128
  %10222 = vxpose.xlu0.b32.cont [4/16] %v10158, 128
  %10223 = vxpose.xlu0.b32.cont [5/16] %v10159, 128
  %10224 = vxpose.xlu0.b32.cont [6/16] %v10160, 128
  %10225 = vxpose.xlu0.b32.cont [7/16] %v10161, 128
  %10226 = vxpose.xlu0.b32.cont [8/16] %v10162, 128
  %10227 = vxpose.xlu0.b32.cont [9/16] %v10163, 128
  %10228 = vxpose.xlu0.b32.cont [10/16] %v10164, 128
  %10229 = vxpose.xlu0.b32.cont [11/16] %v10165, 128
  %10230 = vxpose.xlu0.b32.cont [12/16] %v10166, 128
  %10231 = vxpose.xlu0.b32.cont [13/16] %v10167, 128
  %10232 = vxpose.xlu0.b32.cont [14/16] %v10168, 128
  %10233 = vxpose.xlu0.b32.cont [15/16] %v10169, 128
  %10234 = vxpose.xlu0.b32.end [16/16] %v10170, 128
  %v10235 = vpop.trf.xlu0
  %v10236 = vpop.trf.xlu0
  %v10237 = vpop.trf.xlu0
  %v10238 = vpop.trf.xlu0
  %v10239 = vpop.trf.xlu0
  %v10240 = vpop.trf.xlu0
  %v10241 = vpop.trf.xlu0
  %v10242 = vpop.trf.xlu0
  %v10243 = vpop.trf.xlu0
  %v10244 = vpop.trf.xlu0
  %v10245 = vpop.trf.xlu0
  %v10246 = vpop.trf.xlu0
  %v10247 = vpop.trf.xlu0
  %v10248 = vpop.trf.xlu0
  %v10249 = vpop.trf.xlu0
  %v10250 = vpop.trf.xlu0
  %10251 = vxpose.xlu0.b32.start [1/16] %v10171, 128
  %10252 = vxpose.xlu0.b32.cont [2/16] %v10172, 128
  %10253 = vxpose.xlu0.b32.cont [3/16] %v10173, 128
  %10254 = vxpose.xlu0.b32.cont [4/16] %v10174, 128
  %10255 = vxpose.xlu0.b32.cont [5/16] %v10175, 128
  %10256 = vxpose.xlu0.b32.cont [6/16] %v10176, 128
  %10257 = vxpose.xlu0.b32.cont [7/16] %v10177, 128
  %10258 = vxpose.xlu0.b32.cont [8/16] %v10178, 128
  %10259 = vxpose.xlu0.b32.cont [9/16] %v10179, 128
  %10260 = vxpose.xlu0.b32.cont [10/16] %v10180, 128
  %10261 = vxpose.xlu0.b32.cont [11/16] %v10181, 128
  %10262 = vxpose.xlu0.b32.cont [12/16] %v10182, 128
  %10263 = vxpose.xlu0.b32.cont [13/16] %v10183, 128
  %10264 = vxpose.xlu0.b32.cont [14/16] %v10184, 128
  %10265 = vxpose.xlu0.b32.cont [15/16] %v10185, 128
  %10266 = vxpose.xlu0.b32.end [16/16] %v10186, 128
  %v10267 = vpop.trf.xlu0
  %v10268 = vpop.trf.xlu0
  %v10269 = vpop.trf.xlu0
  %v10270 = vpop.trf.xlu0
  %v10271 = vpop.trf.xlu0
  %v10272 = vpop.trf.xlu0
  %v10273 = vpop.trf.xlu0
  %v10274 = vpop.trf.xlu0
  %v10275 = vpop.trf.xlu0
  %v10276 = vpop.trf.xlu0
  %v10277 = vpop.trf.xlu0
  %v10278 = vpop.trf.xlu0
  %v10279 = vpop.trf.xlu0
  %v10280 = vpop.trf.xlu0
  %v10281 = vpop.trf.xlu0
  %v10282 = vpop.trf.xlu0
  %10283 = vst [vmem:[%s7] sm:$0xff] %v10235
  %10284 = vst [vmem:[%s7 + $0x8] sm:$0xff] %v10267
  %10285 = vst [vmem:[%s7 + $0x10] sm:$0xff] %v10236
  %10286 = vst [vmem:[%s7 + $0x18] sm:$0xff] %v10268
  %10287 = vst [vmem:[%s7 + $0x20] sm:$0xff] %v10237
  %10288 = vst [vmem:[%s7 + $0x28] sm:$0xff] %v10269
  %10289 = vst [vmem:[%s7 + $0x30] sm:$0xff] %v10238
  %10290 = vst [vmem:[%s7 + $0x38] sm:$0xff] %v10270
  %10291 = vst [vmem:[%s7 + $0x40] sm:$0xff] %v10239
  %10292 = vst [vmem:[%s7 + $0x48] sm:$0xff] %v10271
  %10293 = vst [vmem:[%s7 + $0x50] sm:$0xff] %v10240
  %10294 = vst [vmem:[%s7 + $0x58] sm:$0xff] %v10272
  %10295 = vst [vmem:[%s7 + $0x60] sm:$0xff] %v10241
  %10296 = vst [vmem:[%s7 + $0x68] sm:$0xff] %v10273
  %10297 = vst [vmem:[%s7 + $0x70] sm:$0xff] %v10242
  %10298 = vst [vmem:[%s7 + $0x78] sm:$0xff] %v10274
  %10299 = vst [vmem:[%s7 + $0x80] sm:$0xff] %v10243
  %10300 = vst [vmem:[%s7 + $0x88] sm:$0xff] %v10275
  %10301 = vst [vmem:[%s7 + $0x90] sm:$0xff] %v10244
  %10302 = vst [vmem:[%s7 + $0x98] sm:$0xff] %v10276
  %10303 = vst [vmem:[%s7 + $0xa0] sm:$0xff] %v10245
  %10304 = vst [vmem:[%s7 + $0xa8] sm:$0xff] %v10277
  %10305 = vst [vmem:[%s7 + $0xb0] sm:$0xff] %v10246
  %10306 = vst [vmem:[%s7 + $0xb8] sm:$0xff] %v10278
  %10307 = vst [vmem:[%s7 + $0xc0] sm:$0xff] %v10247
  %10308 = vst [vmem:[%s7 + $0xc8] sm:$0xff] %v10279
  %10309 = vst [vmem:[%s7 + $0xd0] sm:$0xff] %v10248
  %10310 = vst [vmem:[%s7 + $0xd8] sm:$0xff] %v10280
  %10311 = vst [vmem:[%s7 + $0xe0] sm:$0xff] %v10249
  %10312 = vst [vmem:[%s7 + $0xe8] sm:$0xff] %v10281
  %10313 = vst [vmem:[%s7 + $0xf0] sm:$0xff] %v10250
  %10314 = vst [vmem:[%s7 + $0xf8] sm:$0xff] %v10282
  %10315 = vxpose.xlu0.b32.start [1/16] %v10187, 128
  %10316 = vxpose.xlu0.b32.cont [2/16] %v10188, 128
  %10317 = vxpose.xlu0.b32.cont [3/16] %v10189, 128
  %10318 = vxpose.xlu0.b32.cont [4/16] %v10190, 128
  %10319 = vxpose.xlu0.b32.cont [5/16] %v10191, 128
  %10320 = vxpose.xlu0.b32.cont [6/16] %v10192, 128
  %10321 = vxpose.xlu0.b32.cont [7/16] %v10193, 128
  %10322 = vxpose.xlu0.b32.cont [8/16] %v10194, 128
  %10323 = vxpose.xlu0.b32.cont [9/16] %v10195, 128
  %10324 = vxpose.xlu0.b32.cont [10/16] %v10196, 128
  %10325 = vxpose.xlu0.b32.cont [11/16] %v10197, 128
  %10326 = vxpose.xlu0.b32.cont [12/16] %v10198, 128
  %10327 = vxpose.xlu0.b32.cont [13/16] %v10199, 128
  %10328 = vxpose.xlu0.b32.cont [14/16] %v10200, 128
  %10329 = vxpose.xlu0.b32.cont [15/16] %v10201, 128
  %10330 = vxpose.xlu0.b32.end [16/16] %v10202, 128
  %v10331 = vpop.trf.xlu0
  %v10332 = vpop.trf.xlu0
  %v10333 = vpop.trf.xlu0
  %v10334 = vpop.trf.xlu0
  %v10335 = vpop.trf.xlu0
  %v10336 = vpop.trf.xlu0
  %v10337 = vpop.trf.xlu0
  %v10338 = vpop.trf.xlu0
  %v10339 = vpop.trf.xlu0
  %v10340 = vpop.trf.xlu0
  %v10341 = vpop.trf.xlu0
  %v10342 = vpop.trf.xlu0
  %v10343 = vpop.trf.xlu0
  %v10344 = vpop.trf.xlu0
  %v10345 = vpop.trf.xlu0
  %v10346 = vpop.trf.xlu0
  %10347 = vxpose.xlu0.b32.start [1/16] %v10203, 128
  %10348 = vxpose.xlu0.b32.cont [2/16] %v10204, 128
  %10349 = vxpose.xlu0.b32.cont [3/16] %v10205, 128
  %10350 = vxpose.xlu0.b32.cont [4/16] %v10206, 128
  %10351 = vxpose.xlu0.b32.cont [5/16] %v10207, 128
  %10352 = vxpose.xlu0.b32.cont [6/16] %v10208, 128
  %10353 = vxpose.xlu0.b32.cont [7/16] %v10209, 128
  %10354 = vxpose.xlu0.b32.cont [8/16] %v10210, 128
  %10355 = vxpose.xlu0.b32.cont [9/16] %v10211, 128
  %10356 = vxpose.xlu0.b32.cont [10/16] %v10212, 128
  %10357 = vxpose.xlu0.b32.cont [11/16] %v10213, 128
  %10358 = vxpose.xlu0.b32.cont [12/16] %v10214, 128
  %10359 = vxpose.xlu0.b32.cont [13/16] %v10215, 128
  %10360 = vxpose.xlu0.b32.cont [14/16] %v10216, 128
  %10361 = vxpose.xlu0.b32.cont [15/16] %v10217, 128
  %10362 = vxpose.xlu0.b32.end [16/16] %v10218, 128
  %v10363 = vpop.trf.xlu0
  %v10364 = vpop.trf.xlu0
  %v10365 = vpop.trf.xlu0
  %v10366 = vpop.trf.xlu0
  %v10367 = vpop.trf.xlu0
  %v10368 = vpop.trf.xlu0
  %v10369 = vpop.trf.xlu0
  %v10370 = vpop.trf.xlu0
  %v10371 = vpop.trf.xlu0
  %v10372 = vpop.trf.xlu0
  %v10373 = vpop.trf.xlu0
  %v10374 = vpop.trf.xlu0
  %v10375 = vpop.trf.xlu0
  %v10376 = vpop.trf.xlu0
  %v10377 = vpop.trf.xlu0
  %v10378 = vpop.trf.xlu0
  %s10379 = scalar_lea.vmem %s7, 256
  %10380 = vst [vmem:[%s10379] sm:$0xff] %v10331
  %10381 = vst [vmem:[%s10379 + $0x8] sm:$0xff] %v10363
  %10382 = vst [vmem:[%s10379 + $0x10] sm:$0xff] %v10332
  %10383 = vst [vmem:[%s10379 + $0x18] sm:$0xff] %v10364
  %10384 = vst [vmem:[%s10379 + $0x20] sm:$0xff] %v10333
  %10385 = vst [vmem:[%s10379 + $0x28] sm:$0xff] %v10365
  %10386 = vst [vmem:[%s10379 + $0x30] sm:$0xff] %v10334
  %10387 = vst [vmem:[%s10379 + $0x38] sm:$0xff] %v10366
  %10388 = vst [vmem:[%s10379 + $0x40] sm:$0xff] %v10335
  %10389 = vst [vmem:[%s10379 + $0x48] sm:$0xff] %v10367
  %10390 = vst [vmem:[%s10379 + $0x50] sm:$0xff] %v10336
  %10391 = vst [vmem:[%s10379 + $0x58] sm:$0xff] %v10368
  %10392 = vst [vmem:[%s10379 + $0x60] sm:$0xff] %v10337
  %10393 = vst [vmem:[%s10379 + $0x68] sm:$0xff] %v10369
  %10394 = vst [vmem:[%s10379 + $0x70] sm:$0xff] %v10338
  %10395 = vst [vmem:[%s10379 + $0x78] sm:$0xff] %v10370
  %10396 = vst [vmem:[%s10379 + $0x80] sm:$0xff] %v10339
  %10397 = vst [vmem:[%s10379 + $0x88] sm:$0xff] %v10371
  %10398 = vst [vmem:[%s10379 + $0x90] sm:$0xff] %v10340
  %10399 = vst [vmem:[%s10379 + $0x98] sm:$0xff] %v10372
  %10400 = vst [vmem:[%s10379 + $0xa0] sm:$0xff] %v10341
  %10401 = vst [vmem:[%s10379 + $0xa8] sm:$0xff] %v10373
  %10402 = vst [vmem:[%s10379 + $0xb0] sm:$0xff] %v10342
  %10403 = vst [vmem:[%s10379 + $0xb8] sm:$0xff] %v10374
  %10404 = vst [vmem:[%s10379 + $0xc0] sm:$0xff] %v10343
  %10405 = vst [vmem:[%s10379 + $0xc8] sm:$0xff] %v10375
  %10406 = vst [vmem:[%s10379 + $0xd0] sm:$0xff] %v10344
  %10407 = vst [vmem:[%s10379 + $0xd8] sm:$0xff] %v10376
  %10408 = vst [vmem:[%s10379 + $0xe0] sm:$0xff] %v10345
  %10409 = vst [vmem:[%s10379 + $0xe8] sm:$0xff] %v10377
  %10410 = vst [vmem:[%s10379 + $0xf0] sm:$0xff] %v10346
  %10411 = vst [vmem:[%s10379 + $0xf8] sm:$0xff] %v10378
  // Predicated region
  $region30: #{lsfe_forward.1} parent=0 // pred_check
    _
  $region31: #{lsfe_forward.1} parent=0 // pred_check_branch
    %10413 = sbr.rel (0) target = $region33
  $region32: #{lsfe_forward.1} parent=0 // pred_region
    _
  $region33: #{lsfe_forward.1} parent=0 // pred_fallthru
    _
  // Predicated region
  $region34: #{lsfe_forward.1} parent=0 // pred_check
    _
  $region35: #{lsfe_forward.1} parent=0 // pred_check_branch
    %10415 = sbr.rel (0) target = $region37
  $region36: #{lsfe_forward.1} parent=0 // pred_region
    _
  $region37: #{lsfe_forward.1} parent=0 // pred_fallthru
    _

</llo_original>
